<compile_context>
chip_gen: v7x
topology: tpu7x:2x2x1
jax: 0.10.0
libtpu: 0.0.40
codegen_flags: <defaults>
</compile_context>

<pallas_src>
import functools

import jax
import jax.numpy as jnp
import numpy as np
from jax.experimental import pallas as pl
from jax.experimental.pallas import tpu as pltpu


# ----------------------------------------------------------------------------
# Pallas kernel: TB batch elements per grid step (NHWC, C on lanes).
# ----------------------------------------------------------------------------
def coordatt_kernel(
    x_ref,      # (TB, H, W, C)  input tile (NHWC)
    wh_ref,     # (W, C)         Linear_h depthwise weights (BN-folded)
    bh_ref,     # (1, C)         Linear_h folded BN shift
    ww_ref,     # (H, C)         Linear_w depthwise weights (BN-folded)
    bw_ref,     # (1, C)         Linear_w folded BN shift
    w1_ref,     # (C, M)         conv1 1x1 weights (bn1-folded)
    b1_ref,     # (1, M)         conv1 folded bias
    w2_ref,     # (M, C)         conv2 1x1 weights
    b2_ref,     # (1, C)         conv2 bias
    w3_ref,     # (M, C)         conv3 1x1 weights
    b3_ref,     # (1, C)         conv3 bias
    o_ref,      # (TB, H, W, C)  output tile (NHWC)
):
    x = x_ref[...]                                   # (TB, H, W, C)
    tb, h, w, c = x.shape

    # Linear_h: depthwise (1,7) conv -> per-channel reduce over W.
    xh = jnp.sum(x * wh_ref[...][None, None, :, :], axis=2) \
        + bh_ref[...][None, :, :]                    # (TB, H, C)
    # Linear_w: depthwise (7,1) conv -> per-channel reduce over H.
    xw = jnp.sum(x * ww_ref[...][None, :, None, :], axis=1) \
        + bw_ref[...][None, :, :]                    # (TB, W, C)

    # conv1 (1x1, C -> M) + folded bn1 + h_swish on the concatenated rows:
    # one tall MXU push instead of two small ones.
    xcat = jnp.concatenate(
        [xh.reshape(tb * h, c), xw.reshape(tb * w, c)], axis=0
    )                                                # (TB*(H+W), C)
    y = jnp.dot(xcat, w1_ref[...], preferred_element_type=jnp.float32) \
        + b1_ref[...]                                # (TB*(H+W), M)
    y = y * (jnp.clip(y + 3.0, 0.0, 6.0) * (1.0 / 6.0))   # h_swish

    yh = y[: tb * h]                                 # (TB*H, M)
    yw = y[tb * h:]                                  # (TB*W, M)

    # conv2 / conv3 (1x1, M -> C) + sigmoid
    ah = jax.nn.sigmoid(
        jnp.dot(yh, w2_ref[...], preferred_element_type=jnp.float32) + b2_ref[...]
    ).reshape(tb, h, c)                              # (TB, H, C)
    aw = jax.nn.sigmoid(
        jnp.dot(yw, w3_ref[...], preferred_element_type=jnp.float32) + b3_ref[...]
    ).reshape(tb, w, c)                              # (TB, W, C)

    # out[b, i, j, c] = ah[b, i, c] * aw[b, j, c]  -- lane-dense (C=512) store.
    o_ref[...] = ah[:, :, None, :] * aw[:, None, :, :]


# ----------------------------------------------------------------------------
# BN folding (eval mode) and weight packing (plain-JAX glue).
# ----------------------------------------------------------------------------
def _bn_fold(gamma, beta, mean, var, eps=1e-5):
    scale = gamma / jnp.sqrt(var + eps)
    shift = beta - mean * scale
    return scale, shift


def _fold_params(params):
    sh, shh = _bn_fold(*params["bn_h"])
    wh = (params["wh"] * sh[:, None]).T              # (7, C)
    bh = shh[None, :]                                # (1, C)

    sw, shw = _bn_fold(*params["bn_w"])
    ww = (params["ww"] * sw[:, None]).T              # (7, C)
    bw = shw[None, :]                                # (1, C)

    s1, sh1 = _bn_fold(*params["bn1"])
    w1 = (params["w1"] * s1[:, None]).T              # (C, M)
    b1 = (params["b1"] * s1 + sh1)[None, :]          # (1, M)

    w2 = params["w2"].T                              # (M, C)
    b2 = params["b2"][None, :]                       # (1, C)
    w3 = params["w3"].T                              # (M, C)
    b3 = params["b3"][None, :]                       # (1, C)
    return wh, bh, ww, bw, w1, b1, w2, b2, w3, b3


# ----------------------------------------------------------------------------
# NHWC fast path (preferred: no layout transposes at all).
# ----------------------------------------------------------------------------
@functools.partial(jax.jit, static_argnames=("block_batch",))
def coord_att_head_nhwc(x_nhwc, params, *, block_batch=8):
    n, h, w, c = x_nhwc.shape
    assert (h, w) == (7, 7) and c == 512, "CoordAtt(512,512) requires (N,7,7,512)"

    wh, bh, ww, bw, w1, b1, w2, b2, w3, b3 = _fold_params(params)
    mip = w1.shape[1]

    # Batch blocking: TB images per grid step; pad ragged batch with zeros.
    tb = min(block_batch, n)
    grid_n = -(-n // tb)
    n_pad = grid_n * tb
    x = x_nhwc
    if n_pad != n:
        x = jnp.pad(x, ((0, n_pad - n), (0, 0), (0, 0), (0, 0)))

    full = lambda *shape: pl.BlockSpec(shape, lambda b: (0,) * len(shape))

    weight_bytes = 4 * (2 * 7 * c + 4 * c + 2 * c * mip + mip + 2 * c)
    cost = pl.CostEstimate(
        flops=(4 * n_pad * h * w * c                 # two depthwise convs
               + 2 * n_pad * (h + w) * c * mip       # conv1
               + 2 * n_pad * (h + w) * mip * c       # conv2 + conv3
               + n_pad * h * w * c),                 # final broadcast multiply
        transcendentals=n_pad * (h + w) * c,         # sigmoids
        bytes_accessed=2 * n_pad * h * w * c * 4 + weight_bytes,
    )

    out = pl.pallas_call(
        coordatt_kernel,
        out_shape=jax.ShapeDtypeStruct((n_pad, h, w, c), jnp.float32),
        grid_spec=pltpu.PrefetchScalarGridSpec(
            num_scalar_prefetch=0,
            grid=(grid_n,),
            in_specs=[
                pl.BlockSpec((tb, h, w, c), lambda b: (b, 0, 0, 0)),  # x
                full(w, c),    # wh   (weights: constant index_map -> resident)
                full(1, c),    # bh
                full(h, c),    # ww
                full(1, c),    # bw
                full(c, mip),  # w1
                full(1, mip),  # b1
                full(mip, c),  # w2
                full(1, c),    # b2
                full(mip, c),  # w3
                full(1, c),    # b3
            ],
            out_specs=pl.BlockSpec((tb, h, w, c), lambda b: (b, 0, 0, 0)),
        ),
        compiler_params=pltpu.CompilerParams(
            dimension_semantics=("parallel",),
        ),
        cost_estimate=cost,
    )(x, wh, bh, ww, bw, w1, b1, w2, b2, w3, b3)

    return out[:n] if n_pad != n else out


# ----------------------------------------------------------------------------
# PyTorch-compatible NCHW shim.  NOTE: the two transposes here read/write the
# whole tensor in HBM; prefer coord_att_head_nhwc when the surrounding model
# can stay NHWC.
# ----------------------------------------------------------------------------
@functools.partial(jax.jit, static_argnames=("block_batch",))
def coord_att_head(x_nchw, params, *, block_batch=8):
    x = jnp.transpose(x_nchw, (0, 2, 3, 1))          # NCHW -> NHWC
    out = coord_att_head_nhwc(x, params, block_batch=block_batch)
    return jnp.transpose(out, (0, 3, 1, 2))          # NHWC -> NCHW


# ----------------------------------------------------------------------------
# Deterministic parameter construction (matching the PyTorch module shapes).
# ----------------------------------------------------------------------------
def make_params(key, c=512, mip=16, k=7):
    ks = jax.random.split(key, 16)

    def bn(k_, n_):
        a, b_, m_, v_ = jax.random.split(k_, 4)
        return (
            1.0 + 0.1 * jax.random.normal(a, (n_,), jnp.float32),   # gamma
            0.1 * jax.random.normal(b_, (n_,), jnp.float32),        # beta
            0.1 * jax.random.normal(m_, (n_,), jnp.float32),        # running_mean
            0.5 + jax.random.uniform(v_, (n_,), jnp.float32),       # running_var
        )

    return {
        # Linear_h: depthwise Conv2d(512,512,(1,7),groups=512) weight -> (C,7)
        "wh": 0.2 * jax.random.normal(ks[0], (c, k), jnp.float32),
        "bn_h": bn(ks[1], c),
        # Linear_w: depthwise Conv2d(512,512,(7,1),groups=512) weight -> (C,7)
        "ww": 0.2 * jax.random.normal(ks[2], (c, k), jnp.float32),
        "bn_w": bn(ks[3], c),
        # conv1: Conv2d(512,16,1) weight (16,512), bias (16,)
        "w1": jax.random.normal(ks[4], (mip, c), jnp.float32) / np.sqrt(c),
        "b1": 0.1 * jax.random.normal(ks[5], (mip,), jnp.float32),
        "bn1": bn(ks[6], mip),
        # conv2/conv3: Conv2d(16,512,1) weight (512,16), bias (512,)
        "w2": jax.random.normal(ks[7], (c, mip), jnp.float32) / np.sqrt(mip),
        "b2": 0.1 * jax.random.normal(ks[8], (c,), jnp.float32),
        "w3": jax.random.normal(ks[9], (c, mip), jnp.float32) / np.sqrt(mip),
        "b3": 0.1 * jax.random.normal(ks[10], (c,), jnp.float32),
    }


# ----------------------------------------------------------------------------
# Pure-JAX reference (NCHW, raw params, eval-mode BN) for verification.
# ----------------------------------------------------------------------------
def reference(x, p, eps=1e-5):
    n, c, h, w = x.shape

    def bn3(z, g, b, m, v):  # z: (n, c, s), per-channel BN
        return g[None, :, None] * (z - m[None, :, None]) / jnp.sqrt(
            v[None, :, None] + eps
        ) + b[None, :, None]

    xh = bn3(jnp.einsum("nchw,cw->nch", x, p["wh"]), *p["bn_h"])   # (n,c,h)
    xw = bn3(jnp.einsum("nchw,ch->ncw", x, p["ww"]), *p["bn_w"])   # (n,c,w)
    y = jnp.concatenate([xh, xw], axis=2)                          # (n,c,h+w)
    y1 = jnp.einsum("ncs,mc->nms", y, p["w1"]) + p["b1"][None, :, None]
    y1 = bn3(y1, *p["bn1"])
    hs = y1 * jnp.clip(y1 + 3.0, 0.0, 6.0) / 6.0                   # h_swish
    yh, yw = hs[:, :, :h], hs[:, :, h:]
    ah = jax.nn.sigmoid(jnp.einsum("nms,om->nos", yh, p["w2"]) + p["b2"][None, :, None])
    aw = jax.nn.sigmoid(jnp.einsum("nms,om->nos", yw, p["w3"]) + p["b3"][None, :, None])
    return ah[:, :, :, None] * aw[:, :, None, :]                   # (n,c,h,w)


if __name__ == "__main__":
    key = jax.random.PRNGKey(0)
    k_x, k_p = jax.random.split(key)

    N, C, H, W = 16, 512, 7, 7
    x = jax.random.normal(k_x, (N, C, H, W), jnp.float32)
    params = make_params(k_p, c=C, mip=16, k=7)

    ref = jax.block_until_ready(reference(x, params))

    # 1) PyTorch-compatible NCHW path: 2 batch blocks of 8 -> grid=(2,).
    out = jax.block_until_ready(coord_att_head(x, params, block_batch=8))
    assert out.shape == (N, C, H, W), out.shape
    np.testing.assert_allclose(np.asarray(out), np.asarray(ref), rtol=1e-4, atol=1e-4)

    # 2) NHWC fast path (no wrapper transposes).
    x_nhwc = jnp.transpose(x, (0, 2, 3, 1))
    out_nhwc = jax.block_until_ready(
        coord_att_head_nhwc(x_nhwc, params, block_batch=8))
    np.testing.assert_allclose(
        np.asarray(jnp.transpose(out_nhwc, (0, 3, 1, 2))),
        np.asarray(ref), rtol=1e-4, atol=1e-4)

    # 3) Ragged batch (exercises the zero-pad + slice path): N=10, block=8.
    out2 = jax.block_until_ready(coord_att_head(x[:10], params, block_batch=8))
    np.testing.assert_allclose(np.asarray(out2), np.asarray(ref[:10]),
                               rtol=1e-4, atol=1e-4)

    print("KERNEL_OK")
</pallas_src>

<mosaic_0001>
module attributes {stable_mosaic.version = 11 : i64} {
  func.func @coordatt_kernel(%arg0: i32, %arg1: memref<8x7x7x512xf32, #tpu.memory_space<vmem>>, %arg2: memref<7x512xf32, #tpu.memory_space<vmem>>, %arg3: memref<1x512xf32, #tpu.memory_space<vmem>>, %arg4: memref<7x512xf32, #tpu.memory_space<vmem>>, %arg5: memref<1x512xf32, #tpu.memory_space<vmem>>, %arg6: memref<512x16xf32, #tpu.memory_space<vmem>>, %arg7: memref<1x16xf32, #tpu.memory_space<vmem>>, %arg8: memref<16x512xf32, #tpu.memory_space<vmem>>, %arg9: memref<1x512xf32, #tpu.memory_space<vmem>>, %arg10: memref<16x512xf32, #tpu.memory_space<vmem>>, %arg11: memref<1x512xf32, #tpu.memory_space<vmem>>, %arg12: memref<8x7x7x512xf32, #tpu.memory_space<vmem>>) attributes {dimension_semantics = [#tpu.dimension_semantics<parallel>], iteration_bounds = array<i64: 2>, scalar_prefetch = 0 : i64, scratch_operands = 0 : i64, tpu.core_type = #tpu.core_type<tc>, window_params = [{transform_indices = @transform_0, window_bounds = array<i64: 8, 7, 7, 512>}, {pipeline_mode = #tpu.pipeline_mode<synchronous>, transform_indices = @transform_1, window_bounds = array<i64: 7, 512>}, {pipeline_mode = #tpu.pipeline_mode<synchronous>, transform_indices = @transform_2, window_bounds = array<i64: 1, 512>}, {pipeline_mode = #tpu.pipeline_mode<synchronous>, transform_indices = @transform_3, window_bounds = array<i64: 7, 512>}, {pipeline_mode = #tpu.pipeline_mode<synchronous>, transform_indices = @transform_4, window_bounds = array<i64: 1, 512>}, {pipeline_mode = #tpu.pipeline_mode<synchronous>, transform_indices = @transform_5, window_bounds = array<i64: 512, 16>}, {pipeline_mode = #tpu.pipeline_mode<synchronous>, transform_indices = @transform_6, window_bounds = array<i64: 1, 16>}, {pipeline_mode = #tpu.pipeline_mode<synchronous>, transform_indices = @transform_7, window_bounds = array<i64: 16, 512>}, {pipeline_mode = #tpu.pipeline_mode<synchronous>, transform_indices = @transform_8, window_bounds = array<i64: 1, 512>}, {pipeline_mode = #tpu.pipeline_mode<synchronous>, transform_indices = @transform_9, window_bounds = array<i64: 16, 512>}, {pipeline_mode = #tpu.pipeline_mode<synchronous>, transform_indices = @transform_10, window_bounds = array<i64: 1, 512>}, {transform_indices = @transform_11, window_bounds = array<i64: 8, 7, 7, 512>}]} {
    %c0 = arith.constant 0 : index
    %c0_0 = arith.constant 0 : index
    %c0_1 = arith.constant 0 : index
    %c0_2 = arith.constant 0 : index
    %0 = vector.load %arg1[%c0, %c0_0, %c0_1, %c0_2] : memref<8x7x7x512xf32, #tpu.memory_space<vmem>>, vector<8x7x7x512xf32>
    %c0_3 = arith.constant 0 : index
    %c0_4 = arith.constant 0 : index
    %1 = vector.load %arg2[%c0_3, %c0_4] : memref<7x512xf32, #tpu.memory_space<vmem>>, vector<7x512xf32>
    %2 = vector.shape_cast %1 : vector<7x512xf32> to vector<1x1x7x512xf32>
    %3 = vector.broadcast %2 : vector<1x1x7x512xf32> to vector<8x7x7x512xf32>
    %4 = arith.mulf %0, %3 : vector<8x7x7x512xf32>
    %cst = arith.constant dense<0.000000e+00> : vector<8x7x512xf32>
    %5 = vector.multi_reduction <add>, %4, %cst [2] : vector<8x7x7x512xf32> to vector<8x7x512xf32>
    %c0_5 = arith.constant 0 : index
    %c0_6 = arith.constant 0 : index
    %6 = vector.load %arg3[%c0_5, %c0_6] : memref<1x512xf32, #tpu.memory_space<vmem>>, vector<1x512xf32>
    %7 = vector.shape_cast %6 : vector<1x512xf32> to vector<1x1x512xf32>
    %8 = vector.broadcast %7 : vector<1x1x512xf32> to vector<8x7x512xf32>
    %9 = arith.addf %5, %8 : vector<8x7x512xf32>
    %c0_7 = arith.constant 0 : index
    %c0_8 = arith.constant 0 : index
    %10 = vector.load %arg4[%c0_7, %c0_8] : memref<7x512xf32, #tpu.memory_space<vmem>>, vector<7x512xf32>
    %11 = vector.shape_cast %10 : vector<7x512xf32> to vector<1x7x1x512xf32>
    %12 = vector.broadcast %11 : vector<1x7x1x512xf32> to vector<8x7x7x512xf32>
    %13 = arith.mulf %0, %12 : vector<8x7x7x512xf32>
    %cst_9 = arith.constant dense<0.000000e+00> : vector<8x7x512xf32>
    %14 = vector.multi_reduction <add>, %13, %cst_9 [1] : vector<8x7x7x512xf32> to vector<8x7x512xf32>
    %c0_10 = arith.constant 0 : index
    %c0_11 = arith.constant 0 : index
    %15 = vector.load %arg5[%c0_10, %c0_11] : memref<1x512xf32, #tpu.memory_space<vmem>>, vector<1x512xf32>
    %16 = vector.shape_cast %15 : vector<1x512xf32> to vector<1x1x512xf32>
    %17 = vector.broadcast %16 : vector<1x1x512xf32> to vector<8x7x512xf32>
    %18 = arith.addf %14, %17 : vector<8x7x512xf32>
    %19 = vector.shape_cast %9 : vector<8x7x512xf32> to vector<56x512xf32>
    %20 = vector.shape_cast %18 : vector<8x7x512xf32> to vector<56x512xf32>
    %21 = tpu.concatenate %19, %20 in 0 : vector<56x512xf32>, vector<56x512xf32> -> vector<112x512xf32>
    %c0_12 = arith.constant 0 : index
    %c0_13 = arith.constant 0 : index
    %22 = vector.load %arg6[%c0_12, %c0_13] : memref<512x16xf32, #tpu.memory_space<vmem>>, vector<512x16xf32>
    %cst_14 = arith.constant dense<0.000000e+00> : vector<112x16xf32>
    %23 = tpu.matmul %21, %22, %cst_14 {dimension_numbers = #tpu.dot_dimension_numbers<[1], [0], [0], [1], [0, 0, 1, 1], [], []>} : vector<112x512xf32>, vector<512x16xf32>, vector<112x16xf32> -> vector<112x16xf32>
    %c0_15 = arith.constant 0 : index
    %c0_16 = arith.constant 0 : index
    %24 = vector.load %arg7[%c0_15, %c0_16] : memref<1x16xf32, #tpu.memory_space<vmem>>, vector<1x16xf32>
    %25 = vector.broadcast %24 : vector<1x16xf32> to vector<112x16xf32>
    %26 = arith.addf %23, %25 : vector<112x16xf32>
    %cst_17 = arith.constant 3.000000e+00 : f32
    %27 = vector.broadcast %cst_17 : f32 to vector<112x16xf32>
    %28 = arith.addf %26, %27 : vector<112x16xf32>
    %cst_18 = arith.constant 0.000000e+00 : f32
    %cst_19 = arith.constant 6.000000e+00 : f32
    %29 = vector.broadcast %cst_18 : f32 to vector<112x16xf32>
    %30 = arith.maximumf %29, %28 : vector<112x16xf32>
    %31 = vector.broadcast %cst_19 : f32 to vector<112x16xf32>
    %32 = arith.minimumf %31, %30 : vector<112x16xf32>
    %cst_20 = arith.constant 0.166666672 : f32
    %33 = vector.broadcast %cst_20 : f32 to vector<112x16xf32>
    %34 = arith.mulf %32, %33 : vector<112x16xf32>
    %35 = arith.mulf %26, %34 : vector<112x16xf32>
    %36 = vector.extract_strided_slice %35 {offsets = [0, 0], sizes = [56, 16], strides = [1, 1]} : vector<112x16xf32> to vector<56x16xf32>
    %37 = vector.extract_strided_slice %35 {offsets = [56, 0], sizes = [56, 16], strides = [1, 1]} : vector<112x16xf32> to vector<56x16xf32>
    %c0_21 = arith.constant 0 : index
    %c0_22 = arith.constant 0 : index
    %38 = vector.load %arg8[%c0_21, %c0_22] : memref<16x512xf32, #tpu.memory_space<vmem>>, vector<16x512xf32>
    %cst_23 = arith.constant dense<0.000000e+00> : vector<56x512xf32>
    %39 = tpu.matmul %36, %38, %cst_23 {dimension_numbers = #tpu.dot_dimension_numbers<[1], [0], [0], [1], [0, 0, 1, 1], [], []>} : vector<56x16xf32>, vector<16x512xf32>, vector<56x512xf32> -> vector<56x512xf32>
    %c0_24 = arith.constant 0 : index
    %c0_25 = arith.constant 0 : index
    %40 = vector.load %arg9[%c0_24, %c0_25] : memref<1x512xf32, #tpu.memory_space<vmem>>, vector<1x512xf32>
    %41 = vector.broadcast %40 : vector<1x512xf32> to vector<56x512xf32>
    %42 = arith.addf %39, %41 : vector<56x512xf32>
    %43 = arith.negf %42 : vector<56x512xf32>
    %44 = math.exp %43 : vector<56x512xf32>
    %cst_26 = arith.constant 1.000000e+00 : f32
    %45 = vector.broadcast %cst_26 : f32 to vector<56x512xf32>
    %46 = arith.addf %45, %44 : vector<56x512xf32>
    %47 = arith.divf %45, %46 : vector<56x512xf32>
    %48 = vector.shape_cast %47 : vector<56x512xf32> to vector<8x7x512xf32>
    %c0_27 = arith.constant 0 : index
    %c0_28 = arith.constant 0 : index
    %49 = vector.load %arg10[%c0_27, %c0_28] : memref<16x512xf32, #tpu.memory_space<vmem>>, vector<16x512xf32>
    %cst_29 = arith.constant dense<0.000000e+00> : vector<56x512xf32>
    %50 = tpu.matmul %37, %49, %cst_29 {dimension_numbers = #tpu.dot_dimension_numbers<[1], [0], [0], [1], [0, 0, 1, 1], [], []>} : vector<56x16xf32>, vector<16x512xf32>, vector<56x512xf32> -> vector<56x512xf32>
    %c0_30 = arith.constant 0 : index
    %c0_31 = arith.constant 0 : index
    %51 = vector.load %arg11[%c0_30, %c0_31] : memref<1x512xf32, #tpu.memory_space<vmem>>, vector<1x512xf32>
    %52 = vector.broadcast %51 : vector<1x512xf32> to vector<56x512xf32>
    %53 = arith.addf %50, %52 : vector<56x512xf32>
    %54 = arith.negf %53 : vector<56x512xf32>
    %55 = math.exp %54 : vector<56x512xf32>
    %cst_32 = arith.constant 1.000000e+00 : f32
    %56 = vector.broadcast %cst_32 : f32 to vector<56x512xf32>
    %57 = arith.addf %56, %55 : vector<56x512xf32>
    %58 = arith.divf %56, %57 : vector<56x512xf32>
    %59 = vector.shape_cast %58 : vector<56x512xf32> to vector<8x7x512xf32>
    %60 = vector.shape_cast %48 : vector<8x7x512xf32> to vector<8x7x1x512xf32>
    %61 = vector.shape_cast %59 : vector<8x7x512xf32> to vector<8x1x7x512xf32>
    %62 = vector.broadcast %60 : vector<8x7x1x512xf32> to vector<8x7x7x512xf32>
    %63 = vector.broadcast %61 : vector<8x1x7x512xf32> to vector<8x7x7x512xf32>
    %64 = arith.mulf %62, %63 : vector<8x7x7x512xf32>
    %c0_33 = arith.constant 0 : index
    %c0_34 = arith.constant 0 : index
    %c0_35 = arith.constant 0 : index
    %c0_36 = arith.constant 0 : index
    %65 = vector.load %arg12[%c0_33, %c0_34, %c0_35, %c0_36] : memref<8x7x7x512xf32, #tpu.memory_space<vmem>>, vector<8x7x7x512xf32>
    tpu.vector_store %arg12[%c0_33, %c0_34, %c0_35, %c0_36], %64 {strides = array<i32>} : memref<8x7x7x512xf32, #tpu.memory_space<vmem>>, vector<8x7x7x512xf32>,
    return
  }
  func.func @transform_0(%arg0: i32) -> (i32, i32, i32, i32) {
    %c0_i32 = arith.constant 0 : i32
    %c0_i32_0 = arith.constant 0 : i32
    %c0_i32_1 = arith.constant 0 : i32
    %c0_i32_2 = arith.constant 0 : i32
    return %arg0, %c0_i32, %c0_i32_0, %c0_i32_1 : i32, i32, i32, i32
  }
  func.func @transform_1(%arg0: i32) -> (i32, i32) {
    %c0_i32 = arith.constant 0 : i32
    %c0_i32_0 = arith.constant 0 : i32
    %c0_i32_1 = arith.constant 0 : i32
    return %c0_i32, %c0_i32_0 : i32, i32
  }
  func.func @transform_2(%arg0: i32) -> (i32, i32) {
    %c0_i32 = arith.constant 0 : i32
    %c0_i32_0 = arith.constant 0 : i32
    %c0_i32_1 = arith.constant 0 : i32
    return %c0_i32, %c0_i32_0 : i32, i32
  }
  func.func @transform_3(%arg0: i32) -> (i32, i32) {
    %c0_i32 = arith.constant 0 : i32
    %c0_i32_0 = arith.constant 0 : i32
    %c0_i32_1 = arith.constant 0 : i32
    return %c0_i32, %c0_i32_0 : i32, i32
  }
  func.func @transform_4(%arg0: i32) -> (i32, i32) {
    %c0_i32 = arith.constant 0 : i32
    %c0_i32_0 = arith.constant 0 : i32
    %c0_i32_1 = arith.constant 0 : i32
    return %c0_i32, %c0_i32_0 : i32, i32
  }
  func.func @transform_5(%arg0: i32) -> (i32, i32) {
    %c0_i32 = arith.constant 0 : i32
    %c0_i32_0 = arith.constant 0 : i32
    %c0_i32_1 = arith.constant 0 : i32
    return %c0_i32, %c0_i32_0 : i32, i32
  }
  func.func @transform_6(%arg0: i32) -> (i32, i32) {
    %c0_i32 = arith.constant 0 : i32
    %c0_i32_0 = arith.constant 0 : i32
    %c0_i32_1 = arith.constant 0 : i32
    return %c0_i32, %c0_i32_0 : i32, i32
  }
  func.func @transform_7(%arg0: i32) -> (i32, i32) {
    %c0_i32 = arith.constant 0 : i32
    %c0_i32_0 = arith.constant 0 : i32
    %c0_i32_1 = arith.constant 0 : i32
    return %c0_i32, %c0_i32_0 : i32, i32
  }
  func.func @transform_8(%arg0: i32) -> (i32, i32) {
    %c0_i32 = arith.constant 0 : i32
    %c0_i32_0 = arith.constant 0 : i32
    %c0_i32_1 = arith.constant 0 : i32
    return %c0_i32, %c0_i32_0 : i32, i32
  }
  func.func @transform_9(%arg0: i32) -> (i32, i32) {
    %c0_i32 = arith.constant 0 : i32
    %c0_i32_0 = arith.constant 0 : i32
    %c0_i32_1 = arith.constant 0 : i32
    return %c0_i32, %c0_i32_0 : i32, i32
  }
  func.func @transform_10(%arg0: i32) -> (i32, i32) {
    %c0_i32 = arith.constant 0 : i32
    %c0_i32_0 = arith.constant 0 : i32
    %c0_i32_1 = arith.constant 0 : i32
    return %c0_i32, %c0_i32_0 : i32, i32
  }
  func.func @transform_11(%arg0: i32) -> (i32, i32, i32, i32) {
    %c0_i32 = arith.constant 0 : i32
    %c0_i32_0 = arith.constant 0 : i32
    %c0_i32_1 = arith.constant 0 : i32
    %c0_i32_2 = arith.constant 0 : i32
    return %arg0, %c0_i32, %c0_i32_0, %c0_i32_1 : i32, i32, i32, i32
  }
}

</mosaic_0001>

<llo_original>
// kernel: coord_att_head_nhwc.1
$region0: #{coord_att_head_nhwc.1}
  #allocation0 [shape = 'u32[]', space=smem, size = 0x4, offset = 0x4, fixed_abs, tag = 'smem constant byte address 0x4 - core index']
  #allocation1 [shape = 'u32[144,128]{1,0:T(1,128)}', space=vmem, size = 0x12000, scoped, tag = 'internal scratch']
  %s0 = inlined_call_operand.vmem [shape: f32[16,7,7,512], index: 0, kind: input, shape index: {}]
  %s1 = inlined_call_operand.vmem [shape: f32[7,512], index: 1, kind: input, shape index: {}]
  %s2 = inlined_call_operand.vmem [shape: f32[1,512], index: 2, kind: input, shape index: {}]
  %s3 = inlined_call_operand.vmem [shape: f32[7,512], index: 3, kind: input, shape index: {}]
  %s4 = inlined_call_operand.vmem [shape: f32[1,512], index: 4, kind: input, shape index: {}]
  %s5 = inlined_call_operand.vmem [shape: f32[512,16], index: 5, kind: input, shape index: {}]
  %s6 = inlined_call_operand.vmem [shape: f32[1,16], index: 6, kind: input, shape index: {}]
  %s7 = inlined_call_operand.vmem [shape: f32[16,512], index: 7, kind: input, shape index: {}]
  %s8 = inlined_call_operand.vmem [shape: f32[1,512], index: 8, kind: input, shape index: {}]
  %s9 = inlined_call_operand.vmem [shape: f32[16,512], index: 9, kind: input, shape index: {}]
  %s10 = inlined_call_operand.vmem [shape: f32[1,512], index: 10, kind: input, shape index: {}]
  %s11 = inlined_call_operand.vmem [shape: f32[16,7,7,512], index: 11, kind: output, shape index: {}]
  %s12 = sld [smem:[#allocation0]]
  $region77: #{coord_att_head_nhwc.1} parent=0
    _
  %s14 = ssub.s32 1, %s12
  %s15 = scalar_select 0, %s14, %s12
  loop: start=0, step=1, limit=4
  $region2: #{coord_att_head_nhwc.1} parent=0 // loop_pre_header
    _
  $region3: #{coord_att_head_nhwc.1} parent=0 // loop_header
    %s17 = sphi 0, %s21
    %p18 = scmp.ge.s32.totalorder %s17, 4
    %s27 = sphi 0, %s29
    %s30 = sphi 0, %s27
    %s31 = sphi 0, %s30
    %s47 = sphi 0, %s31
    %s51 = sphi 0, %s51
    %s53 = sphi 0, %s51
    %s54 = sphi 0, %s53
    %s68 = sphi 0, %s54
    %s72 = sphi 0, %s72
    %s74 = sphi 0, %s72
    %s75 = sphi 0, %s74
    %s89 = sphi 0, %s75
    %s93 = sphi 0, %s93
    %s95 = sphi 0, %s93
    %s96 = sphi 0, %s95
    %s110 = sphi 0, %s96
    %s114 = sphi 0, %s114
    %s116 = sphi 0, %s114
    %s117 = sphi 0, %s116
    %s131 = sphi 0, %s117
    %s135 = sphi 0, %s135
    %s137 = sphi 0, %s135
    %s138 = sphi 0, %s137
    %s152 = sphi 0, %s138
    %s156 = sphi 0, %s156
    %s158 = sphi 0, %s156
    %s159 = sphi 0, %s158
    %s173 = sphi 0, %s159
    %s177 = sphi 0, %s177
    %s179 = sphi 0, %s177
    %s180 = sphi 0, %s179
    %s194 = sphi 0, %s180
    %s198 = sphi 0, %s198
    %s200 = sphi 0, %s198
    %s201 = sphi 0, %s200
    %s215 = sphi 0, %s201
    %s219 = sphi 0, %s219
    %s221 = sphi 0, %s219
    %s222 = sphi 0, %s221
    %s236 = sphi 0, %s222
    %s240 = sphi 0, %s240
    %s242 = sphi 0, %s240
    %s243 = sphi 0, %s242
    %s257 = sphi 0, %s243
    %s263 = sphi 0, %s265
    %s266 = sphi 0, %s263
    %s267 = sphi 0, %s266
    %s283 = sphi 0, %s267
  $region4: #{coord_att_head_nhwc.1} parent=0 // loop_header_branch
    %20 = sbr.rel (%p18) target = $region8
  $region5: #{coord_att_head_nhwc.1} parent=0 // loop_body
    %s22 = ssub.s32 %s17, 1
    %s23 = ssub.s32 %s17, 2
    %s24 = sadd.s32 %s17, 1
    %s25 = ssub.s32 %s17, %s24
    %p26 = scmp.eq.s32.totalorder %s25, 0
    %s28 = sadd.s32 %s27, 1
    %s29 = scalar_select %p26, %s27, %s28
    %p32 = pneg %p26
    %p33 = scmp.eq.s32.totalorder %s17, 1
    %p34 = por %p32, %p33
    %p35 = scmp.ne.s32.totalorder %s27, %s30
    %p36 = scmp.eq.s32.totalorder %s17, 0
    %p37 = por %p35, %p36
    %p38 = scmp.ne.s32.totalorder %s27, %s30
    %p39 = scmp.eq.s32.totalorder %s22, 1
    %p40 = por %p38, %p39
    %p41 = scmp.ne.s32.totalorder %s30, %s31
    %p42 = scmp.eq.s32.totalorder %s22, 0
    %p43 = por %p41, %p42
    %p44 = scmp.ne.s32.totalorder %s30, %s31
    %p45 = scmp.eq.s32.totalorder %s23, 1
    %p46 = por %p44, %p45
    %p48 = scmp.ne.s32.totalorder %s31, %s47
    %p49 = scmp.eq.s32.totalorder %s23, 0
    %p50 = por %p48, %p49
    %s52 = sadd.s32 %s51, 1
    %p55 = scmp.eq.s32.totalorder %s17, 1
    %p56 = scmp.ne.s32.totalorder %s51, %s53
    %p57 = scmp.eq.s32.totalorder %s17, 0
    %p58 = por %p56, %p57
    %p59 = scmp.ne.s32.totalorder %s51, %s53
    %p60 = scmp.eq.s32.totalorder %s22, 1
    %p61 = por %p59, %p60
    %p62 = scmp.ne.s32.totalorder %s53, %s54
    %p63 = scmp.eq.s32.totalorder %s22, 0
    %p64 = por %p62, %p63
    %p65 = scmp.ne.s32.totalorder %s53, %s54
    %p66 = scmp.eq.s32.totalorder %s23, 1
    %p67 = por %p65, %p66
    %p69 = scmp.ne.s32.totalorder %s54, %s68
    %p70 = scmp.eq.s32.totalorder %s23, 0
    %p71 = por %p69, %p70
    %s73 = sadd.s32 %s72, 1
    %p76 = scmp.eq.s32.totalorder %s17, 1
    %p77 = scmp.ne.s32.totalorder %s72, %s74
    %p78 = scmp.eq.s32.totalorder %s17, 0
    %p79 = por %p77, %p78
    %p80 = scmp.ne.s32.totalorder %s72, %s74
    %p81 = scmp.eq.s32.totalorder %s22, 1
    %p82 = por %p80, %p81
    %p83 = scmp.ne.s32.totalorder %s74, %s75
    %p84 = scmp.eq.s32.totalorder %s22, 0
    %p85 = por %p83, %p84
    %p86 = scmp.ne.s32.totalorder %s74, %s75
    %p87 = scmp.eq.s32.totalorder %s23, 1
    %p88 = por %p86, %p87
    %p90 = scmp.ne.s32.totalorder %s75, %s89
    %p91 = scmp.eq.s32.totalorder %s23, 0
    %p92 = por %p90, %p91
    %s94 = sadd.s32 %s93, 1
    %p97 = scmp.eq.s32.totalorder %s17, 1
    %p98 = scmp.ne.s32.totalorder %s93, %s95
    %p99 = scmp.eq.s32.totalorder %s17, 0
    %p100 = por %p98, %p99
    %p101 = scmp.ne.s32.totalorder %s93, %s95
    %p102 = scmp.eq.s32.totalorder %s22, 1
    %p103 = por %p101, %p102
    %p104 = scmp.ne.s32.totalorder %s95, %s96
    %p105 = scmp.eq.s32.totalorder %s22, 0
    %p106 = por %p104, %p105
    %p107 = scmp.ne.s32.totalorder %s95, %s96
    %p108 = scmp.eq.s32.totalorder %s23, 1
    %p109 = por %p107, %p108
    %p111 = scmp.ne.s32.totalorder %s96, %s110
    %p112 = scmp.eq.s32.totalorder %s23, 0
    %p113 = por %p111, %p112
    %s115 = sadd.s32 %s114, 1
    %p118 = scmp.eq.s32.totalorder %s17, 1
    %p119 = scmp.ne.s32.totalorder %s114, %s116
    %p120 = scmp.eq.s32.totalorder %s17, 0
    %p121 = por %p119, %p120
    %p122 = scmp.ne.s32.totalorder %s114, %s116
    %p123 = scmp.eq.s32.totalorder %s22, 1
    %p124 = por %p122, %p123
    %p125 = scmp.ne.s32.totalorder %s116, %s117
    %p126 = scmp.eq.s32.totalorder %s22, 0
    %p127 = por %p125, %p126
    %p128 = scmp.ne.s32.totalorder %s116, %s117
    %p129 = scmp.eq.s32.totalorder %s23, 1
    %p130 = por %p128, %p129
    %p132 = scmp.ne.s32.totalorder %s117, %s131
    %p133 = scmp.eq.s32.totalorder %s23, 0
    %p134 = por %p132, %p133
    %s136 = sadd.s32 %s135, 1
    %p139 = scmp.eq.s32.totalorder %s17, 1
    %p140 = scmp.ne.s32.totalorder %s135, %s137
    %p141 = scmp.eq.s32.totalorder %s17, 0
    %p142 = por %p140, %p141
    %p143 = scmp.ne.s32.totalorder %s135, %s137
    %p144 = scmp.eq.s32.totalorder %s22, 1
    %p145 = por %p143, %p144
    %p146 = scmp.ne.s32.totalorder %s137, %s138
    %p147 = scmp.eq.s32.totalorder %s22, 0
    %p148 = por %p146, %p147
    %p149 = scmp.ne.s32.totalorder %s137, %s138
    %p150 = scmp.eq.s32.totalorder %s23, 1
    %p151 = por %p149, %p150
    %p153 = scmp.ne.s32.totalorder %s138, %s152
    %p154 = scmp.eq.s32.totalorder %s23, 0
    %p155 = por %p153, %p154
    %s157 = sadd.s32 %s156, 1
    %p160 = scmp.eq.s32.totalorder %s17, 1
    %p161 = scmp.ne.s32.totalorder %s156, %s158
    %p162 = scmp.eq.s32.totalorder %s17, 0
    %p163 = por %p161, %p162
    %p164 = scmp.ne.s32.totalorder %s156, %s158
    %p165 = scmp.eq.s32.totalorder %s22, 1
    %p166 = por %p164, %p165
    %p167 = scmp.ne.s32.totalorder %s158, %s159
    %p168 = scmp.eq.s32.totalorder %s22, 0
    %p169 = por %p167, %p168
    %p170 = scmp.ne.s32.totalorder %s158, %s159
    %p171 = scmp.eq.s32.totalorder %s23, 1
    %p172 = por %p170, %p171
    %p174 = scmp.ne.s32.totalorder %s159, %s173
    %p175 = scmp.eq.s32.totalorder %s23, 0
    %p176 = por %p174, %p175
    %s178 = sadd.s32 %s177, 1
    %p181 = scmp.eq.s32.totalorder %s17, 1
    %p182 = scmp.ne.s32.totalorder %s177, %s179
    %p183 = scmp.eq.s32.totalorder %s17, 0
    %p184 = por %p182, %p183
    %p185 = scmp.ne.s32.totalorder %s177, %s179
    %p186 = scmp.eq.s32.totalorder %s22, 1
    %p187 = por %p185, %p186
    %p188 = scmp.ne.s32.totalorder %s179, %s180
    %p189 = scmp.eq.s32.totalorder %s22, 0
    %p190 = por %p188, %p189
    %p191 = scmp.ne.s32.totalorder %s179, %s180
    %p192 = scmp.eq.s32.totalorder %s23, 1
    %p193 = por %p191, %p192
    %p195 = scmp.ne.s32.totalorder %s180, %s194
    %p196 = scmp.eq.s32.totalorder %s23, 0
    %p197 = por %p195, %p196
    %s199 = sadd.s32 %s198, 1
    %p202 = scmp.eq.s32.totalorder %s17, 1
    %p203 = scmp.ne.s32.totalorder %s198, %s200
    %p204 = scmp.eq.s32.totalorder %s17, 0
    %p205 = por %p203, %p204
    %p206 = scmp.ne.s32.totalorder %s198, %s200
    %p207 = scmp.eq.s32.totalorder %s22, 1
    %p208 = por %p206, %p207
    %p209 = scmp.ne.s32.totalorder %s200, %s201
    %p210 = scmp.eq.s32.totalorder %s22, 0
    %p211 = por %p209, %p210
    %p212 = scmp.ne.s32.totalorder %s200, %s201
    %p213 = scmp.eq.s32.totalorder %s23, 1
    %p214 = por %p212, %p213
    %p216 = scmp.ne.s32.totalorder %s201, %s215
    %p217 = scmp.eq.s32.totalorder %s23, 0
    %p218 = por %p216, %p217
    %s220 = sadd.s32 %s219, 1
    %p223 = scmp.eq.s32.totalorder %s17, 1
    %p224 = scmp.ne.s32.totalorder %s219, %s221
    %p225 = scmp.eq.s32.totalorder %s17, 0
    %p226 = por %p224, %p225
    %p227 = scmp.ne.s32.totalorder %s219, %s221
    %p228 = scmp.eq.s32.totalorder %s22, 1
    %p229 = por %p227, %p228
    %p230 = scmp.ne.s32.totalorder %s221, %s222
    %p231 = scmp.eq.s32.totalorder %s22, 0
    %p232 = por %p230, %p231
    %p233 = scmp.ne.s32.totalorder %s221, %s222
    %p234 = scmp.eq.s32.totalorder %s23, 1
    %p235 = por %p233, %p234
    %p237 = scmp.ne.s32.totalorder %s222, %s236
    %p238 = scmp.eq.s32.totalorder %s23, 0
    %p239 = por %p237, %p238
    %s241 = sadd.s32 %s240, 1
    %p244 = scmp.eq.s32.totalorder %s17, 1
    %p245 = scmp.ne.s32.totalorder %s240, %s242
    %p246 = scmp.eq.s32.totalorder %s17, 0
    %p247 = por %p245, %p246
    %p248 = scmp.ne.s32.totalorder %s240, %s242
    %p249 = scmp.eq.s32.totalorder %s22, 1
    %p250 = por %p248, %p249
    %p251 = scmp.ne.s32.totalorder %s242, %s243
    %p252 = scmp.eq.s32.totalorder %s22, 0
    %p253 = por %p251, %p252
    %p254 = scmp.ne.s32.totalorder %s242, %s243
    %p255 = scmp.eq.s32.totalorder %s23, 1
    %p256 = por %p254, %p255
    %p258 = scmp.ne.s32.totalorder %s243, %s257
    %p259 = scmp.eq.s32.totalorder %s23, 0
    %p260 = por %p258, %p259
    %s261 = ssub.s32 %s17, %s24
    %p262 = scmp.eq.s32.totalorder %s261, 0
    %s264 = sadd.s32 %s263, 1
    %s265 = scalar_select %p262, %s263, %s264
    %p268 = pneg %p262
    %p269 = scmp.eq.s32.totalorder %s17, 1
    %p270 = por %p268, %p269
    %p271 = scmp.ne.s32.totalorder %s263, %s266
    %p272 = scmp.eq.s32.totalorder %s17, 0
    %p273 = por %p271, %p272
    %p274 = scmp.ne.s32.totalorder %s263, %s266
    %p275 = scmp.eq.s32.totalorder %s22, 1
    %p276 = por %p274, %p275
    %p277 = scmp.ne.s32.totalorder %s266, %s267
    %p278 = scmp.eq.s32.totalorder %s22, 0
    %p279 = por %p277, %p278
    %p280 = scmp.ne.s32.totalorder %s266, %s267
    %p281 = scmp.eq.s32.totalorder %s23, 1
    %p282 = por %p280, %p281
    %p284 = scmp.ne.s32.totalorder %s267, %s283
    %p285 = scmp.eq.s32.totalorder %s23, 0
    %p286 = por %p284, %p285
    %p287 = scmp.le.s32.totalorder 1, %s17
    %p288 = scmp.lt.s32.totalorder %s17, 3
    %p289 = pnand %p287, %p288
    %p290 = pneg %p289
    // Predicated region
    $region9: #{coord_att_head_nhwc.1} parent=5 // pred_check
      _
    $region10: #{coord_att_head_nhwc.1} parent=5 // pred_check_branch
      %292 = sbr.rel (%p289) target = $region12
    $region11: #{coord_att_head_nhwc.1} parent=5 // pred_region
      %s293 = ssub.s32 %s17, 1
      // Predicated region
      $region13: #{coord_att_head_nhwc.1} parent=11 // pred_check
        %p294 = pneg %p64
      $region14: #{coord_att_head_nhwc.1} parent=11 // pred_check_branch
        %296 = sbr.rel (%p294) target = $region16
      $region15: #{coord_att_head_nhwc.1} parent=11 // pred_region
        _
      $region16: #{coord_att_head_nhwc.1} parent=11 // pred_fallthru
        _
      // Predicated region
      $region17: #{coord_att_head_nhwc.1} parent=11 // pred_check
        %p297 = pneg %p85
      $region18: #{coord_att_head_nhwc.1} parent=11 // pred_check_branch
        %299 = sbr.rel (%p297) target = $region20
      $region19: #{coord_att_head_nhwc.1} parent=11 // pred_region
        _
      $region20: #{coord_att_head_nhwc.1} parent=11 // pred_fallthru
        _
      // Predicated region
      $region21: #{coord_att_head_nhwc.1} parent=11 // pred_check
        %p300 = pneg %p106
      $region22: #{coord_att_head_nhwc.1} parent=11 // pred_check_branch
        %302 = sbr.rel (%p300) target = $region24
      $region23: #{coord_att_head_nhwc.1} parent=11 // pred_region
        _
      $region24: #{coord_att_head_nhwc.1} parent=11 // pred_fallthru
        _
      // Predicated region
      $region25: #{coord_att_head_nhwc.1} parent=11 // pred_check
        %p303 = pneg %p127
      $region26: #{coord_att_head_nhwc.1} parent=11 // pred_check_branch
        %305 = sbr.rel (%p303) target = $region28
      $region27: #{coord_att_head_nhwc.1} parent=11 // pred_region
        _
      $region28: #{coord_att_head_nhwc.1} parent=11 // pred_fallthru
        _
      // Predicated region
      $region29: #{coord_att_head_nhwc.1} parent=11 // pred_check
        %p306 = pneg %p148
      $region30: #{coord_att_head_nhwc.1} parent=11 // pred_check_branch
        %308 = sbr.rel (%p306) target = $region32
      $region31: #{coord_att_head_nhwc.1} parent=11 // pred_region
        _
      $region32: #{coord_att_head_nhwc.1} parent=11 // pred_fallthru
        _
      // Predicated region
      $region33: #{coord_att_head_nhwc.1} parent=11 // pred_check
        %p309 = pneg %p169
      $region34: #{coord_att_head_nhwc.1} parent=11 // pred_check_branch
        %311 = sbr.rel (%p309) target = $region36
      $region35: #{coord_att_head_nhwc.1} parent=11 // pred_region
        _
      $region36: #{coord_att_head_nhwc.1} parent=11 // pred_fallthru
        _
      // Predicated region
      $region37: #{coord_att_head_nhwc.1} parent=11 // pred_check
        %p312 = pneg %p190
      $region38: #{coord_att_head_nhwc.1} parent=11 // pred_check_branch
        %314 = sbr.rel (%p312) target = $region40
      $region39: #{coord_att_head_nhwc.1} parent=11 // pred_region
        _
      $region40: #{coord_att_head_nhwc.1} parent=11 // pred_fallthru
        _
      // Predicated region
      $region41: #{coord_att_head_nhwc.1} parent=11 // pred_check
        %p315 = pneg %p211
      $region42: #{coord_att_head_nhwc.1} parent=11 // pred_check_branch
        %317 = sbr.rel (%p315) target = $region44
      $region43: #{coord_att_head_nhwc.1} parent=11 // pred_region
        _
      $region44: #{coord_att_head_nhwc.1} parent=11 // pred_fallthru
        _
      // Predicated region
      $region45: #{coord_att_head_nhwc.1} parent=11 // pred_check
        %p318 = pneg %p232
      $region46: #{coord_att_head_nhwc.1} parent=11 // pred_check_branch
        %320 = sbr.rel (%p318) target = $region48
      $region47: #{coord_att_head_nhwc.1} parent=11 // pred_region
        _
      $region48: #{coord_att_head_nhwc.1} parent=11 // pred_fallthru
        _
      // Predicated region
      $region49: #{coord_att_head_nhwc.1} parent=11 // pred_check
        %p321 = pneg %p253
      $region50: #{coord_att_head_nhwc.1} parent=11 // pred_check_branch
        %323 = sbr.rel (%p321) target = $region52
      $region51: #{coord_att_head_nhwc.1} parent=11 // pred_region
        _
      $region52: #{coord_att_head_nhwc.1} parent=11 // pred_fallthru
        _
    $region12: #{coord_att_head_nhwc.1} parent=5 // pred_fallthru
      _
    %p324 = scmp.lt.s32.totalorder %s17, 2
    // Predicated region
    $region53: #{coord_att_head_nhwc.1} parent=5 // pred_check
      %p325 = pneg %p324
    $region54: #{coord_att_head_nhwc.1} parent=5 // pred_check_branch
      %327 = sbr.rel (%p325) target = $region56
    $region55: #{coord_att_head_nhwc.1} parent=5 // pred_region
      // Predicated region
      $region57: #{coord_att_head_nhwc.1} parent=55 // pred_check
        %p328 = pneg %p37
      $region58: #{coord_att_head_nhwc.1} parent=55 // pred_check_branch
        %330 = sbr.rel (%p328) target = $region60
      $region59: #{coord_att_head_nhwc.1} parent=55 // pred_region
        %s331 = smul.u32 8, %s17
        %p332 = scmp.lt.s32.totalorder %s331, 15
        %s333 = scalar_select %p332, %s331, 15
        %s334 = smul.addr %s333, 28
        %s335 = smul.addr %s334, 8
        %s336 = scalar_lea.vmem %s0, %s335
        %s337 = smul.u32 8, %s17
      $region60: #{coord_att_head_nhwc.1} parent=55 // pred_fallthru
        _
    $region56: #{coord_att_head_nhwc.1} parent=5 // pred_fallthru
      _
    %p338 = scmp.le.s32.totalorder 1, %s17
    %p339 = scmp.lt.s32.totalorder %s17, 3
    %p340 = pnand %p338, %p339
    %p341 = pneg %p340
    // Predicated region
    $region61: #{coord_att_head_nhwc.1} parent=5 // pred_check
      _
    $region62: #{coord_att_head_nhwc.1} parent=5 // pred_check_branch
      %343 = sbr.rel (%p340) target = $region64
    $region63: #{coord_att_head_nhwc.1} parent=5 // pred_region
      %s344 = ssub.s32 %s17, 1
      %s345 = smul.u32 8, %s22
      %p346 = scmp.lt.s32.totalorder %s345, 15
      %s347 = scalar_select %p346, %s345, 15
      %s348 = smul.addr %s347, 28
      %s349 = smul.addr %s348, 8
      %s350 = scalar_lea.vmem %s0, %s349
      %p351 = pneg %p43
      %p352 = pneg %p40
      %p353 = pneg %p64
      %p354 = pneg %p61
      %p355 = pneg %p85
      %p356 = pneg %p82
      %p357 = pneg %p106
      %p358 = pneg %p103
      %p359 = pneg %p127
      %p360 = pneg %p124
      %p361 = pneg %p148
      %p362 = pneg %p145
      %p363 = pneg %p169
      %p364 = pneg %p166
      %p365 = pneg %p190
      %p366 = pneg %p187
      %p367 = pneg %p211
      %p368 = pneg %p208
      %p369 = pneg %p232
      %p370 = pneg %p229
      %p371 = pneg %p253
      %p372 = pneg %p250
      %p373 = pneg %p279
      %p374 = pneg %p276
      %s375 = smul.u32 8, %s22
      %p376 = scmp.lt.s32.totalorder %s375, 15
      %s377 = scalar_select %p376, %s375, 15
      %s378 = smul.addr %s377, 28
      %s379 = smul.addr %s378, 8
      %s380 = scalar_lea.vmem %s11, %s379
      %s381 = smul.u32 8, %s22
      %p382 = scmp.lt.s32.totalorder %s381, 15
      %s383 = scalar_select %p382, %s381, 15
      %s384 = smul.addr %s383, 28
      %s385 = smul.addr %s384, 8
      %s386 = scalar_lea.vmem %s0, %s385
      %s387 = smul.u32 8, %s22
      %s388 = smul.u32 8, %s22
      %p389 = scmp.lt.s32.totalorder %s388, 15
      %s390 = scalar_select %p389, %s388, 15
      %s391 = smul.addr %s390, 28
      %s392 = smul.addr %s391, 8
      %s393 = scalar_lea.vmem %s11, %s392
      %s394 = smul.u32 8, %s22
      %v395 = vld [vmem:[%s386] sm:$0x7f]
      %v396 = vld [vmem:[%s386 + $0x8] sm:$0x7f]
      %v397 = vld [vmem:[%s386 + $0x10] sm:$0x7f]
      %v398 = vld [vmem:[%s386 + $0x18] sm:$0x7f]
      %v399 = vld [vmem:[%s386 + $0x20] sm:$0x7f]
      %v400 = vld [vmem:[%s386 + $0x28] sm:$0x7f]
      %v401 = vld [vmem:[%s386 + $0x30] sm:$0x7f]
      %v402 = vld [vmem:[%s386 + $0x38] sm:$0x7f]
      %v403 = vld [vmem:[%s386 + $0x40] sm:$0x7f]
      %v404 = vld [vmem:[%s386 + $0x48] sm:$0x7f]
      %v405 = vld [vmem:[%s386 + $0x50] sm:$0x7f]
      %v406 = vld [vmem:[%s386 + $0x58] sm:$0x7f]
      %v407 = vld [vmem:[%s386 + $0x60] sm:$0x7f]
      %v408 = vld [vmem:[%s386 + $0x68] sm:$0x7f]
      %v409 = vld [vmem:[%s386 + $0x70] sm:$0x7f]
      %v410 = vld [vmem:[%s386 + $0x78] sm:$0x7f]
      %v411 = vld [vmem:[%s386 + $0x80] sm:$0x7f]
      %v412 = vld [vmem:[%s386 + $0x88] sm:$0x7f]
      %v413 = vld [vmem:[%s386 + $0x90] sm:$0x7f]
      %v414 = vld [vmem:[%s386 + $0x98] sm:$0x7f]
      %v415 = vld [vmem:[%s386 + $0xa0] sm:$0x7f]
      %v416 = vld [vmem:[%s386 + $0xa8] sm:$0x7f]
      %v417 = vld [vmem:[%s386 + $0xb0] sm:$0x7f]
      %v418 = vld [vmem:[%s386 + $0xb8] sm:$0x7f]
      %v419 = vld [vmem:[%s386 + $0xc0] sm:$0x7f]
      %v420 = vld [vmem:[%s386 + $0xc8] sm:$0x7f]
      %v421 = vld [vmem:[%s386 + $0xd0] sm:$0x7f]
      %v422 = vld [vmem:[%s386 + $0xd8] sm:$0x7f]
      %v423 = vld [vmem:[%s386 + $0xe0] sm:$0x7f]
      %v424 = vld [vmem:[%s386 + $0xe8] sm:$0x7f]
      %v425 = vld [vmem:[%s386 + $0xf0] sm:$0x7f]
      %v426 = vld [vmem:[%s386 + $0xf8] sm:$0x7f]
      %v427 = vld [vmem:[%s386 + $0x100] sm:$0x7f]
      %v428 = vld [vmem:[%s386 + $0x108] sm:$0x7f]
      %v429 = vld [vmem:[%s386 + $0x110] sm:$0x7f]
      %v430 = vld [vmem:[%s386 + $0x118] sm:$0x7f]
      %v431 = vld [vmem:[%s386 + $0x120] sm:$0x7f]
      %v432 = vld [vmem:[%s386 + $0x128] sm:$0x7f]
      %v433 = vld [vmem:[%s386 + $0x130] sm:$0x7f]
      %v434 = vld [vmem:[%s386 + $0x138] sm:$0x7f]
      %v435 = vld [vmem:[%s386 + $0x140] sm:$0x7f]
      %v436 = vld [vmem:[%s386 + $0x148] sm:$0x7f]
      %v437 = vld [vmem:[%s386 + $0x150] sm:$0x7f]
      %v438 = vld [vmem:[%s386 + $0x158] sm:$0x7f]
      %v439 = vld [vmem:[%s386 + $0x160] sm:$0x7f]
      %v440 = vld [vmem:[%s386 + $0x168] sm:$0x7f]
      %v441 = vld [vmem:[%s386 + $0x170] sm:$0x7f]
      %v442 = vld [vmem:[%s386 + $0x178] sm:$0x7f]
      %v443 = vld [vmem:[%s386 + $0x180] sm:$0x7f]
      %v444 = vld [vmem:[%s386 + $0x188] sm:$0x7f]
      %v445 = vld [vmem:[%s386 + $0x190] sm:$0x7f]
      %v446 = vld [vmem:[%s386 + $0x198] sm:$0x7f]
      %v447 = vld [vmem:[%s386 + $0x1a0] sm:$0x7f]
      %v448 = vld [vmem:[%s386 + $0x1a8] sm:$0x7f]
      %v449 = vld [vmem:[%s386 + $0x1b0] sm:$0x7f]
      %v450 = vld [vmem:[%s386 + $0x1b8] sm:$0x7f]
      %v451 = vld [vmem:[%s386 + $0x1c0] sm:$0x7f]
      %v452 = vld [vmem:[%s386 + $0x1c8] sm:$0x7f]
      %v453 = vld [vmem:[%s386 + $0x1d0] sm:$0x7f]
      %v454 = vld [vmem:[%s386 + $0x1d8] sm:$0x7f]
      %v455 = vld [vmem:[%s386 + $0x1e0] sm:$0x7f]
      %v456 = vld [vmem:[%s386 + $0x1e8] sm:$0x7f]
      %v457 = vld [vmem:[%s386 + $0x1f0] sm:$0x7f]
      %v458 = vld [vmem:[%s386 + $0x1f8] sm:$0x7f]
      %v459 = vld [vmem:[%s386 + $0x200] sm:$0x7f]
      %v460 = vld [vmem:[%s386 + $0x208] sm:$0x7f]
      %v461 = vld [vmem:[%s386 + $0x210] sm:$0x7f]
      %v462 = vld [vmem:[%s386 + $0x218] sm:$0x7f]
      %v463 = vld [vmem:[%s386 + $0x220] sm:$0x7f]
      %v464 = vld [vmem:[%s386 + $0x228] sm:$0x7f]
      %v465 = vld [vmem:[%s386 + $0x230] sm:$0x7f]
      %v466 = vld [vmem:[%s386 + $0x238] sm:$0x7f]
      %v467 = vld [vmem:[%s386 + $0x240] sm:$0x7f]
      %v468 = vld [vmem:[%s386 + $0x248] sm:$0x7f]
      %v469 = vld [vmem:[%s386 + $0x250] sm:$0x7f]
      %v470 = vld [vmem:[%s386 + $0x258] sm:$0x7f]
      %v471 = vld [vmem:[%s386 + $0x260] sm:$0x7f]
      %v472 = vld [vmem:[%s386 + $0x268] sm:$0x7f]
      %v473 = vld [vmem:[%s386 + $0x270] sm:$0x7f]
      %v474 = vld [vmem:[%s386 + $0x278] sm:$0x7f]
      %v475 = vld [vmem:[%s386 + $0x280] sm:$0x7f]
      %v476 = vld [vmem:[%s386 + $0x288] sm:$0x7f]
      %v477 = vld [vmem:[%s386 + $0x290] sm:$0x7f]
      %v478 = vld [vmem:[%s386 + $0x298] sm:$0x7f]
      %v479 = vld [vmem:[%s386 + $0x2a0] sm:$0x7f]
      %v480 = vld [vmem:[%s386 + $0x2a8] sm:$0x7f]
      %v481 = vld [vmem:[%s386 + $0x2b0] sm:$0x7f]
      %v482 = vld [vmem:[%s386 + $0x2b8] sm:$0x7f]
      %v483 = vld [vmem:[%s386 + $0x2c0] sm:$0x7f]
      %v484 = vld [vmem:[%s386 + $0x2c8] sm:$0x7f]
      %v485 = vld [vmem:[%s386 + $0x2d0] sm:$0x7f]
      %v486 = vld [vmem:[%s386 + $0x2d8] sm:$0x7f]
      %v487 = vld [vmem:[%s386 + $0x2e0] sm:$0x7f]
      %v488 = vld [vmem:[%s386 + $0x2e8] sm:$0x7f]
      %v489 = vld [vmem:[%s386 + $0x2f0] sm:$0x7f]
      %v490 = vld [vmem:[%s386 + $0x2f8] sm:$0x7f]
      %v491 = vld [vmem:[%s386 + $0x300] sm:$0x7f]
      %v492 = vld [vmem:[%s386 + $0x308] sm:$0x7f]
      %v493 = vld [vmem:[%s386 + $0x310] sm:$0x7f]
      %v494 = vld [vmem:[%s386 + $0x318] sm:$0x7f]
      %v495 = vld [vmem:[%s386 + $0x320] sm:$0x7f]
      %v496 = vld [vmem:[%s386 + $0x328] sm:$0x7f]
      %v497 = vld [vmem:[%s386 + $0x330] sm:$0x7f]
      %v498 = vld [vmem:[%s386 + $0x338] sm:$0x7f]
      %v499 = vld [vmem:[%s386 + $0x340] sm:$0x7f]
      %v500 = vld [vmem:[%s386 + $0x348] sm:$0x7f]
      %v501 = vld [vmem:[%s386 + $0x350] sm:$0x7f]
      %v502 = vld [vmem:[%s386 + $0x358] sm:$0x7f]
      %v503 = vld [vmem:[%s386 + $0x360] sm:$0x7f]
      %v504 = vld [vmem:[%s386 + $0x368] sm:$0x7f]
      %v505 = vld [vmem:[%s386 + $0x370] sm:$0x7f]
      %v506 = vld [vmem:[%s386 + $0x378] sm:$0x7f]
      %v507 = vld [vmem:[%s386 + $0x380] sm:$0x7f]
      %v508 = vld [vmem:[%s386 + $0x388] sm:$0x7f]
      %v509 = vld [vmem:[%s386 + $0x390] sm:$0x7f]
      %v510 = vld [vmem:[%s386 + $0x398] sm:$0x7f]
      %v511 = vld [vmem:[%s386 + $0x3a0] sm:$0x7f]
      %v512 = vld [vmem:[%s386 + $0x3a8] sm:$0x7f]
      %v513 = vld [vmem:[%s386 + $0x3b0] sm:$0x7f]
      %v514 = vld [vmem:[%s386 + $0x3b8] sm:$0x7f]
      %v515 = vld [vmem:[%s386 + $0x3c0] sm:$0x7f]
      %v516 = vld [vmem:[%s386 + $0x3c8] sm:$0x7f]
      %v517 = vld [vmem:[%s386 + $0x3d0] sm:$0x7f]
      %v518 = vld [vmem:[%s386 + $0x3d8] sm:$0x7f]
      %v519 = vld [vmem:[%s386 + $0x3e0] sm:$0x7f]
      %v520 = vld [vmem:[%s386 + $0x3e8] sm:$0x7f]
      %v521 = vld [vmem:[%s386 + $0x3f0] sm:$0x7f]
      %v522 = vld [vmem:[%s386 + $0x3f8] sm:$0x7f]
      %v523 = vld [vmem:[%s386 + $0x400] sm:$0x7f]
      %v524 = vld [vmem:[%s386 + $0x408] sm:$0x7f]
      %v525 = vld [vmem:[%s386 + $0x410] sm:$0x7f]
      %v526 = vld [vmem:[%s386 + $0x418] sm:$0x7f]
      %v527 = vld [vmem:[%s386 + $0x420] sm:$0x7f]
      %v528 = vld [vmem:[%s386 + $0x428] sm:$0x7f]
      %v529 = vld [vmem:[%s386 + $0x430] sm:$0x7f]
      %v530 = vld [vmem:[%s386 + $0x438] sm:$0x7f]
      %v531 = vld [vmem:[%s386 + $0x440] sm:$0x7f]
      %v532 = vld [vmem:[%s386 + $0x448] sm:$0x7f]
      %v533 = vld [vmem:[%s386 + $0x450] sm:$0x7f]
      %v534 = vld [vmem:[%s386 + $0x458] sm:$0x7f]
      %v535 = vld [vmem:[%s386 + $0x460] sm:$0x7f]
      %v536 = vld [vmem:[%s386 + $0x468] sm:$0x7f]
      %v537 = vld [vmem:[%s386 + $0x470] sm:$0x7f]
      %v538 = vld [vmem:[%s386 + $0x478] sm:$0x7f]
      %v539 = vld [vmem:[%s386 + $0x480] sm:$0x7f]
      %v540 = vld [vmem:[%s386 + $0x488] sm:$0x7f]
      %v541 = vld [vmem:[%s386 + $0x490] sm:$0x7f]
      %v542 = vld [vmem:[%s386 + $0x498] sm:$0x7f]
      %v543 = vld [vmem:[%s386 + $0x4a0] sm:$0x7f]
      %v544 = vld [vmem:[%s386 + $0x4a8] sm:$0x7f]
      %v545 = vld [vmem:[%s386 + $0x4b0] sm:$0x7f]
      %v546 = vld [vmem:[%s386 + $0x4b8] sm:$0x7f]
      %v547 = vld [vmem:[%s386 + $0x4c0] sm:$0x7f]
      %v548 = vld [vmem:[%s386 + $0x4c8] sm:$0x7f]
      %v549 = vld [vmem:[%s386 + $0x4d0] sm:$0x7f]
      %v550 = vld [vmem:[%s386 + $0x4d8] sm:$0x7f]
      %v551 = vld [vmem:[%s386 + $0x4e0] sm:$0x7f]
      %v552 = vld [vmem:[%s386 + $0x4e8] sm:$0x7f]
      %v553 = vld [vmem:[%s386 + $0x4f0] sm:$0x7f]
      %v554 = vld [vmem:[%s386 + $0x4f8] sm:$0x7f]
      %v555 = vld [vmem:[%s386 + $0x500] sm:$0x7f]
      %v556 = vld [vmem:[%s386 + $0x508] sm:$0x7f]
      %v557 = vld [vmem:[%s386 + $0x510] sm:$0x7f]
      %v558 = vld [vmem:[%s386 + $0x518] sm:$0x7f]
      %v559 = vld [vmem:[%s386 + $0x520] sm:$0x7f]
      %v560 = vld [vmem:[%s386 + $0x528] sm:$0x7f]
      %v561 = vld [vmem:[%s386 + $0x530] sm:$0x7f]
      %v562 = vld [vmem:[%s386 + $0x538] sm:$0x7f]
      %v563 = vld [vmem:[%s386 + $0x540] sm:$0x7f]
      %v564 = vld [vmem:[%s386 + $0x548] sm:$0x7f]
      %v565 = vld [vmem:[%s386 + $0x550] sm:$0x7f]
      %v566 = vld [vmem:[%s386 + $0x558] sm:$0x7f]
      %v567 = vld [vmem:[%s386 + $0x560] sm:$0x7f]
      %v568 = vld [vmem:[%s386 + $0x568] sm:$0x7f]
      %v569 = vld [vmem:[%s386 + $0x570] sm:$0x7f]
      %v570 = vld [vmem:[%s386 + $0x578] sm:$0x7f]
      %v571 = vld [vmem:[%s386 + $0x580] sm:$0x7f]
      %v572 = vld [vmem:[%s386 + $0x588] sm:$0x7f]
      %v573 = vld [vmem:[%s386 + $0x590] sm:$0x7f]
      %v574 = vld [vmem:[%s386 + $0x598] sm:$0x7f]
      %v575 = vld [vmem:[%s386 + $0x5a0] sm:$0x7f]
      %v576 = vld [vmem:[%s386 + $0x5a8] sm:$0x7f]
      %v577 = vld [vmem:[%s386 + $0x5b0] sm:$0x7f]
      %v578 = vld [vmem:[%s386 + $0x5b8] sm:$0x7f]
      %v579 = vld [vmem:[%s386 + $0x5c0] sm:$0x7f]
      %v580 = vld [vmem:[%s386 + $0x5c8] sm:$0x7f]
      %v581 = vld [vmem:[%s386 + $0x5d0] sm:$0x7f]
      %v582 = vld [vmem:[%s386 + $0x5d8] sm:$0x7f]
      %v583 = vld [vmem:[%s386 + $0x5e0] sm:$0x7f]
      %v584 = vld [vmem:[%s386 + $0x5e8] sm:$0x7f]
      %v585 = vld [vmem:[%s386 + $0x5f0] sm:$0x7f]
      %v586 = vld [vmem:[%s386 + $0x5f8] sm:$0x7f]
      %v587 = vld [vmem:[%s386 + $0x600] sm:$0x7f]
      %v588 = vld [vmem:[%s386 + $0x608] sm:$0x7f]
      %v589 = vld [vmem:[%s386 + $0x610] sm:$0x7f]
      %v590 = vld [vmem:[%s386 + $0x618] sm:$0x7f]
      %v591 = vld [vmem:[%s386 + $0x620] sm:$0x7f]
      %v592 = vld [vmem:[%s386 + $0x628] sm:$0x7f]
      %v593 = vld [vmem:[%s386 + $0x630] sm:$0x7f]
      %v594 = vld [vmem:[%s386 + $0x638] sm:$0x7f]
      %v595 = vld [vmem:[%s386 + $0x640] sm:$0x7f]
      %v596 = vld [vmem:[%s386 + $0x648] sm:$0x7f]
      %v597 = vld [vmem:[%s386 + $0x650] sm:$0x7f]
      %v598 = vld [vmem:[%s386 + $0x658] sm:$0x7f]
      %v599 = vld [vmem:[%s386 + $0x660] sm:$0x7f]
      %v600 = vld [vmem:[%s386 + $0x668] sm:$0x7f]
      %v601 = vld [vmem:[%s386 + $0x670] sm:$0x7f]
      %v602 = vld [vmem:[%s386 + $0x678] sm:$0x7f]
      %v603 = vld [vmem:[%s386 + $0x680] sm:$0x7f]
      %v604 = vld [vmem:[%s386 + $0x688] sm:$0x7f]
      %v605 = vld [vmem:[%s386 + $0x690] sm:$0x7f]
      %v606 = vld [vmem:[%s386 + $0x698] sm:$0x7f]
      %v607 = vld [vmem:[%s386 + $0x6a0] sm:$0x7f]
      %v608 = vld [vmem:[%s386 + $0x6a8] sm:$0x7f]
      %v609 = vld [vmem:[%s386 + $0x6b0] sm:$0x7f]
      %v610 = vld [vmem:[%s386 + $0x6b8] sm:$0x7f]
      %v611 = vld [vmem:[%s386 + $0x6c0] sm:$0x7f]
      %v612 = vld [vmem:[%s386 + $0x6c8] sm:$0x7f]
      %v613 = vld [vmem:[%s386 + $0x6d0] sm:$0x7f]
      %v614 = vld [vmem:[%s386 + $0x6d8] sm:$0x7f]
      %v615 = vld [vmem:[%s386 + $0x6e0] sm:$0x7f]
      %v616 = vld [vmem:[%s386 + $0x6e8] sm:$0x7f]
      %v617 = vld [vmem:[%s386 + $0x6f0] sm:$0x7f]
      %v618 = vld [vmem:[%s386 + $0x6f8] sm:$0x7f]
      %v619 = vld [vmem:[%s1] sm:$0x7f]
      %v620 = vld [vmem:[%s1 + $0x8] sm:$0x7f]
      %v621 = vld [vmem:[%s1 + $0x10] sm:$0x7f]
      %v622 = vld [vmem:[%s1 + $0x18] sm:$0x7f]
      %v623 = vmul.f32 %v395, %v619
      %v624 = vmul.f32 %v396, %v620
      %v625 = vmul.f32 %v397, %v621
      %v626 = vmul.f32 %v398, %v622
      %v627 = vmul.f32 %v399, %v619
      %v628 = vmul.f32 %v400, %v620
      %v629 = vmul.f32 %v401, %v621
      %v630 = vmul.f32 %v402, %v622
      %v631 = vmul.f32 %v403, %v619
      %v632 = vmul.f32 %v404, %v620
      %v633 = vmul.f32 %v405, %v621
      %v634 = vmul.f32 %v406, %v622
      %v635 = vmul.f32 %v407, %v619
      %v636 = vmul.f32 %v408, %v620
      %v637 = vmul.f32 %v409, %v621
      %v638 = vmul.f32 %v410, %v622
      %v639 = vmul.f32 %v411, %v619
      %v640 = vmul.f32 %v412, %v620
      %v641 = vmul.f32 %v413, %v621
      %v642 = vmul.f32 %v414, %v622
      %v643 = vmul.f32 %v415, %v619
      %v644 = vmul.f32 %v416, %v620
      %v645 = vmul.f32 %v417, %v621
      %v646 = vmul.f32 %v418, %v622
      %v647 = vmul.f32 %v419, %v619
      %v648 = vmul.f32 %v420, %v620
      %v649 = vmul.f32 %v421, %v621
      %v650 = vmul.f32 %v422, %v622
      %v651 = vmul.f32 %v423, %v619
      %v652 = vmul.f32 %v424, %v620
      %v653 = vmul.f32 %v425, %v621
      %v654 = vmul.f32 %v426, %v622
      %v655 = vmul.f32 %v427, %v619
      %v656 = vmul.f32 %v428, %v620
      %v657 = vmul.f32 %v429, %v621
      %v658 = vmul.f32 %v430, %v622
      %v659 = vmul.f32 %v431, %v619
      %v660 = vmul.f32 %v432, %v620
      %v661 = vmul.f32 %v433, %v621
      %v662 = vmul.f32 %v434, %v622
      %v663 = vmul.f32 %v435, %v619
      %v664 = vmul.f32 %v436, %v620
      %v665 = vmul.f32 %v437, %v621
      %v666 = vmul.f32 %v438, %v622
      %v667 = vmul.f32 %v439, %v619
      %v668 = vmul.f32 %v440, %v620
      %v669 = vmul.f32 %v441, %v621
      %v670 = vmul.f32 %v442, %v622
      %v671 = vmul.f32 %v443, %v619
      %v672 = vmul.f32 %v444, %v620
      %v673 = vmul.f32 %v445, %v621
      %v674 = vmul.f32 %v446, %v622
      %v675 = vmul.f32 %v447, %v619
      %v676 = vmul.f32 %v448, %v620
      %v677 = vmul.f32 %v449, %v621
      %v678 = vmul.f32 %v450, %v622
      %v679 = vmul.f32 %v451, %v619
      %v680 = vmul.f32 %v452, %v620
      %v681 = vmul.f32 %v453, %v621
      %v682 = vmul.f32 %v454, %v622
      %v683 = vmul.f32 %v455, %v619
      %v684 = vmul.f32 %v456, %v620
      %v685 = vmul.f32 %v457, %v621
      %v686 = vmul.f32 %v458, %v622
      %v687 = vmul.f32 %v459, %v619
      %v688 = vmul.f32 %v460, %v620
      %v689 = vmul.f32 %v461, %v621
      %v690 = vmul.f32 %v462, %v622
      %v691 = vmul.f32 %v463, %v619
      %v692 = vmul.f32 %v464, %v620
      %v693 = vmul.f32 %v465, %v621
      %v694 = vmul.f32 %v466, %v622
      %v695 = vmul.f32 %v467, %v619
      %v696 = vmul.f32 %v468, %v620
      %v697 = vmul.f32 %v469, %v621
      %v698 = vmul.f32 %v470, %v622
      %v699 = vmul.f32 %v471, %v619
      %v700 = vmul.f32 %v472, %v620
      %v701 = vmul.f32 %v473, %v621
      %v702 = vmul.f32 %v474, %v622
      %v703 = vmul.f32 %v475, %v619
      %v704 = vmul.f32 %v476, %v620
      %v705 = vmul.f32 %v477, %v621
      %v706 = vmul.f32 %v478, %v622
      %v707 = vmul.f32 %v479, %v619
      %v708 = vmul.f32 %v480, %v620
      %v709 = vmul.f32 %v481, %v621
      %v710 = vmul.f32 %v482, %v622
      %v711 = vmul.f32 %v483, %v619
      %v712 = vmul.f32 %v484, %v620
      %v713 = vmul.f32 %v485, %v621
      %v714 = vmul.f32 %v486, %v622
      %v715 = vmul.f32 %v487, %v619
      %v716 = vmul.f32 %v488, %v620
      %v717 = vmul.f32 %v489, %v621
      %v718 = vmul.f32 %v490, %v622
      %v719 = vmul.f32 %v491, %v619
      %v720 = vmul.f32 %v492, %v620
      %v721 = vmul.f32 %v493, %v621
      %v722 = vmul.f32 %v494, %v622
      %v723 = vmul.f32 %v495, %v619
      %v724 = vmul.f32 %v496, %v620
      %v725 = vmul.f32 %v497, %v621
      %v726 = vmul.f32 %v498, %v622
      %v727 = vmul.f32 %v499, %v619
      %v728 = vmul.f32 %v500, %v620
      %v729 = vmul.f32 %v501, %v621
      %v730 = vmul.f32 %v502, %v622
      %v731 = vmul.f32 %v503, %v619
      %v732 = vmul.f32 %v504, %v620
      %v733 = vmul.f32 %v505, %v621
      %v734 = vmul.f32 %v506, %v622
      %v735 = vmul.f32 %v507, %v619
      %v736 = vmul.f32 %v508, %v620
      %v737 = vmul.f32 %v509, %v621
      %v738 = vmul.f32 %v510, %v622
      %v739 = vmul.f32 %v511, %v619
      %v740 = vmul.f32 %v512, %v620
      %v741 = vmul.f32 %v513, %v621
      %v742 = vmul.f32 %v514, %v622
      %v743 = vmul.f32 %v515, %v619
      %v744 = vmul.f32 %v516, %v620
      %v745 = vmul.f32 %v517, %v621
      %v746 = vmul.f32 %v518, %v622
      %v747 = vmul.f32 %v519, %v619
      %v748 = vmul.f32 %v520, %v620
      %v749 = vmul.f32 %v521, %v621
      %v750 = vmul.f32 %v522, %v622
      %v751 = vmul.f32 %v523, %v619
      %v752 = vmul.f32 %v524, %v620
      %v753 = vmul.f32 %v525, %v621
      %v754 = vmul.f32 %v526, %v622
      %v755 = vmul.f32 %v527, %v619
      %v756 = vmul.f32 %v528, %v620
      %v757 = vmul.f32 %v529, %v621
      %v758 = vmul.f32 %v530, %v622
      %v759 = vmul.f32 %v531, %v619
      %v760 = vmul.f32 %v532, %v620
      %v761 = vmul.f32 %v533, %v621
      %v762 = vmul.f32 %v534, %v622
      %v763 = vmul.f32 %v535, %v619
      %v764 = vmul.f32 %v536, %v620
      %v765 = vmul.f32 %v537, %v621
      %v766 = vmul.f32 %v538, %v622
      %v767 = vmul.f32 %v539, %v619
      %v768 = vmul.f32 %v540, %v620
      %v769 = vmul.f32 %v541, %v621
      %v770 = vmul.f32 %v542, %v622
      %v771 = vmul.f32 %v543, %v619
      %v772 = vmul.f32 %v544, %v620
      %v773 = vmul.f32 %v545, %v621
      %v774 = vmul.f32 %v546, %v622
      %v775 = vmul.f32 %v547, %v619
      %v776 = vmul.f32 %v548, %v620
      %v777 = vmul.f32 %v549, %v621
      %v778 = vmul.f32 %v550, %v622
      %v779 = vmul.f32 %v551, %v619
      %v780 = vmul.f32 %v552, %v620
      %v781 = vmul.f32 %v553, %v621
      %v782 = vmul.f32 %v554, %v622
      %v783 = vmul.f32 %v555, %v619
      %v784 = vmul.f32 %v556, %v620
      %v785 = vmul.f32 %v557, %v621
      %v786 = vmul.f32 %v558, %v622
      %v787 = vmul.f32 %v559, %v619
      %v788 = vmul.f32 %v560, %v620
      %v789 = vmul.f32 %v561, %v621
      %v790 = vmul.f32 %v562, %v622
      %v791 = vmul.f32 %v563, %v619
      %v792 = vmul.f32 %v564, %v620
      %v793 = vmul.f32 %v565, %v621
      %v794 = vmul.f32 %v566, %v622
      %v795 = vmul.f32 %v567, %v619
      %v796 = vmul.f32 %v568, %v620
      %v797 = vmul.f32 %v569, %v621
      %v798 = vmul.f32 %v570, %v622
      %v799 = vmul.f32 %v571, %v619
      %v800 = vmul.f32 %v572, %v620
      %v801 = vmul.f32 %v573, %v621
      %v802 = vmul.f32 %v574, %v622
      %v803 = vmul.f32 %v575, %v619
      %v804 = vmul.f32 %v576, %v620
      %v805 = vmul.f32 %v577, %v621
      %v806 = vmul.f32 %v578, %v622
      %v807 = vmul.f32 %v579, %v619
      %v808 = vmul.f32 %v580, %v620
      %v809 = vmul.f32 %v581, %v621
      %v810 = vmul.f32 %v582, %v622
      %v811 = vmul.f32 %v583, %v619
      %v812 = vmul.f32 %v584, %v620
      %v813 = vmul.f32 %v585, %v621
      %v814 = vmul.f32 %v586, %v622
      %v815 = vmul.f32 %v587, %v619
      %v816 = vmul.f32 %v588, %v620
      %v817 = vmul.f32 %v589, %v621
      %v818 = vmul.f32 %v590, %v622
      %v819 = vmul.f32 %v591, %v619
      %v820 = vmul.f32 %v592, %v620
      %v821 = vmul.f32 %v593, %v621
      %v822 = vmul.f32 %v594, %v622
      %v823 = vmul.f32 %v595, %v619
      %v824 = vmul.f32 %v596, %v620
      %v825 = vmul.f32 %v597, %v621
      %v826 = vmul.f32 %v598, %v622
      %v827 = vmul.f32 %v599, %v619
      %v828 = vmul.f32 %v600, %v620
      %v829 = vmul.f32 %v601, %v621
      %v830 = vmul.f32 %v602, %v622
      %v831 = vmul.f32 %v603, %v619
      %v832 = vmul.f32 %v604, %v620
      %v833 = vmul.f32 %v605, %v621
      %v834 = vmul.f32 %v606, %v622
      %v835 = vmul.f32 %v607, %v619
      %v836 = vmul.f32 %v608, %v620
      %v837 = vmul.f32 %v609, %v621
      %v838 = vmul.f32 %v610, %v622
      %v839 = vmul.f32 %v611, %v619
      %v840 = vmul.f32 %v612, %v620
      %v841 = vmul.f32 %v613, %v621
      %v842 = vmul.f32 %v614, %v622
      %v843 = vmul.f32 %v615, %v619
      %v844 = vmul.f32 %v616, %v620
      %v845 = vmul.f32 %v617, %v621
      %v846 = vmul.f32 %v618, %v622
      %vm847 = vcmask 1046528
      %v848 = vsel %vm847, %v623, 0.0
      %v849 = vrot.slane %v848, 4
      %v850 = vadd.f32 %v848, %v849
      %v851 = vrot.slane %v850, 2
      %v852 = vadd.f32 %v850, %v851
      %v853 = vrot.slane %v852, 1
      %v854 = vadd.f32 %v852, %v853
      %v855 = vsel %vm847, %v624, 0.0
      %v856 = vrot.slane %v855, 4
      %v857 = vadd.f32 %v855, %v856
      %v858 = vrot.slane %v857, 2
      %v859 = vadd.f32 %v857, %v858
      %v860 = vrot.slane %v859, 1
      %v861 = vadd.f32 %v859, %v860
      %v862 = vsel %vm847, %v625, 0.0
      %v863 = vrot.slane %v862, 4
      %v864 = vadd.f32 %v862, %v863
      %v865 = vrot.slane %v864, 2
      %v866 = vadd.f32 %v864, %v865
      %v867 = vrot.slane %v866, 1
      %v868 = vadd.f32 %v866, %v867
      %v869 = vsel %vm847, %v626, 0.0
      %v870 = vrot.slane %v869, 4
      %v871 = vadd.f32 %v869, %v870
      %v872 = vrot.slane %v871, 2
      %v873 = vadd.f32 %v871, %v872
      %v874 = vrot.slane %v873, 1
      %v875 = vadd.f32 %v873, %v874
      %v876 = vsel %vm847, %v627, 0.0
      %v877 = vrot.slane %v876, 4
      %v878 = vadd.f32 %v876, %v877
      %v879 = vrot.slane %v878, 2
      %v880 = vadd.f32 %v878, %v879
      %v881 = vrot.slane %v880, 1
      %v882 = vadd.f32 %v880, %v881
      %v883 = vsel %vm847, %v628, 0.0
      %v884 = vrot.slane %v883, 4
      %v885 = vadd.f32 %v883, %v884
      %v886 = vrot.slane %v885, 2
      %v887 = vadd.f32 %v885, %v886
      %v888 = vrot.slane %v887, 1
      %v889 = vadd.f32 %v887, %v888
      %v890 = vsel %vm847, %v629, 0.0
      %v891 = vrot.slane %v890, 4
      %v892 = vadd.f32 %v890, %v891
      %v893 = vrot.slane %v892, 2
      %v894 = vadd.f32 %v892, %v893
      %v895 = vrot.slane %v894, 1
      %v896 = vadd.f32 %v894, %v895
      %v897 = vsel %vm847, %v630, 0.0
      %v898 = vrot.slane %v897, 4
      %v899 = vadd.f32 %v897, %v898
      %v900 = vrot.slane %v899, 2
      %v901 = vadd.f32 %v899, %v900
      %v902 = vrot.slane %v901, 1
      %v903 = vadd.f32 %v901, %v902
      %v904 = vsel %vm847, %v631, 0.0
      %v905 = vrot.slane %v904, 4
      %v906 = vadd.f32 %v904, %v905
      %v907 = vrot.slane %v906, 2
      %v908 = vadd.f32 %v906, %v907
      %v909 = vrot.slane %v908, 1
      %v910 = vadd.f32 %v908, %v909
      %v911 = vsel %vm847, %v632, 0.0
      %v912 = vrot.slane %v911, 4
      %v913 = vadd.f32 %v911, %v912
      %v914 = vrot.slane %v913, 2
      %v915 = vadd.f32 %v913, %v914
      %v916 = vrot.slane %v915, 1
      %v917 = vadd.f32 %v915, %v916
      %v918 = vsel %vm847, %v633, 0.0
      %v919 = vrot.slane %v918, 4
      %v920 = vadd.f32 %v918, %v919
      %v921 = vrot.slane %v920, 2
      %v922 = vadd.f32 %v920, %v921
      %v923 = vrot.slane %v922, 1
      %v924 = vadd.f32 %v922, %v923
      %v925 = vsel %vm847, %v634, 0.0
      %v926 = vrot.slane %v925, 4
      %v927 = vadd.f32 %v925, %v926
      %v928 = vrot.slane %v927, 2
      %v929 = vadd.f32 %v927, %v928
      %v930 = vrot.slane %v929, 1
      %v931 = vadd.f32 %v929, %v930
      %v932 = vsel %vm847, %v635, 0.0
      %v933 = vrot.slane %v932, 4
      %v934 = vadd.f32 %v932, %v933
      %v935 = vrot.slane %v934, 2
      %v936 = vadd.f32 %v934, %v935
      %v937 = vrot.slane %v936, 1
      %v938 = vadd.f32 %v936, %v937
      %v939 = vsel %vm847, %v636, 0.0
      %v940 = vrot.slane %v939, 4
      %v941 = vadd.f32 %v939, %v940
      %v942 = vrot.slane %v941, 2
      %v943 = vadd.f32 %v941, %v942
      %v944 = vrot.slane %v943, 1
      %v945 = vadd.f32 %v943, %v944
      %v946 = vsel %vm847, %v637, 0.0
      %v947 = vrot.slane %v946, 4
      %v948 = vadd.f32 %v946, %v947
      %v949 = vrot.slane %v948, 2
      %v950 = vadd.f32 %v948, %v949
      %v951 = vrot.slane %v950, 1
      %v952 = vadd.f32 %v950, %v951
      %v953 = vsel %vm847, %v638, 0.0
      %v954 = vrot.slane %v953, 4
      %v955 = vadd.f32 %v953, %v954
      %v956 = vrot.slane %v955, 2
      %v957 = vadd.f32 %v955, %v956
      %v958 = vrot.slane %v957, 1
      %v959 = vadd.f32 %v957, %v958
      %v960 = vsel %vm847, %v639, 0.0
      %v961 = vrot.slane %v960, 4
      %v962 = vadd.f32 %v960, %v961
      %v963 = vrot.slane %v962, 2
      %v964 = vadd.f32 %v962, %v963
      %v965 = vrot.slane %v964, 1
      %v966 = vadd.f32 %v964, %v965
      %v967 = vsel %vm847, %v640, 0.0
      %v968 = vrot.slane %v967, 4
      %v969 = vadd.f32 %v967, %v968
      %v970 = vrot.slane %v969, 2
      %v971 = vadd.f32 %v969, %v970
      %v972 = vrot.slane %v971, 1
      %v973 = vadd.f32 %v971, %v972
      %v974 = vsel %vm847, %v641, 0.0
      %v975 = vrot.slane %v974, 4
      %v976 = vadd.f32 %v974, %v975
      %v977 = vrot.slane %v976, 2
      %v978 = vadd.f32 %v976, %v977
      %v979 = vrot.slane %v978, 1
      %v980 = vadd.f32 %v978, %v979
      %v981 = vsel %vm847, %v642, 0.0
      %v982 = vrot.slane %v981, 4
      %v983 = vadd.f32 %v981, %v982
      %v984 = vrot.slane %v983, 2
      %v985 = vadd.f32 %v983, %v984
      %v986 = vrot.slane %v985, 1
      %v987 = vadd.f32 %v985, %v986
      %v988 = vsel %vm847, %v643, 0.0
      %v989 = vrot.slane %v988, 4
      %v990 = vadd.f32 %v988, %v989
      %v991 = vrot.slane %v990, 2
      %v992 = vadd.f32 %v990, %v991
      %v993 = vrot.slane %v992, 1
      %v994 = vadd.f32 %v992, %v993
      %v995 = vsel %vm847, %v644, 0.0
      %v996 = vrot.slane %v995, 4
      %v997 = vadd.f32 %v995, %v996
      %v998 = vrot.slane %v997, 2
      %v999 = vadd.f32 %v997, %v998
      %v1000 = vrot.slane %v999, 1
      %v1001 = vadd.f32 %v999, %v1000
      %v1002 = vsel %vm847, %v645, 0.0
      %v1003 = vrot.slane %v1002, 4
      %v1004 = vadd.f32 %v1002, %v1003
      %v1005 = vrot.slane %v1004, 2
      %v1006 = vadd.f32 %v1004, %v1005
      %v1007 = vrot.slane %v1006, 1
      %v1008 = vadd.f32 %v1006, %v1007
      %v1009 = vsel %vm847, %v646, 0.0
      %v1010 = vrot.slane %v1009, 4
      %v1011 = vadd.f32 %v1009, %v1010
      %v1012 = vrot.slane %v1011, 2
      %v1013 = vadd.f32 %v1011, %v1012
      %v1014 = vrot.slane %v1013, 1
      %v1015 = vadd.f32 %v1013, %v1014
      %v1016 = vsel %vm847, %v647, 0.0
      %v1017 = vrot.slane %v1016, 4
      %v1018 = vadd.f32 %v1016, %v1017
      %v1019 = vrot.slane %v1018, 2
      %v1020 = vadd.f32 %v1018, %v1019
      %v1021 = vrot.slane %v1020, 1
      %v1022 = vadd.f32 %v1020, %v1021
      %v1023 = vsel %vm847, %v648, 0.0
      %v1024 = vrot.slane %v1023, 4
      %v1025 = vadd.f32 %v1023, %v1024
      %v1026 = vrot.slane %v1025, 2
      %v1027 = vadd.f32 %v1025, %v1026
      %v1028 = vrot.slane %v1027, 1
      %v1029 = vadd.f32 %v1027, %v1028
      %v1030 = vsel %vm847, %v649, 0.0
      %v1031 = vrot.slane %v1030, 4
      %v1032 = vadd.f32 %v1030, %v1031
      %v1033 = vrot.slane %v1032, 2
      %v1034 = vadd.f32 %v1032, %v1033
      %v1035 = vrot.slane %v1034, 1
      %v1036 = vadd.f32 %v1034, %v1035
      %v1037 = vsel %vm847, %v650, 0.0
      %v1038 = vrot.slane %v1037, 4
      %v1039 = vadd.f32 %v1037, %v1038
      %v1040 = vrot.slane %v1039, 2
      %v1041 = vadd.f32 %v1039, %v1040
      %v1042 = vrot.slane %v1041, 1
      %v1043 = vadd.f32 %v1041, %v1042
      %v1044 = vsel %vm847, %v651, 0.0
      %v1045 = vrot.slane %v1044, 4
      %v1046 = vadd.f32 %v1044, %v1045
      %v1047 = vrot.slane %v1046, 2
      %v1048 = vadd.f32 %v1046, %v1047
      %v1049 = vrot.slane %v1048, 1
      %v1050 = vadd.f32 %v1048, %v1049
      %v1051 = vsel %vm847, %v652, 0.0
      %v1052 = vrot.slane %v1051, 4
      %v1053 = vadd.f32 %v1051, %v1052
      %v1054 = vrot.slane %v1053, 2
      %v1055 = vadd.f32 %v1053, %v1054
      %v1056 = vrot.slane %v1055, 1
      %v1057 = vadd.f32 %v1055, %v1056
      %v1058 = vsel %vm847, %v653, 0.0
      %v1059 = vrot.slane %v1058, 4
      %v1060 = vadd.f32 %v1058, %v1059
      %v1061 = vrot.slane %v1060, 2
      %v1062 = vadd.f32 %v1060, %v1061
      %v1063 = vrot.slane %v1062, 1
      %v1064 = vadd.f32 %v1062, %v1063
      %v1065 = vsel %vm847, %v654, 0.0
      %v1066 = vrot.slane %v1065, 4
      %v1067 = vadd.f32 %v1065, %v1066
      %v1068 = vrot.slane %v1067, 2
      %v1069 = vadd.f32 %v1067, %v1068
      %v1070 = vrot.slane %v1069, 1
      %v1071 = vadd.f32 %v1069, %v1070
      %v1072 = vsel %vm847, %v655, 0.0
      %v1073 = vrot.slane %v1072, 4
      %v1074 = vadd.f32 %v1072, %v1073
      %v1075 = vrot.slane %v1074, 2
      %v1076 = vadd.f32 %v1074, %v1075
      %v1077 = vrot.slane %v1076, 1
      %v1078 = vadd.f32 %v1076, %v1077
      %v1079 = vsel %vm847, %v656, 0.0
      %v1080 = vrot.slane %v1079, 4
      %v1081 = vadd.f32 %v1079, %v1080
      %v1082 = vrot.slane %v1081, 2
      %v1083 = vadd.f32 %v1081, %v1082
      %v1084 = vrot.slane %v1083, 1
      %v1085 = vadd.f32 %v1083, %v1084
      %v1086 = vsel %vm847, %v657, 0.0
      %v1087 = vrot.slane %v1086, 4
      %v1088 = vadd.f32 %v1086, %v1087
      %v1089 = vrot.slane %v1088, 2
      %v1090 = vadd.f32 %v1088, %v1089
      %v1091 = vrot.slane %v1090, 1
      %v1092 = vadd.f32 %v1090, %v1091
      %v1093 = vsel %vm847, %v658, 0.0
      %v1094 = vrot.slane %v1093, 4
      %v1095 = vadd.f32 %v1093, %v1094
      %v1096 = vrot.slane %v1095, 2
      %v1097 = vadd.f32 %v1095, %v1096
      %v1098 = vrot.slane %v1097, 1
      %v1099 = vadd.f32 %v1097, %v1098
      %v1100 = vsel %vm847, %v659, 0.0
      %v1101 = vrot.slane %v1100, 4
      %v1102 = vadd.f32 %v1100, %v1101
      %v1103 = vrot.slane %v1102, 2
      %v1104 = vadd.f32 %v1102, %v1103
      %v1105 = vrot.slane %v1104, 1
      %v1106 = vadd.f32 %v1104, %v1105
      %v1107 = vsel %vm847, %v660, 0.0
      %v1108 = vrot.slane %v1107, 4
      %v1109 = vadd.f32 %v1107, %v1108
      %v1110 = vrot.slane %v1109, 2
      %v1111 = vadd.f32 %v1109, %v1110
      %v1112 = vrot.slane %v1111, 1
      %v1113 = vadd.f32 %v1111, %v1112
      %v1114 = vsel %vm847, %v661, 0.0
      %v1115 = vrot.slane %v1114, 4
      %v1116 = vadd.f32 %v1114, %v1115
      %v1117 = vrot.slane %v1116, 2
      %v1118 = vadd.f32 %v1116, %v1117
      %v1119 = vrot.slane %v1118, 1
      %v1120 = vadd.f32 %v1118, %v1119
      %v1121 = vsel %vm847, %v662, 0.0
      %v1122 = vrot.slane %v1121, 4
      %v1123 = vadd.f32 %v1121, %v1122
      %v1124 = vrot.slane %v1123, 2
      %v1125 = vadd.f32 %v1123, %v1124
      %v1126 = vrot.slane %v1125, 1
      %v1127 = vadd.f32 %v1125, %v1126
      %v1128 = vsel %vm847, %v663, 0.0
      %v1129 = vrot.slane %v1128, 4
      %v1130 = vadd.f32 %v1128, %v1129
      %v1131 = vrot.slane %v1130, 2
      %v1132 = vadd.f32 %v1130, %v1131
      %v1133 = vrot.slane %v1132, 1
      %v1134 = vadd.f32 %v1132, %v1133
      %v1135 = vsel %vm847, %v664, 0.0
      %v1136 = vrot.slane %v1135, 4
      %v1137 = vadd.f32 %v1135, %v1136
      %v1138 = vrot.slane %v1137, 2
      %v1139 = vadd.f32 %v1137, %v1138
      %v1140 = vrot.slane %v1139, 1
      %v1141 = vadd.f32 %v1139, %v1140
      %v1142 = vsel %vm847, %v665, 0.0
      %v1143 = vrot.slane %v1142, 4
      %v1144 = vadd.f32 %v1142, %v1143
      %v1145 = vrot.slane %v1144, 2
      %v1146 = vadd.f32 %v1144, %v1145
      %v1147 = vrot.slane %v1146, 1
      %v1148 = vadd.f32 %v1146, %v1147
      %v1149 = vsel %vm847, %v666, 0.0
      %v1150 = vrot.slane %v1149, 4
      %v1151 = vadd.f32 %v1149, %v1150
      %v1152 = vrot.slane %v1151, 2
      %v1153 = vadd.f32 %v1151, %v1152
      %v1154 = vrot.slane %v1153, 1
      %v1155 = vadd.f32 %v1153, %v1154
      %v1156 = vsel %vm847, %v667, 0.0
      %v1157 = vrot.slane %v1156, 4
      %v1158 = vadd.f32 %v1156, %v1157
      %v1159 = vrot.slane %v1158, 2
      %v1160 = vadd.f32 %v1158, %v1159
      %v1161 = vrot.slane %v1160, 1
      %v1162 = vadd.f32 %v1160, %v1161
      %v1163 = vsel %vm847, %v668, 0.0
      %v1164 = vrot.slane %v1163, 4
      %v1165 = vadd.f32 %v1163, %v1164
      %v1166 = vrot.slane %v1165, 2
      %v1167 = vadd.f32 %v1165, %v1166
      %v1168 = vrot.slane %v1167, 1
      %v1169 = vadd.f32 %v1167, %v1168
      %v1170 = vsel %vm847, %v669, 0.0
      %v1171 = vrot.slane %v1170, 4
      %v1172 = vadd.f32 %v1170, %v1171
      %v1173 = vrot.slane %v1172, 2
      %v1174 = vadd.f32 %v1172, %v1173
      %v1175 = vrot.slane %v1174, 1
      %v1176 = vadd.f32 %v1174, %v1175
      %v1177 = vsel %vm847, %v670, 0.0
      %v1178 = vrot.slane %v1177, 4
      %v1179 = vadd.f32 %v1177, %v1178
      %v1180 = vrot.slane %v1179, 2
      %v1181 = vadd.f32 %v1179, %v1180
      %v1182 = vrot.slane %v1181, 1
      %v1183 = vadd.f32 %v1181, %v1182
      %v1184 = vsel %vm847, %v671, 0.0
      %v1185 = vrot.slane %v1184, 4
      %v1186 = vadd.f32 %v1184, %v1185
      %v1187 = vrot.slane %v1186, 2
      %v1188 = vadd.f32 %v1186, %v1187
      %v1189 = vrot.slane %v1188, 1
      %v1190 = vadd.f32 %v1188, %v1189
      %v1191 = vsel %vm847, %v672, 0.0
      %v1192 = vrot.slane %v1191, 4
      %v1193 = vadd.f32 %v1191, %v1192
      %v1194 = vrot.slane %v1193, 2
      %v1195 = vadd.f32 %v1193, %v1194
      %v1196 = vrot.slane %v1195, 1
      %v1197 = vadd.f32 %v1195, %v1196
      %v1198 = vsel %vm847, %v673, 0.0
      %v1199 = vrot.slane %v1198, 4
      %v1200 = vadd.f32 %v1198, %v1199
      %v1201 = vrot.slane %v1200, 2
      %v1202 = vadd.f32 %v1200, %v1201
      %v1203 = vrot.slane %v1202, 1
      %v1204 = vadd.f32 %v1202, %v1203
      %v1205 = vsel %vm847, %v674, 0.0
      %v1206 = vrot.slane %v1205, 4
      %v1207 = vadd.f32 %v1205, %v1206
      %v1208 = vrot.slane %v1207, 2
      %v1209 = vadd.f32 %v1207, %v1208
      %v1210 = vrot.slane %v1209, 1
      %v1211 = vadd.f32 %v1209, %v1210
      %v1212 = vsel %vm847, %v675, 0.0
      %v1213 = vrot.slane %v1212, 4
      %v1214 = vadd.f32 %v1212, %v1213
      %v1215 = vrot.slane %v1214, 2
      %v1216 = vadd.f32 %v1214, %v1215
      %v1217 = vrot.slane %v1216, 1
      %v1218 = vadd.f32 %v1216, %v1217
      %v1219 = vsel %vm847, %v676, 0.0
      %v1220 = vrot.slane %v1219, 4
      %v1221 = vadd.f32 %v1219, %v1220
      %v1222 = vrot.slane %v1221, 2
      %v1223 = vadd.f32 %v1221, %v1222
      %v1224 = vrot.slane %v1223, 1
      %v1225 = vadd.f32 %v1223, %v1224
      %v1226 = vsel %vm847, %v677, 0.0
      %v1227 = vrot.slane %v1226, 4
      %v1228 = vadd.f32 %v1226, %v1227
      %v1229 = vrot.slane %v1228, 2
      %v1230 = vadd.f32 %v1228, %v1229
      %v1231 = vrot.slane %v1230, 1
      %v1232 = vadd.f32 %v1230, %v1231
      %v1233 = vsel %vm847, %v678, 0.0
      %v1234 = vrot.slane %v1233, 4
      %v1235 = vadd.f32 %v1233, %v1234
      %v1236 = vrot.slane %v1235, 2
      %v1237 = vadd.f32 %v1235, %v1236
      %v1238 = vrot.slane %v1237, 1
      %v1239 = vadd.f32 %v1237, %v1238
      %v1240 = vsel %vm847, %v679, 0.0
      %v1241 = vrot.slane %v1240, 4
      %v1242 = vadd.f32 %v1240, %v1241
      %v1243 = vrot.slane %v1242, 2
      %v1244 = vadd.f32 %v1242, %v1243
      %v1245 = vrot.slane %v1244, 1
      %v1246 = vadd.f32 %v1244, %v1245
      %v1247 = vsel %vm847, %v680, 0.0
      %v1248 = vrot.slane %v1247, 4
      %v1249 = vadd.f32 %v1247, %v1248
      %v1250 = vrot.slane %v1249, 2
      %v1251 = vadd.f32 %v1249, %v1250
      %v1252 = vrot.slane %v1251, 1
      %v1253 = vadd.f32 %v1251, %v1252
      %v1254 = vsel %vm847, %v681, 0.0
      %v1255 = vrot.slane %v1254, 4
      %v1256 = vadd.f32 %v1254, %v1255
      %v1257 = vrot.slane %v1256, 2
      %v1258 = vadd.f32 %v1256, %v1257
      %v1259 = vrot.slane %v1258, 1
      %v1260 = vadd.f32 %v1258, %v1259
      %v1261 = vsel %vm847, %v682, 0.0
      %v1262 = vrot.slane %v1261, 4
      %v1263 = vadd.f32 %v1261, %v1262
      %v1264 = vrot.slane %v1263, 2
      %v1265 = vadd.f32 %v1263, %v1264
      %v1266 = vrot.slane %v1265, 1
      %v1267 = vadd.f32 %v1265, %v1266
      %v1268 = vsel %vm847, %v683, 0.0
      %v1269 = vrot.slane %v1268, 4
      %v1270 = vadd.f32 %v1268, %v1269
      %v1271 = vrot.slane %v1270, 2
      %v1272 = vadd.f32 %v1270, %v1271
      %v1273 = vrot.slane %v1272, 1
      %v1274 = vadd.f32 %v1272, %v1273
      %v1275 = vsel %vm847, %v684, 0.0
      %v1276 = vrot.slane %v1275, 4
      %v1277 = vadd.f32 %v1275, %v1276
      %v1278 = vrot.slane %v1277, 2
      %v1279 = vadd.f32 %v1277, %v1278
      %v1280 = vrot.slane %v1279, 1
      %v1281 = vadd.f32 %v1279, %v1280
      %v1282 = vsel %vm847, %v685, 0.0
      %v1283 = vrot.slane %v1282, 4
      %v1284 = vadd.f32 %v1282, %v1283
      %v1285 = vrot.slane %v1284, 2
      %v1286 = vadd.f32 %v1284, %v1285
      %v1287 = vrot.slane %v1286, 1
      %v1288 = vadd.f32 %v1286, %v1287
      %v1289 = vsel %vm847, %v686, 0.0
      %v1290 = vrot.slane %v1289, 4
      %v1291 = vadd.f32 %v1289, %v1290
      %v1292 = vrot.slane %v1291, 2
      %v1293 = vadd.f32 %v1291, %v1292
      %v1294 = vrot.slane %v1293, 1
      %v1295 = vadd.f32 %v1293, %v1294
      %v1296 = vsel %vm847, %v687, 0.0
      %v1297 = vrot.slane %v1296, 4
      %v1298 = vadd.f32 %v1296, %v1297
      %v1299 = vrot.slane %v1298, 2
      %v1300 = vadd.f32 %v1298, %v1299
      %v1301 = vrot.slane %v1300, 1
      %v1302 = vadd.f32 %v1300, %v1301
      %v1303 = vsel %vm847, %v688, 0.0
      %v1304 = vrot.slane %v1303, 4
      %v1305 = vadd.f32 %v1303, %v1304
      %v1306 = vrot.slane %v1305, 2
      %v1307 = vadd.f32 %v1305, %v1306
      %v1308 = vrot.slane %v1307, 1
      %v1309 = vadd.f32 %v1307, %v1308
      %v1310 = vsel %vm847, %v689, 0.0
      %v1311 = vrot.slane %v1310, 4
      %v1312 = vadd.f32 %v1310, %v1311
      %v1313 = vrot.slane %v1312, 2
      %v1314 = vadd.f32 %v1312, %v1313
      %v1315 = vrot.slane %v1314, 1
      %v1316 = vadd.f32 %v1314, %v1315
      %v1317 = vsel %vm847, %v690, 0.0
      %v1318 = vrot.slane %v1317, 4
      %v1319 = vadd.f32 %v1317, %v1318
      %v1320 = vrot.slane %v1319, 2
      %v1321 = vadd.f32 %v1319, %v1320
      %v1322 = vrot.slane %v1321, 1
      %v1323 = vadd.f32 %v1321, %v1322
      %v1324 = vsel %vm847, %v691, 0.0
      %v1325 = vrot.slane %v1324, 4
      %v1326 = vadd.f32 %v1324, %v1325
      %v1327 = vrot.slane %v1326, 2
      %v1328 = vadd.f32 %v1326, %v1327
      %v1329 = vrot.slane %v1328, 1
      %v1330 = vadd.f32 %v1328, %v1329
      %v1331 = vsel %vm847, %v692, 0.0
      %v1332 = vrot.slane %v1331, 4
      %v1333 = vadd.f32 %v1331, %v1332
      %v1334 = vrot.slane %v1333, 2
      %v1335 = vadd.f32 %v1333, %v1334
      %v1336 = vrot.slane %v1335, 1
      %v1337 = vadd.f32 %v1335, %v1336
      %v1338 = vsel %vm847, %v693, 0.0
      %v1339 = vrot.slane %v1338, 4
      %v1340 = vadd.f32 %v1338, %v1339
      %v1341 = vrot.slane %v1340, 2
      %v1342 = vadd.f32 %v1340, %v1341
      %v1343 = vrot.slane %v1342, 1
      %v1344 = vadd.f32 %v1342, %v1343
      %v1345 = vsel %vm847, %v694, 0.0
      %v1346 = vrot.slane %v1345, 4
      %v1347 = vadd.f32 %v1345, %v1346
      %v1348 = vrot.slane %v1347, 2
      %v1349 = vadd.f32 %v1347, %v1348
      %v1350 = vrot.slane %v1349, 1
      %v1351 = vadd.f32 %v1349, %v1350
      %v1352 = vsel %vm847, %v695, 0.0
      %v1353 = vrot.slane %v1352, 4
      %v1354 = vadd.f32 %v1352, %v1353
      %v1355 = vrot.slane %v1354, 2
      %v1356 = vadd.f32 %v1354, %v1355
      %v1357 = vrot.slane %v1356, 1
      %v1358 = vadd.f32 %v1356, %v1357
      %v1359 = vsel %vm847, %v696, 0.0
      %v1360 = vrot.slane %v1359, 4
      %v1361 = vadd.f32 %v1359, %v1360
      %v1362 = vrot.slane %v1361, 2
      %v1363 = vadd.f32 %v1361, %v1362
      %v1364 = vrot.slane %v1363, 1
      %v1365 = vadd.f32 %v1363, %v1364
      %v1366 = vsel %vm847, %v697, 0.0
      %v1367 = vrot.slane %v1366, 4
      %v1368 = vadd.f32 %v1366, %v1367
      %v1369 = vrot.slane %v1368, 2
      %v1370 = vadd.f32 %v1368, %v1369
      %v1371 = vrot.slane %v1370, 1
      %v1372 = vadd.f32 %v1370, %v1371
      %v1373 = vsel %vm847, %v698, 0.0
      %v1374 = vrot.slane %v1373, 4
      %v1375 = vadd.f32 %v1373, %v1374
      %v1376 = vrot.slane %v1375, 2
      %v1377 = vadd.f32 %v1375, %v1376
      %v1378 = vrot.slane %v1377, 1
      %v1379 = vadd.f32 %v1377, %v1378
      %v1380 = vsel %vm847, %v699, 0.0
      %v1381 = vrot.slane %v1380, 4
      %v1382 = vadd.f32 %v1380, %v1381
      %v1383 = vrot.slane %v1382, 2
      %v1384 = vadd.f32 %v1382, %v1383
      %v1385 = vrot.slane %v1384, 1
      %v1386 = vadd.f32 %v1384, %v1385
      %v1387 = vsel %vm847, %v700, 0.0
      %v1388 = vrot.slane %v1387, 4
      %v1389 = vadd.f32 %v1387, %v1388
      %v1390 = vrot.slane %v1389, 2
      %v1391 = vadd.f32 %v1389, %v1390
      %v1392 = vrot.slane %v1391, 1
      %v1393 = vadd.f32 %v1391, %v1392
      %v1394 = vsel %vm847, %v701, 0.0
      %v1395 = vrot.slane %v1394, 4
      %v1396 = vadd.f32 %v1394, %v1395
      %v1397 = vrot.slane %v1396, 2
      %v1398 = vadd.f32 %v1396, %v1397
      %v1399 = vrot.slane %v1398, 1
      %v1400 = vadd.f32 %v1398, %v1399
      %v1401 = vsel %vm847, %v702, 0.0
      %v1402 = vrot.slane %v1401, 4
      %v1403 = vadd.f32 %v1401, %v1402
      %v1404 = vrot.slane %v1403, 2
      %v1405 = vadd.f32 %v1403, %v1404
      %v1406 = vrot.slane %v1405, 1
      %v1407 = vadd.f32 %v1405, %v1406
      %v1408 = vsel %vm847, %v703, 0.0
      %v1409 = vrot.slane %v1408, 4
      %v1410 = vadd.f32 %v1408, %v1409
      %v1411 = vrot.slane %v1410, 2
      %v1412 = vadd.f32 %v1410, %v1411
      %v1413 = vrot.slane %v1412, 1
      %v1414 = vadd.f32 %v1412, %v1413
      %v1415 = vsel %vm847, %v704, 0.0
      %v1416 = vrot.slane %v1415, 4
      %v1417 = vadd.f32 %v1415, %v1416
      %v1418 = vrot.slane %v1417, 2
      %v1419 = vadd.f32 %v1417, %v1418
      %v1420 = vrot.slane %v1419, 1
      %v1421 = vadd.f32 %v1419, %v1420
      %v1422 = vsel %vm847, %v705, 0.0
      %v1423 = vrot.slane %v1422, 4
      %v1424 = vadd.f32 %v1422, %v1423
      %v1425 = vrot.slane %v1424, 2
      %v1426 = vadd.f32 %v1424, %v1425
      %v1427 = vrot.slane %v1426, 1
      %v1428 = vadd.f32 %v1426, %v1427
      %v1429 = vsel %vm847, %v706, 0.0
      %v1430 = vrot.slane %v1429, 4
      %v1431 = vadd.f32 %v1429, %v1430
      %v1432 = vrot.slane %v1431, 2
      %v1433 = vadd.f32 %v1431, %v1432
      %v1434 = vrot.slane %v1433, 1
      %v1435 = vadd.f32 %v1433, %v1434
      %v1436 = vsel %vm847, %v707, 0.0
      %v1437 = vrot.slane %v1436, 4
      %v1438 = vadd.f32 %v1436, %v1437
      %v1439 = vrot.slane %v1438, 2
      %v1440 = vadd.f32 %v1438, %v1439
      %v1441 = vrot.slane %v1440, 1
      %v1442 = vadd.f32 %v1440, %v1441
      %v1443 = vsel %vm847, %v708, 0.0
      %v1444 = vrot.slane %v1443, 4
      %v1445 = vadd.f32 %v1443, %v1444
      %v1446 = vrot.slane %v1445, 2
      %v1447 = vadd.f32 %v1445, %v1446
      %v1448 = vrot.slane %v1447, 1
      %v1449 = vadd.f32 %v1447, %v1448
      %v1450 = vsel %vm847, %v709, 0.0
      %v1451 = vrot.slane %v1450, 4
      %v1452 = vadd.f32 %v1450, %v1451
      %v1453 = vrot.slane %v1452, 2
      %v1454 = vadd.f32 %v1452, %v1453
      %v1455 = vrot.slane %v1454, 1
      %v1456 = vadd.f32 %v1454, %v1455
      %v1457 = vsel %vm847, %v710, 0.0
      %v1458 = vrot.slane %v1457, 4
      %v1459 = vadd.f32 %v1457, %v1458
      %v1460 = vrot.slane %v1459, 2
      %v1461 = vadd.f32 %v1459, %v1460
      %v1462 = vrot.slane %v1461, 1
      %v1463 = vadd.f32 %v1461, %v1462
      %v1464 = vsel %vm847, %v711, 0.0
      %v1465 = vrot.slane %v1464, 4
      %v1466 = vadd.f32 %v1464, %v1465
      %v1467 = vrot.slane %v1466, 2
      %v1468 = vadd.f32 %v1466, %v1467
      %v1469 = vrot.slane %v1468, 1
      %v1470 = vadd.f32 %v1468, %v1469
      %v1471 = vsel %vm847, %v712, 0.0
      %v1472 = vrot.slane %v1471, 4
      %v1473 = vadd.f32 %v1471, %v1472
      %v1474 = vrot.slane %v1473, 2
      %v1475 = vadd.f32 %v1473, %v1474
      %v1476 = vrot.slane %v1475, 1
      %v1477 = vadd.f32 %v1475, %v1476
      %v1478 = vsel %vm847, %v713, 0.0
      %v1479 = vrot.slane %v1478, 4
      %v1480 = vadd.f32 %v1478, %v1479
      %v1481 = vrot.slane %v1480, 2
      %v1482 = vadd.f32 %v1480, %v1481
      %v1483 = vrot.slane %v1482, 1
      %v1484 = vadd.f32 %v1482, %v1483
      %v1485 = vsel %vm847, %v714, 0.0
      %v1486 = vrot.slane %v1485, 4
      %v1487 = vadd.f32 %v1485, %v1486
      %v1488 = vrot.slane %v1487, 2
      %v1489 = vadd.f32 %v1487, %v1488
      %v1490 = vrot.slane %v1489, 1
      %v1491 = vadd.f32 %v1489, %v1490
      %v1492 = vsel %vm847, %v715, 0.0
      %v1493 = vrot.slane %v1492, 4
      %v1494 = vadd.f32 %v1492, %v1493
      %v1495 = vrot.slane %v1494, 2
      %v1496 = vadd.f32 %v1494, %v1495
      %v1497 = vrot.slane %v1496, 1
      %v1498 = vadd.f32 %v1496, %v1497
      %v1499 = vsel %vm847, %v716, 0.0
      %v1500 = vrot.slane %v1499, 4
      %v1501 = vadd.f32 %v1499, %v1500
      %v1502 = vrot.slane %v1501, 2
      %v1503 = vadd.f32 %v1501, %v1502
      %v1504 = vrot.slane %v1503, 1
      %v1505 = vadd.f32 %v1503, %v1504
      %v1506 = vsel %vm847, %v717, 0.0
      %v1507 = vrot.slane %v1506, 4
      %v1508 = vadd.f32 %v1506, %v1507
      %v1509 = vrot.slane %v1508, 2
      %v1510 = vadd.f32 %v1508, %v1509
      %v1511 = vrot.slane %v1510, 1
      %v1512 = vadd.f32 %v1510, %v1511
      %v1513 = vsel %vm847, %v718, 0.0
      %v1514 = vrot.slane %v1513, 4
      %v1515 = vadd.f32 %v1513, %v1514
      %v1516 = vrot.slane %v1515, 2
      %v1517 = vadd.f32 %v1515, %v1516
      %v1518 = vrot.slane %v1517, 1
      %v1519 = vadd.f32 %v1517, %v1518
      %v1520 = vsel %vm847, %v719, 0.0
      %v1521 = vrot.slane %v1520, 4
      %v1522 = vadd.f32 %v1520, %v1521
      %v1523 = vrot.slane %v1522, 2
      %v1524 = vadd.f32 %v1522, %v1523
      %v1525 = vrot.slane %v1524, 1
      %v1526 = vadd.f32 %v1524, %v1525
      %v1527 = vsel %vm847, %v720, 0.0
      %v1528 = vrot.slane %v1527, 4
      %v1529 = vadd.f32 %v1527, %v1528
      %v1530 = vrot.slane %v1529, 2
      %v1531 = vadd.f32 %v1529, %v1530
      %v1532 = vrot.slane %v1531, 1
      %v1533 = vadd.f32 %v1531, %v1532
      %v1534 = vsel %vm847, %v721, 0.0
      %v1535 = vrot.slane %v1534, 4
      %v1536 = vadd.f32 %v1534, %v1535
      %v1537 = vrot.slane %v1536, 2
      %v1538 = vadd.f32 %v1536, %v1537
      %v1539 = vrot.slane %v1538, 1
      %v1540 = vadd.f32 %v1538, %v1539
      %v1541 = vsel %vm847, %v722, 0.0
      %v1542 = vrot.slane %v1541, 4
      %v1543 = vadd.f32 %v1541, %v1542
      %v1544 = vrot.slane %v1543, 2
      %v1545 = vadd.f32 %v1543, %v1544
      %v1546 = vrot.slane %v1545, 1
      %v1547 = vadd.f32 %v1545, %v1546
      %v1548 = vsel %vm847, %v723, 0.0
      %v1549 = vrot.slane %v1548, 4
      %v1550 = vadd.f32 %v1548, %v1549
      %v1551 = vrot.slane %v1550, 2
      %v1552 = vadd.f32 %v1550, %v1551
      %v1553 = vrot.slane %v1552, 1
      %v1554 = vadd.f32 %v1552, %v1553
      %v1555 = vsel %vm847, %v724, 0.0
      %v1556 = vrot.slane %v1555, 4
      %v1557 = vadd.f32 %v1555, %v1556
      %v1558 = vrot.slane %v1557, 2
      %v1559 = vadd.f32 %v1557, %v1558
      %v1560 = vrot.slane %v1559, 1
      %v1561 = vadd.f32 %v1559, %v1560
      %v1562 = vsel %vm847, %v725, 0.0
      %v1563 = vrot.slane %v1562, 4
      %v1564 = vadd.f32 %v1562, %v1563
      %v1565 = vrot.slane %v1564, 2
      %v1566 = vadd.f32 %v1564, %v1565
      %v1567 = vrot.slane %v1566, 1
      %v1568 = vadd.f32 %v1566, %v1567
      %v1569 = vsel %vm847, %v726, 0.0
      %v1570 = vrot.slane %v1569, 4
      %v1571 = vadd.f32 %v1569, %v1570
      %v1572 = vrot.slane %v1571, 2
      %v1573 = vadd.f32 %v1571, %v1572
      %v1574 = vrot.slane %v1573, 1
      %v1575 = vadd.f32 %v1573, %v1574
      %v1576 = vsel %vm847, %v727, 0.0
      %v1577 = vrot.slane %v1576, 4
      %v1578 = vadd.f32 %v1576, %v1577
      %v1579 = vrot.slane %v1578, 2
      %v1580 = vadd.f32 %v1578, %v1579
      %v1581 = vrot.slane %v1580, 1
      %v1582 = vadd.f32 %v1580, %v1581
      %v1583 = vsel %vm847, %v728, 0.0
      %v1584 = vrot.slane %v1583, 4
      %v1585 = vadd.f32 %v1583, %v1584
      %v1586 = vrot.slane %v1585, 2
      %v1587 = vadd.f32 %v1585, %v1586
      %v1588 = vrot.slane %v1587, 1
      %v1589 = vadd.f32 %v1587, %v1588
      %v1590 = vsel %vm847, %v729, 0.0
      %v1591 = vrot.slane %v1590, 4
      %v1592 = vadd.f32 %v1590, %v1591
      %v1593 = vrot.slane %v1592, 2
      %v1594 = vadd.f32 %v1592, %v1593
      %v1595 = vrot.slane %v1594, 1
      %v1596 = vadd.f32 %v1594, %v1595
      %v1597 = vsel %vm847, %v730, 0.0
      %v1598 = vrot.slane %v1597, 4
      %v1599 = vadd.f32 %v1597, %v1598
      %v1600 = vrot.slane %v1599, 2
      %v1601 = vadd.f32 %v1599, %v1600
      %v1602 = vrot.slane %v1601, 1
      %v1603 = vadd.f32 %v1601, %v1602
      %v1604 = vsel %vm847, %v731, 0.0
      %v1605 = vrot.slane %v1604, 4
      %v1606 = vadd.f32 %v1604, %v1605
      %v1607 = vrot.slane %v1606, 2
      %v1608 = vadd.f32 %v1606, %v1607
      %v1609 = vrot.slane %v1608, 1
      %v1610 = vadd.f32 %v1608, %v1609
      %v1611 = vsel %vm847, %v732, 0.0
      %v1612 = vrot.slane %v1611, 4
      %v1613 = vadd.f32 %v1611, %v1612
      %v1614 = vrot.slane %v1613, 2
      %v1615 = vadd.f32 %v1613, %v1614
      %v1616 = vrot.slane %v1615, 1
      %v1617 = vadd.f32 %v1615, %v1616
      %v1618 = vsel %vm847, %v733, 0.0
      %v1619 = vrot.slane %v1618, 4
      %v1620 = vadd.f32 %v1618, %v1619
      %v1621 = vrot.slane %v1620, 2
      %v1622 = vadd.f32 %v1620, %v1621
      %v1623 = vrot.slane %v1622, 1
      %v1624 = vadd.f32 %v1622, %v1623
      %v1625 = vsel %vm847, %v734, 0.0
      %v1626 = vrot.slane %v1625, 4
      %v1627 = vadd.f32 %v1625, %v1626
      %v1628 = vrot.slane %v1627, 2
      %v1629 = vadd.f32 %v1627, %v1628
      %v1630 = vrot.slane %v1629, 1
      %v1631 = vadd.f32 %v1629, %v1630
      %v1632 = vsel %vm847, %v735, 0.0
      %v1633 = vrot.slane %v1632, 4
      %v1634 = vadd.f32 %v1632, %v1633
      %v1635 = vrot.slane %v1634, 2
      %v1636 = vadd.f32 %v1634, %v1635
      %v1637 = vrot.slane %v1636, 1
      %v1638 = vadd.f32 %v1636, %v1637
      %v1639 = vsel %vm847, %v736, 0.0
      %v1640 = vrot.slane %v1639, 4
      %v1641 = vadd.f32 %v1639, %v1640
      %v1642 = vrot.slane %v1641, 2
      %v1643 = vadd.f32 %v1641, %v1642
      %v1644 = vrot.slane %v1643, 1
      %v1645 = vadd.f32 %v1643, %v1644
      %v1646 = vsel %vm847, %v737, 0.0
      %v1647 = vrot.slane %v1646, 4
      %v1648 = vadd.f32 %v1646, %v1647
      %v1649 = vrot.slane %v1648, 2
      %v1650 = vadd.f32 %v1648, %v1649
      %v1651 = vrot.slane %v1650, 1
      %v1652 = vadd.f32 %v1650, %v1651
      %v1653 = vsel %vm847, %v738, 0.0
      %v1654 = vrot.slane %v1653, 4
      %v1655 = vadd.f32 %v1653, %v1654
      %v1656 = vrot.slane %v1655, 2
      %v1657 = vadd.f32 %v1655, %v1656
      %v1658 = vrot.slane %v1657, 1
      %v1659 = vadd.f32 %v1657, %v1658
      %v1660 = vsel %vm847, %v739, 0.0
      %v1661 = vrot.slane %v1660, 4
      %v1662 = vadd.f32 %v1660, %v1661
      %v1663 = vrot.slane %v1662, 2
      %v1664 = vadd.f32 %v1662, %v1663
      %v1665 = vrot.slane %v1664, 1
      %v1666 = vadd.f32 %v1664, %v1665
      %v1667 = vsel %vm847, %v740, 0.0
      %v1668 = vrot.slane %v1667, 4
      %v1669 = vadd.f32 %v1667, %v1668
      %v1670 = vrot.slane %v1669, 2
      %v1671 = vadd.f32 %v1669, %v1670
      %v1672 = vrot.slane %v1671, 1
      %v1673 = vadd.f32 %v1671, %v1672
      %v1674 = vsel %vm847, %v741, 0.0
      %v1675 = vrot.slane %v1674, 4
      %v1676 = vadd.f32 %v1674, %v1675
      %v1677 = vrot.slane %v1676, 2
      %v1678 = vadd.f32 %v1676, %v1677
      %v1679 = vrot.slane %v1678, 1
      %v1680 = vadd.f32 %v1678, %v1679
      %v1681 = vsel %vm847, %v742, 0.0
      %v1682 = vrot.slane %v1681, 4
      %v1683 = vadd.f32 %v1681, %v1682
      %v1684 = vrot.slane %v1683, 2
      %v1685 = vadd.f32 %v1683, %v1684
      %v1686 = vrot.slane %v1685, 1
      %v1687 = vadd.f32 %v1685, %v1686
      %v1688 = vsel %vm847, %v743, 0.0
      %v1689 = vrot.slane %v1688, 4
      %v1690 = vadd.f32 %v1688, %v1689
      %v1691 = vrot.slane %v1690, 2
      %v1692 = vadd.f32 %v1690, %v1691
      %v1693 = vrot.slane %v1692, 1
      %v1694 = vadd.f32 %v1692, %v1693
      %v1695 = vsel %vm847, %v744, 0.0
      %v1696 = vrot.slane %v1695, 4
      %v1697 = vadd.f32 %v1695, %v1696
      %v1698 = vrot.slane %v1697, 2
      %v1699 = vadd.f32 %v1697, %v1698
      %v1700 = vrot.slane %v1699, 1
      %v1701 = vadd.f32 %v1699, %v1700
      %v1702 = vsel %vm847, %v745, 0.0
      %v1703 = vrot.slane %v1702, 4
      %v1704 = vadd.f32 %v1702, %v1703
      %v1705 = vrot.slane %v1704, 2
      %v1706 = vadd.f32 %v1704, %v1705
      %v1707 = vrot.slane %v1706, 1
      %v1708 = vadd.f32 %v1706, %v1707
      %v1709 = vsel %vm847, %v746, 0.0
      %v1710 = vrot.slane %v1709, 4
      %v1711 = vadd.f32 %v1709, %v1710
      %v1712 = vrot.slane %v1711, 2
      %v1713 = vadd.f32 %v1711, %v1712
      %v1714 = vrot.slane %v1713, 1
      %v1715 = vadd.f32 %v1713, %v1714
      %v1716 = vsel %vm847, %v747, 0.0
      %v1717 = vrot.slane %v1716, 4
      %v1718 = vadd.f32 %v1716, %v1717
      %v1719 = vrot.slane %v1718, 2
      %v1720 = vadd.f32 %v1718, %v1719
      %v1721 = vrot.slane %v1720, 1
      %v1722 = vadd.f32 %v1720, %v1721
      %v1723 = vsel %vm847, %v748, 0.0
      %v1724 = vrot.slane %v1723, 4
      %v1725 = vadd.f32 %v1723, %v1724
      %v1726 = vrot.slane %v1725, 2
      %v1727 = vadd.f32 %v1725, %v1726
      %v1728 = vrot.slane %v1727, 1
      %v1729 = vadd.f32 %v1727, %v1728
      %v1730 = vsel %vm847, %v749, 0.0
      %v1731 = vrot.slane %v1730, 4
      %v1732 = vadd.f32 %v1730, %v1731
      %v1733 = vrot.slane %v1732, 2
      %v1734 = vadd.f32 %v1732, %v1733
      %v1735 = vrot.slane %v1734, 1
      %v1736 = vadd.f32 %v1734, %v1735
      %v1737 = vsel %vm847, %v750, 0.0
      %v1738 = vrot.slane %v1737, 4
      %v1739 = vadd.f32 %v1737, %v1738
      %v1740 = vrot.slane %v1739, 2
      %v1741 = vadd.f32 %v1739, %v1740
      %v1742 = vrot.slane %v1741, 1
      %v1743 = vadd.f32 %v1741, %v1742
      %v1744 = vsel %vm847, %v751, 0.0
      %v1745 = vrot.slane %v1744, 4
      %v1746 = vadd.f32 %v1744, %v1745
      %v1747 = vrot.slane %v1746, 2
      %v1748 = vadd.f32 %v1746, %v1747
      %v1749 = vrot.slane %v1748, 1
      %v1750 = vadd.f32 %v1748, %v1749
      %v1751 = vsel %vm847, %v752, 0.0
      %v1752 = vrot.slane %v1751, 4
      %v1753 = vadd.f32 %v1751, %v1752
      %v1754 = vrot.slane %v1753, 2
      %v1755 = vadd.f32 %v1753, %v1754
      %v1756 = vrot.slane %v1755, 1
      %v1757 = vadd.f32 %v1755, %v1756
      %v1758 = vsel %vm847, %v753, 0.0
      %v1759 = vrot.slane %v1758, 4
      %v1760 = vadd.f32 %v1758, %v1759
      %v1761 = vrot.slane %v1760, 2
      %v1762 = vadd.f32 %v1760, %v1761
      %v1763 = vrot.slane %v1762, 1
      %v1764 = vadd.f32 %v1762, %v1763
      %v1765 = vsel %vm847, %v754, 0.0
      %v1766 = vrot.slane %v1765, 4
      %v1767 = vadd.f32 %v1765, %v1766
      %v1768 = vrot.slane %v1767, 2
      %v1769 = vadd.f32 %v1767, %v1768
      %v1770 = vrot.slane %v1769, 1
      %v1771 = vadd.f32 %v1769, %v1770
      %v1772 = vsel %vm847, %v755, 0.0
      %v1773 = vrot.slane %v1772, 4
      %v1774 = vadd.f32 %v1772, %v1773
      %v1775 = vrot.slane %v1774, 2
      %v1776 = vadd.f32 %v1774, %v1775
      %v1777 = vrot.slane %v1776, 1
      %v1778 = vadd.f32 %v1776, %v1777
      %v1779 = vsel %vm847, %v756, 0.0
      %v1780 = vrot.slane %v1779, 4
      %v1781 = vadd.f32 %v1779, %v1780
      %v1782 = vrot.slane %v1781, 2
      %v1783 = vadd.f32 %v1781, %v1782
      %v1784 = vrot.slane %v1783, 1
      %v1785 = vadd.f32 %v1783, %v1784
      %v1786 = vsel %vm847, %v757, 0.0
      %v1787 = vrot.slane %v1786, 4
      %v1788 = vadd.f32 %v1786, %v1787
      %v1789 = vrot.slane %v1788, 2
      %v1790 = vadd.f32 %v1788, %v1789
      %v1791 = vrot.slane %v1790, 1
      %v1792 = vadd.f32 %v1790, %v1791
      %v1793 = vsel %vm847, %v758, 0.0
      %v1794 = vrot.slane %v1793, 4
      %v1795 = vadd.f32 %v1793, %v1794
      %v1796 = vrot.slane %v1795, 2
      %v1797 = vadd.f32 %v1795, %v1796
      %v1798 = vrot.slane %v1797, 1
      %v1799 = vadd.f32 %v1797, %v1798
      %v1800 = vsel %vm847, %v759, 0.0
      %v1801 = vrot.slane %v1800, 4
      %v1802 = vadd.f32 %v1800, %v1801
      %v1803 = vrot.slane %v1802, 2
      %v1804 = vadd.f32 %v1802, %v1803
      %v1805 = vrot.slane %v1804, 1
      %v1806 = vadd.f32 %v1804, %v1805
      %v1807 = vsel %vm847, %v760, 0.0
      %v1808 = vrot.slane %v1807, 4
      %v1809 = vadd.f32 %v1807, %v1808
      %v1810 = vrot.slane %v1809, 2
      %v1811 = vadd.f32 %v1809, %v1810
      %v1812 = vrot.slane %v1811, 1
      %v1813 = vadd.f32 %v1811, %v1812
      %v1814 = vsel %vm847, %v761, 0.0
      %v1815 = vrot.slane %v1814, 4
      %v1816 = vadd.f32 %v1814, %v1815
      %v1817 = vrot.slane %v1816, 2
      %v1818 = vadd.f32 %v1816, %v1817
      %v1819 = vrot.slane %v1818, 1
      %v1820 = vadd.f32 %v1818, %v1819
      %v1821 = vsel %vm847, %v762, 0.0
      %v1822 = vrot.slane %v1821, 4
      %v1823 = vadd.f32 %v1821, %v1822
      %v1824 = vrot.slane %v1823, 2
      %v1825 = vadd.f32 %v1823, %v1824
      %v1826 = vrot.slane %v1825, 1
      %v1827 = vadd.f32 %v1825, %v1826
      %v1828 = vsel %vm847, %v763, 0.0
      %v1829 = vrot.slane %v1828, 4
      %v1830 = vadd.f32 %v1828, %v1829
      %v1831 = vrot.slane %v1830, 2
      %v1832 = vadd.f32 %v1830, %v1831
      %v1833 = vrot.slane %v1832, 1
      %v1834 = vadd.f32 %v1832, %v1833
      %v1835 = vsel %vm847, %v764, 0.0
      %v1836 = vrot.slane %v1835, 4
      %v1837 = vadd.f32 %v1835, %v1836
      %v1838 = vrot.slane %v1837, 2
      %v1839 = vadd.f32 %v1837, %v1838
      %v1840 = vrot.slane %v1839, 1
      %v1841 = vadd.f32 %v1839, %v1840
      %v1842 = vsel %vm847, %v765, 0.0
      %v1843 = vrot.slane %v1842, 4
      %v1844 = vadd.f32 %v1842, %v1843
      %v1845 = vrot.slane %v1844, 2
      %v1846 = vadd.f32 %v1844, %v1845
      %v1847 = vrot.slane %v1846, 1
      %v1848 = vadd.f32 %v1846, %v1847
      %v1849 = vsel %vm847, %v766, 0.0
      %v1850 = vrot.slane %v1849, 4
      %v1851 = vadd.f32 %v1849, %v1850
      %v1852 = vrot.slane %v1851, 2
      %v1853 = vadd.f32 %v1851, %v1852
      %v1854 = vrot.slane %v1853, 1
      %v1855 = vadd.f32 %v1853, %v1854
      %v1856 = vsel %vm847, %v767, 0.0
      %v1857 = vrot.slane %v1856, 4
      %v1858 = vadd.f32 %v1856, %v1857
      %v1859 = vrot.slane %v1858, 2
      %v1860 = vadd.f32 %v1858, %v1859
      %v1861 = vrot.slane %v1860, 1
      %v1862 = vadd.f32 %v1860, %v1861
      %v1863 = vsel %vm847, %v768, 0.0
      %v1864 = vrot.slane %v1863, 4
      %v1865 = vadd.f32 %v1863, %v1864
      %v1866 = vrot.slane %v1865, 2
      %v1867 = vadd.f32 %v1865, %v1866
      %v1868 = vrot.slane %v1867, 1
      %v1869 = vadd.f32 %v1867, %v1868
      %v1870 = vsel %vm847, %v769, 0.0
      %v1871 = vrot.slane %v1870, 4
      %v1872 = vadd.f32 %v1870, %v1871
      %v1873 = vrot.slane %v1872, 2
      %v1874 = vadd.f32 %v1872, %v1873
      %v1875 = vrot.slane %v1874, 1
      %v1876 = vadd.f32 %v1874, %v1875
      %v1877 = vsel %vm847, %v770, 0.0
      %v1878 = vrot.slane %v1877, 4
      %v1879 = vadd.f32 %v1877, %v1878
      %v1880 = vrot.slane %v1879, 2
      %v1881 = vadd.f32 %v1879, %v1880
      %v1882 = vrot.slane %v1881, 1
      %v1883 = vadd.f32 %v1881, %v1882
      %v1884 = vsel %vm847, %v771, 0.0
      %v1885 = vrot.slane %v1884, 4
      %v1886 = vadd.f32 %v1884, %v1885
      %v1887 = vrot.slane %v1886, 2
      %v1888 = vadd.f32 %v1886, %v1887
      %v1889 = vrot.slane %v1888, 1
      %v1890 = vadd.f32 %v1888, %v1889
      %v1891 = vsel %vm847, %v772, 0.0
      %v1892 = vrot.slane %v1891, 4
      %v1893 = vadd.f32 %v1891, %v1892
      %v1894 = vrot.slane %v1893, 2
      %v1895 = vadd.f32 %v1893, %v1894
      %v1896 = vrot.slane %v1895, 1
      %v1897 = vadd.f32 %v1895, %v1896
      %v1898 = vsel %vm847, %v773, 0.0
      %v1899 = vrot.slane %v1898, 4
      %v1900 = vadd.f32 %v1898, %v1899
      %v1901 = vrot.slane %v1900, 2
      %v1902 = vadd.f32 %v1900, %v1901
      %v1903 = vrot.slane %v1902, 1
      %v1904 = vadd.f32 %v1902, %v1903
      %v1905 = vsel %vm847, %v774, 0.0
      %v1906 = vrot.slane %v1905, 4
      %v1907 = vadd.f32 %v1905, %v1906
      %v1908 = vrot.slane %v1907, 2
      %v1909 = vadd.f32 %v1907, %v1908
      %v1910 = vrot.slane %v1909, 1
      %v1911 = vadd.f32 %v1909, %v1910
      %v1912 = vsel %vm847, %v775, 0.0
      %v1913 = vrot.slane %v1912, 4
      %v1914 = vadd.f32 %v1912, %v1913
      %v1915 = vrot.slane %v1914, 2
      %v1916 = vadd.f32 %v1914, %v1915
      %v1917 = vrot.slane %v1916, 1
      %v1918 = vadd.f32 %v1916, %v1917
      %v1919 = vsel %vm847, %v776, 0.0
      %v1920 = vrot.slane %v1919, 4
      %v1921 = vadd.f32 %v1919, %v1920
      %v1922 = vrot.slane %v1921, 2
      %v1923 = vadd.f32 %v1921, %v1922
      %v1924 = vrot.slane %v1923, 1
      %v1925 = vadd.f32 %v1923, %v1924
      %v1926 = vsel %vm847, %v777, 0.0
      %v1927 = vrot.slane %v1926, 4
      %v1928 = vadd.f32 %v1926, %v1927
      %v1929 = vrot.slane %v1928, 2
      %v1930 = vadd.f32 %v1928, %v1929
      %v1931 = vrot.slane %v1930, 1
      %v1932 = vadd.f32 %v1930, %v1931
      %v1933 = vsel %vm847, %v778, 0.0
      %v1934 = vrot.slane %v1933, 4
      %v1935 = vadd.f32 %v1933, %v1934
      %v1936 = vrot.slane %v1935, 2
      %v1937 = vadd.f32 %v1935, %v1936
      %v1938 = vrot.slane %v1937, 1
      %v1939 = vadd.f32 %v1937, %v1938
      %v1940 = vsel %vm847, %v779, 0.0
      %v1941 = vrot.slane %v1940, 4
      %v1942 = vadd.f32 %v1940, %v1941
      %v1943 = vrot.slane %v1942, 2
      %v1944 = vadd.f32 %v1942, %v1943
      %v1945 = vrot.slane %v1944, 1
      %v1946 = vadd.f32 %v1944, %v1945
      %v1947 = vsel %vm847, %v780, 0.0
      %v1948 = vrot.slane %v1947, 4
      %v1949 = vadd.f32 %v1947, %v1948
      %v1950 = vrot.slane %v1949, 2
      %v1951 = vadd.f32 %v1949, %v1950
      %v1952 = vrot.slane %v1951, 1
      %v1953 = vadd.f32 %v1951, %v1952
      %v1954 = vsel %vm847, %v781, 0.0
      %v1955 = vrot.slane %v1954, 4
      %v1956 = vadd.f32 %v1954, %v1955
      %v1957 = vrot.slane %v1956, 2
      %v1958 = vadd.f32 %v1956, %v1957
      %v1959 = vrot.slane %v1958, 1
      %v1960 = vadd.f32 %v1958, %v1959
      %v1961 = vsel %vm847, %v782, 0.0
      %v1962 = vrot.slane %v1961, 4
      %v1963 = vadd.f32 %v1961, %v1962
      %v1964 = vrot.slane %v1963, 2
      %v1965 = vadd.f32 %v1963, %v1964
      %v1966 = vrot.slane %v1965, 1
      %v1967 = vadd.f32 %v1965, %v1966
      %v1968 = vsel %vm847, %v783, 0.0
      %v1969 = vrot.slane %v1968, 4
      %v1970 = vadd.f32 %v1968, %v1969
      %v1971 = vrot.slane %v1970, 2
      %v1972 = vadd.f32 %v1970, %v1971
      %v1973 = vrot.slane %v1972, 1
      %v1974 = vadd.f32 %v1972, %v1973
      %v1975 = vsel %vm847, %v784, 0.0
      %v1976 = vrot.slane %v1975, 4
      %v1977 = vadd.f32 %v1975, %v1976
      %v1978 = vrot.slane %v1977, 2
      %v1979 = vadd.f32 %v1977, %v1978
      %v1980 = vrot.slane %v1979, 1
      %v1981 = vadd.f32 %v1979, %v1980
      %v1982 = vsel %vm847, %v785, 0.0
      %v1983 = vrot.slane %v1982, 4
      %v1984 = vadd.f32 %v1982, %v1983
      %v1985 = vrot.slane %v1984, 2
      %v1986 = vadd.f32 %v1984, %v1985
      %v1987 = vrot.slane %v1986, 1
      %v1988 = vadd.f32 %v1986, %v1987
      %v1989 = vsel %vm847, %v786, 0.0
      %v1990 = vrot.slane %v1989, 4
      %v1991 = vadd.f32 %v1989, %v1990
      %v1992 = vrot.slane %v1991, 2
      %v1993 = vadd.f32 %v1991, %v1992
      %v1994 = vrot.slane %v1993, 1
      %v1995 = vadd.f32 %v1993, %v1994
      %v1996 = vsel %vm847, %v787, 0.0
      %v1997 = vrot.slane %v1996, 4
      %v1998 = vadd.f32 %v1996, %v1997
      %v1999 = vrot.slane %v1998, 2
      %v2000 = vadd.f32 %v1998, %v1999
      %v2001 = vrot.slane %v2000, 1
      %v2002 = vadd.f32 %v2000, %v2001
      %v2003 = vsel %vm847, %v788, 0.0
      %v2004 = vrot.slane %v2003, 4
      %v2005 = vadd.f32 %v2003, %v2004
      %v2006 = vrot.slane %v2005, 2
      %v2007 = vadd.f32 %v2005, %v2006
      %v2008 = vrot.slane %v2007, 1
      %v2009 = vadd.f32 %v2007, %v2008
      %v2010 = vsel %vm847, %v789, 0.0
      %v2011 = vrot.slane %v2010, 4
      %v2012 = vadd.f32 %v2010, %v2011
      %v2013 = vrot.slane %v2012, 2
      %v2014 = vadd.f32 %v2012, %v2013
      %v2015 = vrot.slane %v2014, 1
      %v2016 = vadd.f32 %v2014, %v2015
      %v2017 = vsel %vm847, %v790, 0.0
      %v2018 = vrot.slane %v2017, 4
      %v2019 = vadd.f32 %v2017, %v2018
      %v2020 = vrot.slane %v2019, 2
      %v2021 = vadd.f32 %v2019, %v2020
      %v2022 = vrot.slane %v2021, 1
      %v2023 = vadd.f32 %v2021, %v2022
      %v2024 = vsel %vm847, %v791, 0.0
      %v2025 = vrot.slane %v2024, 4
      %v2026 = vadd.f32 %v2024, %v2025
      %v2027 = vrot.slane %v2026, 2
      %v2028 = vadd.f32 %v2026, %v2027
      %v2029 = vrot.slane %v2028, 1
      %v2030 = vadd.f32 %v2028, %v2029
      %v2031 = vsel %vm847, %v792, 0.0
      %v2032 = vrot.slane %v2031, 4
      %v2033 = vadd.f32 %v2031, %v2032
      %v2034 = vrot.slane %v2033, 2
      %v2035 = vadd.f32 %v2033, %v2034
      %v2036 = vrot.slane %v2035, 1
      %v2037 = vadd.f32 %v2035, %v2036
      %v2038 = vsel %vm847, %v793, 0.0
      %v2039 = vrot.slane %v2038, 4
      %v2040 = vadd.f32 %v2038, %v2039
      %v2041 = vrot.slane %v2040, 2
      %v2042 = vadd.f32 %v2040, %v2041
      %v2043 = vrot.slane %v2042, 1
      %v2044 = vadd.f32 %v2042, %v2043
      %v2045 = vsel %vm847, %v794, 0.0
      %v2046 = vrot.slane %v2045, 4
      %v2047 = vadd.f32 %v2045, %v2046
      %v2048 = vrot.slane %v2047, 2
      %v2049 = vadd.f32 %v2047, %v2048
      %v2050 = vrot.slane %v2049, 1
      %v2051 = vadd.f32 %v2049, %v2050
      %v2052 = vsel %vm847, %v795, 0.0
      %v2053 = vrot.slane %v2052, 4
      %v2054 = vadd.f32 %v2052, %v2053
      %v2055 = vrot.slane %v2054, 2
      %v2056 = vadd.f32 %v2054, %v2055
      %v2057 = vrot.slane %v2056, 1
      %v2058 = vadd.f32 %v2056, %v2057
      %v2059 = vsel %vm847, %v796, 0.0
      %v2060 = vrot.slane %v2059, 4
      %v2061 = vadd.f32 %v2059, %v2060
      %v2062 = vrot.slane %v2061, 2
      %v2063 = vadd.f32 %v2061, %v2062
      %v2064 = vrot.slane %v2063, 1
      %v2065 = vadd.f32 %v2063, %v2064
      %v2066 = vsel %vm847, %v797, 0.0
      %v2067 = vrot.slane %v2066, 4
      %v2068 = vadd.f32 %v2066, %v2067
      %v2069 = vrot.slane %v2068, 2
      %v2070 = vadd.f32 %v2068, %v2069
      %v2071 = vrot.slane %v2070, 1
      %v2072 = vadd.f32 %v2070, %v2071
      %v2073 = vsel %vm847, %v798, 0.0
      %v2074 = vrot.slane %v2073, 4
      %v2075 = vadd.f32 %v2073, %v2074
      %v2076 = vrot.slane %v2075, 2
      %v2077 = vadd.f32 %v2075, %v2076
      %v2078 = vrot.slane %v2077, 1
      %v2079 = vadd.f32 %v2077, %v2078
      %v2080 = vsel %vm847, %v799, 0.0
      %v2081 = vrot.slane %v2080, 4
      %v2082 = vadd.f32 %v2080, %v2081
      %v2083 = vrot.slane %v2082, 2
      %v2084 = vadd.f32 %v2082, %v2083
      %v2085 = vrot.slane %v2084, 1
      %v2086 = vadd.f32 %v2084, %v2085
      %v2087 = vsel %vm847, %v800, 0.0
      %v2088 = vrot.slane %v2087, 4
      %v2089 = vadd.f32 %v2087, %v2088
      %v2090 = vrot.slane %v2089, 2
      %v2091 = vadd.f32 %v2089, %v2090
      %v2092 = vrot.slane %v2091, 1
      %v2093 = vadd.f32 %v2091, %v2092
      %v2094 = vsel %vm847, %v801, 0.0
      %v2095 = vrot.slane %v2094, 4
      %v2096 = vadd.f32 %v2094, %v2095
      %v2097 = vrot.slane %v2096, 2
      %v2098 = vadd.f32 %v2096, %v2097
      %v2099 = vrot.slane %v2098, 1
      %v2100 = vadd.f32 %v2098, %v2099
      %v2101 = vsel %vm847, %v802, 0.0
      %v2102 = vrot.slane %v2101, 4
      %v2103 = vadd.f32 %v2101, %v2102
      %v2104 = vrot.slane %v2103, 2
      %v2105 = vadd.f32 %v2103, %v2104
      %v2106 = vrot.slane %v2105, 1
      %v2107 = vadd.f32 %v2105, %v2106
      %v2108 = vsel %vm847, %v803, 0.0
      %v2109 = vrot.slane %v2108, 4
      %v2110 = vadd.f32 %v2108, %v2109
      %v2111 = vrot.slane %v2110, 2
      %v2112 = vadd.f32 %v2110, %v2111
      %v2113 = vrot.slane %v2112, 1
      %v2114 = vadd.f32 %v2112, %v2113
      %v2115 = vsel %vm847, %v804, 0.0
      %v2116 = vrot.slane %v2115, 4
      %v2117 = vadd.f32 %v2115, %v2116
      %v2118 = vrot.slane %v2117, 2
      %v2119 = vadd.f32 %v2117, %v2118
      %v2120 = vrot.slane %v2119, 1
      %v2121 = vadd.f32 %v2119, %v2120
      %v2122 = vsel %vm847, %v805, 0.0
      %v2123 = vrot.slane %v2122, 4
      %v2124 = vadd.f32 %v2122, %v2123
      %v2125 = vrot.slane %v2124, 2
      %v2126 = vadd.f32 %v2124, %v2125
      %v2127 = vrot.slane %v2126, 1
      %v2128 = vadd.f32 %v2126, %v2127
      %v2129 = vsel %vm847, %v806, 0.0
      %v2130 = vrot.slane %v2129, 4
      %v2131 = vadd.f32 %v2129, %v2130
      %v2132 = vrot.slane %v2131, 2
      %v2133 = vadd.f32 %v2131, %v2132
      %v2134 = vrot.slane %v2133, 1
      %v2135 = vadd.f32 %v2133, %v2134
      %v2136 = vsel %vm847, %v807, 0.0
      %v2137 = vrot.slane %v2136, 4
      %v2138 = vadd.f32 %v2136, %v2137
      %v2139 = vrot.slane %v2138, 2
      %v2140 = vadd.f32 %v2138, %v2139
      %v2141 = vrot.slane %v2140, 1
      %v2142 = vadd.f32 %v2140, %v2141
      %v2143 = vsel %vm847, %v808, 0.0
      %v2144 = vrot.slane %v2143, 4
      %v2145 = vadd.f32 %v2143, %v2144
      %v2146 = vrot.slane %v2145, 2
      %v2147 = vadd.f32 %v2145, %v2146
      %v2148 = vrot.slane %v2147, 1
      %v2149 = vadd.f32 %v2147, %v2148
      %v2150 = vsel %vm847, %v809, 0.0
      %v2151 = vrot.slane %v2150, 4
      %v2152 = vadd.f32 %v2150, %v2151
      %v2153 = vrot.slane %v2152, 2
      %v2154 = vadd.f32 %v2152, %v2153
      %v2155 = vrot.slane %v2154, 1
      %v2156 = vadd.f32 %v2154, %v2155
      %v2157 = vsel %vm847, %v810, 0.0
      %v2158 = vrot.slane %v2157, 4
      %v2159 = vadd.f32 %v2157, %v2158
      %v2160 = vrot.slane %v2159, 2
      %v2161 = vadd.f32 %v2159, %v2160
      %v2162 = vrot.slane %v2161, 1
      %v2163 = vadd.f32 %v2161, %v2162
      %v2164 = vsel %vm847, %v811, 0.0
      %v2165 = vrot.slane %v2164, 4
      %v2166 = vadd.f32 %v2164, %v2165
      %v2167 = vrot.slane %v2166, 2
      %v2168 = vadd.f32 %v2166, %v2167
      %v2169 = vrot.slane %v2168, 1
      %v2170 = vadd.f32 %v2168, %v2169
      %v2171 = vsel %vm847, %v812, 0.0
      %v2172 = vrot.slane %v2171, 4
      %v2173 = vadd.f32 %v2171, %v2172
      %v2174 = vrot.slane %v2173, 2
      %v2175 = vadd.f32 %v2173, %v2174
      %v2176 = vrot.slane %v2175, 1
      %v2177 = vadd.f32 %v2175, %v2176
      %v2178 = vsel %vm847, %v813, 0.0
      %v2179 = vrot.slane %v2178, 4
      %v2180 = vadd.f32 %v2178, %v2179
      %v2181 = vrot.slane %v2180, 2
      %v2182 = vadd.f32 %v2180, %v2181
      %v2183 = vrot.slane %v2182, 1
      %v2184 = vadd.f32 %v2182, %v2183
      %v2185 = vsel %vm847, %v814, 0.0
      %v2186 = vrot.slane %v2185, 4
      %v2187 = vadd.f32 %v2185, %v2186
      %v2188 = vrot.slane %v2187, 2
      %v2189 = vadd.f32 %v2187, %v2188
      %v2190 = vrot.slane %v2189, 1
      %v2191 = vadd.f32 %v2189, %v2190
      %v2192 = vsel %vm847, %v815, 0.0
      %v2193 = vrot.slane %v2192, 4
      %v2194 = vadd.f32 %v2192, %v2193
      %v2195 = vrot.slane %v2194, 2
      %v2196 = vadd.f32 %v2194, %v2195
      %v2197 = vrot.slane %v2196, 1
      %v2198 = vadd.f32 %v2196, %v2197
      %v2199 = vsel %vm847, %v816, 0.0
      %v2200 = vrot.slane %v2199, 4
      %v2201 = vadd.f32 %v2199, %v2200
      %v2202 = vrot.slane %v2201, 2
      %v2203 = vadd.f32 %v2201, %v2202
      %v2204 = vrot.slane %v2203, 1
      %v2205 = vadd.f32 %v2203, %v2204
      %v2206 = vsel %vm847, %v817, 0.0
      %v2207 = vrot.slane %v2206, 4
      %v2208 = vadd.f32 %v2206, %v2207
      %v2209 = vrot.slane %v2208, 2
      %v2210 = vadd.f32 %v2208, %v2209
      %v2211 = vrot.slane %v2210, 1
      %v2212 = vadd.f32 %v2210, %v2211
      %v2213 = vsel %vm847, %v818, 0.0
      %v2214 = vrot.slane %v2213, 4
      %v2215 = vadd.f32 %v2213, %v2214
      %v2216 = vrot.slane %v2215, 2
      %v2217 = vadd.f32 %v2215, %v2216
      %v2218 = vrot.slane %v2217, 1
      %v2219 = vadd.f32 %v2217, %v2218
      %v2220 = vsel %vm847, %v819, 0.0
      %v2221 = vrot.slane %v2220, 4
      %v2222 = vadd.f32 %v2220, %v2221
      %v2223 = vrot.slane %v2222, 2
      %v2224 = vadd.f32 %v2222, %v2223
      %v2225 = vrot.slane %v2224, 1
      %v2226 = vadd.f32 %v2224, %v2225
      %v2227 = vsel %vm847, %v820, 0.0
      %v2228 = vrot.slane %v2227, 4
      %v2229 = vadd.f32 %v2227, %v2228
      %v2230 = vrot.slane %v2229, 2
      %v2231 = vadd.f32 %v2229, %v2230
      %v2232 = vrot.slane %v2231, 1
      %v2233 = vadd.f32 %v2231, %v2232
      %v2234 = vsel %vm847, %v821, 0.0
      %v2235 = vrot.slane %v2234, 4
      %v2236 = vadd.f32 %v2234, %v2235
      %v2237 = vrot.slane %v2236, 2
      %v2238 = vadd.f32 %v2236, %v2237
      %v2239 = vrot.slane %v2238, 1
      %v2240 = vadd.f32 %v2238, %v2239
      %v2241 = vsel %vm847, %v822, 0.0
      %v2242 = vrot.slane %v2241, 4
      %v2243 = vadd.f32 %v2241, %v2242
      %v2244 = vrot.slane %v2243, 2
      %v2245 = vadd.f32 %v2243, %v2244
      %v2246 = vrot.slane %v2245, 1
      %v2247 = vadd.f32 %v2245, %v2246
      %v2248 = vsel %vm847, %v823, 0.0
      %v2249 = vrot.slane %v2248, 4
      %v2250 = vadd.f32 %v2248, %v2249
      %v2251 = vrot.slane %v2250, 2
      %v2252 = vadd.f32 %v2250, %v2251
      %v2253 = vrot.slane %v2252, 1
      %v2254 = vadd.f32 %v2252, %v2253
      %v2255 = vsel %vm847, %v824, 0.0
      %v2256 = vrot.slane %v2255, 4
      %v2257 = vadd.f32 %v2255, %v2256
      %v2258 = vrot.slane %v2257, 2
      %v2259 = vadd.f32 %v2257, %v2258
      %v2260 = vrot.slane %v2259, 1
      %v2261 = vadd.f32 %v2259, %v2260
      %v2262 = vsel %vm847, %v825, 0.0
      %v2263 = vrot.slane %v2262, 4
      %v2264 = vadd.f32 %v2262, %v2263
      %v2265 = vrot.slane %v2264, 2
      %v2266 = vadd.f32 %v2264, %v2265
      %v2267 = vrot.slane %v2266, 1
      %v2268 = vadd.f32 %v2266, %v2267
      %v2269 = vsel %vm847, %v826, 0.0
      %v2270 = vrot.slane %v2269, 4
      %v2271 = vadd.f32 %v2269, %v2270
      %v2272 = vrot.slane %v2271, 2
      %v2273 = vadd.f32 %v2271, %v2272
      %v2274 = vrot.slane %v2273, 1
      %v2275 = vadd.f32 %v2273, %v2274
      %v2276 = vsel %vm847, %v827, 0.0
      %v2277 = vrot.slane %v2276, 4
      %v2278 = vadd.f32 %v2276, %v2277
      %v2279 = vrot.slane %v2278, 2
      %v2280 = vadd.f32 %v2278, %v2279
      %v2281 = vrot.slane %v2280, 1
      %v2282 = vadd.f32 %v2280, %v2281
      %v2283 = vsel %vm847, %v828, 0.0
      %v2284 = vrot.slane %v2283, 4
      %v2285 = vadd.f32 %v2283, %v2284
      %v2286 = vrot.slane %v2285, 2
      %v2287 = vadd.f32 %v2285, %v2286
      %v2288 = vrot.slane %v2287, 1
      %v2289 = vadd.f32 %v2287, %v2288
      %v2290 = vsel %vm847, %v829, 0.0
      %v2291 = vrot.slane %v2290, 4
      %v2292 = vadd.f32 %v2290, %v2291
      %v2293 = vrot.slane %v2292, 2
      %v2294 = vadd.f32 %v2292, %v2293
      %v2295 = vrot.slane %v2294, 1
      %v2296 = vadd.f32 %v2294, %v2295
      %v2297 = vsel %vm847, %v830, 0.0
      %v2298 = vrot.slane %v2297, 4
      %v2299 = vadd.f32 %v2297, %v2298
      %v2300 = vrot.slane %v2299, 2
      %v2301 = vadd.f32 %v2299, %v2300
      %v2302 = vrot.slane %v2301, 1
      %v2303 = vadd.f32 %v2301, %v2302
      %v2304 = vsel %vm847, %v831, 0.0
      %v2305 = vrot.slane %v2304, 4
      %v2306 = vadd.f32 %v2304, %v2305
      %v2307 = vrot.slane %v2306, 2
      %v2308 = vadd.f32 %v2306, %v2307
      %v2309 = vrot.slane %v2308, 1
      %v2310 = vadd.f32 %v2308, %v2309
      %v2311 = vsel %vm847, %v832, 0.0
      %v2312 = vrot.slane %v2311, 4
      %v2313 = vadd.f32 %v2311, %v2312
      %v2314 = vrot.slane %v2313, 2
      %v2315 = vadd.f32 %v2313, %v2314
      %v2316 = vrot.slane %v2315, 1
      %v2317 = vadd.f32 %v2315, %v2316
      %v2318 = vsel %vm847, %v833, 0.0
      %v2319 = vrot.slane %v2318, 4
      %v2320 = vadd.f32 %v2318, %v2319
      %v2321 = vrot.slane %v2320, 2
      %v2322 = vadd.f32 %v2320, %v2321
      %v2323 = vrot.slane %v2322, 1
      %v2324 = vadd.f32 %v2322, %v2323
      %v2325 = vsel %vm847, %v834, 0.0
      %v2326 = vrot.slane %v2325, 4
      %v2327 = vadd.f32 %v2325, %v2326
      %v2328 = vrot.slane %v2327, 2
      %v2329 = vadd.f32 %v2327, %v2328
      %v2330 = vrot.slane %v2329, 1
      %v2331 = vadd.f32 %v2329, %v2330
      %v2332 = vsel %vm847, %v835, 0.0
      %v2333 = vrot.slane %v2332, 4
      %v2334 = vadd.f32 %v2332, %v2333
      %v2335 = vrot.slane %v2334, 2
      %v2336 = vadd.f32 %v2334, %v2335
      %v2337 = vrot.slane %v2336, 1
      %v2338 = vadd.f32 %v2336, %v2337
      %v2339 = vsel %vm847, %v836, 0.0
      %v2340 = vrot.slane %v2339, 4
      %v2341 = vadd.f32 %v2339, %v2340
      %v2342 = vrot.slane %v2341, 2
      %v2343 = vadd.f32 %v2341, %v2342
      %v2344 = vrot.slane %v2343, 1
      %v2345 = vadd.f32 %v2343, %v2344
      %v2346 = vsel %vm847, %v837, 0.0
      %v2347 = vrot.slane %v2346, 4
      %v2348 = vadd.f32 %v2346, %v2347
      %v2349 = vrot.slane %v2348, 2
      %v2350 = vadd.f32 %v2348, %v2349
      %v2351 = vrot.slane %v2350, 1
      %v2352 = vadd.f32 %v2350, %v2351
      %v2353 = vsel %vm847, %v838, 0.0
      %v2354 = vrot.slane %v2353, 4
      %v2355 = vadd.f32 %v2353, %v2354
      %v2356 = vrot.slane %v2355, 2
      %v2357 = vadd.f32 %v2355, %v2356
      %v2358 = vrot.slane %v2357, 1
      %v2359 = vadd.f32 %v2357, %v2358
      %v2360 = vsel %vm847, %v839, 0.0
      %v2361 = vrot.slane %v2360, 4
      %v2362 = vadd.f32 %v2360, %v2361
      %v2363 = vrot.slane %v2362, 2
      %v2364 = vadd.f32 %v2362, %v2363
      %v2365 = vrot.slane %v2364, 1
      %v2366 = vadd.f32 %v2364, %v2365
      %v2367 = vsel %vm847, %v840, 0.0
      %v2368 = vrot.slane %v2367, 4
      %v2369 = vadd.f32 %v2367, %v2368
      %v2370 = vrot.slane %v2369, 2
      %v2371 = vadd.f32 %v2369, %v2370
      %v2372 = vrot.slane %v2371, 1
      %v2373 = vadd.f32 %v2371, %v2372
      %v2374 = vsel %vm847, %v841, 0.0
      %v2375 = vrot.slane %v2374, 4
      %v2376 = vadd.f32 %v2374, %v2375
      %v2377 = vrot.slane %v2376, 2
      %v2378 = vadd.f32 %v2376, %v2377
      %v2379 = vrot.slane %v2378, 1
      %v2380 = vadd.f32 %v2378, %v2379
      %v2381 = vsel %vm847, %v842, 0.0
      %v2382 = vrot.slane %v2381, 4
      %v2383 = vadd.f32 %v2381, %v2382
      %v2384 = vrot.slane %v2383, 2
      %v2385 = vadd.f32 %v2383, %v2384
      %v2386 = vrot.slane %v2385, 1
      %v2387 = vadd.f32 %v2385, %v2386
      %v2388 = vsel %vm847, %v843, 0.0
      %v2389 = vrot.slane %v2388, 4
      %v2390 = vadd.f32 %v2388, %v2389
      %v2391 = vrot.slane %v2390, 2
      %v2392 = vadd.f32 %v2390, %v2391
      %v2393 = vrot.slane %v2392, 1
      %v2394 = vadd.f32 %v2392, %v2393
      %v2395 = vsel %vm847, %v844, 0.0
      %v2396 = vrot.slane %v2395, 4
      %v2397 = vadd.f32 %v2395, %v2396
      %v2398 = vrot.slane %v2397, 2
      %v2399 = vadd.f32 %v2397, %v2398
      %v2400 = vrot.slane %v2399, 1
      %v2401 = vadd.f32 %v2399, %v2400
      %v2402 = vsel %vm847, %v845, 0.0
      %v2403 = vrot.slane %v2402, 4
      %v2404 = vadd.f32 %v2402, %v2403
      %v2405 = vrot.slane %v2404, 2
      %v2406 = vadd.f32 %v2404, %v2405
      %v2407 = vrot.slane %v2406, 1
      %v2408 = vadd.f32 %v2406, %v2407
      %v2409 = vsel %vm847, %v846, 0.0
      %v2410 = vrot.slane %v2409, 4
      %v2411 = vadd.f32 %v2409, %v2410
      %v2412 = vrot.slane %v2411, 2
      %v2413 = vadd.f32 %v2411, %v2412
      %v2414 = vrot.slane %v2413, 1
      %v2415 = vadd.f32 %v2413, %v2414
      %v2416 = vld [vmem:[%s2] sm:$0xf]
      %v2418 = vlaneseq
      %v2419 = vshrl.u32 %v2418, 7
      %v2420 = vsub.s32 0, %v2419
      %v2421 = vrot.slane %v2416, %v2420
      %v2422 = vlaneseq
      %v2423 = vshrl.u32 %v2422, 7
      %v2424 = vsub.s32 1, %v2423
      %v2425 = vrot.slane %v2416, %v2424
      %v2426 = vlaneseq
      %v2427 = vshrl.u32 %v2426, 7
      %v2428 = vsub.s32 2, %v2427
      %v2429 = vrot.slane %v2416, %v2428
      %v2430 = vlaneseq
      %v2431 = vshrl.u32 %v2430, 7
      %v2432 = vsub.s32 3, %v2431
      %v2433 = vrot.slane %v2416, %v2432
      %v2438 = vadd.f32 %v854, %v2421
      %v2439 = vadd.f32 %v861, %v2425
      %v2440 = vadd.f32 %v868, %v2429
      %v2441 = vadd.f32 %v875, %v2433
      %v2442 = vadd.f32 %v882, %v2421
      %v2443 = vadd.f32 %v889, %v2425
      %v2444 = vadd.f32 %v896, %v2429
      %v2445 = vadd.f32 %v903, %v2433
      %v2446 = vadd.f32 %v910, %v2421
      %v2447 = vadd.f32 %v917, %v2425
      %v2448 = vadd.f32 %v924, %v2429
      %v2449 = vadd.f32 %v931, %v2433
      %v2450 = vadd.f32 %v938, %v2421
      %v2451 = vadd.f32 %v945, %v2425
      %v2452 = vadd.f32 %v952, %v2429
      %v2453 = vadd.f32 %v959, %v2433
      %v2454 = vadd.f32 %v966, %v2421
      %v2455 = vadd.f32 %v973, %v2425
      %v2456 = vadd.f32 %v980, %v2429
      %v2457 = vadd.f32 %v987, %v2433
      %v2458 = vadd.f32 %v994, %v2421
      %v2459 = vadd.f32 %v1001, %v2425
      %v2460 = vadd.f32 %v1008, %v2429
      %v2461 = vadd.f32 %v1015, %v2433
      %v2462 = vadd.f32 %v1022, %v2421
      %v2463 = vadd.f32 %v1029, %v2425
      %v2464 = vadd.f32 %v1036, %v2429
      %v2465 = vadd.f32 %v1043, %v2433
      %v2466 = vadd.f32 %v1050, %v2421
      %v2467 = vadd.f32 %v1057, %v2425
      %v2468 = vadd.f32 %v1064, %v2429
      %v2469 = vadd.f32 %v1071, %v2433
      %v2470 = vadd.f32 %v1078, %v2421
      %v2471 = vadd.f32 %v1085, %v2425
      %v2472 = vadd.f32 %v1092, %v2429
      %v2473 = vadd.f32 %v1099, %v2433
      %v2474 = vadd.f32 %v1106, %v2421
      %v2475 = vadd.f32 %v1113, %v2425
      %v2476 = vadd.f32 %v1120, %v2429
      %v2477 = vadd.f32 %v1127, %v2433
      %v2478 = vadd.f32 %v1134, %v2421
      %v2479 = vadd.f32 %v1141, %v2425
      %v2480 = vadd.f32 %v1148, %v2429
      %v2481 = vadd.f32 %v1155, %v2433
      %v2482 = vadd.f32 %v1162, %v2421
      %v2483 = vadd.f32 %v1169, %v2425
      %v2484 = vadd.f32 %v1176, %v2429
      %v2485 = vadd.f32 %v1183, %v2433
      %v2486 = vadd.f32 %v1190, %v2421
      %v2487 = vadd.f32 %v1197, %v2425
      %v2488 = vadd.f32 %v1204, %v2429
      %v2489 = vadd.f32 %v1211, %v2433
      %v2490 = vadd.f32 %v1218, %v2421
      %v2491 = vadd.f32 %v1225, %v2425
      %v2492 = vadd.f32 %v1232, %v2429
      %v2493 = vadd.f32 %v1239, %v2433
      %v2494 = vadd.f32 %v1246, %v2421
      %v2495 = vadd.f32 %v1253, %v2425
      %v2496 = vadd.f32 %v1260, %v2429
      %v2497 = vadd.f32 %v1267, %v2433
      %v2498 = vadd.f32 %v1274, %v2421
      %v2499 = vadd.f32 %v1281, %v2425
      %v2500 = vadd.f32 %v1288, %v2429
      %v2501 = vadd.f32 %v1295, %v2433
      %v2502 = vadd.f32 %v1302, %v2421
      %v2503 = vadd.f32 %v1309, %v2425
      %v2504 = vadd.f32 %v1316, %v2429
      %v2505 = vadd.f32 %v1323, %v2433
      %v2506 = vadd.f32 %v1330, %v2421
      %v2507 = vadd.f32 %v1337, %v2425
      %v2508 = vadd.f32 %v1344, %v2429
      %v2509 = vadd.f32 %v1351, %v2433
      %v2510 = vadd.f32 %v1358, %v2421
      %v2511 = vadd.f32 %v1365, %v2425
      %v2512 = vadd.f32 %v1372, %v2429
      %v2513 = vadd.f32 %v1379, %v2433
      %v2514 = vadd.f32 %v1386, %v2421
      %v2515 = vadd.f32 %v1393, %v2425
      %v2516 = vadd.f32 %v1400, %v2429
      %v2517 = vadd.f32 %v1407, %v2433
      %v2518 = vadd.f32 %v1414, %v2421
      %v2519 = vadd.f32 %v1421, %v2425
      %v2520 = vadd.f32 %v1428, %v2429
      %v2521 = vadd.f32 %v1435, %v2433
      %v2522 = vadd.f32 %v1442, %v2421
      %v2523 = vadd.f32 %v1449, %v2425
      %v2524 = vadd.f32 %v1456, %v2429
      %v2525 = vadd.f32 %v1463, %v2433
      %v2526 = vadd.f32 %v1470, %v2421
      %v2527 = vadd.f32 %v1477, %v2425
      %v2528 = vadd.f32 %v1484, %v2429
      %v2529 = vadd.f32 %v1491, %v2433
      %v2530 = vadd.f32 %v1498, %v2421
      %v2531 = vadd.f32 %v1505, %v2425
      %v2532 = vadd.f32 %v1512, %v2429
      %v2533 = vadd.f32 %v1519, %v2433
      %v2534 = vadd.f32 %v1526, %v2421
      %v2535 = vadd.f32 %v1533, %v2425
      %v2536 = vadd.f32 %v1540, %v2429
      %v2537 = vadd.f32 %v1547, %v2433
      %v2538 = vadd.f32 %v1554, %v2421
      %v2539 = vadd.f32 %v1561, %v2425
      %v2540 = vadd.f32 %v1568, %v2429
      %v2541 = vadd.f32 %v1575, %v2433
      %v2542 = vadd.f32 %v1582, %v2421
      %v2543 = vadd.f32 %v1589, %v2425
      %v2544 = vadd.f32 %v1596, %v2429
      %v2545 = vadd.f32 %v1603, %v2433
      %v2546 = vadd.f32 %v1610, %v2421
      %v2547 = vadd.f32 %v1617, %v2425
      %v2548 = vadd.f32 %v1624, %v2429
      %v2549 = vadd.f32 %v1631, %v2433
      %v2550 = vadd.f32 %v1638, %v2421
      %v2551 = vadd.f32 %v1645, %v2425
      %v2552 = vadd.f32 %v1652, %v2429
      %v2553 = vadd.f32 %v1659, %v2433
      %v2554 = vadd.f32 %v1666, %v2421
      %v2555 = vadd.f32 %v1673, %v2425
      %v2556 = vadd.f32 %v1680, %v2429
      %v2557 = vadd.f32 %v1687, %v2433
      %v2558 = vadd.f32 %v1694, %v2421
      %v2559 = vadd.f32 %v1701, %v2425
      %v2560 = vadd.f32 %v1708, %v2429
      %v2561 = vadd.f32 %v1715, %v2433
      %v2562 = vadd.f32 %v1722, %v2421
      %v2563 = vadd.f32 %v1729, %v2425
      %v2564 = vadd.f32 %v1736, %v2429
      %v2565 = vadd.f32 %v1743, %v2433
      %v2566 = vadd.f32 %v1750, %v2421
      %v2567 = vadd.f32 %v1757, %v2425
      %v2568 = vadd.f32 %v1764, %v2429
      %v2569 = vadd.f32 %v1771, %v2433
      %v2570 = vadd.f32 %v1778, %v2421
      %v2571 = vadd.f32 %v1785, %v2425
      %v2572 = vadd.f32 %v1792, %v2429
      %v2573 = vadd.f32 %v1799, %v2433
      %v2574 = vadd.f32 %v1806, %v2421
      %v2575 = vadd.f32 %v1813, %v2425
      %v2576 = vadd.f32 %v1820, %v2429
      %v2577 = vadd.f32 %v1827, %v2433
      %v2578 = vadd.f32 %v1834, %v2421
      %v2579 = vadd.f32 %v1841, %v2425
      %v2580 = vadd.f32 %v1848, %v2429
      %v2581 = vadd.f32 %v1855, %v2433
      %v2582 = vadd.f32 %v1862, %v2421
      %v2583 = vadd.f32 %v1869, %v2425
      %v2584 = vadd.f32 %v1876, %v2429
      %v2585 = vadd.f32 %v1883, %v2433
      %v2586 = vadd.f32 %v1890, %v2421
      %v2587 = vadd.f32 %v1897, %v2425
      %v2588 = vadd.f32 %v1904, %v2429
      %v2589 = vadd.f32 %v1911, %v2433
      %v2590 = vadd.f32 %v1918, %v2421
      %v2591 = vadd.f32 %v1925, %v2425
      %v2592 = vadd.f32 %v1932, %v2429
      %v2593 = vadd.f32 %v1939, %v2433
      %v2594 = vadd.f32 %v1946, %v2421
      %v2595 = vadd.f32 %v1953, %v2425
      %v2596 = vadd.f32 %v1960, %v2429
      %v2597 = vadd.f32 %v1967, %v2433
      %v2598 = vadd.f32 %v1974, %v2421
      %v2599 = vadd.f32 %v1981, %v2425
      %v2600 = vadd.f32 %v1988, %v2429
      %v2601 = vadd.f32 %v1995, %v2433
      %v2602 = vadd.f32 %v2002, %v2421
      %v2603 = vadd.f32 %v2009, %v2425
      %v2604 = vadd.f32 %v2016, %v2429
      %v2605 = vadd.f32 %v2023, %v2433
      %v2606 = vadd.f32 %v2030, %v2421
      %v2607 = vadd.f32 %v2037, %v2425
      %v2608 = vadd.f32 %v2044, %v2429
      %v2609 = vadd.f32 %v2051, %v2433
      %v2610 = vadd.f32 %v2058, %v2421
      %v2611 = vadd.f32 %v2065, %v2425
      %v2612 = vadd.f32 %v2072, %v2429
      %v2613 = vadd.f32 %v2079, %v2433
      %v2614 = vadd.f32 %v2086, %v2421
      %v2615 = vadd.f32 %v2093, %v2425
      %v2616 = vadd.f32 %v2100, %v2429
      %v2617 = vadd.f32 %v2107, %v2433
      %v2618 = vadd.f32 %v2114, %v2421
      %v2619 = vadd.f32 %v2121, %v2425
      %v2620 = vadd.f32 %v2128, %v2429
      %v2621 = vadd.f32 %v2135, %v2433
      %v2622 = vadd.f32 %v2142, %v2421
      %v2623 = vadd.f32 %v2149, %v2425
      %v2624 = vadd.f32 %v2156, %v2429
      %v2625 = vadd.f32 %v2163, %v2433
      %v2626 = vadd.f32 %v2170, %v2421
      %v2627 = vadd.f32 %v2177, %v2425
      %v2628 = vadd.f32 %v2184, %v2429
      %v2629 = vadd.f32 %v2191, %v2433
      %v2630 = vadd.f32 %v2198, %v2421
      %v2631 = vadd.f32 %v2205, %v2425
      %v2632 = vadd.f32 %v2212, %v2429
      %v2633 = vadd.f32 %v2219, %v2433
      %v2634 = vadd.f32 %v2226, %v2421
      %v2635 = vadd.f32 %v2233, %v2425
      %v2636 = vadd.f32 %v2240, %v2429
      %v2637 = vadd.f32 %v2247, %v2433
      %v2638 = vadd.f32 %v2254, %v2421
      %v2639 = vadd.f32 %v2261, %v2425
      %v2640 = vadd.f32 %v2268, %v2429
      %v2641 = vadd.f32 %v2275, %v2433
      %v2642 = vadd.f32 %v2282, %v2421
      %v2643 = vadd.f32 %v2289, %v2425
      %v2644 = vadd.f32 %v2296, %v2429
      %v2645 = vadd.f32 %v2303, %v2433
      %v2646 = vadd.f32 %v2310, %v2421
      %v2647 = vadd.f32 %v2317, %v2425
      %v2648 = vadd.f32 %v2324, %v2429
      %v2649 = vadd.f32 %v2331, %v2433
      %v2650 = vadd.f32 %v2338, %v2421
      %v2651 = vadd.f32 %v2345, %v2425
      %v2652 = vadd.f32 %v2352, %v2429
      %v2653 = vadd.f32 %v2359, %v2433
      %v2654 = vadd.f32 %v2366, %v2421
      %v2655 = vadd.f32 %v2373, %v2425
      %v2656 = vadd.f32 %v2380, %v2429
      %v2657 = vadd.f32 %v2387, %v2433
      %v2658 = vadd.f32 %v2394, %v2421
      %v2659 = vadd.f32 %v2401, %v2425
      %v2660 = vadd.f32 %v2408, %v2429
      %v2661 = vadd.f32 %v2415, %v2433
      %v2662 = vld [vmem:[%s3] sm:$0x7f]
      %v2663 = vld [vmem:[%s3 + $0x8] sm:$0x7f]
      %v2664 = vld [vmem:[%s3 + $0x10] sm:$0x7f]
      %v2665 = vld [vmem:[%s3 + $0x18] sm:$0x7f]
      %v2670 = vcombine.low %v2662, %v2663
      %v2671 = vcombine.high %v2662, %v2663
      %v2672 = vcombine.low %v2664, %v2665
      %v2673 = vcombine.high %v2664, %v2665
      %v2675 = vunpack.c.l.s4 1966171168
      %v2676 = vunpack.c.0.s8 %v2675
      %v2677 = vlaneseq
      %v2678 = vshrl.u32 %v2677, 7
      %v2679 = vsub.s32 %v2676, %v2678
      %v2680 = vrot.slane %v2670, %v2679
      %v2682 = vunpack.c.l.s4 1966171168
      %v2683 = vunpack.c.0.s8 %v2682
      %v2684 = vlaneseq
      %v2685 = vshrl.u32 %v2684, 7
      %v2686 = vsub.s32 %v2683, %v2685
      %v2687 = vrot.slane %v2671, %v2686
      %v2689 = vunpack.c.l.s4 1966171168
      %v2690 = vunpack.c.0.s8 %v2689
      %v2691 = vlaneseq
      %v2692 = vshrl.u32 %v2691, 7
      %v2693 = vsub.s32 %v2690, %v2692
      %v2694 = vrot.slane %v2672, %v2693
      %v2696 = vunpack.c.l.s4 1966171168
      %v2697 = vunpack.c.0.s8 %v2696
      %v2698 = vlaneseq
      %v2699 = vshrl.u32 %v2698, 7
      %v2700 = vsub.s32 %v2697, %v2699
      %v2701 = vrot.slane %v2673, %v2700
      %v2702 = vcombine.low %v2680, %v2694
      %v2703 = vcombine.high %v2680, %v2694
      %v2704 = vcombine.low %v2687, %v2701
      %v2705 = vcombine.high %v2687, %v2701
      %v2707 = vunpack.c.l.s4 1966171168
      %v2708 = vunpack.c.0.s8 %v2707
      %v2709 = vlaneseq
      %v2710 = vshrl.u32 %v2709, 7
      %v2711 = vsub.s32 %v2708, %v2710
      %v2712 = vrot.slane %v2702, %v2711
      %v2714 = vunpack.c.l.s4 1966171168
      %v2715 = vunpack.c.0.s8 %v2714
      %v2716 = vlaneseq
      %v2717 = vshrl.u32 %v2716, 7
      %v2718 = vsub.s32 %v2715, %v2717
      %v2719 = vrot.slane %v2704, %v2718
      %v2721 = vunpack.c.l.s4 1966171168
      %v2722 = vunpack.c.0.s8 %v2721
      %v2723 = vlaneseq
      %v2724 = vshrl.u32 %v2723, 7
      %v2725 = vsub.s32 %v2722, %v2724
      %v2726 = vrot.slane %v2703, %v2725
      %v2728 = vunpack.c.l.s4 1966171168
      %v2729 = vunpack.c.0.s8 %v2728
      %v2730 = vlaneseq
      %v2731 = vshrl.u32 %v2730, 7
      %v2732 = vsub.s32 %v2729, %v2731
      %v2733 = vrot.slane %v2705, %v2732
      %v2734 = vcombine.high %v2712, %v2712
      %v2735 = vcombine.high %v2719, %v2719
      %v2736 = vcombine.high %v2726, %v2726
      %v2737 = vlaneseq
      %v2738 = vshrl.u32 %v2737, 7
      %v2739 = vsub.s32 0, %v2738
      %v2740 = vrot.slane %v2712, %v2739
      %v2741 = vlaneseq
      %v2742 = vshrl.u32 %v2741, 7
      %v2743 = vsub.s32 1, %v2742
      %v2744 = vrot.slane %v2712, %v2743
      %v2745 = vlaneseq
      %v2746 = vshrl.u32 %v2745, 7
      %v2747 = vsub.s32 2, %v2746
      %v2748 = vrot.slane %v2712, %v2747
      %v2749 = vlaneseq
      %v2750 = vshrl.u32 %v2749, 7
      %v2751 = vsub.s32 3, %v2750
      %v2752 = vrot.slane %v2712, %v2751
      %v2753 = vlaneseq
      %v2754 = vshrl.u32 %v2753, 7
      %v2755 = vsub.s32 0, %v2754
      %v2756 = vrot.slane %v2726, %v2755
      %v2757 = vlaneseq
      %v2758 = vshrl.u32 %v2757, 7
      %v2759 = vsub.s32 1, %v2758
      %v2760 = vrot.slane %v2726, %v2759
      %v2761 = vlaneseq
      %v2762 = vshrl.u32 %v2761, 7
      %v2763 = vsub.s32 2, %v2762
      %v2764 = vrot.slane %v2726, %v2763
      %v2765 = vlaneseq
      %v2766 = vshrl.u32 %v2765, 7
      %v2767 = vsub.s32 3, %v2766
      %v2768 = vrot.slane %v2726, %v2767
      %v2769 = vlaneseq
      %v2770 = vshrl.u32 %v2769, 7
      %v2771 = vsub.s32 0, %v2770
      %v2772 = vrot.slane %v2734, %v2771
      %v2773 = vlaneseq
      %v2774 = vshrl.u32 %v2773, 7
      %v2775 = vsub.s32 1, %v2774
      %v2776 = vrot.slane %v2734, %v2775
      %v2777 = vlaneseq
      %v2778 = vshrl.u32 %v2777, 7
      %v2779 = vsub.s32 2, %v2778
      %v2780 = vrot.slane %v2734, %v2779
      %v2781 = vlaneseq
      %v2782 = vshrl.u32 %v2781, 7
      %v2783 = vsub.s32 3, %v2782
      %v2784 = vrot.slane %v2734, %v2783
      %v2785 = vlaneseq
      %v2786 = vshrl.u32 %v2785, 7
      %v2787 = vsub.s32 0, %v2786
      %v2788 = vrot.slane %v2736, %v2787
      %v2789 = vlaneseq
      %v2790 = vshrl.u32 %v2789, 7
      %v2791 = vsub.s32 1, %v2790
      %v2792 = vrot.slane %v2736, %v2791
      %v2793 = vlaneseq
      %v2794 = vshrl.u32 %v2793, 7
      %v2795 = vsub.s32 2, %v2794
      %v2796 = vrot.slane %v2736, %v2795
      %v2797 = vlaneseq
      %v2798 = vshrl.u32 %v2797, 7
      %v2799 = vsub.s32 3, %v2798
      %v2800 = vrot.slane %v2736, %v2799
      %v2801 = vlaneseq
      %v2802 = vshrl.u32 %v2801, 7
      %v2803 = vsub.s32 0, %v2802
      %v2804 = vrot.slane %v2719, %v2803
      %v2805 = vlaneseq
      %v2806 = vshrl.u32 %v2805, 7
      %v2807 = vsub.s32 1, %v2806
      %v2808 = vrot.slane %v2719, %v2807
      %v2809 = vlaneseq
      %v2810 = vshrl.u32 %v2809, 7
      %v2811 = vsub.s32 2, %v2810
      %v2812 = vrot.slane %v2719, %v2811
      %v2813 = vlaneseq
      %v2814 = vshrl.u32 %v2813, 7
      %v2815 = vsub.s32 3, %v2814
      %v2816 = vrot.slane %v2719, %v2815
      %v2817 = vlaneseq
      %v2818 = vshrl.u32 %v2817, 7
      %v2819 = vsub.s32 0, %v2818
      %v2820 = vrot.slane %v2733, %v2819
      %v2821 = vlaneseq
      %v2822 = vshrl.u32 %v2821, 7
      %v2823 = vsub.s32 1, %v2822
      %v2824 = vrot.slane %v2733, %v2823
      %v2825 = vlaneseq
      %v2826 = vshrl.u32 %v2825, 7
      %v2827 = vsub.s32 2, %v2826
      %v2828 = vrot.slane %v2733, %v2827
      %v2829 = vlaneseq
      %v2830 = vshrl.u32 %v2829, 7
      %v2831 = vsub.s32 3, %v2830
      %v2832 = vrot.slane %v2733, %v2831
      %v2833 = vlaneseq
      %v2834 = vshrl.u32 %v2833, 7
      %v2835 = vsub.s32 0, %v2834
      %v2836 = vrot.slane %v2735, %v2835
      %v2837 = vlaneseq
      %v2838 = vshrl.u32 %v2837, 7
      %v2839 = vsub.s32 1, %v2838
      %v2840 = vrot.slane %v2735, %v2839
      %v2841 = vlaneseq
      %v2842 = vshrl.u32 %v2841, 7
      %v2843 = vsub.s32 2, %v2842
      %v2844 = vrot.slane %v2735, %v2843
      %v2845 = vlaneseq
      %v2846 = vshrl.u32 %v2845, 7
      %v2847 = vsub.s32 3, %v2846
      %v2848 = vrot.slane %v2735, %v2847
      %v2877 = vmul.f32 %v395, %v2740
      %v2878 = vmul.f32 %v396, %v2744
      %v2879 = vmul.f32 %v397, %v2748
      %v2880 = vmul.f32 %v398, %v2752
      %v2881 = vmul.f32 %v399, %v2756
      %v2882 = vmul.f32 %v400, %v2760
      %v2883 = vmul.f32 %v401, %v2764
      %v2884 = vmul.f32 %v402, %v2768
      %v2885 = vmul.f32 %v403, %v2772
      %v2886 = vmul.f32 %v404, %v2776
      %v2887 = vmul.f32 %v405, %v2780
      %v2888 = vmul.f32 %v406, %v2784
      %v2889 = vmul.f32 %v407, %v2788
      %v2890 = vmul.f32 %v408, %v2792
      %v2891 = vmul.f32 %v409, %v2796
      %v2892 = vmul.f32 %v410, %v2800
      %v2893 = vmul.f32 %v411, %v2804
      %v2894 = vmul.f32 %v412, %v2808
      %v2895 = vmul.f32 %v413, %v2812
      %v2896 = vmul.f32 %v414, %v2816
      %v2897 = vmul.f32 %v415, %v2820
      %v2898 = vmul.f32 %v416, %v2824
      %v2899 = vmul.f32 %v417, %v2828
      %v2900 = vmul.f32 %v418, %v2832
      %v2901 = vmul.f32 %v419, %v2836
      %v2902 = vmul.f32 %v420, %v2840
      %v2903 = vmul.f32 %v421, %v2844
      %v2904 = vmul.f32 %v422, %v2848
      %v2905 = vmul.f32 %v423, %v2740
      %v2906 = vmul.f32 %v424, %v2744
      %v2907 = vmul.f32 %v425, %v2748
      %v2908 = vmul.f32 %v426, %v2752
      %v2909 = vmul.f32 %v427, %v2756
      %v2910 = vmul.f32 %v428, %v2760
      %v2911 = vmul.f32 %v429, %v2764
      %v2912 = vmul.f32 %v430, %v2768
      %v2913 = vmul.f32 %v431, %v2772
      %v2914 = vmul.f32 %v432, %v2776
      %v2915 = vmul.f32 %v433, %v2780
      %v2916 = vmul.f32 %v434, %v2784
      %v2917 = vmul.f32 %v435, %v2788
      %v2918 = vmul.f32 %v436, %v2792
      %v2919 = vmul.f32 %v437, %v2796
      %v2920 = vmul.f32 %v438, %v2800
      %v2921 = vmul.f32 %v439, %v2804
      %v2922 = vmul.f32 %v440, %v2808
      %v2923 = vmul.f32 %v441, %v2812
      %v2924 = vmul.f32 %v442, %v2816
      %v2925 = vmul.f32 %v443, %v2820
      %v2926 = vmul.f32 %v444, %v2824
      %v2927 = vmul.f32 %v445, %v2828
      %v2928 = vmul.f32 %v446, %v2832
      %v2929 = vmul.f32 %v447, %v2836
      %v2930 = vmul.f32 %v448, %v2840
      %v2931 = vmul.f32 %v449, %v2844
      %v2932 = vmul.f32 %v450, %v2848
      %v2933 = vmul.f32 %v451, %v2740
      %v2934 = vmul.f32 %v452, %v2744
      %v2935 = vmul.f32 %v453, %v2748
      %v2936 = vmul.f32 %v454, %v2752
      %v2937 = vmul.f32 %v455, %v2756
      %v2938 = vmul.f32 %v456, %v2760
      %v2939 = vmul.f32 %v457, %v2764
      %v2940 = vmul.f32 %v458, %v2768
      %v2941 = vmul.f32 %v459, %v2772
      %v2942 = vmul.f32 %v460, %v2776
      %v2943 = vmul.f32 %v461, %v2780
      %v2944 = vmul.f32 %v462, %v2784
      %v2945 = vmul.f32 %v463, %v2788
      %v2946 = vmul.f32 %v464, %v2792
      %v2947 = vmul.f32 %v465, %v2796
      %v2948 = vmul.f32 %v466, %v2800
      %v2949 = vmul.f32 %v467, %v2804
      %v2950 = vmul.f32 %v468, %v2808
      %v2951 = vmul.f32 %v469, %v2812
      %v2952 = vmul.f32 %v470, %v2816
      %v2953 = vmul.f32 %v471, %v2820
      %v2954 = vmul.f32 %v472, %v2824
      %v2955 = vmul.f32 %v473, %v2828
      %v2956 = vmul.f32 %v474, %v2832
      %v2957 = vmul.f32 %v475, %v2836
      %v2958 = vmul.f32 %v476, %v2840
      %v2959 = vmul.f32 %v477, %v2844
      %v2960 = vmul.f32 %v478, %v2848
      %v2961 = vmul.f32 %v479, %v2740
      %v2962 = vmul.f32 %v480, %v2744
      %v2963 = vmul.f32 %v481, %v2748
      %v2964 = vmul.f32 %v482, %v2752
      %v2965 = vmul.f32 %v483, %v2756
      %v2966 = vmul.f32 %v484, %v2760
      %v2967 = vmul.f32 %v485, %v2764
      %v2968 = vmul.f32 %v486, %v2768
      %v2969 = vmul.f32 %v487, %v2772
      %v2970 = vmul.f32 %v488, %v2776
      %v2971 = vmul.f32 %v489, %v2780
      %v2972 = vmul.f32 %v490, %v2784
      %v2973 = vmul.f32 %v491, %v2788
      %v2974 = vmul.f32 %v492, %v2792
      %v2975 = vmul.f32 %v493, %v2796
      %v2976 = vmul.f32 %v494, %v2800
      %v2977 = vmul.f32 %v495, %v2804
      %v2978 = vmul.f32 %v496, %v2808
      %v2979 = vmul.f32 %v497, %v2812
      %v2980 = vmul.f32 %v498, %v2816
      %v2981 = vmul.f32 %v499, %v2820
      %v2982 = vmul.f32 %v500, %v2824
      %v2983 = vmul.f32 %v501, %v2828
      %v2984 = vmul.f32 %v502, %v2832
      %v2985 = vmul.f32 %v503, %v2836
      %v2986 = vmul.f32 %v504, %v2840
      %v2987 = vmul.f32 %v505, %v2844
      %v2988 = vmul.f32 %v506, %v2848
      %v2989 = vmul.f32 %v507, %v2740
      %v2990 = vmul.f32 %v508, %v2744
      %v2991 = vmul.f32 %v509, %v2748
      %v2992 = vmul.f32 %v510, %v2752
      %v2993 = vmul.f32 %v511, %v2756
      %v2994 = vmul.f32 %v512, %v2760
      %v2995 = vmul.f32 %v513, %v2764
      %v2996 = vmul.f32 %v514, %v2768
      %v2997 = vmul.f32 %v515, %v2772
      %v2998 = vmul.f32 %v516, %v2776
      %v2999 = vmul.f32 %v517, %v2780
      %v3000 = vmul.f32 %v518, %v2784
      %v3001 = vmul.f32 %v519, %v2788
      %v3002 = vmul.f32 %v520, %v2792
      %v3003 = vmul.f32 %v521, %v2796
      %v3004 = vmul.f32 %v522, %v2800
      %v3005 = vmul.f32 %v523, %v2804
      %v3006 = vmul.f32 %v524, %v2808
      %v3007 = vmul.f32 %v525, %v2812
      %v3008 = vmul.f32 %v526, %v2816
      %v3009 = vmul.f32 %v527, %v2820
      %v3010 = vmul.f32 %v528, %v2824
      %v3011 = vmul.f32 %v529, %v2828
      %v3012 = vmul.f32 %v530, %v2832
      %v3013 = vmul.f32 %v531, %v2836
      %v3014 = vmul.f32 %v532, %v2840
      %v3015 = vmul.f32 %v533, %v2844
      %v3016 = vmul.f32 %v534, %v2848
      %v3017 = vmul.f32 %v535, %v2740
      %v3018 = vmul.f32 %v536, %v2744
      %v3019 = vmul.f32 %v537, %v2748
      %v3020 = vmul.f32 %v538, %v2752
      %v3021 = vmul.f32 %v539, %v2756
      %v3022 = vmul.f32 %v540, %v2760
      %v3023 = vmul.f32 %v541, %v2764
      %v3024 = vmul.f32 %v542, %v2768
      %v3025 = vmul.f32 %v543, %v2772
      %v3026 = vmul.f32 %v544, %v2776
      %v3027 = vmul.f32 %v545, %v2780
      %v3028 = vmul.f32 %v546, %v2784
      %v3029 = vmul.f32 %v547, %v2788
      %v3030 = vmul.f32 %v548, %v2792
      %v3031 = vmul.f32 %v549, %v2796
      %v3032 = vmul.f32 %v550, %v2800
      %v3033 = vmul.f32 %v551, %v2804
      %v3034 = vmul.f32 %v552, %v2808
      %v3035 = vmul.f32 %v553, %v2812
      %v3036 = vmul.f32 %v554, %v2816
      %v3037 = vmul.f32 %v555, %v2820
      %v3038 = vmul.f32 %v556, %v2824
      %v3039 = vmul.f32 %v557, %v2828
      %v3040 = vmul.f32 %v558, %v2832
      %v3041 = vmul.f32 %v559, %v2836
      %v3042 = vmul.f32 %v560, %v2840
      %v3043 = vmul.f32 %v561, %v2844
      %v3044 = vmul.f32 %v562, %v2848
      %v3045 = vmul.f32 %v563, %v2740
      %v3046 = vmul.f32 %v564, %v2744
      %v3047 = vmul.f32 %v565, %v2748
      %v3048 = vmul.f32 %v566, %v2752
      %v3049 = vmul.f32 %v567, %v2756
      %v3050 = vmul.f32 %v568, %v2760
      %v3051 = vmul.f32 %v569, %v2764
      %v3052 = vmul.f32 %v570, %v2768
      %v3053 = vmul.f32 %v571, %v2772
      %v3054 = vmul.f32 %v572, %v2776
      %v3055 = vmul.f32 %v573, %v2780
      %v3056 = vmul.f32 %v574, %v2784
      %v3057 = vmul.f32 %v575, %v2788
      %v3058 = vmul.f32 %v576, %v2792
      %v3059 = vmul.f32 %v577, %v2796
      %v3060 = vmul.f32 %v578, %v2800
      %v3061 = vmul.f32 %v579, %v2804
      %v3062 = vmul.f32 %v580, %v2808
      %v3063 = vmul.f32 %v581, %v2812
      %v3064 = vmul.f32 %v582, %v2816
      %v3065 = vmul.f32 %v583, %v2820
      %v3066 = vmul.f32 %v584, %v2824
      %v3067 = vmul.f32 %v585, %v2828
      %v3068 = vmul.f32 %v586, %v2832
      %v3069 = vmul.f32 %v587, %v2836
      %v3070 = vmul.f32 %v588, %v2840
      %v3071 = vmul.f32 %v589, %v2844
      %v3072 = vmul.f32 %v590, %v2848
      %v3073 = vmul.f32 %v591, %v2740
      %v3074 = vmul.f32 %v592, %v2744
      %v3075 = vmul.f32 %v593, %v2748
      %v3076 = vmul.f32 %v594, %v2752
      %v3077 = vmul.f32 %v595, %v2756
      %v3078 = vmul.f32 %v596, %v2760
      %v3079 = vmul.f32 %v597, %v2764
      %v3080 = vmul.f32 %v598, %v2768
      %v3081 = vmul.f32 %v599, %v2772
      %v3082 = vmul.f32 %v600, %v2776
      %v3083 = vmul.f32 %v601, %v2780
      %v3084 = vmul.f32 %v602, %v2784
      %v3085 = vmul.f32 %v603, %v2788
      %v3086 = vmul.f32 %v604, %v2792
      %v3087 = vmul.f32 %v605, %v2796
      %v3088 = vmul.f32 %v606, %v2800
      %v3089 = vmul.f32 %v607, %v2804
      %v3090 = vmul.f32 %v608, %v2808
      %v3091 = vmul.f32 %v609, %v2812
      %v3092 = vmul.f32 %v610, %v2816
      %v3093 = vmul.f32 %v611, %v2820
      %v3094 = vmul.f32 %v612, %v2824
      %v3095 = vmul.f32 %v613, %v2828
      %v3096 = vmul.f32 %v614, %v2832
      %v3097 = vmul.f32 %v615, %v2836
      %v3098 = vmul.f32 %v616, %v2840
      %v3099 = vmul.f32 %v617, %v2844
      %v3100 = vmul.f32 %v618, %v2848
      %v3101 = vsel %vm847, %v2877, 0.0
      %v3102 = vsel %vm847, %v2881, 0.0
      %v3103 = vadd.f32 %v3101, %v3102
      %v3104 = vsel %vm847, %v2885, 0.0
      %v3105 = vadd.f32 %v3103, %v3104
      %v3106 = vsel %vm847, %v2889, 0.0
      %v3107 = vadd.f32 %v3105, %v3106
      %v3108 = vsel %vm847, %v2893, 0.0
      %v3109 = vadd.f32 %v3107, %v3108
      %v3110 = vsel %vm847, %v2897, 0.0
      %v3111 = vadd.f32 %v3109, %v3110
      %v3112 = vsel %vm847, %v2901, 0.0
      %v3113 = vadd.f32 %v3111, %v3112
      %v3114 = vsel %vm847, %v2878, 0.0
      %v3115 = vsel %vm847, %v2882, 0.0
      %v3116 = vadd.f32 %v3114, %v3115
      %v3117 = vsel %vm847, %v2886, 0.0
      %v3118 = vadd.f32 %v3116, %v3117
      %v3119 = vsel %vm847, %v2890, 0.0
      %v3120 = vadd.f32 %v3118, %v3119
      %v3121 = vsel %vm847, %v2894, 0.0
      %v3122 = vadd.f32 %v3120, %v3121
      %v3123 = vsel %vm847, %v2898, 0.0
      %v3124 = vadd.f32 %v3122, %v3123
      %v3125 = vsel %vm847, %v2902, 0.0
      %v3126 = vadd.f32 %v3124, %v3125
      %v3127 = vsel %vm847, %v2879, 0.0
      %v3128 = vsel %vm847, %v2883, 0.0
      %v3129 = vadd.f32 %v3127, %v3128
      %v3130 = vsel %vm847, %v2887, 0.0
      %v3131 = vadd.f32 %v3129, %v3130
      %v3132 = vsel %vm847, %v2891, 0.0
      %v3133 = vadd.f32 %v3131, %v3132
      %v3134 = vsel %vm847, %v2895, 0.0
      %v3135 = vadd.f32 %v3133, %v3134
      %v3136 = vsel %vm847, %v2899, 0.0
      %v3137 = vadd.f32 %v3135, %v3136
      %v3138 = vsel %vm847, %v2903, 0.0
      %v3139 = vadd.f32 %v3137, %v3138
      %v3140 = vsel %vm847, %v2880, 0.0
      %v3141 = vsel %vm847, %v2884, 0.0
      %v3142 = vadd.f32 %v3140, %v3141
      %v3143 = vsel %vm847, %v2888, 0.0
      %v3144 = vadd.f32 %v3142, %v3143
      %v3145 = vsel %vm847, %v2892, 0.0
      %v3146 = vadd.f32 %v3144, %v3145
      %v3147 = vsel %vm847, %v2896, 0.0
      %v3148 = vadd.f32 %v3146, %v3147
      %v3149 = vsel %vm847, %v2900, 0.0
      %v3150 = vadd.f32 %v3148, %v3149
      %v3151 = vsel %vm847, %v2904, 0.0
      %v3152 = vadd.f32 %v3150, %v3151
      %v3153 = vsel %vm847, %v2905, 0.0
      %v3154 = vsel %vm847, %v2909, 0.0
      %v3155 = vadd.f32 %v3153, %v3154
      %v3156 = vsel %vm847, %v2913, 0.0
      %v3157 = vadd.f32 %v3155, %v3156
      %v3158 = vsel %vm847, %v2917, 0.0
      %v3159 = vadd.f32 %v3157, %v3158
      %v3160 = vsel %vm847, %v2921, 0.0
      %v3161 = vadd.f32 %v3159, %v3160
      %v3162 = vsel %vm847, %v2925, 0.0
      %v3163 = vadd.f32 %v3161, %v3162
      %v3164 = vsel %vm847, %v2929, 0.0
      %v3165 = vadd.f32 %v3163, %v3164
      %v3166 = vsel %vm847, %v2906, 0.0
      %v3167 = vsel %vm847, %v2910, 0.0
      %v3168 = vadd.f32 %v3166, %v3167
      %v3169 = vsel %vm847, %v2914, 0.0
      %v3170 = vadd.f32 %v3168, %v3169
      %v3171 = vsel %vm847, %v2918, 0.0
      %v3172 = vadd.f32 %v3170, %v3171
      %v3173 = vsel %vm847, %v2922, 0.0
      %v3174 = vadd.f32 %v3172, %v3173
      %v3175 = vsel %vm847, %v2926, 0.0
      %v3176 = vadd.f32 %v3174, %v3175
      %v3177 = vsel %vm847, %v2930, 0.0
      %v3178 = vadd.f32 %v3176, %v3177
      %v3179 = vsel %vm847, %v2907, 0.0
      %v3180 = vsel %vm847, %v2911, 0.0
      %v3181 = vadd.f32 %v3179, %v3180
      %v3182 = vsel %vm847, %v2915, 0.0
      %v3183 = vadd.f32 %v3181, %v3182
      %v3184 = vsel %vm847, %v2919, 0.0
      %v3185 = vadd.f32 %v3183, %v3184
      %v3186 = vsel %vm847, %v2923, 0.0
      %v3187 = vadd.f32 %v3185, %v3186
      %v3188 = vsel %vm847, %v2927, 0.0
      %v3189 = vadd.f32 %v3187, %v3188
      %v3190 = vsel %vm847, %v2931, 0.0
      %v3191 = vadd.f32 %v3189, %v3190
      %v3192 = vsel %vm847, %v2908, 0.0
      %v3193 = vsel %vm847, %v2912, 0.0
      %v3194 = vadd.f32 %v3192, %v3193
      %v3195 = vsel %vm847, %v2916, 0.0
      %v3196 = vadd.f32 %v3194, %v3195
      %v3197 = vsel %vm847, %v2920, 0.0
      %v3198 = vadd.f32 %v3196, %v3197
      %v3199 = vsel %vm847, %v2924, 0.0
      %v3200 = vadd.f32 %v3198, %v3199
      %v3201 = vsel %vm847, %v2928, 0.0
      %v3202 = vadd.f32 %v3200, %v3201
      %v3203 = vsel %vm847, %v2932, 0.0
      %v3204 = vadd.f32 %v3202, %v3203
      %v3205 = vsel %vm847, %v2933, 0.0
      %v3206 = vsel %vm847, %v2937, 0.0
      %v3207 = vadd.f32 %v3205, %v3206
      %v3208 = vsel %vm847, %v2941, 0.0
      %v3209 = vadd.f32 %v3207, %v3208
      %v3210 = vsel %vm847, %v2945, 0.0
      %v3211 = vadd.f32 %v3209, %v3210
      %v3212 = vsel %vm847, %v2949, 0.0
      %v3213 = vadd.f32 %v3211, %v3212
      %v3214 = vsel %vm847, %v2953, 0.0
      %v3215 = vadd.f32 %v3213, %v3214
      %v3216 = vsel %vm847, %v2957, 0.0
      %v3217 = vadd.f32 %v3215, %v3216
      %v3218 = vsel %vm847, %v2934, 0.0
      %v3219 = vsel %vm847, %v2938, 0.0
      %v3220 = vadd.f32 %v3218, %v3219
      %v3221 = vsel %vm847, %v2942, 0.0
      %v3222 = vadd.f32 %v3220, %v3221
      %v3223 = vsel %vm847, %v2946, 0.0
      %v3224 = vadd.f32 %v3222, %v3223
      %v3225 = vsel %vm847, %v2950, 0.0
      %v3226 = vadd.f32 %v3224, %v3225
      %v3227 = vsel %vm847, %v2954, 0.0
      %v3228 = vadd.f32 %v3226, %v3227
      %v3229 = vsel %vm847, %v2958, 0.0
      %v3230 = vadd.f32 %v3228, %v3229
      %v3231 = vsel %vm847, %v2935, 0.0
      %v3232 = vsel %vm847, %v2939, 0.0
      %v3233 = vadd.f32 %v3231, %v3232
      %v3234 = vsel %vm847, %v2943, 0.0
      %v3235 = vadd.f32 %v3233, %v3234
      %v3236 = vsel %vm847, %v2947, 0.0
      %v3237 = vadd.f32 %v3235, %v3236
      %v3238 = vsel %vm847, %v2951, 0.0
      %v3239 = vadd.f32 %v3237, %v3238
      %v3240 = vsel %vm847, %v2955, 0.0
      %v3241 = vadd.f32 %v3239, %v3240
      %v3242 = vsel %vm847, %v2959, 0.0
      %v3243 = vadd.f32 %v3241, %v3242
      %v3244 = vsel %vm847, %v2936, 0.0
      %v3245 = vsel %vm847, %v2940, 0.0
      %v3246 = vadd.f32 %v3244, %v3245
      %v3247 = vsel %vm847, %v2944, 0.0
      %v3248 = vadd.f32 %v3246, %v3247
      %v3249 = vsel %vm847, %v2948, 0.0
      %v3250 = vadd.f32 %v3248, %v3249
      %v3251 = vsel %vm847, %v2952, 0.0
      %v3252 = vadd.f32 %v3250, %v3251
      %v3253 = vsel %vm847, %v2956, 0.0
      %v3254 = vadd.f32 %v3252, %v3253
      %v3255 = vsel %vm847, %v2960, 0.0
      %v3256 = vadd.f32 %v3254, %v3255
      %v3257 = vsel %vm847, %v2961, 0.0
      %v3258 = vsel %vm847, %v2965, 0.0
      %v3259 = vadd.f32 %v3257, %v3258
      %v3260 = vsel %vm847, %v2969, 0.0
      %v3261 = vadd.f32 %v3259, %v3260
      %v3262 = vsel %vm847, %v2973, 0.0
      %v3263 = vadd.f32 %v3261, %v3262
      %v3264 = vsel %vm847, %v2977, 0.0
      %v3265 = vadd.f32 %v3263, %v3264
      %v3266 = vsel %vm847, %v2981, 0.0
      %v3267 = vadd.f32 %v3265, %v3266
      %v3268 = vsel %vm847, %v2985, 0.0
      %v3269 = vadd.f32 %v3267, %v3268
      %v3270 = vsel %vm847, %v2962, 0.0
      %v3271 = vsel %vm847, %v2966, 0.0
      %v3272 = vadd.f32 %v3270, %v3271
      %v3273 = vsel %vm847, %v2970, 0.0
      %v3274 = vadd.f32 %v3272, %v3273
      %v3275 = vsel %vm847, %v2974, 0.0
      %v3276 = vadd.f32 %v3274, %v3275
      %v3277 = vsel %vm847, %v2978, 0.0
      %v3278 = vadd.f32 %v3276, %v3277
      %v3279 = vsel %vm847, %v2982, 0.0
      %v3280 = vadd.f32 %v3278, %v3279
      %v3281 = vsel %vm847, %v2986, 0.0
      %v3282 = vadd.f32 %v3280, %v3281
      %v3283 = vsel %vm847, %v2963, 0.0
      %v3284 = vsel %vm847, %v2967, 0.0
      %v3285 = vadd.f32 %v3283, %v3284
      %v3286 = vsel %vm847, %v2971, 0.0
      %v3287 = vadd.f32 %v3285, %v3286
      %v3288 = vsel %vm847, %v2975, 0.0
      %v3289 = vadd.f32 %v3287, %v3288
      %v3290 = vsel %vm847, %v2979, 0.0
      %v3291 = vadd.f32 %v3289, %v3290
      %v3292 = vsel %vm847, %v2983, 0.0
      %v3293 = vadd.f32 %v3291, %v3292
      %v3294 = vsel %vm847, %v2987, 0.0
      %v3295 = vadd.f32 %v3293, %v3294
      %v3296 = vsel %vm847, %v2964, 0.0
      %v3297 = vsel %vm847, %v2968, 0.0
      %v3298 = vadd.f32 %v3296, %v3297
      %v3299 = vsel %vm847, %v2972, 0.0
      %v3300 = vadd.f32 %v3298, %v3299
      %v3301 = vsel %vm847, %v2976, 0.0
      %v3302 = vadd.f32 %v3300, %v3301
      %v3303 = vsel %vm847, %v2980, 0.0
      %v3304 = vadd.f32 %v3302, %v3303
      %v3305 = vsel %vm847, %v2984, 0.0
      %v3306 = vadd.f32 %v3304, %v3305
      %v3307 = vsel %vm847, %v2988, 0.0
      %v3308 = vadd.f32 %v3306, %v3307
      %v3309 = vsel %vm847, %v2989, 0.0
      %v3310 = vsel %vm847, %v2993, 0.0
      %v3311 = vadd.f32 %v3309, %v3310
      %v3312 = vsel %vm847, %v2997, 0.0
      %v3313 = vadd.f32 %v3311, %v3312
      %v3314 = vsel %vm847, %v3001, 0.0
      %v3315 = vadd.f32 %v3313, %v3314
      %v3316 = vsel %vm847, %v3005, 0.0
      %v3317 = vadd.f32 %v3315, %v3316
      %v3318 = vsel %vm847, %v3009, 0.0
      %v3319 = vadd.f32 %v3317, %v3318
      %v3320 = vsel %vm847, %v3013, 0.0
      %v3321 = vadd.f32 %v3319, %v3320
      %v3322 = vsel %vm847, %v2990, 0.0
      %v3323 = vsel %vm847, %v2994, 0.0
      %v3324 = vadd.f32 %v3322, %v3323
      %v3325 = vsel %vm847, %v2998, 0.0
      %v3326 = vadd.f32 %v3324, %v3325
      %v3327 = vsel %vm847, %v3002, 0.0
      %v3328 = vadd.f32 %v3326, %v3327
      %v3329 = vsel %vm847, %v3006, 0.0
      %v3330 = vadd.f32 %v3328, %v3329
      %v3331 = vsel %vm847, %v3010, 0.0
      %v3332 = vadd.f32 %v3330, %v3331
      %v3333 = vsel %vm847, %v3014, 0.0
      %v3334 = vadd.f32 %v3332, %v3333
      %v3335 = vsel %vm847, %v2991, 0.0
      %v3336 = vsel %vm847, %v2995, 0.0
      %v3337 = vadd.f32 %v3335, %v3336
      %v3338 = vsel %vm847, %v2999, 0.0
      %v3339 = vadd.f32 %v3337, %v3338
      %v3340 = vsel %vm847, %v3003, 0.0
      %v3341 = vadd.f32 %v3339, %v3340
      %v3342 = vsel %vm847, %v3007, 0.0
      %v3343 = vadd.f32 %v3341, %v3342
      %v3344 = vsel %vm847, %v3011, 0.0
      %v3345 = vadd.f32 %v3343, %v3344
      %v3346 = vsel %vm847, %v3015, 0.0
      %v3347 = vadd.f32 %v3345, %v3346
      %v3348 = vsel %vm847, %v2992, 0.0
      %v3349 = vsel %vm847, %v2996, 0.0
      %v3350 = vadd.f32 %v3348, %v3349
      %v3351 = vsel %vm847, %v3000, 0.0
      %v3352 = vadd.f32 %v3350, %v3351
      %v3353 = vsel %vm847, %v3004, 0.0
      %v3354 = vadd.f32 %v3352, %v3353
      %v3355 = vsel %vm847, %v3008, 0.0
      %v3356 = vadd.f32 %v3354, %v3355
      %v3357 = vsel %vm847, %v3012, 0.0
      %v3358 = vadd.f32 %v3356, %v3357
      %v3359 = vsel %vm847, %v3016, 0.0
      %v3360 = vadd.f32 %v3358, %v3359
      %v3361 = vsel %vm847, %v3017, 0.0
      %v3362 = vsel %vm847, %v3021, 0.0
      %v3363 = vadd.f32 %v3361, %v3362
      %v3364 = vsel %vm847, %v3025, 0.0
      %v3365 = vadd.f32 %v3363, %v3364
      %v3366 = vsel %vm847, %v3029, 0.0
      %v3367 = vadd.f32 %v3365, %v3366
      %v3368 = vsel %vm847, %v3033, 0.0
      %v3369 = vadd.f32 %v3367, %v3368
      %v3370 = vsel %vm847, %v3037, 0.0
      %v3371 = vadd.f32 %v3369, %v3370
      %v3372 = vsel %vm847, %v3041, 0.0
      %v3373 = vadd.f32 %v3371, %v3372
      %v3374 = vsel %vm847, %v3018, 0.0
      %v3375 = vsel %vm847, %v3022, 0.0
      %v3376 = vadd.f32 %v3374, %v3375
      %v3377 = vsel %vm847, %v3026, 0.0
      %v3378 = vadd.f32 %v3376, %v3377
      %v3379 = vsel %vm847, %v3030, 0.0
      %v3380 = vadd.f32 %v3378, %v3379
      %v3381 = vsel %vm847, %v3034, 0.0
      %v3382 = vadd.f32 %v3380, %v3381
      %v3383 = vsel %vm847, %v3038, 0.0
      %v3384 = vadd.f32 %v3382, %v3383
      %v3385 = vsel %vm847, %v3042, 0.0
      %v3386 = vadd.f32 %v3384, %v3385
      %v3387 = vsel %vm847, %v3019, 0.0
      %v3388 = vsel %vm847, %v3023, 0.0
      %v3389 = vadd.f32 %v3387, %v3388
      %v3390 = vsel %vm847, %v3027, 0.0
      %v3391 = vadd.f32 %v3389, %v3390
      %v3392 = vsel %vm847, %v3031, 0.0
      %v3393 = vadd.f32 %v3391, %v3392
      %v3394 = vsel %vm847, %v3035, 0.0
      %v3395 = vadd.f32 %v3393, %v3394
      %v3396 = vsel %vm847, %v3039, 0.0
      %v3397 = vadd.f32 %v3395, %v3396
      %v3398 = vsel %vm847, %v3043, 0.0
      %v3399 = vadd.f32 %v3397, %v3398
      %v3400 = vsel %vm847, %v3020, 0.0
      %v3401 = vsel %vm847, %v3024, 0.0
      %v3402 = vadd.f32 %v3400, %v3401
      %v3403 = vsel %vm847, %v3028, 0.0
      %v3404 = vadd.f32 %v3402, %v3403
      %v3405 = vsel %vm847, %v3032, 0.0
      %v3406 = vadd.f32 %v3404, %v3405
      %v3407 = vsel %vm847, %v3036, 0.0
      %v3408 = vadd.f32 %v3406, %v3407
      %v3409 = vsel %vm847, %v3040, 0.0
      %v3410 = vadd.f32 %v3408, %v3409
      %v3411 = vsel %vm847, %v3044, 0.0
      %v3412 = vadd.f32 %v3410, %v3411
      %v3413 = vsel %vm847, %v3045, 0.0
      %v3414 = vsel %vm847, %v3049, 0.0
      %v3415 = vadd.f32 %v3413, %v3414
      %v3416 = vsel %vm847, %v3053, 0.0
      %v3417 = vadd.f32 %v3415, %v3416
      %v3418 = vsel %vm847, %v3057, 0.0
      %v3419 = vadd.f32 %v3417, %v3418
      %v3420 = vsel %vm847, %v3061, 0.0
      %v3421 = vadd.f32 %v3419, %v3420
      %v3422 = vsel %vm847, %v3065, 0.0
      %v3423 = vadd.f32 %v3421, %v3422
      %v3424 = vsel %vm847, %v3069, 0.0
      %v3425 = vadd.f32 %v3423, %v3424
      %v3426 = vsel %vm847, %v3046, 0.0
      %v3427 = vsel %vm847, %v3050, 0.0
      %v3428 = vadd.f32 %v3426, %v3427
      %v3429 = vsel %vm847, %v3054, 0.0
      %v3430 = vadd.f32 %v3428, %v3429
      %v3431 = vsel %vm847, %v3058, 0.0
      %v3432 = vadd.f32 %v3430, %v3431
      %v3433 = vsel %vm847, %v3062, 0.0
      %v3434 = vadd.f32 %v3432, %v3433
      %v3435 = vsel %vm847, %v3066, 0.0
      %v3436 = vadd.f32 %v3434, %v3435
      %v3437 = vsel %vm847, %v3070, 0.0
      %v3438 = vadd.f32 %v3436, %v3437
      %v3439 = vsel %vm847, %v3047, 0.0
      %v3440 = vsel %vm847, %v3051, 0.0
      %v3441 = vadd.f32 %v3439, %v3440
      %v3442 = vsel %vm847, %v3055, 0.0
      %v3443 = vadd.f32 %v3441, %v3442
      %v3444 = vsel %vm847, %v3059, 0.0
      %v3445 = vadd.f32 %v3443, %v3444
      %v3446 = vsel %vm847, %v3063, 0.0
      %v3447 = vadd.f32 %v3445, %v3446
      %v3448 = vsel %vm847, %v3067, 0.0
      %v3449 = vadd.f32 %v3447, %v3448
      %v3450 = vsel %vm847, %v3071, 0.0
      %v3451 = vadd.f32 %v3449, %v3450
      %v3452 = vsel %vm847, %v3048, 0.0
      %v3453 = vsel %vm847, %v3052, 0.0
      %v3454 = vadd.f32 %v3452, %v3453
      %v3455 = vsel %vm847, %v3056, 0.0
      %v3456 = vadd.f32 %v3454, %v3455
      %v3457 = vsel %vm847, %v3060, 0.0
      %v3458 = vadd.f32 %v3456, %v3457
      %v3459 = vsel %vm847, %v3064, 0.0
      %v3460 = vadd.f32 %v3458, %v3459
      %v3461 = vsel %vm847, %v3068, 0.0
      %v3462 = vadd.f32 %v3460, %v3461
      %v3463 = vsel %vm847, %v3072, 0.0
      %v3464 = vadd.f32 %v3462, %v3463
      %v3465 = vsel %vm847, %v3073, 0.0
      %v3466 = vsel %vm847, %v3077, 0.0
      %v3467 = vadd.f32 %v3465, %v3466
      %v3468 = vsel %vm847, %v3081, 0.0
      %v3469 = vadd.f32 %v3467, %v3468
      %v3470 = vsel %vm847, %v3085, 0.0
      %v3471 = vadd.f32 %v3469, %v3470
      %v3472 = vsel %vm847, %v3089, 0.0
      %v3473 = vadd.f32 %v3471, %v3472
      %v3474 = vsel %vm847, %v3093, 0.0
      %v3475 = vadd.f32 %v3473, %v3474
      %v3476 = vsel %vm847, %v3097, 0.0
      %v3477 = vadd.f32 %v3475, %v3476
      %v3478 = vsel %vm847, %v3074, 0.0
      %v3479 = vsel %vm847, %v3078, 0.0
      %v3480 = vadd.f32 %v3478, %v3479
      %v3481 = vsel %vm847, %v3082, 0.0
      %v3482 = vadd.f32 %v3480, %v3481
      %v3483 = vsel %vm847, %v3086, 0.0
      %v3484 = vadd.f32 %v3482, %v3483
      %v3485 = vsel %vm847, %v3090, 0.0
      %v3486 = vadd.f32 %v3484, %v3485
      %v3487 = vsel %vm847, %v3094, 0.0
      %v3488 = vadd.f32 %v3486, %v3487
      %v3489 = vsel %vm847, %v3098, 0.0
      %v3490 = vadd.f32 %v3488, %v3489
      %v3491 = vsel %vm847, %v3075, 0.0
      %v3492 = vsel %vm847, %v3079, 0.0
      %v3493 = vadd.f32 %v3491, %v3492
      %v3494 = vsel %vm847, %v3083, 0.0
      %v3495 = vadd.f32 %v3493, %v3494
      %v3496 = vsel %vm847, %v3087, 0.0
      %v3497 = vadd.f32 %v3495, %v3496
      %v3498 = vsel %vm847, %v3091, 0.0
      %v3499 = vadd.f32 %v3497, %v3498
      %v3500 = vsel %vm847, %v3095, 0.0
      %v3501 = vadd.f32 %v3499, %v3500
      %v3502 = vsel %vm847, %v3099, 0.0
      %v3503 = vadd.f32 %v3501, %v3502
      %v3504 = vsel %vm847, %v3076, 0.0
      %v3505 = vsel %vm847, %v3080, 0.0
      %v3506 = vadd.f32 %v3504, %v3505
      %v3507 = vsel %vm847, %v3084, 0.0
      %v3508 = vadd.f32 %v3506, %v3507
      %v3509 = vsel %vm847, %v3088, 0.0
      %v3510 = vadd.f32 %v3508, %v3509
      %v3511 = vsel %vm847, %v3092, 0.0
      %v3512 = vadd.f32 %v3510, %v3511
      %v3513 = vsel %vm847, %v3096, 0.0
      %v3514 = vadd.f32 %v3512, %v3513
      %v3515 = vsel %vm847, %v3100, 0.0
      %v3516 = vadd.f32 %v3514, %v3515
      %v3517 = vld [vmem:[%s4] sm:$0xf]
      %v3519 = vlaneseq
      %v3520 = vshrl.u32 %v3519, 7
      %v3521 = vsub.s32 0, %v3520
      %v3522 = vrot.slane %v3517, %v3521
      %v3523 = vlaneseq
      %v3524 = vshrl.u32 %v3523, 7
      %v3525 = vsub.s32 1, %v3524
      %v3526 = vrot.slane %v3517, %v3525
      %v3527 = vlaneseq
      %v3528 = vshrl.u32 %v3527, 7
      %v3529 = vsub.s32 2, %v3528
      %v3530 = vrot.slane %v3517, %v3529
      %v3531 = vlaneseq
      %v3532 = vshrl.u32 %v3531, 7
      %v3533 = vsub.s32 3, %v3532
      %v3534 = vrot.slane %v3517, %v3533
      %v3539 = vadd.f32 %v3113, %v3522
      %v3540 = vadd.f32 %v3126, %v3526
      %v3541 = vadd.f32 %v3139, %v3530
      %v3542 = vadd.f32 %v3152, %v3534
      %v3543 = vadd.f32 %v3165, %v3522
      %v3544 = vadd.f32 %v3178, %v3526
      %v3545 = vadd.f32 %v3191, %v3530
      %v3546 = vadd.f32 %v3204, %v3534
      %v3547 = vadd.f32 %v3217, %v3522
      %v3548 = vadd.f32 %v3230, %v3526
      %v3549 = vadd.f32 %v3243, %v3530
      %v3550 = vadd.f32 %v3256, %v3534
      %v3551 = vadd.f32 %v3269, %v3522
      %v3552 = vadd.f32 %v3282, %v3526
      %v3553 = vadd.f32 %v3295, %v3530
      %v3554 = vadd.f32 %v3308, %v3534
      %v3555 = vadd.f32 %v3321, %v3522
      %v3556 = vadd.f32 %v3334, %v3526
      %v3557 = vadd.f32 %v3347, %v3530
      %v3558 = vadd.f32 %v3360, %v3534
      %v3559 = vadd.f32 %v3373, %v3522
      %v3560 = vadd.f32 %v3386, %v3526
      %v3561 = vadd.f32 %v3399, %v3530
      %v3562 = vadd.f32 %v3412, %v3534
      %v3563 = vadd.f32 %v3425, %v3522
      %v3564 = vadd.f32 %v3438, %v3526
      %v3565 = vadd.f32 %v3451, %v3530
      %v3566 = vadd.f32 %v3464, %v3534
      %v3567 = vadd.f32 %v3477, %v3522
      %v3568 = vadd.f32 %v3490, %v3526
      %v3569 = vadd.f32 %v3503, %v3530
      %v3570 = vadd.f32 %v3516, %v3534
      %v3603 = vcombine.low %v3539, %v3540
      %v3604 = vcombine.high %v3539, %v3540
      %v3605 = vcombine.low %v3541, %v3542
      %v3606 = vcombine.high %v3541, %v3542
      %v3608 = vunpack.c.l.s4 1966171168
      %v3609 = vunpack.c.0.s8 %v3608
      %v3610 = vlaneseq
      %v3611 = vshrl.u32 %v3610, 7
      %v3612 = vsub.s32 %v3609, %v3611
      %v3613 = vrot.slane %v3603, %v3612
      %v3615 = vunpack.c.l.s4 1966171168
      %v3616 = vunpack.c.0.s8 %v3615
      %v3617 = vlaneseq
      %v3618 = vshrl.u32 %v3617, 7
      %v3619 = vsub.s32 %v3616, %v3618
      %v3620 = vrot.slane %v3604, %v3619
      %v3622 = vunpack.c.l.s4 1966171168
      %v3623 = vunpack.c.0.s8 %v3622
      %v3624 = vlaneseq
      %v3625 = vshrl.u32 %v3624, 7
      %v3626 = vsub.s32 %v3623, %v3625
      %v3627 = vrot.slane %v3605, %v3626
      %v3629 = vunpack.c.l.s4 1966171168
      %v3630 = vunpack.c.0.s8 %v3629
      %v3631 = vlaneseq
      %v3632 = vshrl.u32 %v3631, 7
      %v3633 = vsub.s32 %v3630, %v3632
      %v3634 = vrot.slane %v3606, %v3633
      %v3635 = vcombine.low %v3613, %v3627
      %v3636 = vcombine.high %v3613, %v3627
      %v3637 = vcombine.low %v3620, %v3634
      %v3638 = vcombine.high %v3620, %v3634
      %v3640 = vunpack.c.l.s4 1966171168
      %v3641 = vunpack.c.0.s8 %v3640
      %v3642 = vlaneseq
      %v3643 = vshrl.u32 %v3642, 7
      %v3644 = vsub.s32 %v3641, %v3643
      %v3645 = vrot.slane %v3635, %v3644
      %v3647 = vunpack.c.l.s4 1966171168
      %v3648 = vunpack.c.0.s8 %v3647
      %v3649 = vlaneseq
      %v3650 = vshrl.u32 %v3649, 7
      %v3651 = vsub.s32 %v3648, %v3650
      %v3652 = vrot.slane %v3637, %v3651
      %v3654 = vunpack.c.l.s4 1966171168
      %v3655 = vunpack.c.0.s8 %v3654
      %v3656 = vlaneseq
      %v3657 = vshrl.u32 %v3656, 7
      %v3658 = vsub.s32 %v3655, %v3657
      %v3659 = vrot.slane %v3636, %v3658
      %v3661 = vunpack.c.l.s4 1966171168
      %v3662 = vunpack.c.0.s8 %v3661
      %v3663 = vlaneseq
      %v3664 = vshrl.u32 %v3663, 7
      %v3665 = vsub.s32 %v3662, %v3664
      %v3666 = vrot.slane %v3638, %v3665
      %v3667 = vcombine.high %v3645, %v3645
      %v3668 = vcombine.high %v3652, %v3652
      %v3669 = vcombine.high %v3659, %v3659
      %v3670 = vcombine.low %v3543, %v3544
      %v3671 = vcombine.high %v3543, %v3544
      %v3672 = vcombine.low %v3545, %v3546
      %v3673 = vcombine.high %v3545, %v3546
      %v3675 = vunpack.c.l.s4 1966171168
      %v3676 = vunpack.c.0.s8 %v3675
      %v3677 = vlaneseq
      %v3678 = vshrl.u32 %v3677, 7
      %v3679 = vsub.s32 %v3676, %v3678
      %v3680 = vrot.slane %v3670, %v3679
      %v3682 = vunpack.c.l.s4 1966171168
      %v3683 = vunpack.c.0.s8 %v3682
      %v3684 = vlaneseq
      %v3685 = vshrl.u32 %v3684, 7
      %v3686 = vsub.s32 %v3683, %v3685
      %v3687 = vrot.slane %v3671, %v3686
      %v3689 = vunpack.c.l.s4 1966171168
      %v3690 = vunpack.c.0.s8 %v3689
      %v3691 = vlaneseq
      %v3692 = vshrl.u32 %v3691, 7
      %v3693 = vsub.s32 %v3690, %v3692
      %v3694 = vrot.slane %v3672, %v3693
      %v3696 = vunpack.c.l.s4 1966171168
      %v3697 = vunpack.c.0.s8 %v3696
      %v3698 = vlaneseq
      %v3699 = vshrl.u32 %v3698, 7
      %v3700 = vsub.s32 %v3697, %v3699
      %v3701 = vrot.slane %v3673, %v3700
      %v3702 = vcombine.low %v3680, %v3694
      %v3703 = vcombine.high %v3680, %v3694
      %v3704 = vcombine.low %v3687, %v3701
      %v3705 = vcombine.high %v3687, %v3701
      %v3707 = vunpack.c.l.s4 1966171168
      %v3708 = vunpack.c.0.s8 %v3707
      %v3709 = vlaneseq
      %v3710 = vshrl.u32 %v3709, 7
      %v3711 = vsub.s32 %v3708, %v3710
      %v3712 = vrot.slane %v3702, %v3711
      %v3714 = vunpack.c.l.s4 1966171168
      %v3715 = vunpack.c.0.s8 %v3714
      %v3716 = vlaneseq
      %v3717 = vshrl.u32 %v3716, 7
      %v3718 = vsub.s32 %v3715, %v3717
      %v3719 = vrot.slane %v3704, %v3718
      %v3721 = vunpack.c.l.s4 1966171168
      %v3722 = vunpack.c.0.s8 %v3721
      %v3723 = vlaneseq
      %v3724 = vshrl.u32 %v3723, 7
      %v3725 = vsub.s32 %v3722, %v3724
      %v3726 = vrot.slane %v3703, %v3725
      %v3728 = vunpack.c.l.s4 1966171168
      %v3729 = vunpack.c.0.s8 %v3728
      %v3730 = vlaneseq
      %v3731 = vshrl.u32 %v3730, 7
      %v3732 = vsub.s32 %v3729, %v3731
      %v3733 = vrot.slane %v3705, %v3732
      %v3734 = vcombine.high %v3712, %v3712
      %v3735 = vcombine.high %v3719, %v3719
      %v3736 = vcombine.high %v3726, %v3726
      %v3737 = vcombine.low %v3547, %v3548
      %v3738 = vcombine.high %v3547, %v3548
      %v3739 = vcombine.low %v3549, %v3550
      %v3740 = vcombine.high %v3549, %v3550
      %v3742 = vunpack.c.l.s4 1966171168
      %v3743 = vunpack.c.0.s8 %v3742
      %v3744 = vlaneseq
      %v3745 = vshrl.u32 %v3744, 7
      %v3746 = vsub.s32 %v3743, %v3745
      %v3747 = vrot.slane %v3737, %v3746
      %v3749 = vunpack.c.l.s4 1966171168
      %v3750 = vunpack.c.0.s8 %v3749
      %v3751 = vlaneseq
      %v3752 = vshrl.u32 %v3751, 7
      %v3753 = vsub.s32 %v3750, %v3752
      %v3754 = vrot.slane %v3738, %v3753
      %v3756 = vunpack.c.l.s4 1966171168
      %v3757 = vunpack.c.0.s8 %v3756
      %v3758 = vlaneseq
      %v3759 = vshrl.u32 %v3758, 7
      %v3760 = vsub.s32 %v3757, %v3759
      %v3761 = vrot.slane %v3739, %v3760
      %v3763 = vunpack.c.l.s4 1966171168
      %v3764 = vunpack.c.0.s8 %v3763
      %v3765 = vlaneseq
      %v3766 = vshrl.u32 %v3765, 7
      %v3767 = vsub.s32 %v3764, %v3766
      %v3768 = vrot.slane %v3740, %v3767
      %v3769 = vcombine.low %v3747, %v3761
      %v3770 = vcombine.high %v3747, %v3761
      %v3771 = vcombine.low %v3754, %v3768
      %v3772 = vcombine.high %v3754, %v3768
      %v3774 = vunpack.c.l.s4 1966171168
      %v3775 = vunpack.c.0.s8 %v3774
      %v3776 = vlaneseq
      %v3777 = vshrl.u32 %v3776, 7
      %v3778 = vsub.s32 %v3775, %v3777
      %v3779 = vrot.slane %v3769, %v3778
      %v3781 = vunpack.c.l.s4 1966171168
      %v3782 = vunpack.c.0.s8 %v3781
      %v3783 = vlaneseq
      %v3784 = vshrl.u32 %v3783, 7
      %v3785 = vsub.s32 %v3782, %v3784
      %v3786 = vrot.slane %v3771, %v3785
      %v3788 = vunpack.c.l.s4 1966171168
      %v3789 = vunpack.c.0.s8 %v3788
      %v3790 = vlaneseq
      %v3791 = vshrl.u32 %v3790, 7
      %v3792 = vsub.s32 %v3789, %v3791
      %v3793 = vrot.slane %v3770, %v3792
      %v3795 = vunpack.c.l.s4 1966171168
      %v3796 = vunpack.c.0.s8 %v3795
      %v3797 = vlaneseq
      %v3798 = vshrl.u32 %v3797, 7
      %v3799 = vsub.s32 %v3796, %v3798
      %v3800 = vrot.slane %v3772, %v3799
      %v3801 = vcombine.high %v3779, %v3779
      %v3802 = vcombine.high %v3786, %v3786
      %v3803 = vcombine.high %v3793, %v3793
      %v3804 = vcombine.low %v3551, %v3552
      %v3805 = vcombine.high %v3551, %v3552
      %v3806 = vcombine.low %v3553, %v3554
      %v3807 = vcombine.high %v3553, %v3554
      %v3809 = vunpack.c.l.s4 1966171168
      %v3810 = vunpack.c.0.s8 %v3809
      %v3811 = vlaneseq
      %v3812 = vshrl.u32 %v3811, 7
      %v3813 = vsub.s32 %v3810, %v3812
      %v3814 = vrot.slane %v3804, %v3813
      %v3816 = vunpack.c.l.s4 1966171168
      %v3817 = vunpack.c.0.s8 %v3816
      %v3818 = vlaneseq
      %v3819 = vshrl.u32 %v3818, 7
      %v3820 = vsub.s32 %v3817, %v3819
      %v3821 = vrot.slane %v3805, %v3820
      %v3823 = vunpack.c.l.s4 1966171168
      %v3824 = vunpack.c.0.s8 %v3823
      %v3825 = vlaneseq
      %v3826 = vshrl.u32 %v3825, 7
      %v3827 = vsub.s32 %v3824, %v3826
      %v3828 = vrot.slane %v3806, %v3827
      %v3830 = vunpack.c.l.s4 1966171168
      %v3831 = vunpack.c.0.s8 %v3830
      %v3832 = vlaneseq
      %v3833 = vshrl.u32 %v3832, 7
      %v3834 = vsub.s32 %v3831, %v3833
      %v3835 = vrot.slane %v3807, %v3834
      %v3836 = vcombine.low %v3814, %v3828
      %v3837 = vcombine.high %v3814, %v3828
      %v3838 = vcombine.low %v3821, %v3835
      %v3839 = vcombine.high %v3821, %v3835
      %v3841 = vunpack.c.l.s4 1966171168
      %v3842 = vunpack.c.0.s8 %v3841
      %v3843 = vlaneseq
      %v3844 = vshrl.u32 %v3843, 7
      %v3845 = vsub.s32 %v3842, %v3844
      %v3846 = vrot.slane %v3836, %v3845
      %v3848 = vunpack.c.l.s4 1966171168
      %v3849 = vunpack.c.0.s8 %v3848
      %v3850 = vlaneseq
      %v3851 = vshrl.u32 %v3850, 7
      %v3852 = vsub.s32 %v3849, %v3851
      %v3853 = vrot.slane %v3838, %v3852
      %v3855 = vunpack.c.l.s4 1966171168
      %v3856 = vunpack.c.0.s8 %v3855
      %v3857 = vlaneseq
      %v3858 = vshrl.u32 %v3857, 7
      %v3859 = vsub.s32 %v3856, %v3858
      %v3860 = vrot.slane %v3837, %v3859
      %v3862 = vunpack.c.l.s4 1966171168
      %v3863 = vunpack.c.0.s8 %v3862
      %v3864 = vlaneseq
      %v3865 = vshrl.u32 %v3864, 7
      %v3866 = vsub.s32 %v3863, %v3865
      %v3867 = vrot.slane %v3839, %v3866
      %v3868 = vcombine.high %v3846, %v3846
      %v3869 = vcombine.high %v3853, %v3853
      %v3870 = vcombine.high %v3860, %v3860
      %v3871 = vcombine.low %v3555, %v3556
      %v3872 = vcombine.high %v3555, %v3556
      %v3873 = vcombine.low %v3557, %v3558
      %v3874 = vcombine.high %v3557, %v3558
      %v3876 = vunpack.c.l.s4 1966171168
      %v3877 = vunpack.c.0.s8 %v3876
      %v3878 = vlaneseq
      %v3879 = vshrl.u32 %v3878, 7
      %v3880 = vsub.s32 %v3877, %v3879
      %v3881 = vrot.slane %v3871, %v3880
      %v3883 = vunpack.c.l.s4 1966171168
      %v3884 = vunpack.c.0.s8 %v3883
      %v3885 = vlaneseq
      %v3886 = vshrl.u32 %v3885, 7
      %v3887 = vsub.s32 %v3884, %v3886
      %v3888 = vrot.slane %v3872, %v3887
      %v3890 = vunpack.c.l.s4 1966171168
      %v3891 = vunpack.c.0.s8 %v3890
      %v3892 = vlaneseq
      %v3893 = vshrl.u32 %v3892, 7
      %v3894 = vsub.s32 %v3891, %v3893
      %v3895 = vrot.slane %v3873, %v3894
      %v3897 = vunpack.c.l.s4 1966171168
      %v3898 = vunpack.c.0.s8 %v3897
      %v3899 = vlaneseq
      %v3900 = vshrl.u32 %v3899, 7
      %v3901 = vsub.s32 %v3898, %v3900
      %v3902 = vrot.slane %v3874, %v3901
      %v3903 = vcombine.low %v3881, %v3895
      %v3904 = vcombine.high %v3881, %v3895
      %v3905 = vcombine.low %v3888, %v3902
      %v3906 = vcombine.high %v3888, %v3902
      %v3908 = vunpack.c.l.s4 1966171168
      %v3909 = vunpack.c.0.s8 %v3908
      %v3910 = vlaneseq
      %v3911 = vshrl.u32 %v3910, 7
      %v3912 = vsub.s32 %v3909, %v3911
      %v3913 = vrot.slane %v3903, %v3912
      %v3915 = vunpack.c.l.s4 1966171168
      %v3916 = vunpack.c.0.s8 %v3915
      %v3917 = vlaneseq
      %v3918 = vshrl.u32 %v3917, 7
      %v3919 = vsub.s32 %v3916, %v3918
      %v3920 = vrot.slane %v3905, %v3919
      %v3922 = vunpack.c.l.s4 1966171168
      %v3923 = vunpack.c.0.s8 %v3922
      %v3924 = vlaneseq
      %v3925 = vshrl.u32 %v3924, 7
      %v3926 = vsub.s32 %v3923, %v3925
      %v3927 = vrot.slane %v3904, %v3926
      %v3929 = vunpack.c.l.s4 1966171168
      %v3930 = vunpack.c.0.s8 %v3929
      %v3931 = vlaneseq
      %v3932 = vshrl.u32 %v3931, 7
      %v3933 = vsub.s32 %v3930, %v3932
      %v3934 = vrot.slane %v3906, %v3933
      %v3935 = vcombine.high %v3913, %v3913
      %v3936 = vcombine.high %v3920, %v3920
      %v3937 = vcombine.high %v3927, %v3927
      %v3938 = vcombine.low %v3559, %v3560
      %v3939 = vcombine.high %v3559, %v3560
      %v3940 = vcombine.low %v3561, %v3562
      %v3941 = vcombine.high %v3561, %v3562
      %v3943 = vunpack.c.l.s4 1966171168
      %v3944 = vunpack.c.0.s8 %v3943
      %v3945 = vlaneseq
      %v3946 = vshrl.u32 %v3945, 7
      %v3947 = vsub.s32 %v3944, %v3946
      %v3948 = vrot.slane %v3938, %v3947
      %v3950 = vunpack.c.l.s4 1966171168
      %v3951 = vunpack.c.0.s8 %v3950
      %v3952 = vlaneseq
      %v3953 = vshrl.u32 %v3952, 7
      %v3954 = vsub.s32 %v3951, %v3953
      %v3955 = vrot.slane %v3939, %v3954
      %v3957 = vunpack.c.l.s4 1966171168
      %v3958 = vunpack.c.0.s8 %v3957
      %v3959 = vlaneseq
      %v3960 = vshrl.u32 %v3959, 7
      %v3961 = vsub.s32 %v3958, %v3960
      %v3962 = vrot.slane %v3940, %v3961
      %v3964 = vunpack.c.l.s4 1966171168
      %v3965 = vunpack.c.0.s8 %v3964
      %v3966 = vlaneseq
      %v3967 = vshrl.u32 %v3966, 7
      %v3968 = vsub.s32 %v3965, %v3967
      %v3969 = vrot.slane %v3941, %v3968
      %v3970 = vcombine.low %v3948, %v3962
      %v3971 = vcombine.high %v3948, %v3962
      %v3972 = vcombine.low %v3955, %v3969
      %v3973 = vcombine.high %v3955, %v3969
      %v3975 = vunpack.c.l.s4 1966171168
      %v3976 = vunpack.c.0.s8 %v3975
      %v3977 = vlaneseq
      %v3978 = vshrl.u32 %v3977, 7
      %v3979 = vsub.s32 %v3976, %v3978
      %v3980 = vrot.slane %v3970, %v3979
      %v3982 = vunpack.c.l.s4 1966171168
      %v3983 = vunpack.c.0.s8 %v3982
      %v3984 = vlaneseq
      %v3985 = vshrl.u32 %v3984, 7
      %v3986 = vsub.s32 %v3983, %v3985
      %v3987 = vrot.slane %v3972, %v3986
      %v3989 = vunpack.c.l.s4 1966171168
      %v3990 = vunpack.c.0.s8 %v3989
      %v3991 = vlaneseq
      %v3992 = vshrl.u32 %v3991, 7
      %v3993 = vsub.s32 %v3990, %v3992
      %v3994 = vrot.slane %v3971, %v3993
      %v3996 = vunpack.c.l.s4 1966171168
      %v3997 = vunpack.c.0.s8 %v3996
      %v3998 = vlaneseq
      %v3999 = vshrl.u32 %v3998, 7
      %v4000 = vsub.s32 %v3997, %v3999
      %v4001 = vrot.slane %v3973, %v4000
      %v4002 = vcombine.high %v3980, %v3980
      %v4003 = vcombine.high %v3987, %v3987
      %v4004 = vcombine.high %v3994, %v3994
      %v4005 = vcombine.low %v3563, %v3564
      %v4006 = vcombine.high %v3563, %v3564
      %v4007 = vcombine.low %v3565, %v3566
      %v4008 = vcombine.high %v3565, %v3566
      %v4010 = vunpack.c.l.s4 1966171168
      %v4011 = vunpack.c.0.s8 %v4010
      %v4012 = vlaneseq
      %v4013 = vshrl.u32 %v4012, 7
      %v4014 = vsub.s32 %v4011, %v4013
      %v4015 = vrot.slane %v4005, %v4014
      %v4017 = vunpack.c.l.s4 1966171168
      %v4018 = vunpack.c.0.s8 %v4017
      %v4019 = vlaneseq
      %v4020 = vshrl.u32 %v4019, 7
      %v4021 = vsub.s32 %v4018, %v4020
      %v4022 = vrot.slane %v4006, %v4021
      %v4024 = vunpack.c.l.s4 1966171168
      %v4025 = vunpack.c.0.s8 %v4024
      %v4026 = vlaneseq
      %v4027 = vshrl.u32 %v4026, 7
      %v4028 = vsub.s32 %v4025, %v4027
      %v4029 = vrot.slane %v4007, %v4028
      %v4031 = vunpack.c.l.s4 1966171168
      %v4032 = vunpack.c.0.s8 %v4031
      %v4033 = vlaneseq
      %v4034 = vshrl.u32 %v4033, 7
      %v4035 = vsub.s32 %v4032, %v4034
      %v4036 = vrot.slane %v4008, %v4035
      %v4037 = vcombine.low %v4015, %v4029
      %v4038 = vcombine.high %v4015, %v4029
      %v4039 = vcombine.low %v4022, %v4036
      %v4040 = vcombine.high %v4022, %v4036
      %v4042 = vunpack.c.l.s4 1966171168
      %v4043 = vunpack.c.0.s8 %v4042
      %v4044 = vlaneseq
      %v4045 = vshrl.u32 %v4044, 7
      %v4046 = vsub.s32 %v4043, %v4045
      %v4047 = vrot.slane %v4037, %v4046
      %v4049 = vunpack.c.l.s4 1966171168
      %v4050 = vunpack.c.0.s8 %v4049
      %v4051 = vlaneseq
      %v4052 = vshrl.u32 %v4051, 7
      %v4053 = vsub.s32 %v4050, %v4052
      %v4054 = vrot.slane %v4039, %v4053
      %v4056 = vunpack.c.l.s4 1966171168
      %v4057 = vunpack.c.0.s8 %v4056
      %v4058 = vlaneseq
      %v4059 = vshrl.u32 %v4058, 7
      %v4060 = vsub.s32 %v4057, %v4059
      %v4061 = vrot.slane %v4038, %v4060
      %v4063 = vunpack.c.l.s4 1966171168
      %v4064 = vunpack.c.0.s8 %v4063
      %v4065 = vlaneseq
      %v4066 = vshrl.u32 %v4065, 7
      %v4067 = vsub.s32 %v4064, %v4066
      %v4068 = vrot.slane %v4040, %v4067
      %v4069 = vcombine.high %v4047, %v4047
      %v4070 = vcombine.high %v4054, %v4054
      %v4071 = vcombine.high %v4061, %v4061
      %v4072 = vcombine.low %v3567, %v3568
      %v4073 = vcombine.high %v3567, %v3568
      %v4074 = vcombine.low %v3569, %v3570
      %v4075 = vcombine.high %v3569, %v3570
      %v4077 = vunpack.c.l.s4 1966171168
      %v4078 = vunpack.c.0.s8 %v4077
      %v4079 = vlaneseq
      %v4080 = vshrl.u32 %v4079, 7
      %v4081 = vsub.s32 %v4078, %v4080
      %v4082 = vrot.slane %v4072, %v4081
      %v4084 = vunpack.c.l.s4 1966171168
      %v4085 = vunpack.c.0.s8 %v4084
      %v4086 = vlaneseq
      %v4087 = vshrl.u32 %v4086, 7
      %v4088 = vsub.s32 %v4085, %v4087
      %v4089 = vrot.slane %v4073, %v4088
      %v4091 = vunpack.c.l.s4 1966171168
      %v4092 = vunpack.c.0.s8 %v4091
      %v4093 = vlaneseq
      %v4094 = vshrl.u32 %v4093, 7
      %v4095 = vsub.s32 %v4092, %v4094
      %v4096 = vrot.slane %v4074, %v4095
      %v4098 = vunpack.c.l.s4 1966171168
      %v4099 = vunpack.c.0.s8 %v4098
      %v4100 = vlaneseq
      %v4101 = vshrl.u32 %v4100, 7
      %v4102 = vsub.s32 %v4099, %v4101
      %v4103 = vrot.slane %v4075, %v4102
      %v4104 = vcombine.low %v4082, %v4096
      %v4105 = vcombine.high %v4082, %v4096
      %v4106 = vcombine.low %v4089, %v4103
      %v4107 = vcombine.high %v4089, %v4103
      %v4109 = vunpack.c.l.s4 1966171168
      %v4110 = vunpack.c.0.s8 %v4109
      %v4111 = vlaneseq
      %v4112 = vshrl.u32 %v4111, 7
      %v4113 = vsub.s32 %v4110, %v4112
      %v4114 = vrot.slane %v4104, %v4113
      %v4116 = vunpack.c.l.s4 1966171168
      %v4117 = vunpack.c.0.s8 %v4116
      %v4118 = vlaneseq
      %v4119 = vshrl.u32 %v4118, 7
      %v4120 = vsub.s32 %v4117, %v4119
      %v4121 = vrot.slane %v4106, %v4120
      %v4123 = vunpack.c.l.s4 1966171168
      %v4124 = vunpack.c.0.s8 %v4123
      %v4125 = vlaneseq
      %v4126 = vshrl.u32 %v4125, 7
      %v4127 = vsub.s32 %v4124, %v4126
      %v4128 = vrot.slane %v4105, %v4127
      %v4130 = vunpack.c.l.s4 1966171168
      %v4131 = vunpack.c.0.s8 %v4130
      %v4132 = vlaneseq
      %v4133 = vshrl.u32 %v4132, 7
      %v4134 = vsub.s32 %v4131, %v4133
      %v4135 = vrot.slane %v4107, %v4134
      %v4136 = vcombine.high %v4114, %v4114
      %v4137 = vcombine.high %v4121, %v4121
      %v4138 = vcombine.high %v4128, %v4128
      %v4363 = vrot.slane %v2442, 7
      %vm4364 = vcmask 1041409
      %v4365 = vsel %vm4364, %v4363, %v2438
      %v4366 = vrot.slane %v2446, 6
      %vm4367 = vcmask 1042434
      %v4368 = vsel %vm4367, %v4366, %v4365
      %v4369 = vrot.slane %v2450, 5
      %vm4370 = vcmask 1043459
      %v4371 = vsel %vm4370, %v4369, %v4368
      %v4372 = vrot.slane %v2454, 4
      %vm4373 = vcmask 1044484
      %v4374 = vsel %vm4373, %v4372, %v4371
      %v4375 = vrot.slane %v2458, 3
      %vm4376 = vcmask 1045509
      %v4377 = vsel %vm4376, %v4375, %v4374
      %v4378 = vrot.slane %v2462, 2
      %vm4379 = vcmask 1046534
      %v4380 = vsel %vm4379, %v4378, %v4377
      %v4381 = vrot.slane %v2466, 1
      %vm4382 = vcmask 1047559
      %v4383 = vsel %vm4382, %v4381, %v4380
      %v4384 = vrot.slane %v2443, 7
      %v4385 = vsel %vm4364, %v4384, %v2439
      %v4386 = vrot.slane %v2447, 6
      %v4387 = vsel %vm4367, %v4386, %v4385
      %v4388 = vrot.slane %v2451, 5
      %v4389 = vsel %vm4370, %v4388, %v4387
      %v4390 = vrot.slane %v2455, 4
      %v4391 = vsel %vm4373, %v4390, %v4389
      %v4392 = vrot.slane %v2459, 3
      %v4393 = vsel %vm4376, %v4392, %v4391
      %v4394 = vrot.slane %v2463, 2
      %v4395 = vsel %vm4379, %v4394, %v4393
      %v4396 = vrot.slane %v2467, 1
      %v4397 = vsel %vm4382, %v4396, %v4395
      %v4398 = vrot.slane %v2444, 7
      %v4399 = vsel %vm4364, %v4398, %v2440
      %v4400 = vrot.slane %v2448, 6
      %v4401 = vsel %vm4367, %v4400, %v4399
      %v4402 = vrot.slane %v2452, 5
      %v4403 = vsel %vm4370, %v4402, %v4401
      %v4404 = vrot.slane %v2456, 4
      %v4405 = vsel %vm4373, %v4404, %v4403
      %v4406 = vrot.slane %v2460, 3
      %v4407 = vsel %vm4376, %v4406, %v4405
      %v4408 = vrot.slane %v2464, 2
      %v4409 = vsel %vm4379, %v4408, %v4407
      %v4410 = vrot.slane %v2468, 1
      %v4411 = vsel %vm4382, %v4410, %v4409
      %v4412 = vrot.slane %v2445, 7
      %v4413 = vsel %vm4364, %v4412, %v2441
      %v4414 = vrot.slane %v2449, 6
      %v4415 = vsel %vm4367, %v4414, %v4413
      %v4416 = vrot.slane %v2453, 5
      %v4417 = vsel %vm4370, %v4416, %v4415
      %v4418 = vrot.slane %v2457, 4
      %v4419 = vsel %vm4373, %v4418, %v4417
      %v4420 = vrot.slane %v2461, 3
      %v4421 = vsel %vm4376, %v4420, %v4419
      %v4422 = vrot.slane %v2465, 2
      %v4423 = vsel %vm4379, %v4422, %v4421
      %v4424 = vrot.slane %v2469, 1
      %v4425 = vsel %vm4382, %v4424, %v4423
      %v4426 = vrot.slane %v2474, 7
      %v4427 = vsel %vm4364, %v4426, %v2470
      %v4428 = vrot.slane %v2478, 6
      %v4429 = vsel %vm4367, %v4428, %v4427
      %v4430 = vrot.slane %v2482, 5
      %v4431 = vsel %vm4370, %v4430, %v4429
      %v4432 = vrot.slane %v2486, 4
      %v4433 = vsel %vm4373, %v4432, %v4431
      %v4434 = vrot.slane %v2490, 3
      %v4435 = vsel %vm4376, %v4434, %v4433
      %v4436 = vrot.slane %v2494, 2
      %v4437 = vsel %vm4379, %v4436, %v4435
      %v4438 = vrot.slane %v2498, 1
      %v4439 = vsel %vm4382, %v4438, %v4437
      %v4440 = vrot.slane %v2475, 7
      %v4441 = vsel %vm4364, %v4440, %v2471
      %v4442 = vrot.slane %v2479, 6
      %v4443 = vsel %vm4367, %v4442, %v4441
      %v4444 = vrot.slane %v2483, 5
      %v4445 = vsel %vm4370, %v4444, %v4443
      %v4446 = vrot.slane %v2487, 4
      %v4447 = vsel %vm4373, %v4446, %v4445
      %v4448 = vrot.slane %v2491, 3
      %v4449 = vsel %vm4376, %v4448, %v4447
      %v4450 = vrot.slane %v2495, 2
      %v4451 = vsel %vm4379, %v4450, %v4449
      %v4452 = vrot.slane %v2499, 1
      %v4453 = vsel %vm4382, %v4452, %v4451
      %v4454 = vrot.slane %v2476, 7
      %v4455 = vsel %vm4364, %v4454, %v2472
      %v4456 = vrot.slane %v2480, 6
      %v4457 = vsel %vm4367, %v4456, %v4455
      %v4458 = vrot.slane %v2484, 5
      %v4459 = vsel %vm4370, %v4458, %v4457
      %v4460 = vrot.slane %v2488, 4
      %v4461 = vsel %vm4373, %v4460, %v4459
      %v4462 = vrot.slane %v2492, 3
      %v4463 = vsel %vm4376, %v4462, %v4461
      %v4464 = vrot.slane %v2496, 2
      %v4465 = vsel %vm4379, %v4464, %v4463
      %v4466 = vrot.slane %v2500, 1
      %v4467 = vsel %vm4382, %v4466, %v4465
      %v4468 = vrot.slane %v2477, 7
      %v4469 = vsel %vm4364, %v4468, %v2473
      %v4470 = vrot.slane %v2481, 6
      %v4471 = vsel %vm4367, %v4470, %v4469
      %v4472 = vrot.slane %v2485, 5
      %v4473 = vsel %vm4370, %v4472, %v4471
      %v4474 = vrot.slane %v2489, 4
      %v4475 = vsel %vm4373, %v4474, %v4473
      %v4476 = vrot.slane %v2493, 3
      %v4477 = vsel %vm4376, %v4476, %v4475
      %v4478 = vrot.slane %v2497, 2
      %v4479 = vsel %vm4379, %v4478, %v4477
      %v4480 = vrot.slane %v2501, 1
      %v4481 = vsel %vm4382, %v4480, %v4479
      %v4482 = vrot.slane %v2506, 7
      %v4483 = vsel %vm4364, %v4482, %v2502
      %v4484 = vrot.slane %v2510, 6
      %v4485 = vsel %vm4367, %v4484, %v4483
      %v4486 = vrot.slane %v2514, 5
      %v4487 = vsel %vm4370, %v4486, %v4485
      %v4488 = vrot.slane %v2518, 4
      %v4489 = vsel %vm4373, %v4488, %v4487
      %v4490 = vrot.slane %v2522, 3
      %v4491 = vsel %vm4376, %v4490, %v4489
      %v4492 = vrot.slane %v2526, 2
      %v4493 = vsel %vm4379, %v4492, %v4491
      %v4494 = vrot.slane %v2530, 1
      %v4495 = vsel %vm4382, %v4494, %v4493
      %v4496 = vrot.slane %v2507, 7
      %v4497 = vsel %vm4364, %v4496, %v2503
      %v4498 = vrot.slane %v2511, 6
      %v4499 = vsel %vm4367, %v4498, %v4497
      %v4500 = vrot.slane %v2515, 5
      %v4501 = vsel %vm4370, %v4500, %v4499
      %v4502 = vrot.slane %v2519, 4
      %v4503 = vsel %vm4373, %v4502, %v4501
      %v4504 = vrot.slane %v2523, 3
      %v4505 = vsel %vm4376, %v4504, %v4503
      %v4506 = vrot.slane %v2527, 2
      %v4507 = vsel %vm4379, %v4506, %v4505
      %v4508 = vrot.slane %v2531, 1
      %v4509 = vsel %vm4382, %v4508, %v4507
      %v4510 = vrot.slane %v2508, 7
      %v4511 = vsel %vm4364, %v4510, %v2504
      %v4512 = vrot.slane %v2512, 6
      %v4513 = vsel %vm4367, %v4512, %v4511
      %v4514 = vrot.slane %v2516, 5
      %v4515 = vsel %vm4370, %v4514, %v4513
      %v4516 = vrot.slane %v2520, 4
      %v4517 = vsel %vm4373, %v4516, %v4515
      %v4518 = vrot.slane %v2524, 3
      %v4519 = vsel %vm4376, %v4518, %v4517
      %v4520 = vrot.slane %v2528, 2
      %v4521 = vsel %vm4379, %v4520, %v4519
      %v4522 = vrot.slane %v2532, 1
      %v4523 = vsel %vm4382, %v4522, %v4521
      %v4524 = vrot.slane %v2509, 7
      %v4525 = vsel %vm4364, %v4524, %v2505
      %v4526 = vrot.slane %v2513, 6
      %v4527 = vsel %vm4367, %v4526, %v4525
      %v4528 = vrot.slane %v2517, 5
      %v4529 = vsel %vm4370, %v4528, %v4527
      %v4530 = vrot.slane %v2521, 4
      %v4531 = vsel %vm4373, %v4530, %v4529
      %v4532 = vrot.slane %v2525, 3
      %v4533 = vsel %vm4376, %v4532, %v4531
      %v4534 = vrot.slane %v2529, 2
      %v4535 = vsel %vm4379, %v4534, %v4533
      %v4536 = vrot.slane %v2533, 1
      %v4537 = vsel %vm4382, %v4536, %v4535
      %v4538 = vrot.slane %v2538, 7
      %v4539 = vsel %vm4364, %v4538, %v2534
      %v4540 = vrot.slane %v2542, 6
      %v4541 = vsel %vm4367, %v4540, %v4539
      %v4542 = vrot.slane %v2546, 5
      %v4543 = vsel %vm4370, %v4542, %v4541
      %v4544 = vrot.slane %v2550, 4
      %v4545 = vsel %vm4373, %v4544, %v4543
      %v4546 = vrot.slane %v2554, 3
      %v4547 = vsel %vm4376, %v4546, %v4545
      %v4548 = vrot.slane %v2558, 2
      %v4549 = vsel %vm4379, %v4548, %v4547
      %v4550 = vrot.slane %v2562, 1
      %v4551 = vsel %vm4382, %v4550, %v4549
      %v4552 = vrot.slane %v2539, 7
      %v4553 = vsel %vm4364, %v4552, %v2535
      %v4554 = vrot.slane %v2543, 6
      %v4555 = vsel %vm4367, %v4554, %v4553
      %v4556 = vrot.slane %v2547, 5
      %v4557 = vsel %vm4370, %v4556, %v4555
      %v4558 = vrot.slane %v2551, 4
      %v4559 = vsel %vm4373, %v4558, %v4557
      %v4560 = vrot.slane %v2555, 3
      %v4561 = vsel %vm4376, %v4560, %v4559
      %v4562 = vrot.slane %v2559, 2
      %v4563 = vsel %vm4379, %v4562, %v4561
      %v4564 = vrot.slane %v2563, 1
      %v4565 = vsel %vm4382, %v4564, %v4563
      %v4566 = vrot.slane %v2540, 7
      %v4567 = vsel %vm4364, %v4566, %v2536
      %v4568 = vrot.slane %v2544, 6
      %v4569 = vsel %vm4367, %v4568, %v4567
      %v4570 = vrot.slane %v2548, 5
      %v4571 = vsel %vm4370, %v4570, %v4569
      %v4572 = vrot.slane %v2552, 4
      %v4573 = vsel %vm4373, %v4572, %v4571
      %v4574 = vrot.slane %v2556, 3
      %v4575 = vsel %vm4376, %v4574, %v4573
      %v4576 = vrot.slane %v2560, 2
      %v4577 = vsel %vm4379, %v4576, %v4575
      %v4578 = vrot.slane %v2564, 1
      %v4579 = vsel %vm4382, %v4578, %v4577
      %v4580 = vrot.slane %v2541, 7
      %v4581 = vsel %vm4364, %v4580, %v2537
      %v4582 = vrot.slane %v2545, 6
      %v4583 = vsel %vm4367, %v4582, %v4581
      %v4584 = vrot.slane %v2549, 5
      %v4585 = vsel %vm4370, %v4584, %v4583
      %v4586 = vrot.slane %v2553, 4
      %v4587 = vsel %vm4373, %v4586, %v4585
      %v4588 = vrot.slane %v2557, 3
      %v4589 = vsel %vm4376, %v4588, %v4587
      %v4590 = vrot.slane %v2561, 2
      %v4591 = vsel %vm4379, %v4590, %v4589
      %v4592 = vrot.slane %v2565, 1
      %v4593 = vsel %vm4382, %v4592, %v4591
      %v4594 = vrot.slane %v2570, 7
      %v4595 = vsel %vm4364, %v4594, %v2566
      %v4596 = vrot.slane %v2574, 6
      %v4597 = vsel %vm4367, %v4596, %v4595
      %v4598 = vrot.slane %v2578, 5
      %v4599 = vsel %vm4370, %v4598, %v4597
      %v4600 = vrot.slane %v2582, 4
      %v4601 = vsel %vm4373, %v4600, %v4599
      %v4602 = vrot.slane %v2586, 3
      %v4603 = vsel %vm4376, %v4602, %v4601
      %v4604 = vrot.slane %v2590, 2
      %v4605 = vsel %vm4379, %v4604, %v4603
      %v4606 = vrot.slane %v2594, 1
      %v4607 = vsel %vm4382, %v4606, %v4605
      %v4608 = vrot.slane %v2571, 7
      %v4609 = vsel %vm4364, %v4608, %v2567
      %v4610 = vrot.slane %v2575, 6
      %v4611 = vsel %vm4367, %v4610, %v4609
      %v4612 = vrot.slane %v2579, 5
      %v4613 = vsel %vm4370, %v4612, %v4611
      %v4614 = vrot.slane %v2583, 4
      %v4615 = vsel %vm4373, %v4614, %v4613
      %v4616 = vrot.slane %v2587, 3
      %v4617 = vsel %vm4376, %v4616, %v4615
      %v4618 = vrot.slane %v2591, 2
      %v4619 = vsel %vm4379, %v4618, %v4617
      %v4620 = vrot.slane %v2595, 1
      %v4621 = vsel %vm4382, %v4620, %v4619
      %v4622 = vrot.slane %v2572, 7
      %v4623 = vsel %vm4364, %v4622, %v2568
      %v4624 = vrot.slane %v2576, 6
      %v4625 = vsel %vm4367, %v4624, %v4623
      %v4626 = vrot.slane %v2580, 5
      %v4627 = vsel %vm4370, %v4626, %v4625
      %v4628 = vrot.slane %v2584, 4
      %v4629 = vsel %vm4373, %v4628, %v4627
      %v4630 = vrot.slane %v2588, 3
      %v4631 = vsel %vm4376, %v4630, %v4629
      %v4632 = vrot.slane %v2592, 2
      %v4633 = vsel %vm4379, %v4632, %v4631
      %v4634 = vrot.slane %v2596, 1
      %v4635 = vsel %vm4382, %v4634, %v4633
      %v4636 = vrot.slane %v2573, 7
      %v4637 = vsel %vm4364, %v4636, %v2569
      %v4638 = vrot.slane %v2577, 6
      %v4639 = vsel %vm4367, %v4638, %v4637
      %v4640 = vrot.slane %v2581, 5
      %v4641 = vsel %vm4370, %v4640, %v4639
      %v4642 = vrot.slane %v2585, 4
      %v4643 = vsel %vm4373, %v4642, %v4641
      %v4644 = vrot.slane %v2589, 3
      %v4645 = vsel %vm4376, %v4644, %v4643
      %v4646 = vrot.slane %v2593, 2
      %v4647 = vsel %vm4379, %v4646, %v4645
      %v4648 = vrot.slane %v2597, 1
      %v4649 = vsel %vm4382, %v4648, %v4647
      %v4650 = vrot.slane %v2602, 7
      %v4651 = vsel %vm4364, %v4650, %v2598
      %v4652 = vrot.slane %v2606, 6
      %v4653 = vsel %vm4367, %v4652, %v4651
      %v4654 = vrot.slane %v2610, 5
      %v4655 = vsel %vm4370, %v4654, %v4653
      %v4656 = vrot.slane %v2614, 4
      %v4657 = vsel %vm4373, %v4656, %v4655
      %v4658 = vrot.slane %v2618, 3
      %v4659 = vsel %vm4376, %v4658, %v4657
      %v4660 = vrot.slane %v2622, 2
      %v4661 = vsel %vm4379, %v4660, %v4659
      %v4662 = vrot.slane %v2626, 1
      %v4663 = vsel %vm4382, %v4662, %v4661
      %v4664 = vrot.slane %v2603, 7
      %v4665 = vsel %vm4364, %v4664, %v2599
      %v4666 = vrot.slane %v2607, 6
      %v4667 = vsel %vm4367, %v4666, %v4665
      %v4668 = vrot.slane %v2611, 5
      %v4669 = vsel %vm4370, %v4668, %v4667
      %v4670 = vrot.slane %v2615, 4
      %v4671 = vsel %vm4373, %v4670, %v4669
      %v4672 = vrot.slane %v2619, 3
      %v4673 = vsel %vm4376, %v4672, %v4671
      %v4674 = vrot.slane %v2623, 2
      %v4675 = vsel %vm4379, %v4674, %v4673
      %v4676 = vrot.slane %v2627, 1
      %v4677 = vsel %vm4382, %v4676, %v4675
      %v4678 = vrot.slane %v2604, 7
      %v4679 = vsel %vm4364, %v4678, %v2600
      %v4680 = vrot.slane %v2608, 6
      %v4681 = vsel %vm4367, %v4680, %v4679
      %v4682 = vrot.slane %v2612, 5
      %v4683 = vsel %vm4370, %v4682, %v4681
      %v4684 = vrot.slane %v2616, 4
      %v4685 = vsel %vm4373, %v4684, %v4683
      %v4686 = vrot.slane %v2620, 3
      %v4687 = vsel %vm4376, %v4686, %v4685
      %v4688 = vrot.slane %v2624, 2
      %v4689 = vsel %vm4379, %v4688, %v4687
      %v4690 = vrot.slane %v2628, 1
      %v4691 = vsel %vm4382, %v4690, %v4689
      %v4692 = vrot.slane %v2605, 7
      %v4693 = vsel %vm4364, %v4692, %v2601
      %v4694 = vrot.slane %v2609, 6
      %v4695 = vsel %vm4367, %v4694, %v4693
      %v4696 = vrot.slane %v2613, 5
      %v4697 = vsel %vm4370, %v4696, %v4695
      %v4698 = vrot.slane %v2617, 4
      %v4699 = vsel %vm4373, %v4698, %v4697
      %v4700 = vrot.slane %v2621, 3
      %v4701 = vsel %vm4376, %v4700, %v4699
      %v4702 = vrot.slane %v2625, 2
      %v4703 = vsel %vm4379, %v4702, %v4701
      %v4704 = vrot.slane %v2629, 1
      %v4705 = vsel %vm4382, %v4704, %v4703
      %v4706 = vrot.slane %v2634, 7
      %v4707 = vsel %vm4364, %v4706, %v2630
      %v4708 = vrot.slane %v2638, 6
      %v4709 = vsel %vm4367, %v4708, %v4707
      %v4710 = vrot.slane %v2642, 5
      %v4711 = vsel %vm4370, %v4710, %v4709
      %v4712 = vrot.slane %v2646, 4
      %v4713 = vsel %vm4373, %v4712, %v4711
      %v4714 = vrot.slane %v2650, 3
      %v4715 = vsel %vm4376, %v4714, %v4713
      %v4716 = vrot.slane %v2654, 2
      %v4717 = vsel %vm4379, %v4716, %v4715
      %v4718 = vrot.slane %v2658, 1
      %v4719 = vsel %vm4382, %v4718, %v4717
      %v4720 = vrot.slane %v2635, 7
      %v4721 = vsel %vm4364, %v4720, %v2631
      %v4722 = vrot.slane %v2639, 6
      %v4723 = vsel %vm4367, %v4722, %v4721
      %v4724 = vrot.slane %v2643, 5
      %v4725 = vsel %vm4370, %v4724, %v4723
      %v4726 = vrot.slane %v2647, 4
      %v4727 = vsel %vm4373, %v4726, %v4725
      %v4728 = vrot.slane %v2651, 3
      %v4729 = vsel %vm4376, %v4728, %v4727
      %v4730 = vrot.slane %v2655, 2
      %v4731 = vsel %vm4379, %v4730, %v4729
      %v4732 = vrot.slane %v2659, 1
      %v4733 = vsel %vm4382, %v4732, %v4731
      %v4734 = vrot.slane %v2636, 7
      %v4735 = vsel %vm4364, %v4734, %v2632
      %v4736 = vrot.slane %v2640, 6
      %v4737 = vsel %vm4367, %v4736, %v4735
      %v4738 = vrot.slane %v2644, 5
      %v4739 = vsel %vm4370, %v4738, %v4737
      %v4740 = vrot.slane %v2648, 4
      %v4741 = vsel %vm4373, %v4740, %v4739
      %v4742 = vrot.slane %v2652, 3
      %v4743 = vsel %vm4376, %v4742, %v4741
      %v4744 = vrot.slane %v2656, 2
      %v4745 = vsel %vm4379, %v4744, %v4743
      %v4746 = vrot.slane %v2660, 1
      %v4747 = vsel %vm4382, %v4746, %v4745
      %v4748 = vrot.slane %v2637, 7
      %v4749 = vsel %vm4364, %v4748, %v2633
      %v4750 = vrot.slane %v2641, 6
      %v4751 = vsel %vm4367, %v4750, %v4749
      %v4752 = vrot.slane %v2645, 5
      %v4753 = vsel %vm4370, %v4752, %v4751
      %v4754 = vrot.slane %v2649, 4
      %v4755 = vsel %vm4373, %v4754, %v4753
      %v4756 = vrot.slane %v2653, 3
      %v4757 = vsel %vm4376, %v4756, %v4755
      %v4758 = vrot.slane %v2657, 2
      %v4759 = vsel %vm4379, %v4758, %v4757
      %v4760 = vrot.slane %v2661, 1
      %v4761 = vsel %vm4382, %v4760, %v4759
      %v4790 = vcombine.low %v3645, %v3659
      %v4791 = vcombine.low %v3667, %v3669
      %v4792 = vcombine.low %v3652, %v3666
      %v4793 = vcombine.low %v3668, %v3712
      %v4795 = vunpack.c.l.s4 1966171168
      %v4796 = vunpack.c.0.s8 %v4795
      %v4797 = vlaneseq
      %v4798 = vshrl.u32 %v4797, 7
      %v4799 = vsub.s32 %v4796, %v4798
      %v4800 = vrot.slane %v4790, %v4799
      %v4802 = vunpack.c.l.s4 1966171168
      %v4803 = vunpack.c.0.s8 %v4802
      %v4804 = vlaneseq
      %v4805 = vshrl.u32 %v4804, 7
      %v4806 = vsub.s32 %v4803, %v4805
      %v4807 = vrot.slane %v4791, %v4806
      %v4809 = vunpack.c.l.s4 1966171168
      %v4810 = vunpack.c.0.s8 %v4809
      %v4811 = vlaneseq
      %v4812 = vshrl.u32 %v4811, 7
      %v4813 = vsub.s32 %v4810, %v4812
      %v4814 = vrot.slane %v4792, %v4813
      %v4816 = vunpack.c.l.s4 1966171168
      %v4817 = vunpack.c.0.s8 %v4816
      %v4818 = vlaneseq
      %v4819 = vshrl.u32 %v4818, 7
      %v4820 = vsub.s32 %v4817, %v4819
      %v4821 = vrot.slane %v4793, %v4820
      %v4822 = vcombine.low %v4800, %v4807
      %v4823 = vcombine.high %v4800, %v4807
      %v4824 = vcombine.low %v4814, %v4821
      %v4825 = vcombine.high %v4814, %v4821
      %v4827 = vunpack.c.l.s4 1966171168
      %v4828 = vunpack.c.0.s8 %v4827
      %v4829 = vlaneseq
      %v4830 = vshrl.u32 %v4829, 7
      %v4831 = vsub.s32 %v4828, %v4830
      %v4832 = vrot.slane %v4822, %v4831
      %v4834 = vunpack.c.l.s4 1966171168
      %v4835 = vunpack.c.0.s8 %v4834
      %v4836 = vlaneseq
      %v4837 = vshrl.u32 %v4836, 7
      %v4838 = vsub.s32 %v4835, %v4837
      %v4839 = vrot.slane %v4823, %v4838
      %v4841 = vunpack.c.l.s4 1966171168
      %v4842 = vunpack.c.0.s8 %v4841
      %v4843 = vlaneseq
      %v4844 = vshrl.u32 %v4843, 7
      %v4845 = vsub.s32 %v4842, %v4844
      %v4846 = vrot.slane %v4824, %v4845
      %v4848 = vunpack.c.l.s4 1966171168
      %v4849 = vunpack.c.0.s8 %v4848
      %v4850 = vlaneseq
      %v4851 = vshrl.u32 %v4850, 7
      %v4852 = vsub.s32 %v4849, %v4851
      %v4853 = vrot.slane %v4825, %v4852
      %v4854 = vcombine.low %v4832, %v4846
      %v4855 = vcombine.high %v4832, %v4846
      %v4856 = vcombine.low %v4839, %v4853
      %v4857 = vcombine.high %v4839, %v4853
      %v4858 = vcombine.low %v3726, %v3734
      %v4859 = vcombine.low %v3736, %v3719
      %v4860 = vcombine.low %v3733, %v3735
      %v4861 = vcombine.low %v3779, %v3793
      %v4863 = vunpack.c.l.s4 1966171168
      %v4864 = vunpack.c.0.s8 %v4863
      %v4865 = vlaneseq
      %v4866 = vshrl.u32 %v4865, 7
      %v4867 = vsub.s32 %v4864, %v4866
      %v4868 = vrot.slane %v4858, %v4867
      %v4870 = vunpack.c.l.s4 1966171168
      %v4871 = vunpack.c.0.s8 %v4870
      %v4872 = vlaneseq
      %v4873 = vshrl.u32 %v4872, 7
      %v4874 = vsub.s32 %v4871, %v4873
      %v4875 = vrot.slane %v4859, %v4874
      %v4877 = vunpack.c.l.s4 1966171168
      %v4878 = vunpack.c.0.s8 %v4877
      %v4879 = vlaneseq
      %v4880 = vshrl.u32 %v4879, 7
      %v4881 = vsub.s32 %v4878, %v4880
      %v4882 = vrot.slane %v4860, %v4881
      %v4884 = vunpack.c.l.s4 1966171168
      %v4885 = vunpack.c.0.s8 %v4884
      %v4886 = vlaneseq
      %v4887 = vshrl.u32 %v4886, 7
      %v4888 = vsub.s32 %v4885, %v4887
      %v4889 = vrot.slane %v4861, %v4888
      %v4890 = vcombine.low %v4868, %v4875
      %v4891 = vcombine.high %v4868, %v4875
      %v4892 = vcombine.low %v4882, %v4889
      %v4893 = vcombine.high %v4882, %v4889
      %v4895 = vunpack.c.l.s4 1966171168
      %v4896 = vunpack.c.0.s8 %v4895
      %v4897 = vlaneseq
      %v4898 = vshrl.u32 %v4897, 7
      %v4899 = vsub.s32 %v4896, %v4898
      %v4900 = vrot.slane %v4890, %v4899
      %v4902 = vunpack.c.l.s4 1966171168
      %v4903 = vunpack.c.0.s8 %v4902
      %v4904 = vlaneseq
      %v4905 = vshrl.u32 %v4904, 7
      %v4906 = vsub.s32 %v4903, %v4905
      %v4907 = vrot.slane %v4891, %v4906
      %v4909 = vunpack.c.l.s4 1966171168
      %v4910 = vunpack.c.0.s8 %v4909
      %v4911 = vlaneseq
      %v4912 = vshrl.u32 %v4911, 7
      %v4913 = vsub.s32 %v4910, %v4912
      %v4914 = vrot.slane %v4892, %v4913
      %v4916 = vunpack.c.l.s4 1966171168
      %v4917 = vunpack.c.0.s8 %v4916
      %v4918 = vlaneseq
      %v4919 = vshrl.u32 %v4918, 7
      %v4920 = vsub.s32 %v4917, %v4919
      %v4921 = vrot.slane %v4893, %v4920
      %v4922 = vcombine.low %v4900, %v4914
      %v4923 = vcombine.high %v4900, %v4914
      %v4924 = vcombine.low %v4907, %v4921
      %v4925 = vcombine.high %v4907, %v4921
      %v4926 = vcombine.low %v3801, %v3803
      %v4927 = vcombine.low %v3786, %v3800
      %v4928 = vcombine.low %v3802, %v3846
      %v4929 = vcombine.low %v3860, %v3868
      %v4931 = vunpack.c.l.s4 1966171168
      %v4932 = vunpack.c.0.s8 %v4931
      %v4933 = vlaneseq
      %v4934 = vshrl.u32 %v4933, 7
      %v4935 = vsub.s32 %v4932, %v4934
      %v4936 = vrot.slane %v4926, %v4935
      %v4938 = vunpack.c.l.s4 1966171168
      %v4939 = vunpack.c.0.s8 %v4938
      %v4940 = vlaneseq
      %v4941 = vshrl.u32 %v4940, 7
      %v4942 = vsub.s32 %v4939, %v4941
      %v4943 = vrot.slane %v4927, %v4942
      %v4945 = vunpack.c.l.s4 1966171168
      %v4946 = vunpack.c.0.s8 %v4945
      %v4947 = vlaneseq
      %v4948 = vshrl.u32 %v4947, 7
      %v4949 = vsub.s32 %v4946, %v4948
      %v4950 = vrot.slane %v4928, %v4949
      %v4952 = vunpack.c.l.s4 1966171168
      %v4953 = vunpack.c.0.s8 %v4952
      %v4954 = vlaneseq
      %v4955 = vshrl.u32 %v4954, 7
      %v4956 = vsub.s32 %v4953, %v4955
      %v4957 = vrot.slane %v4929, %v4956
      %v4958 = vcombine.low %v4936, %v4943
      %v4959 = vcombine.high %v4936, %v4943
      %v4960 = vcombine.low %v4950, %v4957
      %v4961 = vcombine.high %v4950, %v4957
      %v4963 = vunpack.c.l.s4 1966171168
      %v4964 = vunpack.c.0.s8 %v4963
      %v4965 = vlaneseq
      %v4966 = vshrl.u32 %v4965, 7
      %v4967 = vsub.s32 %v4964, %v4966
      %v4968 = vrot.slane %v4958, %v4967
      %v4970 = vunpack.c.l.s4 1966171168
      %v4971 = vunpack.c.0.s8 %v4970
      %v4972 = vlaneseq
      %v4973 = vshrl.u32 %v4972, 7
      %v4974 = vsub.s32 %v4971, %v4973
      %v4975 = vrot.slane %v4959, %v4974
      %v4977 = vunpack.c.l.s4 1966171168
      %v4978 = vunpack.c.0.s8 %v4977
      %v4979 = vlaneseq
      %v4980 = vshrl.u32 %v4979, 7
      %v4981 = vsub.s32 %v4978, %v4980
      %v4982 = vrot.slane %v4960, %v4981
      %v4984 = vunpack.c.l.s4 1966171168
      %v4985 = vunpack.c.0.s8 %v4984
      %v4986 = vlaneseq
      %v4987 = vshrl.u32 %v4986, 7
      %v4988 = vsub.s32 %v4985, %v4987
      %v4989 = vrot.slane %v4961, %v4988
      %v4990 = vcombine.low %v4968, %v4982
      %v4991 = vcombine.high %v4968, %v4982
      %v4992 = vcombine.low %v4975, %v4989
      %v4993 = vcombine.high %v4975, %v4989
      %v4994 = vcombine.low %v3870, %v3853
      %v4995 = vcombine.low %v3867, %v3869
      %v4996 = vcombine.low %v3913, %v3927
      %v4997 = vcombine.low %v3935, %v3937
      %v4999 = vunpack.c.l.s4 1966171168
      %v5000 = vunpack.c.0.s8 %v4999
      %v5001 = vlaneseq
      %v5002 = vshrl.u32 %v5001, 7
      %v5003 = vsub.s32 %v5000, %v5002
      %v5004 = vrot.slane %v4994, %v5003
      %v5006 = vunpack.c.l.s4 1966171168
      %v5007 = vunpack.c.0.s8 %v5006
      %v5008 = vlaneseq
      %v5009 = vshrl.u32 %v5008, 7
      %v5010 = vsub.s32 %v5007, %v5009
      %v5011 = vrot.slane %v4995, %v5010
      %v5013 = vunpack.c.l.s4 1966171168
      %v5014 = vunpack.c.0.s8 %v5013
      %v5015 = vlaneseq
      %v5016 = vshrl.u32 %v5015, 7
      %v5017 = vsub.s32 %v5014, %v5016
      %v5018 = vrot.slane %v4996, %v5017
      %v5020 = vunpack.c.l.s4 1966171168
      %v5021 = vunpack.c.0.s8 %v5020
      %v5022 = vlaneseq
      %v5023 = vshrl.u32 %v5022, 7
      %v5024 = vsub.s32 %v5021, %v5023
      %v5025 = vrot.slane %v4997, %v5024
      %v5026 = vcombine.low %v5004, %v5011
      %v5027 = vcombine.high %v5004, %v5011
      %v5028 = vcombine.low %v5018, %v5025
      %v5029 = vcombine.high %v5018, %v5025
      %v5031 = vunpack.c.l.s4 1966171168
      %v5032 = vunpack.c.0.s8 %v5031
      %v5033 = vlaneseq
      %v5034 = vshrl.u32 %v5033, 7
      %v5035 = vsub.s32 %v5032, %v5034
      %v5036 = vrot.slane %v5026, %v5035
      %v5038 = vunpack.c.l.s4 1966171168
      %v5039 = vunpack.c.0.s8 %v5038
      %v5040 = vlaneseq
      %v5041 = vshrl.u32 %v5040, 7
      %v5042 = vsub.s32 %v5039, %v5041
      %v5043 = vrot.slane %v5027, %v5042
      %v5045 = vunpack.c.l.s4 1966171168
      %v5046 = vunpack.c.0.s8 %v5045
      %v5047 = vlaneseq
      %v5048 = vshrl.u32 %v5047, 7
      %v5049 = vsub.s32 %v5046, %v5048
      %v5050 = vrot.slane %v5028, %v5049
      %v5052 = vunpack.c.l.s4 1966171168
      %v5053 = vunpack.c.0.s8 %v5052
      %v5054 = vlaneseq
      %v5055 = vshrl.u32 %v5054, 7
      %v5056 = vsub.s32 %v5053, %v5055
      %v5057 = vrot.slane %v5029, %v5056
      %v5058 = vcombine.low %v5036, %v5050
      %v5059 = vcombine.high %v5036, %v5050
      %v5060 = vcombine.low %v5043, %v5057
      %v5061 = vcombine.high %v5043, %v5057
      %v5062 = vcombine.low %v3920, %v3934
      %v5063 = vcombine.low %v3936, %v3980
      %v5064 = vcombine.low %v3994, %v4002
      %v5065 = vcombine.low %v4004, %v3987
      %v5067 = vunpack.c.l.s4 1966171168
      %v5068 = vunpack.c.0.s8 %v5067
      %v5069 = vlaneseq
      %v5070 = vshrl.u32 %v5069, 7
      %v5071 = vsub.s32 %v5068, %v5070
      %v5072 = vrot.slane %v5062, %v5071
      %v5074 = vunpack.c.l.s4 1966171168
      %v5075 = vunpack.c.0.s8 %v5074
      %v5076 = vlaneseq
      %v5077 = vshrl.u32 %v5076, 7
      %v5078 = vsub.s32 %v5075, %v5077
      %v5079 = vrot.slane %v5063, %v5078
      %v5081 = vunpack.c.l.s4 1966171168
      %v5082 = vunpack.c.0.s8 %v5081
      %v5083 = vlaneseq
      %v5084 = vshrl.u32 %v5083, 7
      %v5085 = vsub.s32 %v5082, %v5084
      %v5086 = vrot.slane %v5064, %v5085
      %v5088 = vunpack.c.l.s4 1966171168
      %v5089 = vunpack.c.0.s8 %v5088
      %v5090 = vlaneseq
      %v5091 = vshrl.u32 %v5090, 7
      %v5092 = vsub.s32 %v5089, %v5091
      %v5093 = vrot.slane %v5065, %v5092
      %v5094 = vcombine.low %v5072, %v5079
      %v5095 = vcombine.high %v5072, %v5079
      %v5096 = vcombine.low %v5086, %v5093
      %v5097 = vcombine.high %v5086, %v5093
      %v5099 = vunpack.c.l.s4 1966171168
      %v5100 = vunpack.c.0.s8 %v5099
      %v5101 = vlaneseq
      %v5102 = vshrl.u32 %v5101, 7
      %v5103 = vsub.s32 %v5100, %v5102
      %v5104 = vrot.slane %v5094, %v5103
      %v5106 = vunpack.c.l.s4 1966171168
      %v5107 = vunpack.c.0.s8 %v5106
      %v5108 = vlaneseq
      %v5109 = vshrl.u32 %v5108, 7
      %v5110 = vsub.s32 %v5107, %v5109
      %v5111 = vrot.slane %v5095, %v5110
      %v5113 = vunpack.c.l.s4 1966171168
      %v5114 = vunpack.c.0.s8 %v5113
      %v5115 = vlaneseq
      %v5116 = vshrl.u32 %v5115, 7
      %v5117 = vsub.s32 %v5114, %v5116
      %v5118 = vrot.slane %v5096, %v5117
      %v5120 = vunpack.c.l.s4 1966171168
      %v5121 = vunpack.c.0.s8 %v5120
      %v5122 = vlaneseq
      %v5123 = vshrl.u32 %v5122, 7
      %v5124 = vsub.s32 %v5121, %v5123
      %v5125 = vrot.slane %v5097, %v5124
      %v5126 = vcombine.low %v5104, %v5118
      %v5127 = vcombine.high %v5104, %v5118
      %v5128 = vcombine.low %v5111, %v5125
      %v5129 = vcombine.high %v5111, %v5125
      %v5130 = vcombine.low %v4001, %v4003
      %v5131 = vcombine.low %v4047, %v4061
      %v5132 = vcombine.low %v4069, %v4071
      %v5133 = vcombine.low %v4054, %v4068
      %v5135 = vunpack.c.l.s4 1966171168
      %v5136 = vunpack.c.0.s8 %v5135
      %v5137 = vlaneseq
      %v5138 = vshrl.u32 %v5137, 7
      %v5139 = vsub.s32 %v5136, %v5138
      %v5140 = vrot.slane %v5130, %v5139
      %v5142 = vunpack.c.l.s4 1966171168
      %v5143 = vunpack.c.0.s8 %v5142
      %v5144 = vlaneseq
      %v5145 = vshrl.u32 %v5144, 7
      %v5146 = vsub.s32 %v5143, %v5145
      %v5147 = vrot.slane %v5131, %v5146
      %v5149 = vunpack.c.l.s4 1966171168
      %v5150 = vunpack.c.0.s8 %v5149
      %v5151 = vlaneseq
      %v5152 = vshrl.u32 %v5151, 7
      %v5153 = vsub.s32 %v5150, %v5152
      %v5154 = vrot.slane %v5132, %v5153
      %v5156 = vunpack.c.l.s4 1966171168
      %v5157 = vunpack.c.0.s8 %v5156
      %v5158 = vlaneseq
      %v5159 = vshrl.u32 %v5158, 7
      %v5160 = vsub.s32 %v5157, %v5159
      %v5161 = vrot.slane %v5133, %v5160
      %v5162 = vcombine.low %v5140, %v5147
      %v5163 = vcombine.high %v5140, %v5147
      %v5164 = vcombine.low %v5154, %v5161
      %v5165 = vcombine.high %v5154, %v5161
      %v5167 = vunpack.c.l.s4 1966171168
      %v5168 = vunpack.c.0.s8 %v5167
      %v5169 = vlaneseq
      %v5170 = vshrl.u32 %v5169, 7
      %v5171 = vsub.s32 %v5168, %v5170
      %v5172 = vrot.slane %v5162, %v5171
      %v5174 = vunpack.c.l.s4 1966171168
      %v5175 = vunpack.c.0.s8 %v5174
      %v5176 = vlaneseq
      %v5177 = vshrl.u32 %v5176, 7
      %v5178 = vsub.s32 %v5175, %v5177
      %v5179 = vrot.slane %v5163, %v5178
      %v5181 = vunpack.c.l.s4 1966171168
      %v5182 = vunpack.c.0.s8 %v5181
      %v5183 = vlaneseq
      %v5184 = vshrl.u32 %v5183, 7
      %v5185 = vsub.s32 %v5182, %v5184
      %v5186 = vrot.slane %v5164, %v5185
      %v5188 = vunpack.c.l.s4 1966171168
      %v5189 = vunpack.c.0.s8 %v5188
      %v5190 = vlaneseq
      %v5191 = vshrl.u32 %v5190, 7
      %v5192 = vsub.s32 %v5189, %v5191
      %v5193 = vrot.slane %v5165, %v5192
      %v5194 = vcombine.low %v5172, %v5186
      %v5195 = vcombine.high %v5172, %v5186
      %v5196 = vcombine.low %v5179, %v5193
      %v5197 = vcombine.high %v5179, %v5193
      %v5198 = vcombine.low %v4070, %v4114
      %v5199 = vcombine.low %v4128, %v4136
      %v5200 = vcombine.low %v4138, %v4121
      %v5201 = vcombine.low %v4135, %v4137
      %v5203 = vunpack.c.l.s4 1966171168
      %v5204 = vunpack.c.0.s8 %v5203
      %v5205 = vlaneseq
      %v5206 = vshrl.u32 %v5205, 7
      %v5207 = vsub.s32 %v5204, %v5206
      %v5208 = vrot.slane %v5198, %v5207
      %v5210 = vunpack.c.l.s4 1966171168
      %v5211 = vunpack.c.0.s8 %v5210
      %v5212 = vlaneseq
      %v5213 = vshrl.u32 %v5212, 7
      %v5214 = vsub.s32 %v5211, %v5213
      %v5215 = vrot.slane %v5199, %v5214
      %v5217 = vunpack.c.l.s4 1966171168
      %v5218 = vunpack.c.0.s8 %v5217
      %v5219 = vlaneseq
      %v5220 = vshrl.u32 %v5219, 7
      %v5221 = vsub.s32 %v5218, %v5220
      %v5222 = vrot.slane %v5200, %v5221
      %v5224 = vunpack.c.l.s4 1966171168
      %v5225 = vunpack.c.0.s8 %v5224
      %v5226 = vlaneseq
      %v5227 = vshrl.u32 %v5226, 7
      %v5228 = vsub.s32 %v5225, %v5227
      %v5229 = vrot.slane %v5201, %v5228
      %v5230 = vcombine.low %v5208, %v5215
      %v5231 = vcombine.high %v5208, %v5215
      %v5232 = vcombine.low %v5222, %v5229
      %v5233 = vcombine.high %v5222, %v5229
      %v5235 = vunpack.c.l.s4 1966171168
      %v5236 = vunpack.c.0.s8 %v5235
      %v5237 = vlaneseq
      %v5238 = vshrl.u32 %v5237, 7
      %v5239 = vsub.s32 %v5236, %v5238
      %v5240 = vrot.slane %v5230, %v5239
      %v5242 = vunpack.c.l.s4 1966171168
      %v5243 = vunpack.c.0.s8 %v5242
      %v5244 = vlaneseq
      %v5245 = vshrl.u32 %v5244, 7
      %v5246 = vsub.s32 %v5243, %v5245
      %v5247 = vrot.slane %v5231, %v5246
      %v5249 = vunpack.c.l.s4 1966171168
      %v5250 = vunpack.c.0.s8 %v5249
      %v5251 = vlaneseq
      %v5252 = vshrl.u32 %v5251, 7
      %v5253 = vsub.s32 %v5250, %v5252
      %v5254 = vrot.slane %v5232, %v5253
      %v5256 = vunpack.c.l.s4 1966171168
      %v5257 = vunpack.c.0.s8 %v5256
      %v5258 = vlaneseq
      %v5259 = vshrl.u32 %v5258, 7
      %v5260 = vsub.s32 %v5257, %v5259
      %v5261 = vrot.slane %v5233, %v5260
      %v5262 = vcombine.low %v5240, %v5254
      %v5263 = vcombine.high %v5240, %v5254
      %v5264 = vcombine.low %v5247, %v5261
      %v5265 = vcombine.high %v5247, %v5261
      %v5294 = vld [vmem:[%s5] sm:$0xff]
      %v5295 = vld [vmem:[%s5 + $0x8] sm:$0xff]
      %v5296 = vld [vmem:[%s5 + $0x10] sm:$0xff]
      %v5297 = vld [vmem:[%s5 + $0x18] sm:$0xff]
      %v5298 = vld [vmem:[%s5 + $0x20] sm:$0xff]
      %v5299 = vld [vmem:[%s5 + $0x28] sm:$0xff]
      %v5300 = vld [vmem:[%s5 + $0x30] sm:$0xff]
      %v5301 = vld [vmem:[%s5 + $0x38] sm:$0xff]
      %v5302 = vld [vmem:[%s5 + $0x40] sm:$0xff]
      %v5303 = vld [vmem:[%s5 + $0x48] sm:$0xff]
      %v5304 = vld [vmem:[%s5 + $0x50] sm:$0xff]
      %v5305 = vld [vmem:[%s5 + $0x58] sm:$0xff]
      %v5306 = vld [vmem:[%s5 + $0x60] sm:$0xff]
      %v5307 = vld [vmem:[%s5 + $0x68] sm:$0xff]
      %v5308 = vld [vmem:[%s5 + $0x70] sm:$0xff]
      %v5309 = vld [vmem:[%s5 + $0x78] sm:$0xff]
      %v5310 = vld [vmem:[%s5 + $0x80] sm:$0xff]
      %v5311 = vld [vmem:[%s5 + $0x88] sm:$0xff]
      %v5312 = vld [vmem:[%s5 + $0x90] sm:$0xff]
      %v5313 = vld [vmem:[%s5 + $0x98] sm:$0xff]
      %v5314 = vld [vmem:[%s5 + $0xa0] sm:$0xff]
      %v5315 = vld [vmem:[%s5 + $0xa8] sm:$0xff]
      %v5316 = vld [vmem:[%s5 + $0xb0] sm:$0xff]
      %v5317 = vld [vmem:[%s5 + $0xb8] sm:$0xff]
      %v5318 = vld [vmem:[%s5 + $0xc0] sm:$0xff]
      %v5319 = vld [vmem:[%s5 + $0xc8] sm:$0xff]
      %v5320 = vld [vmem:[%s5 + $0xd0] sm:$0xff]
      %v5321 = vld [vmem:[%s5 + $0xd8] sm:$0xff]
      %v5322 = vld [vmem:[%s5 + $0xe0] sm:$0xff]
      %v5323 = vld [vmem:[%s5 + $0xe8] sm:$0xff]
      %v5324 = vld [vmem:[%s5 + $0xf0] sm:$0xff]
      %v5325 = vld [vmem:[%s5 + $0xf8] sm:$0xff]
      %v5326 = vld [vmem:[%s5 + $0x100] sm:$0xff]
      %v5327 = vld [vmem:[%s5 + $0x108] sm:$0xff]
      %v5328 = vld [vmem:[%s5 + $0x110] sm:$0xff]
      %v5329 = vld [vmem:[%s5 + $0x118] sm:$0xff]
      %v5330 = vld [vmem:[%s5 + $0x120] sm:$0xff]
      %v5331 = vld [vmem:[%s5 + $0x128] sm:$0xff]
      %v5332 = vld [vmem:[%s5 + $0x130] sm:$0xff]
      %v5333 = vld [vmem:[%s5 + $0x138] sm:$0xff]
      %v5334 = vld [vmem:[%s5 + $0x140] sm:$0xff]
      %v5335 = vld [vmem:[%s5 + $0x148] sm:$0xff]
      %v5336 = vld [vmem:[%s5 + $0x150] sm:$0xff]
      %v5337 = vld [vmem:[%s5 + $0x158] sm:$0xff]
      %v5338 = vld [vmem:[%s5 + $0x160] sm:$0xff]
      %v5339 = vld [vmem:[%s5 + $0x168] sm:$0xff]
      %v5340 = vld [vmem:[%s5 + $0x170] sm:$0xff]
      %v5341 = vld [vmem:[%s5 + $0x178] sm:$0xff]
      %v5342 = vld [vmem:[%s5 + $0x180] sm:$0xff]
      %v5343 = vld [vmem:[%s5 + $0x188] sm:$0xff]
      %v5344 = vld [vmem:[%s5 + $0x190] sm:$0xff]
      %v5345 = vld [vmem:[%s5 + $0x198] sm:$0xff]
      %v5346 = vld [vmem:[%s5 + $0x1a0] sm:$0xff]
      %v5347 = vld [vmem:[%s5 + $0x1a8] sm:$0xff]
      %v5348 = vld [vmem:[%s5 + $0x1b0] sm:$0xff]
      %v5349 = vld [vmem:[%s5 + $0x1b8] sm:$0xff]
      %v5350 = vld [vmem:[%s5 + $0x1c0] sm:$0xff]
      %v5351 = vld [vmem:[%s5 + $0x1c8] sm:$0xff]
      %v5352 = vld [vmem:[%s5 + $0x1d0] sm:$0xff]
      %v5353 = vld [vmem:[%s5 + $0x1d8] sm:$0xff]
      %v5354 = vld [vmem:[%s5 + $0x1e0] sm:$0xff]
      %v5355 = vld [vmem:[%s5 + $0x1e8] sm:$0xff]
      %v5356 = vld [vmem:[%s5 + $0x1f0] sm:$0xff]
      %v5357 = vld [vmem:[%s5 + $0x1f8] sm:$0xff]
      %v5358 = vld [vmem:[%s6] sm:$0x1]
      %v5360 = vlaneseq
      %v5361 = vshrl.u32 %v5360, 7
      %v5362 = vsub.s32 0, %v5361
      %v5363 = vrot.slane %v5358, %v5362
      %5365 = vmatprep.subr.mxu0 0.0
      %5366 = vmatpush1.msra.mxu0 %v5294
      %5367 = vmatprep.subr.mxu0 0.0
      %5368 = vmatpush1.msra.mxu0 %v5295
      %5369 = vmatprep.subr.mxu0 0.0
      %5370 = vmatpush1.msra.mxu0 %v5296
      %5371 = vmatprep.subr.mxu0 0.0
      %5372 = vmatpush1.msra.mxu0 %v5297
      %5373 = vmatprep.subr.mxu0 0.0
      %5374 = vmatpush1.msra.mxu0 %v5298
      %5375 = vmatprep.subr.mxu0 0.0
      %5376 = vmatpush1.msra.mxu0 %v5299
      %5377 = vmatprep.subr.mxu0 0.0
      %5378 = vmatpush1.msra.mxu0 %v5300
      %5379 = vmatprep.subr.mxu0 0.0
      %5380 = vmatpush1.msra.mxu0 %v5301
      %5381 = vmatprep.subr.mxu0 0.0
      %5382 = vmatpush1.msra.mxu0 %v5302
      %5383 = vmatprep.subr.mxu0 0.0
      %5384 = vmatpush1.msra.mxu0 %v5303
      %5385 = vmatprep.subr.mxu0 0.0
      %5386 = vmatpush1.msra.mxu0 %v5304
      %5387 = vmatprep.subr.mxu0 0.0
      %5388 = vmatpush1.msra.mxu0 %v5305
      %5389 = vmatprep.subr.mxu0 0.0
      %5390 = vmatpush1.msra.mxu0 %v5306
      %5391 = vmatprep.subr.mxu0 0.0
      %5392 = vmatpush1.msra.mxu0 %v5307
      %5393 = vmatprep.subr.mxu0 0.0
      %5394 = vmatpush1.msra.mxu0 %v5308
      %5395 = vmatprep.subr.mxu0 0.0
      %5396 = vmatpush1.msra.mxu0 %v5309
      %5397 = vmatprep.subr.mxu0 0.0
      %5398 = vmatpush1.msra.mxu0 %v5310
      %5399 = vmatprep.subr.mxu0 0.0
      %5400 = vmatpush1.msra.mxu0 %v5311
      %5401 = vmatprep.subr.mxu0 0.0
      %5402 = vmatpush1.msra.mxu0 %v5312
      %5403 = vmatprep.subr.mxu0 0.0
      %5404 = vmatpush1.msra.mxu0 %v5313
      %5405 = vmatprep.subr.mxu0 0.0
      %5406 = vmatpush1.msra.mxu0 %v5314
      %5407 = vmatprep.subr.mxu0 0.0
      %5408 = vmatpush1.msra.mxu0 %v5315
      %5409 = vmatprep.subr.mxu0 0.0
      %5410 = vmatpush1.msra.mxu0 %v5316
      %5411 = vmatprep.subr.mxu0 0.0
      %5412 = vmatpush1.msra.mxu0 %v5317
      %5413 = vmatprep.subr.mxu0 0.0
      %5414 = vmatpush1.msra.mxu0 %v5318
      %5415 = vmatprep.subr.mxu0 0.0
      %5416 = vmatpush1.msra.mxu0 %v5319
      %5417 = vmatprep.subr.mxu0 0.0
      %5418 = vmatpush1.msra.mxu0 %v5320
      %5419 = vmatprep.subr.mxu0 0.0
      %5420 = vmatpush1.msra.mxu0 %v5321
      %5421 = vmatprep.subr.mxu0 0.0
      %5422 = vmatpush1.msra.mxu0 %v5322
      %5423 = vmatprep.subr.mxu0 0.0
      %5424 = vmatpush1.msra.mxu0 %v5323
      %5425 = vmatprep.subr.mxu0 0.0
      %5426 = vmatpush1.msra.mxu0 %v5324
      %5427 = vmatprep.subr.mxu0 0.0
      %5428 = vmatpush1.msra.mxu0 %v5325
      %5429 = vmatprep.mubr.f32.mxu0 %v4397
      %5430 = vmatmul.mubr.f32.gmra.mrb[0].mxu0 %v4383
      %v5431 = vpop.f32.mrb[0].mxu0
      %v5432 = vadd.f32 %v5363, %v5431
      %v5433 = vpop.f32.mrb[0].mxu0
      %5434 = vmatprep.mubr.f32.mxu0 %v4453
      %5435 = vmatmul.mubr.f32.gmra.mrb[0].mxu0 %v4439
      %v5436 = vpop.f32.mrb[0].mxu0
      %v5437 = vadd.f32 %v5363, %v5436
      %v5438 = vpop.f32.mrb[0].mxu0
      %5439 = vmatprep.mubr.f32.mxu0 %v4509
      %5440 = vmatmul.mubr.f32.gmra.mrb[0].mxu0 %v4495
      %v5441 = vpop.f32.mrb[0].mxu0
      %v5442 = vadd.f32 %v5363, %v5441
      %v5443 = vpop.f32.mrb[0].mxu0
      %5444 = vmatprep.mubr.f32.mxu0 %v4565
      %5445 = vmatmul.mubr.f32.gmra.mrb[0].mxu0 %v4551
      %v5446 = vpop.f32.mrb[0].mxu0
      %v5447 = vadd.f32 %v5363, %v5446
      %v5448 = vpop.f32.mrb[0].mxu0
      %5449 = vmatprep.mubr.f32.mxu0 %v4621
      %5450 = vmatmul.mubr.f32.gmra.mrb[0].mxu0 %v4607
      %v5451 = vpop.f32.mrb[0].mxu0
      %v5452 = vadd.f32 %v5363, %v5451
      %v5453 = vpop.f32.mrb[0].mxu0
      %5454 = vmatprep.mubr.f32.mxu0 %v4677
      %5455 = vmatmul.mubr.f32.gmra.mrb[0].mxu0 %v4663
      %v5456 = vpop.f32.mrb[0].mxu0
      %v5457 = vadd.f32 %v5363, %v5456
      %v5458 = vpop.f32.mrb[0].mxu0
      %5459 = vmatprep.mubr.f32.mxu0 %v4733
      %5460 = vmatmul.mubr.f32.gmra.mrb[0].mxu0 %v4719
      %v5461 = vpop.f32.mrb[0].mxu0
      %v5462 = vadd.f32 %v5363, %v5461
      %v5463 = vpop.f32.mrb[0].mxu0
      %5464 = vmatprep.mubr.f32.mxu0 %v4856
      %5465 = vmatmul.mubr.f32.gmra.mrb[0].mxu0 %v4854
      %v5466 = vpop.f32.mrb[0].mxu0
      %v5467 = vadd.f32 %v5363, %v5466
      %v5468 = vpop.f32.mrb[0].mxu0
      %5469 = vmatprep.mubr.f32.mxu0 %v4924
      %5470 = vmatmul.mubr.f32.gmra.mrb[0].mxu0 %v4922
      %v5471 = vpop.f32.mrb[0].mxu0
      %v5472 = vadd.f32 %v5363, %v5471
      %v5473 = vpop.f32.mrb[0].mxu0
      %5474 = vmatprep.mubr.f32.mxu0 %v4992
      %5475 = vmatmul.mubr.f32.gmra.mrb[0].mxu0 %v4990
      %v5476 = vpop.f32.mrb[0].mxu0
      %v5477 = vadd.f32 %v5363, %v5476
      %v5478 = vpop.f32.mrb[0].mxu0
      %5479 = vmatprep.mubr.f32.mxu0 %v5060
      %5480 = vmatmul.mubr.f32.gmra.mrb[0].mxu0 %v5058
      %v5481 = vpop.f32.mrb[0].mxu0
      %v5482 = vadd.f32 %v5363, %v5481
      %v5483 = vpop.f32.mrb[0].mxu0
      %5484 = vmatprep.mubr.f32.mxu0 %v5128
      %5485 = vmatmul.mubr.f32.gmra.mrb[0].mxu0 %v5126
      %v5486 = vpop.f32.mrb[0].mxu0
      %v5487 = vadd.f32 %v5363, %v5486
      %v5488 = vpop.f32.mrb[0].mxu0
      %5489 = vmatprep.mubr.f32.mxu0 %v5196
      %5490 = vmatmul.mubr.f32.gmra.mrb[0].mxu0 %v5194
      %v5491 = vpop.f32.mrb[0].mxu0
      %v5492 = vadd.f32 %v5363, %v5491
      %v5493 = vpop.f32.mrb[0].mxu0
      %5494 = vmatprep.mubr.f32.mxu0 %v5264
      %5495 = vmatmul.mubr.f32.gmra.mrb[0].mxu0 %v5262
      %v5496 = vpop.f32.mrb[0].mxu0
      %v5497 = vadd.f32 %v5363, %v5496
      %v5498 = vpop.f32.mrb[0].mxu0
      %5499 = vdwg.mxu0
      %5500 = vmatprep.subr.mxu0 0.0
      %5501 = vmatpush1.msra.mxu0 %v5326
      %5502 = vmatprep.subr.mxu0 0.0
      %5503 = vmatpush1.msra.mxu0 %v5327
      %5504 = vmatprep.subr.mxu0 0.0
      %5505 = vmatpush1.msra.mxu0 %v5328
      %5506 = vmatprep.subr.mxu0 0.0
      %5507 = vmatpush1.msra.mxu0 %v5329
      %5508 = vmatprep.subr.mxu0 0.0
      %5509 = vmatpush1.msra.mxu0 %v5330
      %5510 = vmatprep.subr.mxu0 0.0
      %5511 = vmatpush1.msra.mxu0 %v5331
      %5512 = vmatprep.subr.mxu0 0.0
      %5513 = vmatpush1.msra.mxu0 %v5332
      %5514 = vmatprep.subr.mxu0 0.0
      %5515 = vmatpush1.msra.mxu0 %v5333
      %5516 = vmatprep.subr.mxu0 0.0
      %5517 = vmatpush1.msra.mxu0 %v5334
      %5518 = vmatprep.subr.mxu0 0.0
      %5519 = vmatpush1.msra.mxu0 %v5335
      %5520 = vmatprep.subr.mxu0 0.0
      %5521 = vmatpush1.msra.mxu0 %v5336
      %5522 = vmatprep.subr.mxu0 0.0
      %5523 = vmatpush1.msra.mxu0 %v5337
      %5524 = vmatprep.subr.mxu0 0.0
      %5525 = vmatpush1.msra.mxu0 %v5338
      %5526 = vmatprep.subr.mxu0 0.0
      %5527 = vmatpush1.msra.mxu0 %v5339
      %5528 = vmatprep.subr.mxu0 0.0
      %5529 = vmatpush1.msra.mxu0 %v5340
      %5530 = vmatprep.subr.mxu0 0.0
      %5531 = vmatpush1.msra.mxu0 %v5341
      %5532 = vmatprep.subr.mxu0 0.0
      %5533 = vmatpush1.msra.mxu0 %v5342
      %5534 = vmatprep.subr.mxu0 0.0
      %5535 = vmatpush1.msra.mxu0 %v5343
      %5536 = vmatprep.subr.mxu0 0.0
      %5537 = vmatpush1.msra.mxu0 %v5344
      %5538 = vmatprep.subr.mxu0 0.0
      %5539 = vmatpush1.msra.mxu0 %v5345
      %5540 = vmatprep.subr.mxu0 0.0
      %5541 = vmatpush1.msra.mxu0 %v5346
      %5542 = vmatprep.subr.mxu0 0.0
      %5543 = vmatpush1.msra.mxu0 %v5347
      %5544 = vmatprep.subr.mxu0 0.0
      %5545 = vmatpush1.msra.mxu0 %v5348
      %5546 = vmatprep.subr.mxu0 0.0
      %5547 = vmatpush1.msra.mxu0 %v5349
      %5548 = vmatprep.subr.mxu0 0.0
      %5549 = vmatpush1.msra.mxu0 %v5350
      %5550 = vmatprep.subr.mxu0 0.0
      %5551 = vmatpush1.msra.mxu0 %v5351
      %5552 = vmatprep.subr.mxu0 0.0
      %5553 = vmatpush1.msra.mxu0 %v5352
      %5554 = vmatprep.subr.mxu0 0.0
      %5555 = vmatpush1.msra.mxu0 %v5353
      %5556 = vmatprep.subr.mxu0 0.0
      %5557 = vmatpush1.msra.mxu0 %v5354
      %5558 = vmatprep.subr.mxu0 0.0
      %5559 = vmatpush1.msra.mxu0 %v5355
      %5560 = vmatprep.subr.mxu0 0.0
      %5561 = vmatpush1.msra.mxu0 %v5356
      %5562 = vmatprep.subr.mxu0 0.0
      %5563 = vmatpush1.msra.mxu0 %v5357
      %5564 = vmatprep.mubr.f32.mxu0 %v4425
      %5565 = vmatmul.mubr.f32.gmra.mrb[0].mxu0 %v4411
      %v5566 = vpop.f32.mrb[0].mxu0
      %v5567 = vadd.f32 %v5432, %v5566
      %v5568 = vpop.f32.mrb[0].mxu0
      %5569 = vmatprep.mubr.f32.mxu0 %v4481
      %5570 = vmatmul.mubr.f32.gmra.mrb[0].mxu0 %v4467
      %v5571 = vpop.f32.mrb[0].mxu0
      %v5572 = vadd.f32 %v5437, %v5571
      %v5573 = vpop.f32.mrb[0].mxu0
      %5574 = vmatprep.mubr.f32.mxu0 %v4537
      %5575 = vmatmul.mubr.f32.gmra.mrb[0].mxu0 %v4523
      %v5576 = vpop.f32.mrb[0].mxu0
      %v5577 = vadd.f32 %v5442, %v5576
      %v5578 = vpop.f32.mrb[0].mxu0
      %5579 = vmatprep.mubr.f32.mxu0 %v4593
      %5580 = vmatmul.mubr.f32.gmra.mrb[0].mxu0 %v4579
      %v5581 = vpop.f32.mrb[0].mxu0
      %v5582 = vadd.f32 %v5447, %v5581
      %v5583 = vpop.f32.mrb[0].mxu0
      %5584 = vmatprep.mubr.f32.mxu0 %v4649
      %5585 = vmatmul.mubr.f32.gmra.mrb[0].mxu0 %v4635
      %v5586 = vpop.f32.mrb[0].mxu0
      %v5587 = vadd.f32 %v5452, %v5586
      %v5588 = vpop.f32.mrb[0].mxu0
      %5589 = vmatprep.mubr.f32.mxu0 %v4705
      %5590 = vmatmul.mubr.f32.gmra.mrb[0].mxu0 %v4691
      %v5591 = vpop.f32.mrb[0].mxu0
      %v5592 = vadd.f32 %v5457, %v5591
      %v5593 = vpop.f32.mrb[0].mxu0
      %5594 = vmatprep.mubr.f32.mxu0 %v4761
      %5595 = vmatmul.mubr.f32.gmra.mrb[0].mxu0 %v4747
      %v5596 = vpop.f32.mrb[0].mxu0
      %v5597 = vadd.f32 %v5462, %v5596
      %v5598 = vpop.f32.mrb[0].mxu0
      %5599 = vmatprep.mubr.f32.mxu0 %v4857
      %5600 = vmatmul.mubr.f32.gmra.mrb[0].mxu0 %v4855
      %v5601 = vpop.f32.mrb[0].mxu0
      %v5602 = vadd.f32 %v5467, %v5601
      %v5603 = vpop.f32.mrb[0].mxu0
      %5604 = vmatprep.mubr.f32.mxu0 %v4925
      %5605 = vmatmul.mubr.f32.gmra.mrb[0].mxu0 %v4923
      %v5606 = vpop.f32.mrb[0].mxu0
      %v5607 = vadd.f32 %v5472, %v5606
      %v5608 = vpop.f32.mrb[0].mxu0
      %5609 = vmatprep.mubr.f32.mxu0 %v4993
      %5610 = vmatmul.mubr.f32.gmra.mrb[0].mxu0 %v4991
      %v5611 = vpop.f32.mrb[0].mxu0
      %v5612 = vadd.f32 %v5477, %v5611
      %v5613 = vpop.f32.mrb[0].mxu0
      %5614 = vmatprep.mubr.f32.mxu0 %v5061
      %5615 = vmatmul.mubr.f32.gmra.mrb[0].mxu0 %v5059
      %v5616 = vpop.f32.mrb[0].mxu0
      %v5617 = vadd.f32 %v5482, %v5616
      %v5618 = vpop.f32.mrb[0].mxu0
      %5619 = vmatprep.mubr.f32.mxu0 %v5129
      %5620 = vmatmul.mubr.f32.gmra.mrb[0].mxu0 %v5127
      %v5621 = vpop.f32.mrb[0].mxu0
      %v5622 = vadd.f32 %v5487, %v5621
      %v5623 = vpop.f32.mrb[0].mxu0
      %5624 = vmatprep.mubr.f32.mxu0 %v5197
      %5625 = vmatmul.mubr.f32.gmra.mrb[0].mxu0 %v5195
      %v5626 = vpop.f32.mrb[0].mxu0
      %v5627 = vadd.f32 %v5492, %v5626
      %v5628 = vpop.f32.mrb[0].mxu0
      %5629 = vmatprep.mubr.f32.mxu0 %v5265
      %5630 = vmatmul.mubr.f32.gmra.mrb[0].mxu0 %v5263
      %v5631 = vpop.f32.mrb[0].mxu0
      %v5632 = vadd.f32 %v5497, %v5631
      %v5633 = vpop.f32.mrb[0].mxu0
      %5634 = vdwg.mxu0
      %v5635 = vadd.f32 %v5567, 3.0
      %v5636 = vadd.f32 %v5572, 3.0
      %v5637 = vadd.f32 %v5577, 3.0
      %v5638 = vadd.f32 %v5582, 3.0
      %v5639 = vadd.f32 %v5587, 3.0
      %v5640 = vadd.f32 %v5592, 3.0
      %v5641 = vadd.f32 %v5597, 3.0
      %v5642 = vadd.f32 %v5602, 3.0
      %v5643 = vadd.f32 %v5607, 3.0
      %v5644 = vadd.f32 %v5612, 3.0
      %v5645 = vadd.f32 %v5617, 3.0
      %v5646 = vadd.f32 %v5622, 3.0
      %v5647 = vadd.f32 %v5627, 3.0
      %v5648 = vadd.f32 %v5632, 3.0
      %v5649 = vmax.f32 %v5635, 0.0
      %v5650 = vmax.f32 %v5636, 0.0
      %v5651 = vmax.f32 %v5637, 0.0
      %v5652 = vmax.f32 %v5638, 0.0
      %v5653 = vmax.f32 %v5639, 0.0
      %v5654 = vmax.f32 %v5640, 0.0
      %v5655 = vmax.f32 %v5641, 0.0
      %v5656 = vmax.f32 %v5642, 0.0
      %v5657 = vmax.f32 %v5643, 0.0
      %v5658 = vmax.f32 %v5644, 0.0
      %v5659 = vmax.f32 %v5645, 0.0
      %v5660 = vmax.f32 %v5646, 0.0
      %v5661 = vmax.f32 %v5647, 0.0
      %v5662 = vmax.f32 %v5648, 0.0
      %v5663 = vmin.f32 %v5649, 6.0
      %v5664 = vmin.f32 %v5650, 6.0
      %v5665 = vmin.f32 %v5651, 6.0
      %v5666 = vmin.f32 %v5652, 6.0
      %v5667 = vmin.f32 %v5653, 6.0
      %v5668 = vmin.f32 %v5654, 6.0
      %v5669 = vmin.f32 %v5655, 6.0
      %v5670 = vmin.f32 %v5656, 6.0
      %v5671 = vmin.f32 %v5657, 6.0
      %v5672 = vmin.f32 %v5658, 6.0
      %v5673 = vmin.f32 %v5659, 6.0
      %v5674 = vmin.f32 %v5660, 6.0
      %v5675 = vmin.f32 %v5661, 6.0
      %v5676 = vmin.f32 %v5662, 6.0
      %v5677 = vmul.f32 %v5663, 0.16666667
      %v5678 = vmul.f32 %v5664, 0.16666667
      %v5679 = vmul.f32 %v5665, 0.16666667
      %v5680 = vmul.f32 %v5666, 0.16666667
      %v5681 = vmul.f32 %v5667, 0.16666667
      %v5682 = vmul.f32 %v5668, 0.16666667
      %v5683 = vmul.f32 %v5669, 0.16666667
      %v5684 = vmul.f32 %v5670, 0.16666667
      %v5685 = vmul.f32 %v5671, 0.16666667
      %v5686 = vmul.f32 %v5672, 0.16666667
      %v5687 = vmul.f32 %v5673, 0.16666667
      %v5688 = vmul.f32 %v5674, 0.16666667
      %v5689 = vmul.f32 %v5675, 0.16666667
      %v5690 = vmul.f32 %v5676, 0.16666667
      %v5691 = vmul.f32 %v5567, %v5677
      %v5692 = vmul.f32 %v5572, %v5678
      %v5693 = vmul.f32 %v5577, %v5679
      %v5694 = vmul.f32 %v5582, %v5680
      %v5695 = vmul.f32 %v5587, %v5681
      %v5696 = vmul.f32 %v5592, %v5682
      %v5697 = vmul.f32 %v5597, %v5683
      %v5698 = vmul.f32 %v5602, %v5684
      %v5699 = vmul.f32 %v5607, %v5685
      %v5700 = vmul.f32 %v5612, %v5686
      %v5701 = vmul.f32 %v5617, %v5687
      %v5702 = vmul.f32 %v5622, %v5688
      %v5703 = vmul.f32 %v5627, %v5689
      %v5704 = vmul.f32 %v5632, %v5690
      %v5705 = vld [vmem:[%s7] sm:$0xff]
      %v5706 = vld [vmem:[%s7 + $0x8] sm:$0xff]
      %v5707 = vld [vmem:[%s7 + $0x10] sm:$0xff]
      %v5708 = vld [vmem:[%s7 + $0x18] sm:$0xff]
      %v5709 = vld [vmem:[%s7 + $0x20] sm:$0xff]
      %v5710 = vld [vmem:[%s7 + $0x28] sm:$0xff]
      %v5711 = vld [vmem:[%s7 + $0x30] sm:$0xff]
      %v5712 = vld [vmem:[%s7 + $0x38] sm:$0xff]
      %v5713 = vld [vmem:[%s8] sm:$0xf]
      %v5715 = vlaneseq
      %v5716 = vshrl.u32 %v5715, 7
      %v5717 = vsub.s32 0, %v5716
      %v5718 = vrot.slane %v5713, %v5717
      %v5719 = vlaneseq
      %v5720 = vshrl.u32 %v5719, 7
      %v5721 = vsub.s32 1, %v5720
      %v5722 = vrot.slane %v5713, %v5721
      %v5723 = vlaneseq
      %v5724 = vshrl.u32 %v5723, 7
      %v5725 = vsub.s32 2, %v5724
      %v5726 = vrot.slane %v5713, %v5725
      %v5727 = vlaneseq
      %v5728 = vshrl.u32 %v5727, 7
      %v5729 = vsub.s32 3, %v5728
      %v5730 = vrot.slane %v5713, %v5729
      %vm5735 = vcmask 130048
      %v5737 = vsel %vm5735, %v5691, 0
      %v5740 = vsel %vm5735, %v5692, 0
      %v5743 = vsel %vm5735, %v5693, 0
      %v5746 = vsel %vm5735, %v5694, 0
      %v5749 = vsel %vm5735, %v5695, 0
      %v5752 = vsel %vm5735, %v5696, 0
      %v5755 = vsel %vm5735, %v5697, 0
      %5757 = vmatprep.subr.mxu0 %v5706
      %5758 = vmatpush1.msra.mxu0 %v5705
      %5759 = vmatprep.subr.mxu0 %v5710
      %5760 = vmatpush1.msra.mxu0 %v5709
      %5761 = vmatprep.subr.mxu0 0.0
      %5762 = vmatpush1.msra.mxu0 0.0
      %5763 = vmatprep.subr.mxu0 0.0
      %5764 = vmatpush1.msra.mxu0 0.0
      %5765 = vmatprep.subr.mxu0 0.0
      %5766 = vmatpush1.msra.mxu0 0.0
      %5767 = vmatprep.subr.mxu0 0.0
      %5768 = vmatpush1.msra.mxu0 0.0
      %5769 = vmatprep.subr.mxu0 0.0
      %5770 = vmatpush1.msra.mxu0 0.0
      %5771 = vmatprep.subr.mxu0 0.0
      %5772 = vmatpush1.msra.mxu0 0.0
      %5773 = vmatprep.subr.mxu0 0.0
      %5774 = vmatpush1.msra.mxu0 0.0
      %5775 = vmatprep.subr.mxu0 0.0
      %5776 = vmatpush1.msra.mxu0 0.0
      %5777 = vmatprep.subr.mxu0 0.0
      %5778 = vmatpush1.msra.mxu0 0.0
      %5779 = vmatprep.subr.mxu0 0.0
      %5780 = vmatpush1.msra.mxu0 0.0
      %5781 = vmatprep.subr.mxu0 0.0
      %5782 = vmatpush1.msra.mxu0 0.0
      %5783 = vmatprep.subr.mxu0 0.0
      %5784 = vmatpush1.msra.mxu0 0.0
      %5785 = vmatprep.subr.mxu0 0.0
      %5786 = vmatpush1.msra.mxu0 0.0
      %5787 = vmatprep.subr.mxu0 0.0
      %5788 = vmatpush1.msra.mxu0 0.0
      %5789 = vmatprep.subr.mxu0 0.0
      %5790 = vmatpush1.msra.mxu0 0.0
      %5791 = vmatprep.subr.mxu0 0.0
      %5792 = vmatpush1.msra.mxu0 0.0
      %5793 = vmatprep.subr.mxu0 0.0
      %5794 = vmatpush1.msra.mxu0 0.0
      %5795 = vmatprep.subr.mxu0 0.0
      %5796 = vmatpush1.msra.mxu0 0.0
      %5797 = vmatprep.subr.mxu0 0.0
      %5798 = vmatpush1.msra.mxu0 0.0
      %5799 = vmatprep.subr.mxu0 0.0
      %5800 = vmatpush1.msra.mxu0 0.0
      %5801 = vmatprep.subr.mxu0 0.0
      %5802 = vmatpush1.msra.mxu0 0.0
      %5803 = vmatprep.subr.mxu0 0.0
      %5804 = vmatpush1.msra.mxu0 0.0
      %5805 = vmatprep.subr.mxu0 0.0
      %5806 = vmatpush1.msra.mxu0 0.0
      %5807 = vmatprep.subr.mxu0 0.0
      %5808 = vmatpush1.msra.mxu0 0.0
      %5809 = vmatprep.subr.mxu0 0.0
      %5810 = vmatpush1.msra.mxu0 0.0
      %5811 = vmatprep.subr.mxu0 0.0
      %5812 = vmatpush1.msra.mxu0 0.0
      %5813 = vmatprep.subr.mxu0 0.0
      %5814 = vmatpush1.msra.mxu0 0.0
      %5815 = vmatprep.subr.mxu0 0.0
      %5816 = vmatpush1.msra.mxu0 0.0
      %5817 = vmatprep.subr.mxu0 0.0
      %5818 = vmatpush1.msra.mxu0 0.0
      %5819 = vmatprep.subr.mxu0 0.0
      %5820 = vmatpush1.msra.mxu0 0.0
      %5821 = vmatprep.mubr.f32.mxu0 0.0
      %5822 = vmatmul.mubr.f32.gmra.mrb[0].mxu0 %v5737
      %v5823 = vpop.f32.mrb[0].mxu0
      %v5824 = vadd.f32 %v5718, %v5823
      %v5825 = vpop.f32.mrb[0].mxu0
      %v5826 = vadd.f32 %v5722, %v5825
      %5827 = vmatprep.mubr.f32.mxu0 0.0
      %5828 = vmatmul.mubr.f32.gmra.mrb[0].mxu0 %v5740
      %v5829 = vpop.f32.mrb[0].mxu0
      %v5830 = vadd.f32 %v5718, %v5829
      %v5831 = vpop.f32.mrb[0].mxu0
      %v5832 = vadd.f32 %v5722, %v5831
      %5833 = vmatprep.mubr.f32.mxu0 0.0
      %5834 = vmatmul.mubr.f32.gmra.mrb[0].mxu0 %v5743
      %v5835 = vpop.f32.mrb[0].mxu0
      %v5836 = vadd.f32 %v5718, %v5835
      %v5837 = vpop.f32.mrb[0].mxu0
      %v5838 = vadd.f32 %v5722, %v5837
      %5839 = vmatprep.mubr.f32.mxu0 0.0
      %5840 = vmatmul.mubr.f32.gmra.mrb[0].mxu0 %v5746
      %v5841 = vpop.f32.mrb[0].mxu0
      %v5842 = vadd.f32 %v5718, %v5841
      %v5843 = vpop.f32.mrb[0].mxu0
      %v5844 = vadd.f32 %v5722, %v5843
      %5845 = vmatprep.mubr.f32.mxu0 0.0
      %5846 = vmatmul.mubr.f32.gmra.mrb[0].mxu0 %v5749
      %v5847 = vpop.f32.mrb[0].mxu0
      %v5848 = vadd.f32 %v5718, %v5847
      %v5849 = vpop.f32.mrb[0].mxu0
      %v5850 = vadd.f32 %v5722, %v5849
      %5851 = vmatprep.mubr.f32.mxu0 0.0
      %5852 = vmatmul.mubr.f32.gmra.mrb[0].mxu0 %v5752
      %v5853 = vpop.f32.mrb[0].mxu0
      %v5854 = vadd.f32 %v5718, %v5853
      %v5855 = vpop.f32.mrb[0].mxu0
      %v5856 = vadd.f32 %v5722, %v5855
      %5857 = vmatprep.mubr.f32.mxu0 0.0
      %5858 = vmatmul.mubr.f32.gmra.mrb[0].mxu0 %v5755
      %v5859 = vpop.f32.mrb[0].mxu0
      %v5860 = vadd.f32 %v5718, %v5859
      %v5861 = vpop.f32.mrb[0].mxu0
      %v5862 = vadd.f32 %v5722, %v5861
      %5863 = vdwg.mxu0
      %5864 = vmatprep.subr.mxu0 %v5708
      %5865 = vmatpush1.msra.mxu0 %v5707
      %5866 = vmatprep.subr.mxu0 %v5712
      %5867 = vmatpush1.msra.mxu0 %v5711
      %5868 = vmatprep.subr.mxu0 0.0
      %5869 = vmatpush1.msra.mxu0 0.0
      %5870 = vmatprep.subr.mxu0 0.0
      %5871 = vmatpush1.msra.mxu0 0.0
      %5872 = vmatprep.subr.mxu0 0.0
      %5873 = vmatpush1.msra.mxu0 0.0
      %5874 = vmatprep.subr.mxu0 0.0
      %5875 = vmatpush1.msra.mxu0 0.0
      %5876 = vmatprep.subr.mxu0 0.0
      %5877 = vmatpush1.msra.mxu0 0.0
      %5878 = vmatprep.subr.mxu0 0.0
      %5879 = vmatpush1.msra.mxu0 0.0
      %5880 = vmatprep.subr.mxu0 0.0
      %5881 = vmatpush1.msra.mxu0 0.0
      %5882 = vmatprep.subr.mxu0 0.0
      %5883 = vmatpush1.msra.mxu0 0.0
      %5884 = vmatprep.subr.mxu0 0.0
      %5885 = vmatpush1.msra.mxu0 0.0
      %5886 = vmatprep.subr.mxu0 0.0
      %5887 = vmatpush1.msra.mxu0 0.0
      %5888 = vmatprep.subr.mxu0 0.0
      %5889 = vmatpush1.msra.mxu0 0.0
      %5890 = vmatprep.subr.mxu0 0.0
      %5891 = vmatpush1.msra.mxu0 0.0
      %5892 = vmatprep.subr.mxu0 0.0
      %5893 = vmatpush1.msra.mxu0 0.0
      %5894 = vmatprep.subr.mxu0 0.0
      %5895 = vmatpush1.msra.mxu0 0.0
      %5896 = vmatprep.subr.mxu0 0.0
      %5897 = vmatpush1.msra.mxu0 0.0
      %5898 = vmatprep.subr.mxu0 0.0
      %5899 = vmatpush1.msra.mxu0 0.0
      %5900 = vmatprep.subr.mxu0 0.0
      %5901 = vmatpush1.msra.mxu0 0.0
      %5902 = vmatprep.subr.mxu0 0.0
      %5903 = vmatpush1.msra.mxu0 0.0
      %5904 = vmatprep.subr.mxu0 0.0
      %5905 = vmatpush1.msra.mxu0 0.0
      %5906 = vmatprep.subr.mxu0 0.0
      %5907 = vmatpush1.msra.mxu0 0.0
      %5908 = vmatprep.subr.mxu0 0.0
      %5909 = vmatpush1.msra.mxu0 0.0
      %5910 = vmatprep.subr.mxu0 0.0
      %5911 = vmatpush1.msra.mxu0 0.0
      %5912 = vmatprep.subr.mxu0 0.0
      %5913 = vmatpush1.msra.mxu0 0.0
      %5914 = vmatprep.subr.mxu0 0.0
      %5915 = vmatpush1.msra.mxu0 0.0
      %5916 = vmatprep.subr.mxu0 0.0
      %5917 = vmatpush1.msra.mxu0 0.0
      %5918 = vmatprep.subr.mxu0 0.0
      %5919 = vmatpush1.msra.mxu0 0.0
      %5920 = vmatprep.subr.mxu0 0.0
      %5921 = vmatpush1.msra.mxu0 0.0
      %5922 = vmatprep.subr.mxu0 0.0
      %5923 = vmatpush1.msra.mxu0 0.0
      %5924 = vmatprep.subr.mxu0 0.0
      %5925 = vmatpush1.msra.mxu0 0.0
      %5926 = vmatprep.subr.mxu0 0.0
      %5927 = vmatpush1.msra.mxu0 0.0
      %5928 = vmatprep.mubr.f32.mxu0 0.0
      %5929 = vmatmul.mubr.f32.gmra.mrb[0].mxu0 %v5737
      %v5930 = vpop.f32.mrb[0].mxu0
      %v5931 = vadd.f32 %v5726, %v5930
      %v5932 = vpop.f32.mrb[0].mxu0
      %v5933 = vadd.f32 %v5730, %v5932
      %5934 = vmatprep.mubr.f32.mxu0 0.0
      %5935 = vmatmul.mubr.f32.gmra.mrb[0].mxu0 %v5740
      %v5936 = vpop.f32.mrb[0].mxu0
      %v5937 = vadd.f32 %v5726, %v5936
      %v5938 = vpop.f32.mrb[0].mxu0
      %v5939 = vadd.f32 %v5730, %v5938
      %5940 = vmatprep.mubr.f32.mxu0 0.0
      %5941 = vmatmul.mubr.f32.gmra.mrb[0].mxu0 %v5743
      %v5942 = vpop.f32.mrb[0].mxu0
      %v5943 = vadd.f32 %v5726, %v5942
      %v5944 = vpop.f32.mrb[0].mxu0
      %v5945 = vadd.f32 %v5730, %v5944
      %5946 = vmatprep.mubr.f32.mxu0 0.0
      %5947 = vmatmul.mubr.f32.gmra.mrb[0].mxu0 %v5746
      %v5948 = vpop.f32.mrb[0].mxu0
      %v5949 = vadd.f32 %v5726, %v5948
      %v5950 = vpop.f32.mrb[0].mxu0
      %v5951 = vadd.f32 %v5730, %v5950
      %5952 = vmatprep.mubr.f32.mxu0 0.0
      %5953 = vmatmul.mubr.f32.gmra.mrb[0].mxu0 %v5749
      %v5954 = vpop.f32.mrb[0].mxu0
      %v5955 = vadd.f32 %v5726, %v5954
      %v5956 = vpop.f32.mrb[0].mxu0
      %v5957 = vadd.f32 %v5730, %v5956
      %5958 = vmatprep.mubr.f32.mxu0 0.0
      %5959 = vmatmul.mubr.f32.gmra.mrb[0].mxu0 %v5752
      %v5960 = vpop.f32.mrb[0].mxu0
      %v5961 = vadd.f32 %v5726, %v5960
      %v5962 = vpop.f32.mrb[0].mxu0
      %v5963 = vadd.f32 %v5730, %v5962
      %5964 = vmatprep.mubr.f32.mxu0 0.0
      %5965 = vmatmul.mubr.f32.gmra.mrb[0].mxu0 %v5755
      %v5966 = vpop.f32.mrb[0].mxu0
      %v5967 = vadd.f32 %v5726, %v5966
      %v5968 = vpop.f32.mrb[0].mxu0
      %v5969 = vadd.f32 %v5730, %v5968
      %5970 = vdwg.mxu0
      %v5971 = vxor.u32 %v5824, 2147483648
      %v5972 = vxor.u32 %v5826, 2147483648
      %v5973 = vxor.u32 %v5931, 2147483648
      %v5974 = vxor.u32 %v5933, 2147483648
      %v5975 = vxor.u32 %v5830, 2147483648
      %v5976 = vxor.u32 %v5832, 2147483648
      %v5977 = vxor.u32 %v5937, 2147483648
      %v5978 = vxor.u32 %v5939, 2147483648
      %v5979 = vxor.u32 %v5836, 2147483648
      %v5980 = vxor.u32 %v5838, 2147483648
      %v5981 = vxor.u32 %v5943, 2147483648
      %v5982 = vxor.u32 %v5945, 2147483648
      %v5983 = vxor.u32 %v5842, 2147483648
      %v5984 = vxor.u32 %v5844, 2147483648
      %v5985 = vxor.u32 %v5949, 2147483648
      %v5986 = vxor.u32 %v5951, 2147483648
      %v5987 = vxor.u32 %v5848, 2147483648
      %v5988 = vxor.u32 %v5850, 2147483648
      %v5989 = vxor.u32 %v5955, 2147483648
      %v5990 = vxor.u32 %v5957, 2147483648
      %v5991 = vxor.u32 %v5854, 2147483648
      %v5992 = vxor.u32 %v5856, 2147483648
      %v5993 = vxor.u32 %v5961, 2147483648
      %v5994 = vxor.u32 %v5963, 2147483648
      %v5995 = vxor.u32 %v5860, 2147483648
      %v5996 = vxor.u32 %v5862, 2147483648
      %v5997 = vxor.u32 %v5967, 2147483648
      %v5998 = vxor.u32 %v5969, 2147483648
      %v5999 = vmul.f32 %v5971, 1.442695
      %v6000 = vpow.pop %v5999
      %v6001 = vmul.f32 %v5972, 1.442695
      %v6002 = vpow.pop %v6001
      %v6003 = vmul.f32 %v5973, 1.442695
      %v6004 = vpow.pop %v6003
      %v6005 = vmul.f32 %v5974, 1.442695
      %v6006 = vpow.pop %v6005
      %v6007 = vmul.f32 %v5975, 1.442695
      %v6008 = vpow.pop %v6007
      %v6009 = vmul.f32 %v5976, 1.442695
      %v6010 = vpow.pop %v6009
      %v6011 = vmul.f32 %v5977, 1.442695
      %v6012 = vpow.pop %v6011
      %v6013 = vmul.f32 %v5978, 1.442695
      %v6014 = vpow.pop %v6013
      %v6015 = vmul.f32 %v5979, 1.442695
      %v6016 = vpow.pop %v6015
      %v6017 = vmul.f32 %v5980, 1.442695
      %v6018 = vpow.pop %v6017
      %v6019 = vmul.f32 %v5981, 1.442695
      %v6020 = vpow.pop %v6019
      %v6021 = vmul.f32 %v5982, 1.442695
      %v6022 = vpow.pop %v6021
      %v6023 = vmul.f32 %v5983, 1.442695
      %v6024 = vpow.pop %v6023
      %v6025 = vmul.f32 %v5984, 1.442695
      %v6026 = vpow.pop %v6025
      %v6027 = vmul.f32 %v5985, 1.442695
      %v6028 = vpow.pop %v6027
      %v6029 = vmul.f32 %v5986, 1.442695
      %v6030 = vpow.pop %v6029
      %v6031 = vmul.f32 %v5987, 1.442695
      %v6032 = vpow.pop %v6031
      %v6033 = vmul.f32 %v5988, 1.442695
      %v6034 = vpow.pop %v6033
      %v6035 = vmul.f32 %v5989, 1.442695
      %v6036 = vpow.pop %v6035
      %v6037 = vmul.f32 %v5990, 1.442695
      %v6038 = vpow.pop %v6037
      %v6039 = vmul.f32 %v5991, 1.442695
      %v6040 = vpow.pop %v6039
      %v6041 = vmul.f32 %v5992, 1.442695
      %v6042 = vpow.pop %v6041
      %v6043 = vmul.f32 %v5993, 1.442695
      %v6044 = vpow.pop %v6043
      %v6045 = vmul.f32 %v5994, 1.442695
      %v6046 = vpow.pop %v6045
      %v6047 = vmul.f32 %v5995, 1.442695
      %v6048 = vpow.pop %v6047
      %v6049 = vmul.f32 %v5996, 1.442695
      %v6050 = vpow.pop %v6049
      %v6051 = vmul.f32 %v5997, 1.442695
      %v6052 = vpow.pop %v6051
      %v6053 = vmul.f32 %v5998, 1.442695
      %v6054 = vpow.pop %v6053
      %v6055 = vadd.f32 %v6000, 1.0
      %v6056 = vadd.f32 %v6002, 1.0
      %v6057 = vadd.f32 %v6004, 1.0
      %v6058 = vadd.f32 %v6006, 1.0
      %v6059 = vadd.f32 %v6008, 1.0
      %v6060 = vadd.f32 %v6010, 1.0
      %v6061 = vadd.f32 %v6012, 1.0
      %v6062 = vadd.f32 %v6014, 1.0
      %v6063 = vadd.f32 %v6016, 1.0
      %v6064 = vadd.f32 %v6018, 1.0
      %v6065 = vadd.f32 %v6020, 1.0
      %v6066 = vadd.f32 %v6022, 1.0
      %v6067 = vadd.f32 %v6024, 1.0
      %v6068 = vadd.f32 %v6026, 1.0
      %v6069 = vadd.f32 %v6028, 1.0
      %v6070 = vadd.f32 %v6030, 1.0
      %v6071 = vadd.f32 %v6032, 1.0
      %v6072 = vadd.f32 %v6034, 1.0
      %v6073 = vadd.f32 %v6036, 1.0
      %v6074 = vadd.f32 %v6038, 1.0
      %v6075 = vadd.f32 %v6040, 1.0
      %v6076 = vadd.f32 %v6042, 1.0
      %v6077 = vadd.f32 %v6044, 1.0
      %v6078 = vadd.f32 %v6046, 1.0
      %v6079 = vadd.f32 %v6048, 1.0
      %v6080 = vadd.f32 %v6050, 1.0
      %v6081 = vadd.f32 %v6052, 1.0
      %v6082 = vadd.f32 %v6054, 1.0
      %v6083 = vrcp.pop %v6055
      %v6084 = vmul.f32 1.0, %v6083
      %v6085 = vrcp.pop %v6056
      %v6086 = vmul.f32 1.0, %v6085
      %v6087 = vrcp.pop %v6057
      %v6088 = vmul.f32 1.0, %v6087
      %v6089 = vrcp.pop %v6058
      %v6090 = vmul.f32 1.0, %v6089
      %v6091 = vrcp.pop %v6059
      %v6092 = vmul.f32 1.0, %v6091
      %v6093 = vrcp.pop %v6060
      %v6094 = vmul.f32 1.0, %v6093
      %v6095 = vrcp.pop %v6061
      %v6096 = vmul.f32 1.0, %v6095
      %v6097 = vrcp.pop %v6062
      %v6098 = vmul.f32 1.0, %v6097
      %v6099 = vrcp.pop %v6063
      %v6100 = vmul.f32 1.0, %v6099
      %v6101 = vrcp.pop %v6064
      %v6102 = vmul.f32 1.0, %v6101
      %v6103 = vrcp.pop %v6065
      %v6104 = vmul.f32 1.0, %v6103
      %v6105 = vrcp.pop %v6066
      %v6106 = vmul.f32 1.0, %v6105
      %v6107 = vrcp.pop %v6067
      %v6108 = vmul.f32 1.0, %v6107
      %v6109 = vrcp.pop %v6068
      %v6110 = vmul.f32 1.0, %v6109
      %v6111 = vrcp.pop %v6069
      %v6112 = vmul.f32 1.0, %v6111
      %v6113 = vrcp.pop %v6070
      %v6114 = vmul.f32 1.0, %v6113
      %v6115 = vrcp.pop %v6071
      %v6116 = vmul.f32 1.0, %v6115
      %v6117 = vrcp.pop %v6072
      %v6118 = vmul.f32 1.0, %v6117
      %v6119 = vrcp.pop %v6073
      %v6120 = vmul.f32 1.0, %v6119
      %v6121 = vrcp.pop %v6074
      %v6122 = vmul.f32 1.0, %v6121
      %v6123 = vrcp.pop %v6075
      %v6124 = vmul.f32 1.0, %v6123
      %v6125 = vrcp.pop %v6076
      %v6126 = vmul.f32 1.0, %v6125
      %v6127 = vrcp.pop %v6077
      %v6128 = vmul.f32 1.0, %v6127
      %v6129 = vrcp.pop %v6078
      %v6130 = vmul.f32 1.0, %v6129
      %v6131 = vrcp.pop %v6079
      %v6132 = vmul.f32 1.0, %v6131
      %v6133 = vrcp.pop %v6080
      %v6134 = vmul.f32 1.0, %v6133
      %v6135 = vrcp.pop %v6081
      %v6136 = vmul.f32 1.0, %v6135
      %v6137 = vrcp.pop %v6082
      %v6138 = vmul.f32 1.0, %v6137
      %v6139 = vld [vmem:[%s9] sm:$0xff]
      %v6140 = vld [vmem:[%s9 + $0x8] sm:$0xff]
      %v6141 = vld [vmem:[%s9 + $0x10] sm:$0xff]
      %v6142 = vld [vmem:[%s9 + $0x18] sm:$0xff]
      %v6143 = vld [vmem:[%s9 + $0x20] sm:$0xff]
      %v6144 = vld [vmem:[%s9 + $0x28] sm:$0xff]
      %v6145 = vld [vmem:[%s9 + $0x30] sm:$0xff]
      %v6146 = vld [vmem:[%s9 + $0x38] sm:$0xff]
      %v6147 = vld [vmem:[%s10] sm:$0xf]
      %v6149 = vlaneseq
      %v6150 = vshrl.u32 %v6149, 7
      %v6151 = vsub.s32 0, %v6150
      %v6152 = vrot.slane %v6147, %v6151
      %v6153 = vlaneseq
      %v6154 = vshrl.u32 %v6153, 7
      %v6155 = vsub.s32 1, %v6154
      %v6156 = vrot.slane %v6147, %v6155
      %v6157 = vlaneseq
      %v6158 = vshrl.u32 %v6157, 7
      %v6159 = vsub.s32 2, %v6158
      %v6160 = vrot.slane %v6147, %v6159
      %v6161 = vlaneseq
      %v6162 = vshrl.u32 %v6161, 7
      %v6163 = vsub.s32 3, %v6162
      %v6164 = vrot.slane %v6147, %v6163
      %v6170 = vsel %vm5735, %v5698, 0
      %v6173 = vsel %vm5735, %v5699, 0
      %v6176 = vsel %vm5735, %v5700, 0
      %v6179 = vsel %vm5735, %v5701, 0
      %v6182 = vsel %vm5735, %v5702, 0
      %v6185 = vsel %vm5735, %v5703, 0
      %v6188 = vsel %vm5735, %v5704, 0
      %6190 = vmatprep.subr.mxu0 %v6140
      %6191 = vmatpush1.msra.mxu0 %v6139
      %6192 = vmatprep.subr.mxu0 %v6144
      %6193 = vmatpush1.msra.mxu0 %v6143
      %6194 = vmatprep.subr.mxu0 0.0
      %6195 = vmatpush1.msra.mxu0 0.0
      %6196 = vmatprep.subr.mxu0 0.0
      %6197 = vmatpush1.msra.mxu0 0.0
      %6198 = vmatprep.subr.mxu0 0.0
      %6199 = vmatpush1.msra.mxu0 0.0
      %6200 = vmatprep.subr.mxu0 0.0
      %6201 = vmatpush1.msra.mxu0 0.0
      %6202 = vmatprep.subr.mxu0 0.0
      %6203 = vmatpush1.msra.mxu0 0.0
      %6204 = vmatprep.subr.mxu0 0.0
      %6205 = vmatpush1.msra.mxu0 0.0
      %6206 = vmatprep.subr.mxu0 0.0
      %6207 = vmatpush1.msra.mxu0 0.0
      %6208 = vmatprep.subr.mxu0 0.0
      %6209 = vmatpush1.msra.mxu0 0.0
      %6210 = vmatprep.subr.mxu0 0.0
      %6211 = vmatpush1.msra.mxu0 0.0
      %6212 = vmatprep.subr.mxu0 0.0
      %6213 = vmatpush1.msra.mxu0 0.0
      %6214 = vmatprep.subr.mxu0 0.0
      %6215 = vmatpush1.msra.mxu0 0.0
      %6216 = vmatprep.subr.mxu0 0.0
      %6217 = vmatpush1.msra.mxu0 0.0
      %6218 = vmatprep.subr.mxu0 0.0
      %6219 = vmatpush1.msra.mxu0 0.0
      %6220 = vmatprep.subr.mxu0 0.0
      %6221 = vmatpush1.msra.mxu0 0.0
      %6222 = vmatprep.subr.mxu0 0.0
      %6223 = vmatpush1.msra.mxu0 0.0
      %6224 = vmatprep.subr.mxu0 0.0
      %6225 = vmatpush1.msra.mxu0 0.0
      %6226 = vmatprep.subr.mxu0 0.0
      %6227 = vmatpush1.msra.mxu0 0.0
      %6228 = vmatprep.subr.mxu0 0.0
      %6229 = vmatpush1.msra.mxu0 0.0
      %6230 = vmatprep.subr.mxu0 0.0
      %6231 = vmatpush1.msra.mxu0 0.0
      %6232 = vmatprep.subr.mxu0 0.0
      %6233 = vmatpush1.msra.mxu0 0.0
      %6234 = vmatprep.subr.mxu0 0.0
      %6235 = vmatpush1.msra.mxu0 0.0
      %6236 = vmatprep.subr.mxu0 0.0
      %6237 = vmatpush1.msra.mxu0 0.0
      %6238 = vmatprep.subr.mxu0 0.0
      %6239 = vmatpush1.msra.mxu0 0.0
      %6240 = vmatprep.subr.mxu0 0.0
      %6241 = vmatpush1.msra.mxu0 0.0
      %6242 = vmatprep.subr.mxu0 0.0
      %6243 = vmatpush1.msra.mxu0 0.0
      %6244 = vmatprep.subr.mxu0 0.0
      %6245 = vmatpush1.msra.mxu0 0.0
      %6246 = vmatprep.subr.mxu0 0.0
      %6247 = vmatpush1.msra.mxu0 0.0
      %6248 = vmatprep.subr.mxu0 0.0
      %6249 = vmatpush1.msra.mxu0 0.0
      %6250 = vmatprep.subr.mxu0 0.0
      %6251 = vmatpush1.msra.mxu0 0.0
      %6252 = vmatprep.subr.mxu0 0.0
      %6253 = vmatpush1.msra.mxu0 0.0
      %6254 = vmatprep.mubr.f32.mxu0 0.0
      %6255 = vmatmul.mubr.f32.gmra.mrb[0].mxu0 %v6170
      %v6256 = vpop.f32.mrb[0].mxu0
      %v6257 = vadd.f32 %v6152, %v6256
      %v6258 = vpop.f32.mrb[0].mxu0
      %v6259 = vadd.f32 %v6156, %v6258
      %6260 = vmatprep.mubr.f32.mxu0 0.0
      %6261 = vmatmul.mubr.f32.gmra.mrb[0].mxu0 %v6173
      %v6262 = vpop.f32.mrb[0].mxu0
      %v6263 = vadd.f32 %v6152, %v6262
      %v6264 = vpop.f32.mrb[0].mxu0
      %v6265 = vadd.f32 %v6156, %v6264
      %6266 = vmatprep.mubr.f32.mxu0 0.0
      %6267 = vmatmul.mubr.f32.gmra.mrb[0].mxu0 %v6176
      %v6268 = vpop.f32.mrb[0].mxu0
      %v6269 = vadd.f32 %v6152, %v6268
      %v6270 = vpop.f32.mrb[0].mxu0
      %v6271 = vadd.f32 %v6156, %v6270
      %6272 = vmatprep.mubr.f32.mxu0 0.0
      %6273 = vmatmul.mubr.f32.gmra.mrb[0].mxu0 %v6179
      %v6274 = vpop.f32.mrb[0].mxu0
      %v6275 = vadd.f32 %v6152, %v6274
      %v6276 = vpop.f32.mrb[0].mxu0
      %v6277 = vadd.f32 %v6156, %v6276
      %6278 = vmatprep.mubr.f32.mxu0 0.0
      %6279 = vmatmul.mubr.f32.gmra.mrb[0].mxu0 %v6182
      %v6280 = vpop.f32.mrb[0].mxu0
      %v6281 = vadd.f32 %v6152, %v6280
      %v6282 = vpop.f32.mrb[0].mxu0
      %v6283 = vadd.f32 %v6156, %v6282
      %6284 = vmatprep.mubr.f32.mxu0 0.0
      %6285 = vmatmul.mubr.f32.gmra.mrb[0].mxu0 %v6185
      %v6286 = vpop.f32.mrb[0].mxu0
      %v6287 = vadd.f32 %v6152, %v6286
      %v6288 = vpop.f32.mrb[0].mxu0
      %v6289 = vadd.f32 %v6156, %v6288
      %6290 = vmatprep.mubr.f32.mxu0 0.0
      %6291 = vmatmul.mubr.f32.gmra.mrb[0].mxu0 %v6188
      %v6292 = vpop.f32.mrb[0].mxu0
      %v6293 = vadd.f32 %v6152, %v6292
      %v6294 = vpop.f32.mrb[0].mxu0
      %v6295 = vadd.f32 %v6156, %v6294
      %6296 = vdwg.mxu0
      %6297 = vmatprep.subr.mxu0 %v6142
      %6298 = vmatpush1.msra.mxu0 %v6141
      %6299 = vmatprep.subr.mxu0 %v6146
      %6300 = vmatpush1.msra.mxu0 %v6145
      %6301 = vmatprep.subr.mxu0 0.0
      %6302 = vmatpush1.msra.mxu0 0.0
      %6303 = vmatprep.subr.mxu0 0.0
      %6304 = vmatpush1.msra.mxu0 0.0
      %6305 = vmatprep.subr.mxu0 0.0
      %6306 = vmatpush1.msra.mxu0 0.0
      %6307 = vmatprep.subr.mxu0 0.0
      %6308 = vmatpush1.msra.mxu0 0.0
      %6309 = vmatprep.subr.mxu0 0.0
      %6310 = vmatpush1.msra.mxu0 0.0
      %6311 = vmatprep.subr.mxu0 0.0
      %6312 = vmatpush1.msra.mxu0 0.0
      %6313 = vmatprep.subr.mxu0 0.0
      %6314 = vmatpush1.msra.mxu0 0.0
      %6315 = vmatprep.subr.mxu0 0.0
      %6316 = vmatpush1.msra.mxu0 0.0
      %6317 = vmatprep.subr.mxu0 0.0
      %6318 = vmatpush1.msra.mxu0 0.0
      %6319 = vmatprep.subr.mxu0 0.0
      %6320 = vmatpush1.msra.mxu0 0.0
      %6321 = vmatprep.subr.mxu0 0.0
      %6322 = vmatpush1.msra.mxu0 0.0
      %6323 = vmatprep.subr.mxu0 0.0
      %6324 = vmatpush1.msra.mxu0 0.0
      %6325 = vmatprep.subr.mxu0 0.0
      %6326 = vmatpush1.msra.mxu0 0.0
      %6327 = vmatprep.subr.mxu0 0.0
      %6328 = vmatpush1.msra.mxu0 0.0
      %6329 = vmatprep.subr.mxu0 0.0
      %6330 = vmatpush1.msra.mxu0 0.0
      %6331 = vmatprep.subr.mxu0 0.0
      %6332 = vmatpush1.msra.mxu0 0.0
      %6333 = vmatprep.subr.mxu0 0.0
      %6334 = vmatpush1.msra.mxu0 0.0
      %6335 = vmatprep.subr.mxu0 0.0
      %6336 = vmatpush1.msra.mxu0 0.0
      %6337 = vmatprep.subr.mxu0 0.0
      %6338 = vmatpush1.msra.mxu0 0.0
      %6339 = vmatprep.subr.mxu0 0.0
      %6340 = vmatpush1.msra.mxu0 0.0
      %6341 = vmatprep.subr.mxu0 0.0
      %6342 = vmatpush1.msra.mxu0 0.0
      %6343 = vmatprep.subr.mxu0 0.0
      %6344 = vmatpush1.msra.mxu0 0.0
      %6345 = vmatprep.subr.mxu0 0.0
      %6346 = vmatpush1.msra.mxu0 0.0
      %6347 = vmatprep.subr.mxu0 0.0
      %6348 = vmatpush1.msra.mxu0 0.0
      %6349 = vmatprep.subr.mxu0 0.0
      %6350 = vmatpush1.msra.mxu0 0.0
      %6351 = vmatprep.subr.mxu0 0.0
      %6352 = vmatpush1.msra.mxu0 0.0
      %6353 = vmatprep.subr.mxu0 0.0
      %6354 = vmatpush1.msra.mxu0 0.0
      %6355 = vmatprep.subr.mxu0 0.0
      %6356 = vmatpush1.msra.mxu0 0.0
      %6357 = vmatprep.subr.mxu0 0.0
      %6358 = vmatpush1.msra.mxu0 0.0
      %6359 = vmatprep.subr.mxu0 0.0
      %6360 = vmatpush1.msra.mxu0 0.0
      %6361 = vmatprep.mubr.f32.mxu0 0.0
      %6362 = vmatmul.mubr.f32.gmra.mrb[0].mxu0 %v6170
      %v6363 = vpop.f32.mrb[0].mxu0
      %v6364 = vadd.f32 %v6160, %v6363
      %v6365 = vpop.f32.mrb[0].mxu0
      %v6366 = vadd.f32 %v6164, %v6365
      %6367 = vmatprep.mubr.f32.mxu0 0.0
      %6368 = vmatmul.mubr.f32.gmra.mrb[0].mxu0 %v6173
      %v6369 = vpop.f32.mrb[0].mxu0
      %v6370 = vadd.f32 %v6160, %v6369
      %v6371 = vpop.f32.mrb[0].mxu0
      %v6372 = vadd.f32 %v6164, %v6371
      %6373 = vmatprep.mubr.f32.mxu0 0.0
      %6374 = vmatmul.mubr.f32.gmra.mrb[0].mxu0 %v6176
      %v6375 = vpop.f32.mrb[0].mxu0
      %v6376 = vadd.f32 %v6160, %v6375
      %v6377 = vpop.f32.mrb[0].mxu0
      %v6378 = vadd.f32 %v6164, %v6377
      %6379 = vmatprep.mubr.f32.mxu0 0.0
      %6380 = vmatmul.mubr.f32.gmra.mrb[0].mxu0 %v6179
      %v6381 = vpop.f32.mrb[0].mxu0
      %v6382 = vadd.f32 %v6160, %v6381
      %v6383 = vpop.f32.mrb[0].mxu0
      %v6384 = vadd.f32 %v6164, %v6383
      %6385 = vmatprep.mubr.f32.mxu0 0.0
      %6386 = vmatmul.mubr.f32.gmra.mrb[0].mxu0 %v6182
      %v6387 = vpop.f32.mrb[0].mxu0
      %v6388 = vadd.f32 %v6160, %v6387
      %v6389 = vpop.f32.mrb[0].mxu0
      %v6390 = vadd.f32 %v6164, %v6389
      %6391 = vmatprep.mubr.f32.mxu0 0.0
      %6392 = vmatmul.mubr.f32.gmra.mrb[0].mxu0 %v6185
      %v6393 = vpop.f32.mrb[0].mxu0
      %v6394 = vadd.f32 %v6160, %v6393
      %v6395 = vpop.f32.mrb[0].mxu0
      %v6396 = vadd.f32 %v6164, %v6395
      %6397 = vmatprep.mubr.f32.mxu0 0.0
      %6398 = vmatmul.mubr.f32.gmra.mrb[0].mxu0 %v6188
      %v6399 = vpop.f32.mrb[0].mxu0
      %v6400 = vadd.f32 %v6160, %v6399
      %v6401 = vpop.f32.mrb[0].mxu0
      %v6402 = vadd.f32 %v6164, %v6401
      %6403 = vdwg.mxu0
      %v6404 = vxor.u32 %v6257, 2147483648
      %v6405 = vxor.u32 %v6259, 2147483648
      %v6406 = vxor.u32 %v6364, 2147483648
      %v6407 = vxor.u32 %v6366, 2147483648
      %v6408 = vxor.u32 %v6263, 2147483648
      %v6409 = vxor.u32 %v6265, 2147483648
      %v6410 = vxor.u32 %v6370, 2147483648
      %v6411 = vxor.u32 %v6372, 2147483648
      %v6412 = vxor.u32 %v6269, 2147483648
      %v6413 = vxor.u32 %v6271, 2147483648
      %v6414 = vxor.u32 %v6376, 2147483648
      %v6415 = vxor.u32 %v6378, 2147483648
      %v6416 = vxor.u32 %v6275, 2147483648
      %v6417 = vxor.u32 %v6277, 2147483648
      %v6418 = vxor.u32 %v6382, 2147483648
      %v6419 = vxor.u32 %v6384, 2147483648
      %v6420 = vxor.u32 %v6281, 2147483648
      %v6421 = vxor.u32 %v6283, 2147483648
      %v6422 = vxor.u32 %v6388, 2147483648
      %v6423 = vxor.u32 %v6390, 2147483648
      %v6424 = vxor.u32 %v6287, 2147483648
      %v6425 = vxor.u32 %v6289, 2147483648
      %v6426 = vxor.u32 %v6394, 2147483648
      %v6427 = vxor.u32 %v6396, 2147483648
      %v6428 = vxor.u32 %v6293, 2147483648
      %v6429 = vxor.u32 %v6295, 2147483648
      %v6430 = vxor.u32 %v6400, 2147483648
      %v6431 = vxor.u32 %v6402, 2147483648
      %v6432 = vmul.f32 %v6404, 1.442695
      %v6433 = vpow.pop %v6432
      %v6434 = vmul.f32 %v6405, 1.442695
      %v6435 = vpow.pop %v6434
      %v6436 = vmul.f32 %v6406, 1.442695
      %v6437 = vpow.pop %v6436
      %v6438 = vmul.f32 %v6407, 1.442695
      %v6439 = vpow.pop %v6438
      %v6440 = vmul.f32 %v6408, 1.442695
      %v6441 = vpow.pop %v6440
      %v6442 = vmul.f32 %v6409, 1.442695
      %v6443 = vpow.pop %v6442
      %v6444 = vmul.f32 %v6410, 1.442695
      %v6445 = vpow.pop %v6444
      %v6446 = vmul.f32 %v6411, 1.442695
      %v6447 = vpow.pop %v6446
      %v6448 = vmul.f32 %v6412, 1.442695
      %v6449 = vpow.pop %v6448
      %v6450 = vmul.f32 %v6413, 1.442695
      %v6451 = vpow.pop %v6450
      %v6452 = vmul.f32 %v6414, 1.442695
      %v6453 = vpow.pop %v6452
      %v6454 = vmul.f32 %v6415, 1.442695
      %v6455 = vpow.pop %v6454
      %v6456 = vmul.f32 %v6416, 1.442695
      %v6457 = vpow.pop %v6456
      %v6458 = vmul.f32 %v6417, 1.442695
      %v6459 = vpow.pop %v6458
      %v6460 = vmul.f32 %v6418, 1.442695
      %v6461 = vpow.pop %v6460
      %v6462 = vmul.f32 %v6419, 1.442695
      %v6463 = vpow.pop %v6462
      %v6464 = vmul.f32 %v6420, 1.442695
      %v6465 = vpow.pop %v6464
      %v6466 = vmul.f32 %v6421, 1.442695
      %v6467 = vpow.pop %v6466
      %v6468 = vmul.f32 %v6422, 1.442695
      %v6469 = vpow.pop %v6468
      %v6470 = vmul.f32 %v6423, 1.442695
      %v6471 = vpow.pop %v6470
      %v6472 = vmul.f32 %v6424, 1.442695
      %v6473 = vpow.pop %v6472
      %v6474 = vmul.f32 %v6425, 1.442695
      %v6475 = vpow.pop %v6474
      %v6476 = vmul.f32 %v6426, 1.442695
      %v6477 = vpow.pop %v6476
      %v6478 = vmul.f32 %v6427, 1.442695
      %v6479 = vpow.pop %v6478
      %v6480 = vmul.f32 %v6428, 1.442695
      %v6481 = vpow.pop %v6480
      %v6482 = vmul.f32 %v6429, 1.442695
      %v6483 = vpow.pop %v6482
      %v6484 = vmul.f32 %v6430, 1.442695
      %v6485 = vpow.pop %v6484
      %v6486 = vmul.f32 %v6431, 1.442695
      %v6487 = vpow.pop %v6486
      %v6488 = vadd.f32 %v6433, 1.0
      %v6489 = vadd.f32 %v6435, 1.0
      %v6490 = vadd.f32 %v6437, 1.0
      %v6491 = vadd.f32 %v6439, 1.0
      %v6492 = vadd.f32 %v6441, 1.0
      %v6493 = vadd.f32 %v6443, 1.0
      %v6494 = vadd.f32 %v6445, 1.0
      %v6495 = vadd.f32 %v6447, 1.0
      %v6496 = vadd.f32 %v6449, 1.0
      %v6497 = vadd.f32 %v6451, 1.0
      %v6498 = vadd.f32 %v6453, 1.0
      %v6499 = vadd.f32 %v6455, 1.0
      %v6500 = vadd.f32 %v6457, 1.0
      %v6501 = vadd.f32 %v6459, 1.0
      %v6502 = vadd.f32 %v6461, 1.0
      %v6503 = vadd.f32 %v6463, 1.0
      %v6504 = vadd.f32 %v6465, 1.0
      %v6505 = vadd.f32 %v6467, 1.0
      %v6506 = vadd.f32 %v6469, 1.0
      %v6507 = vadd.f32 %v6471, 1.0
      %v6508 = vadd.f32 %v6473, 1.0
      %v6509 = vadd.f32 %v6475, 1.0
      %v6510 = vadd.f32 %v6477, 1.0
      %v6511 = vadd.f32 %v6479, 1.0
      %v6512 = vadd.f32 %v6481, 1.0
      %v6513 = vadd.f32 %v6483, 1.0
      %v6514 = vadd.f32 %v6485, 1.0
      %v6515 = vadd.f32 %v6487, 1.0
      %v6516 = vrcp.pop %v6488
      %v6517 = vmul.f32 1.0, %v6516
      %v6518 = vrcp.pop %v6489
      %v6519 = vmul.f32 1.0, %v6518
      %v6520 = vrcp.pop %v6490
      %v6521 = vmul.f32 1.0, %v6520
      %v6522 = vrcp.pop %v6491
      %v6523 = vmul.f32 1.0, %v6522
      %v6524 = vrcp.pop %v6492
      %v6525 = vmul.f32 1.0, %v6524
      %v6526 = vrcp.pop %v6493
      %v6527 = vmul.f32 1.0, %v6526
      %v6528 = vrcp.pop %v6494
      %v6529 = vmul.f32 1.0, %v6528
      %v6530 = vrcp.pop %v6495
      %v6531 = vmul.f32 1.0, %v6530
      %v6532 = vrcp.pop %v6496
      %v6533 = vmul.f32 1.0, %v6532
      %v6534 = vrcp.pop %v6497
      %v6535 = vmul.f32 1.0, %v6534
      %v6536 = vrcp.pop %v6498
      %v6537 = vmul.f32 1.0, %v6536
      %v6538 = vrcp.pop %v6499
      %v6539 = vmul.f32 1.0, %v6538
      %v6540 = vrcp.pop %v6500
      %v6541 = vmul.f32 1.0, %v6540
      %v6542 = vrcp.pop %v6501
      %v6543 = vmul.f32 1.0, %v6542
      %v6544 = vrcp.pop %v6502
      %v6545 = vmul.f32 1.0, %v6544
      %v6546 = vrcp.pop %v6503
      %v6547 = vmul.f32 1.0, %v6546
      %v6548 = vrcp.pop %v6504
      %v6549 = vmul.f32 1.0, %v6548
      %v6550 = vrcp.pop %v6505
      %v6551 = vmul.f32 1.0, %v6550
      %v6552 = vrcp.pop %v6506
      %v6553 = vmul.f32 1.0, %v6552
      %v6554 = vrcp.pop %v6507
      %v6555 = vmul.f32 1.0, %v6554
      %v6556 = vrcp.pop %v6508
      %v6557 = vmul.f32 1.0, %v6556
      %v6558 = vrcp.pop %v6509
      %v6559 = vmul.f32 1.0, %v6558
      %v6560 = vrcp.pop %v6510
      %v6561 = vmul.f32 1.0, %v6560
      %v6562 = vrcp.pop %v6511
      %v6563 = vmul.f32 1.0, %v6562
      %v6564 = vrcp.pop %v6512
      %v6565 = vmul.f32 1.0, %v6564
      %v6566 = vrcp.pop %v6513
      %v6567 = vmul.f32 1.0, %v6566
      %v6568 = vrcp.pop %v6514
      %v6569 = vmul.f32 1.0, %v6568
      %v6570 = vrcp.pop %v6515
      %v6571 = vmul.f32 1.0, %v6570
      %v6600 = vcombine.low %v6084, %v6086
      %v6601 = vcombine.high %v6084, %v6086
      %v6602 = vcombine.low %v6088, %v6090
      %v6603 = vcombine.high %v6088, %v6090
      %v6605 = vunpack.c.l.s4 1966171168
      %v6606 = vunpack.c.0.s8 %v6605
      %v6607 = vlaneseq
      %v6608 = vshrl.u32 %v6607, 7
      %v6609 = vsub.s32 %v6606, %v6608
      %v6610 = vrot.slane %v6600, %v6609
      %v6612 = vunpack.c.l.s4 1966171168
      %v6613 = vunpack.c.0.s8 %v6612
      %v6614 = vlaneseq
      %v6615 = vshrl.u32 %v6614, 7
      %v6616 = vsub.s32 %v6613, %v6615
      %v6617 = vrot.slane %v6601, %v6616
      %v6619 = vunpack.c.l.s4 1966171168
      %v6620 = vunpack.c.0.s8 %v6619
      %v6621 = vlaneseq
      %v6622 = vshrl.u32 %v6621, 7
      %v6623 = vsub.s32 %v6620, %v6622
      %v6624 = vrot.slane %v6602, %v6623
      %v6626 = vunpack.c.l.s4 1966171168
      %v6627 = vunpack.c.0.s8 %v6626
      %v6628 = vlaneseq
      %v6629 = vshrl.u32 %v6628, 7
      %v6630 = vsub.s32 %v6627, %v6629
      %v6631 = vrot.slane %v6603, %v6630
      %v6632 = vcombine.low %v6610, %v6624
      %v6633 = vcombine.high %v6610, %v6624
      %v6634 = vcombine.low %v6617, %v6631
      %v6635 = vcombine.high %v6617, %v6631
      %v6637 = vunpack.c.l.s4 1966171168
      %v6638 = vunpack.c.0.s8 %v6637
      %v6639 = vlaneseq
      %v6640 = vshrl.u32 %v6639, 7
      %v6641 = vsub.s32 %v6638, %v6640
      %v6642 = vrot.slane %v6632, %v6641
      %v6644 = vunpack.c.l.s4 1966171168
      %v6645 = vunpack.c.0.s8 %v6644
      %v6646 = vlaneseq
      %v6647 = vshrl.u32 %v6646, 7
      %v6648 = vsub.s32 %v6645, %v6647
      %v6649 = vrot.slane %v6634, %v6648
      %v6651 = vunpack.c.l.s4 1966171168
      %v6652 = vunpack.c.0.s8 %v6651
      %v6653 = vlaneseq
      %v6654 = vshrl.u32 %v6653, 7
      %v6655 = vsub.s32 %v6652, %v6654
      %v6656 = vrot.slane %v6633, %v6655
      %v6658 = vunpack.c.l.s4 1966171168
      %v6659 = vunpack.c.0.s8 %v6658
      %v6660 = vlaneseq
      %v6661 = vshrl.u32 %v6660, 7
      %v6662 = vsub.s32 %v6659, %v6661
      %v6663 = vrot.slane %v6635, %v6662
      %v6664 = vcombine.high %v6642, %v6642
      %v6665 = vcombine.high %v6649, %v6649
      %v6666 = vcombine.high %v6656, %v6656
      %v6667 = vcombine.high %v6663, %v6663
      %v6668 = vcombine.low %v6092, %v6094
      %v6669 = vcombine.high %v6092, %v6094
      %v6670 = vcombine.low %v6096, %v6098
      %v6671 = vcombine.high %v6096, %v6098
      %v6673 = vunpack.c.l.s4 1966171168
      %v6674 = vunpack.c.0.s8 %v6673
      %v6675 = vlaneseq
      %v6676 = vshrl.u32 %v6675, 7
      %v6677 = vsub.s32 %v6674, %v6676
      %v6678 = vrot.slane %v6668, %v6677
      %v6680 = vunpack.c.l.s4 1966171168
      %v6681 = vunpack.c.0.s8 %v6680
      %v6682 = vlaneseq
      %v6683 = vshrl.u32 %v6682, 7
      %v6684 = vsub.s32 %v6681, %v6683
      %v6685 = vrot.slane %v6669, %v6684
      %v6687 = vunpack.c.l.s4 1966171168
      %v6688 = vunpack.c.0.s8 %v6687
      %v6689 = vlaneseq
      %v6690 = vshrl.u32 %v6689, 7
      %v6691 = vsub.s32 %v6688, %v6690
      %v6692 = vrot.slane %v6670, %v6691
      %v6694 = vunpack.c.l.s4 1966171168
      %v6695 = vunpack.c.0.s8 %v6694
      %v6696 = vlaneseq
      %v6697 = vshrl.u32 %v6696, 7
      %v6698 = vsub.s32 %v6695, %v6697
      %v6699 = vrot.slane %v6671, %v6698
      %v6700 = vcombine.low %v6678, %v6692
      %v6701 = vcombine.high %v6678, %v6692
      %v6702 = vcombine.low %v6685, %v6699
      %v6703 = vcombine.high %v6685, %v6699
      %v6705 = vunpack.c.l.s4 1966171168
      %v6706 = vunpack.c.0.s8 %v6705
      %v6707 = vlaneseq
      %v6708 = vshrl.u32 %v6707, 7
      %v6709 = vsub.s32 %v6706, %v6708
      %v6710 = vrot.slane %v6700, %v6709
      %v6712 = vunpack.c.l.s4 1966171168
      %v6713 = vunpack.c.0.s8 %v6712
      %v6714 = vlaneseq
      %v6715 = vshrl.u32 %v6714, 7
      %v6716 = vsub.s32 %v6713, %v6715
      %v6717 = vrot.slane %v6702, %v6716
      %v6719 = vunpack.c.l.s4 1966171168
      %v6720 = vunpack.c.0.s8 %v6719
      %v6721 = vlaneseq
      %v6722 = vshrl.u32 %v6721, 7
      %v6723 = vsub.s32 %v6720, %v6722
      %v6724 = vrot.slane %v6701, %v6723
      %v6726 = vunpack.c.l.s4 1966171168
      %v6727 = vunpack.c.0.s8 %v6726
      %v6728 = vlaneseq
      %v6729 = vshrl.u32 %v6728, 7
      %v6730 = vsub.s32 %v6727, %v6729
      %v6731 = vrot.slane %v6703, %v6730
      %v6732 = vcombine.high %v6710, %v6710
      %v6733 = vcombine.high %v6717, %v6717
      %v6734 = vcombine.high %v6724, %v6724
      %v6735 = vcombine.high %v6731, %v6731
      %v6736 = vcombine.low %v6100, %v6102
      %v6737 = vcombine.high %v6100, %v6102
      %v6738 = vcombine.low %v6104, %v6106
      %v6739 = vcombine.high %v6104, %v6106
      %v6741 = vunpack.c.l.s4 1966171168
      %v6742 = vunpack.c.0.s8 %v6741
      %v6743 = vlaneseq
      %v6744 = vshrl.u32 %v6743, 7
      %v6745 = vsub.s32 %v6742, %v6744
      %v6746 = vrot.slane %v6736, %v6745
      %v6748 = vunpack.c.l.s4 1966171168
      %v6749 = vunpack.c.0.s8 %v6748
      %v6750 = vlaneseq
      %v6751 = vshrl.u32 %v6750, 7
      %v6752 = vsub.s32 %v6749, %v6751
      %v6753 = vrot.slane %v6737, %v6752
      %v6755 = vunpack.c.l.s4 1966171168
      %v6756 = vunpack.c.0.s8 %v6755
      %v6757 = vlaneseq
      %v6758 = vshrl.u32 %v6757, 7
      %v6759 = vsub.s32 %v6756, %v6758
      %v6760 = vrot.slane %v6738, %v6759
      %v6762 = vunpack.c.l.s4 1966171168
      %v6763 = vunpack.c.0.s8 %v6762
      %v6764 = vlaneseq
      %v6765 = vshrl.u32 %v6764, 7
      %v6766 = vsub.s32 %v6763, %v6765
      %v6767 = vrot.slane %v6739, %v6766
      %v6768 = vcombine.low %v6746, %v6760
      %v6769 = vcombine.high %v6746, %v6760
      %v6770 = vcombine.low %v6753, %v6767
      %v6771 = vcombine.high %v6753, %v6767
      %v6773 = vunpack.c.l.s4 1966171168
      %v6774 = vunpack.c.0.s8 %v6773
      %v6775 = vlaneseq
      %v6776 = vshrl.u32 %v6775, 7
      %v6777 = vsub.s32 %v6774, %v6776
      %v6778 = vrot.slane %v6768, %v6777
      %v6780 = vunpack.c.l.s4 1966171168
      %v6781 = vunpack.c.0.s8 %v6780
      %v6782 = vlaneseq
      %v6783 = vshrl.u32 %v6782, 7
      %v6784 = vsub.s32 %v6781, %v6783
      %v6785 = vrot.slane %v6770, %v6784
      %v6787 = vunpack.c.l.s4 1966171168
      %v6788 = vunpack.c.0.s8 %v6787
      %v6789 = vlaneseq
      %v6790 = vshrl.u32 %v6789, 7
      %v6791 = vsub.s32 %v6788, %v6790
      %v6792 = vrot.slane %v6769, %v6791
      %v6794 = vunpack.c.l.s4 1966171168
      %v6795 = vunpack.c.0.s8 %v6794
      %v6796 = vlaneseq
      %v6797 = vshrl.u32 %v6796, 7
      %v6798 = vsub.s32 %v6795, %v6797
      %v6799 = vrot.slane %v6771, %v6798
      %v6800 = vcombine.high %v6778, %v6778
      %v6801 = vcombine.high %v6785, %v6785
      %v6802 = vcombine.high %v6792, %v6792
      %v6803 = vcombine.high %v6799, %v6799
      %v6804 = vcombine.low %v6108, %v6110
      %v6805 = vcombine.high %v6108, %v6110
      %v6806 = vcombine.low %v6112, %v6114
      %v6807 = vcombine.high %v6112, %v6114
      %v6809 = vunpack.c.l.s4 1966171168
      %v6810 = vunpack.c.0.s8 %v6809
      %v6811 = vlaneseq
      %v6812 = vshrl.u32 %v6811, 7
      %v6813 = vsub.s32 %v6810, %v6812
      %v6814 = vrot.slane %v6804, %v6813
      %v6816 = vunpack.c.l.s4 1966171168
      %v6817 = vunpack.c.0.s8 %v6816
      %v6818 = vlaneseq
      %v6819 = vshrl.u32 %v6818, 7
      %v6820 = vsub.s32 %v6817, %v6819
      %v6821 = vrot.slane %v6805, %v6820
      %v6823 = vunpack.c.l.s4 1966171168
      %v6824 = vunpack.c.0.s8 %v6823
      %v6825 = vlaneseq
      %v6826 = vshrl.u32 %v6825, 7
      %v6827 = vsub.s32 %v6824, %v6826
      %v6828 = vrot.slane %v6806, %v6827
      %v6830 = vunpack.c.l.s4 1966171168
      %v6831 = vunpack.c.0.s8 %v6830
      %v6832 = vlaneseq
      %v6833 = vshrl.u32 %v6832, 7
      %v6834 = vsub.s32 %v6831, %v6833
      %v6835 = vrot.slane %v6807, %v6834
      %v6836 = vcombine.low %v6814, %v6828
      %v6837 = vcombine.high %v6814, %v6828
      %v6838 = vcombine.low %v6821, %v6835
      %v6839 = vcombine.high %v6821, %v6835
      %v6841 = vunpack.c.l.s4 1966171168
      %v6842 = vunpack.c.0.s8 %v6841
      %v6843 = vlaneseq
      %v6844 = vshrl.u32 %v6843, 7
      %v6845 = vsub.s32 %v6842, %v6844
      %v6846 = vrot.slane %v6836, %v6845
      %v6848 = vunpack.c.l.s4 1966171168
      %v6849 = vunpack.c.0.s8 %v6848
      %v6850 = vlaneseq
      %v6851 = vshrl.u32 %v6850, 7
      %v6852 = vsub.s32 %v6849, %v6851
      %v6853 = vrot.slane %v6838, %v6852
      %v6855 = vunpack.c.l.s4 1966171168
      %v6856 = vunpack.c.0.s8 %v6855
      %v6857 = vlaneseq
      %v6858 = vshrl.u32 %v6857, 7
      %v6859 = vsub.s32 %v6856, %v6858
      %v6860 = vrot.slane %v6837, %v6859
      %v6862 = vunpack.c.l.s4 1966171168
      %v6863 = vunpack.c.0.s8 %v6862
      %v6864 = vlaneseq
      %v6865 = vshrl.u32 %v6864, 7
      %v6866 = vsub.s32 %v6863, %v6865
      %v6867 = vrot.slane %v6839, %v6866
      %v6868 = vcombine.high %v6846, %v6846
      %v6869 = vcombine.high %v6853, %v6853
      %v6870 = vcombine.high %v6860, %v6860
      %v6871 = vcombine.high %v6867, %v6867
      %v6872 = vcombine.low %v6116, %v6118
      %v6873 = vcombine.high %v6116, %v6118
      %v6874 = vcombine.low %v6120, %v6122
      %v6875 = vcombine.high %v6120, %v6122
      %v6877 = vunpack.c.l.s4 1966171168
      %v6878 = vunpack.c.0.s8 %v6877
      %v6879 = vlaneseq
      %v6880 = vshrl.u32 %v6879, 7
      %v6881 = vsub.s32 %v6878, %v6880
      %v6882 = vrot.slane %v6872, %v6881
      %v6884 = vunpack.c.l.s4 1966171168
      %v6885 = vunpack.c.0.s8 %v6884
      %v6886 = vlaneseq
      %v6887 = vshrl.u32 %v6886, 7
      %v6888 = vsub.s32 %v6885, %v6887
      %v6889 = vrot.slane %v6873, %v6888
      %v6891 = vunpack.c.l.s4 1966171168
      %v6892 = vunpack.c.0.s8 %v6891
      %v6893 = vlaneseq
      %v6894 = vshrl.u32 %v6893, 7
      %v6895 = vsub.s32 %v6892, %v6894
      %v6896 = vrot.slane %v6874, %v6895
      %v6898 = vunpack.c.l.s4 1966171168
      %v6899 = vunpack.c.0.s8 %v6898
      %v6900 = vlaneseq
      %v6901 = vshrl.u32 %v6900, 7
      %v6902 = vsub.s32 %v6899, %v6901
      %v6903 = vrot.slane %v6875, %v6902
      %v6904 = vcombine.low %v6882, %v6896
      %v6905 = vcombine.high %v6882, %v6896
      %v6906 = vcombine.low %v6889, %v6903
      %v6907 = vcombine.high %v6889, %v6903
      %v6909 = vunpack.c.l.s4 1966171168
      %v6910 = vunpack.c.0.s8 %v6909
      %v6911 = vlaneseq
      %v6912 = vshrl.u32 %v6911, 7
      %v6913 = vsub.s32 %v6910, %v6912
      %v6914 = vrot.slane %v6904, %v6913
      %v6916 = vunpack.c.l.s4 1966171168
      %v6917 = vunpack.c.0.s8 %v6916
      %v6918 = vlaneseq
      %v6919 = vshrl.u32 %v6918, 7
      %v6920 = vsub.s32 %v6917, %v6919
      %v6921 = vrot.slane %v6906, %v6920
      %v6923 = vunpack.c.l.s4 1966171168
      %v6924 = vunpack.c.0.s8 %v6923
      %v6925 = vlaneseq
      %v6926 = vshrl.u32 %v6925, 7
      %v6927 = vsub.s32 %v6924, %v6926
      %v6928 = vrot.slane %v6905, %v6927
      %v6930 = vunpack.c.l.s4 1966171168
      %v6931 = vunpack.c.0.s8 %v6930
      %v6932 = vlaneseq
      %v6933 = vshrl.u32 %v6932, 7
      %v6934 = vsub.s32 %v6931, %v6933
      %v6935 = vrot.slane %v6907, %v6934
      %v6936 = vcombine.high %v6914, %v6914
      %v6937 = vcombine.high %v6921, %v6921
      %v6938 = vcombine.high %v6928, %v6928
      %v6939 = vcombine.high %v6935, %v6935
      %v6940 = vcombine.low %v6124, %v6126
      %v6941 = vcombine.high %v6124, %v6126
      %v6942 = vcombine.low %v6128, %v6130
      %v6943 = vcombine.high %v6128, %v6130
      %v6945 = vunpack.c.l.s4 1966171168
      %v6946 = vunpack.c.0.s8 %v6945
      %v6947 = vlaneseq
      %v6948 = vshrl.u32 %v6947, 7
      %v6949 = vsub.s32 %v6946, %v6948
      %v6950 = vrot.slane %v6940, %v6949
      %v6952 = vunpack.c.l.s4 1966171168
      %v6953 = vunpack.c.0.s8 %v6952
      %v6954 = vlaneseq
      %v6955 = vshrl.u32 %v6954, 7
      %v6956 = vsub.s32 %v6953, %v6955
      %v6957 = vrot.slane %v6941, %v6956
      %v6959 = vunpack.c.l.s4 1966171168
      %v6960 = vunpack.c.0.s8 %v6959
      %v6961 = vlaneseq
      %v6962 = vshrl.u32 %v6961, 7
      %v6963 = vsub.s32 %v6960, %v6962
      %v6964 = vrot.slane %v6942, %v6963
      %v6966 = vunpack.c.l.s4 1966171168
      %v6967 = vunpack.c.0.s8 %v6966
      %v6968 = vlaneseq
      %v6969 = vshrl.u32 %v6968, 7
      %v6970 = vsub.s32 %v6967, %v6969
      %v6971 = vrot.slane %v6943, %v6970
      %v6972 = vcombine.low %v6950, %v6964
      %v6973 = vcombine.high %v6950, %v6964
      %v6974 = vcombine.low %v6957, %v6971
      %v6975 = vcombine.high %v6957, %v6971
      %v6977 = vunpack.c.l.s4 1966171168
      %v6978 = vunpack.c.0.s8 %v6977
      %v6979 = vlaneseq
      %v6980 = vshrl.u32 %v6979, 7
      %v6981 = vsub.s32 %v6978, %v6980
      %v6982 = vrot.slane %v6972, %v6981
      %v6984 = vunpack.c.l.s4 1966171168
      %v6985 = vunpack.c.0.s8 %v6984
      %v6986 = vlaneseq
      %v6987 = vshrl.u32 %v6986, 7
      %v6988 = vsub.s32 %v6985, %v6987
      %v6989 = vrot.slane %v6974, %v6988
      %v6991 = vunpack.c.l.s4 1966171168
      %v6992 = vunpack.c.0.s8 %v6991
      %v6993 = vlaneseq
      %v6994 = vshrl.u32 %v6993, 7
      %v6995 = vsub.s32 %v6992, %v6994
      %v6996 = vrot.slane %v6973, %v6995
      %v6998 = vunpack.c.l.s4 1966171168
      %v6999 = vunpack.c.0.s8 %v6998
      %v7000 = vlaneseq
      %v7001 = vshrl.u32 %v7000, 7
      %v7002 = vsub.s32 %v6999, %v7001
      %v7003 = vrot.slane %v6975, %v7002
      %v7004 = vcombine.high %v6982, %v6982
      %v7005 = vcombine.high %v6989, %v6989
      %v7006 = vcombine.high %v6996, %v6996
      %v7007 = vcombine.high %v7003, %v7003
      %v7008 = vcombine.low %v6132, %v6134
      %v7009 = vcombine.high %v6132, %v6134
      %v7010 = vcombine.low %v6136, %v6138
      %v7011 = vcombine.high %v6136, %v6138
      %v7013 = vunpack.c.l.s4 1966171168
      %v7014 = vunpack.c.0.s8 %v7013
      %v7015 = vlaneseq
      %v7016 = vshrl.u32 %v7015, 7
      %v7017 = vsub.s32 %v7014, %v7016
      %v7018 = vrot.slane %v7008, %v7017
      %v7020 = vunpack.c.l.s4 1966171168
      %v7021 = vunpack.c.0.s8 %v7020
      %v7022 = vlaneseq
      %v7023 = vshrl.u32 %v7022, 7
      %v7024 = vsub.s32 %v7021, %v7023
      %v7025 = vrot.slane %v7009, %v7024
      %v7027 = vunpack.c.l.s4 1966171168
      %v7028 = vunpack.c.0.s8 %v7027
      %v7029 = vlaneseq
      %v7030 = vshrl.u32 %v7029, 7
      %v7031 = vsub.s32 %v7028, %v7030
      %v7032 = vrot.slane %v7010, %v7031
      %v7034 = vunpack.c.l.s4 1966171168
      %v7035 = vunpack.c.0.s8 %v7034
      %v7036 = vlaneseq
      %v7037 = vshrl.u32 %v7036, 7
      %v7038 = vsub.s32 %v7035, %v7037
      %v7039 = vrot.slane %v7011, %v7038
      %v7040 = vcombine.low %v7018, %v7032
      %v7041 = vcombine.high %v7018, %v7032
      %v7042 = vcombine.low %v7025, %v7039
      %v7043 = vcombine.high %v7025, %v7039
      %v7045 = vunpack.c.l.s4 1966171168
      %v7046 = vunpack.c.0.s8 %v7045
      %v7047 = vlaneseq
      %v7048 = vshrl.u32 %v7047, 7
      %v7049 = vsub.s32 %v7046, %v7048
      %v7050 = vrot.slane %v7040, %v7049
      %v7052 = vunpack.c.l.s4 1966171168
      %v7053 = vunpack.c.0.s8 %v7052
      %v7054 = vlaneseq
      %v7055 = vshrl.u32 %v7054, 7
      %v7056 = vsub.s32 %v7053, %v7055
      %v7057 = vrot.slane %v7042, %v7056
      %v7059 = vunpack.c.l.s4 1966171168
      %v7060 = vunpack.c.0.s8 %v7059
      %v7061 = vlaneseq
      %v7062 = vshrl.u32 %v7061, 7
      %v7063 = vsub.s32 %v7060, %v7062
      %v7064 = vrot.slane %v7041, %v7063
      %v7066 = vunpack.c.l.s4 1966171168
      %v7067 = vunpack.c.0.s8 %v7066
      %v7068 = vlaneseq
      %v7069 = vshrl.u32 %v7068, 7
      %v7070 = vsub.s32 %v7067, %v7069
      %v7071 = vrot.slane %v7043, %v7070
      %v7072 = vcombine.high %v7050, %v7050
      %v7073 = vcombine.high %v7057, %v7057
      %v7074 = vcombine.high %v7064, %v7064
      %v7075 = vcombine.high %v7071, %v7071
      %v7104 = vcombine.low %v6517, %v6519
      %v7105 = vcombine.high %v6517, %v6519
      %v7106 = vcombine.low %v6521, %v6523
      %v7107 = vcombine.high %v6521, %v6523
      %v7109 = vunpack.c.l.s4 1966171168
      %v7110 = vunpack.c.0.s8 %v7109
      %v7111 = vlaneseq
      %v7112 = vshrl.u32 %v7111, 7
      %v7113 = vsub.s32 %v7110, %v7112
      %v7114 = vrot.slane %v7104, %v7113
      %v7116 = vunpack.c.l.s4 1966171168
      %v7117 = vunpack.c.0.s8 %v7116
      %v7118 = vlaneseq
      %v7119 = vshrl.u32 %v7118, 7
      %v7120 = vsub.s32 %v7117, %v7119
      %v7121 = vrot.slane %v7105, %v7120
      %v7123 = vunpack.c.l.s4 1966171168
      %v7124 = vunpack.c.0.s8 %v7123
      %v7125 = vlaneseq
      %v7126 = vshrl.u32 %v7125, 7
      %v7127 = vsub.s32 %v7124, %v7126
      %v7128 = vrot.slane %v7106, %v7127
      %v7130 = vunpack.c.l.s4 1966171168
      %v7131 = vunpack.c.0.s8 %v7130
      %v7132 = vlaneseq
      %v7133 = vshrl.u32 %v7132, 7
      %v7134 = vsub.s32 %v7131, %v7133
      %v7135 = vrot.slane %v7107, %v7134
      %v7136 = vcombine.low %v7114, %v7128
      %v7137 = vcombine.high %v7114, %v7128
      %v7138 = vcombine.low %v7121, %v7135
      %v7139 = vcombine.high %v7121, %v7135
      %v7141 = vunpack.c.l.s4 1966171168
      %v7142 = vunpack.c.0.s8 %v7141
      %v7143 = vlaneseq
      %v7144 = vshrl.u32 %v7143, 7
      %v7145 = vsub.s32 %v7142, %v7144
      %v7146 = vrot.slane %v7136, %v7145
      %v7148 = vunpack.c.l.s4 1966171168
      %v7149 = vunpack.c.0.s8 %v7148
      %v7150 = vlaneseq
      %v7151 = vshrl.u32 %v7150, 7
      %v7152 = vsub.s32 %v7149, %v7151
      %v7153 = vrot.slane %v7138, %v7152
      %v7155 = vunpack.c.l.s4 1966171168
      %v7156 = vunpack.c.0.s8 %v7155
      %v7157 = vlaneseq
      %v7158 = vshrl.u32 %v7157, 7
      %v7159 = vsub.s32 %v7156, %v7158
      %v7160 = vrot.slane %v7137, %v7159
      %v7162 = vunpack.c.l.s4 1966171168
      %v7163 = vunpack.c.0.s8 %v7162
      %v7164 = vlaneseq
      %v7165 = vshrl.u32 %v7164, 7
      %v7166 = vsub.s32 %v7163, %v7165
      %v7167 = vrot.slane %v7139, %v7166
      %v7168 = vcombine.high %v7146, %v7146
      %v7169 = vcombine.high %v7153, %v7153
      %v7170 = vcombine.high %v7160, %v7160
      %v7171 = vcombine.high %v7167, %v7167
      %v7172 = vcombine.low %v6525, %v6527
      %v7173 = vcombine.high %v6525, %v6527
      %v7174 = vcombine.low %v6529, %v6531
      %v7175 = vcombine.high %v6529, %v6531
      %v7177 = vunpack.c.l.s4 1966171168
      %v7178 = vunpack.c.0.s8 %v7177
      %v7179 = vlaneseq
      %v7180 = vshrl.u32 %v7179, 7
      %v7181 = vsub.s32 %v7178, %v7180
      %v7182 = vrot.slane %v7172, %v7181
      %v7184 = vunpack.c.l.s4 1966171168
      %v7185 = vunpack.c.0.s8 %v7184
      %v7186 = vlaneseq
      %v7187 = vshrl.u32 %v7186, 7
      %v7188 = vsub.s32 %v7185, %v7187
      %v7189 = vrot.slane %v7173, %v7188
      %v7191 = vunpack.c.l.s4 1966171168
      %v7192 = vunpack.c.0.s8 %v7191
      %v7193 = vlaneseq
      %v7194 = vshrl.u32 %v7193, 7
      %v7195 = vsub.s32 %v7192, %v7194
      %v7196 = vrot.slane %v7174, %v7195
      %v7198 = vunpack.c.l.s4 1966171168
      %v7199 = vunpack.c.0.s8 %v7198
      %v7200 = vlaneseq
      %v7201 = vshrl.u32 %v7200, 7
      %v7202 = vsub.s32 %v7199, %v7201
      %v7203 = vrot.slane %v7175, %v7202
      %v7204 = vcombine.low %v7182, %v7196
      %v7205 = vcombine.high %v7182, %v7196
      %v7206 = vcombine.low %v7189, %v7203
      %v7207 = vcombine.high %v7189, %v7203
      %v7209 = vunpack.c.l.s4 1966171168
      %v7210 = vunpack.c.0.s8 %v7209
      %v7211 = vlaneseq
      %v7212 = vshrl.u32 %v7211, 7
      %v7213 = vsub.s32 %v7210, %v7212
      %v7214 = vrot.slane %v7204, %v7213
      %v7216 = vunpack.c.l.s4 1966171168
      %v7217 = vunpack.c.0.s8 %v7216
      %v7218 = vlaneseq
      %v7219 = vshrl.u32 %v7218, 7
      %v7220 = vsub.s32 %v7217, %v7219
      %v7221 = vrot.slane %v7206, %v7220
      %v7223 = vunpack.c.l.s4 1966171168
      %v7224 = vunpack.c.0.s8 %v7223
      %v7225 = vlaneseq
      %v7226 = vshrl.u32 %v7225, 7
      %v7227 = vsub.s32 %v7224, %v7226
      %v7228 = vrot.slane %v7205, %v7227
      %v7230 = vunpack.c.l.s4 1966171168
      %v7231 = vunpack.c.0.s8 %v7230
      %v7232 = vlaneseq
      %v7233 = vshrl.u32 %v7232, 7
      %v7234 = vsub.s32 %v7231, %v7233
      %v7235 = vrot.slane %v7207, %v7234
      %v7236 = vcombine.high %v7214, %v7214
      %v7237 = vcombine.high %v7221, %v7221
      %v7238 = vcombine.high %v7228, %v7228
      %v7239 = vcombine.high %v7235, %v7235
      %v7240 = vcombine.low %v6533, %v6535
      %v7241 = vcombine.high %v6533, %v6535
      %v7242 = vcombine.low %v6537, %v6539
      %v7243 = vcombine.high %v6537, %v6539
      %v7245 = vunpack.c.l.s4 1966171168
      %v7246 = vunpack.c.0.s8 %v7245
      %v7247 = vlaneseq
      %v7248 = vshrl.u32 %v7247, 7
      %v7249 = vsub.s32 %v7246, %v7248
      %v7250 = vrot.slane %v7240, %v7249
      %v7252 = vunpack.c.l.s4 1966171168
      %v7253 = vunpack.c.0.s8 %v7252
      %v7254 = vlaneseq
      %v7255 = vshrl.u32 %v7254, 7
      %v7256 = vsub.s32 %v7253, %v7255
      %v7257 = vrot.slane %v7241, %v7256
      %v7259 = vunpack.c.l.s4 1966171168
      %v7260 = vunpack.c.0.s8 %v7259
      %v7261 = vlaneseq
      %v7262 = vshrl.u32 %v7261, 7
      %v7263 = vsub.s32 %v7260, %v7262
      %v7264 = vrot.slane %v7242, %v7263
      %v7266 = vunpack.c.l.s4 1966171168
      %v7267 = vunpack.c.0.s8 %v7266
      %v7268 = vlaneseq
      %v7269 = vshrl.u32 %v7268, 7
      %v7270 = vsub.s32 %v7267, %v7269
      %v7271 = vrot.slane %v7243, %v7270
      %v7272 = vcombine.low %v7250, %v7264
      %v7273 = vcombine.high %v7250, %v7264
      %v7274 = vcombine.low %v7257, %v7271
      %v7275 = vcombine.high %v7257, %v7271
      %v7277 = vunpack.c.l.s4 1966171168
      %v7278 = vunpack.c.0.s8 %v7277
      %v7279 = vlaneseq
      %v7280 = vshrl.u32 %v7279, 7
      %v7281 = vsub.s32 %v7278, %v7280
      %v7282 = vrot.slane %v7272, %v7281
      %v7284 = vunpack.c.l.s4 1966171168
      %v7285 = vunpack.c.0.s8 %v7284
      %v7286 = vlaneseq
      %v7287 = vshrl.u32 %v7286, 7
      %v7288 = vsub.s32 %v7285, %v7287
      %v7289 = vrot.slane %v7274, %v7288
      %v7291 = vunpack.c.l.s4 1966171168
      %v7292 = vunpack.c.0.s8 %v7291
      %v7293 = vlaneseq
      %v7294 = vshrl.u32 %v7293, 7
      %v7295 = vsub.s32 %v7292, %v7294
      %v7296 = vrot.slane %v7273, %v7295
      %v7298 = vunpack.c.l.s4 1966171168
      %v7299 = vunpack.c.0.s8 %v7298
      %v7300 = vlaneseq
      %v7301 = vshrl.u32 %v7300, 7
      %v7302 = vsub.s32 %v7299, %v7301
      %v7303 = vrot.slane %v7275, %v7302
      %v7304 = vcombine.high %v7282, %v7282
      %v7305 = vcombine.high %v7289, %v7289
      %v7306 = vcombine.high %v7296, %v7296
      %v7307 = vcombine.high %v7303, %v7303
      %v7308 = vcombine.low %v6541, %v6543
      %v7309 = vcombine.high %v6541, %v6543
      %v7310 = vcombine.low %v6545, %v6547
      %v7311 = vcombine.high %v6545, %v6547
      %v7313 = vunpack.c.l.s4 1966171168
      %v7314 = vunpack.c.0.s8 %v7313
      %v7315 = vlaneseq
      %v7316 = vshrl.u32 %v7315, 7
      %v7317 = vsub.s32 %v7314, %v7316
      %v7318 = vrot.slane %v7308, %v7317
      %v7320 = vunpack.c.l.s4 1966171168
      %v7321 = vunpack.c.0.s8 %v7320
      %v7322 = vlaneseq
      %v7323 = vshrl.u32 %v7322, 7
      %v7324 = vsub.s32 %v7321, %v7323
      %v7325 = vrot.slane %v7309, %v7324
      %v7327 = vunpack.c.l.s4 1966171168
      %v7328 = vunpack.c.0.s8 %v7327
      %v7329 = vlaneseq
      %v7330 = vshrl.u32 %v7329, 7
      %v7331 = vsub.s32 %v7328, %v7330
      %v7332 = vrot.slane %v7310, %v7331
      %v7334 = vunpack.c.l.s4 1966171168
      %v7335 = vunpack.c.0.s8 %v7334
      %v7336 = vlaneseq
      %v7337 = vshrl.u32 %v7336, 7
      %v7338 = vsub.s32 %v7335, %v7337
      %v7339 = vrot.slane %v7311, %v7338
      %v7340 = vcombine.low %v7318, %v7332
      %v7341 = vcombine.high %v7318, %v7332
      %v7342 = vcombine.low %v7325, %v7339
      %v7343 = vcombine.high %v7325, %v7339
      %v7345 = vunpack.c.l.s4 1966171168
      %v7346 = vunpack.c.0.s8 %v7345
      %v7347 = vlaneseq
      %v7348 = vshrl.u32 %v7347, 7
      %v7349 = vsub.s32 %v7346, %v7348
      %v7350 = vrot.slane %v7340, %v7349
      %v7352 = vunpack.c.l.s4 1966171168
      %v7353 = vunpack.c.0.s8 %v7352
      %v7354 = vlaneseq
      %v7355 = vshrl.u32 %v7354, 7
      %v7356 = vsub.s32 %v7353, %v7355
      %v7357 = vrot.slane %v7342, %v7356
      %v7359 = vunpack.c.l.s4 1966171168
      %v7360 = vunpack.c.0.s8 %v7359
      %v7361 = vlaneseq
      %v7362 = vshrl.u32 %v7361, 7
      %v7363 = vsub.s32 %v7360, %v7362
      %v7364 = vrot.slane %v7341, %v7363
      %v7366 = vunpack.c.l.s4 1966171168
      %v7367 = vunpack.c.0.s8 %v7366
      %v7368 = vlaneseq
      %v7369 = vshrl.u32 %v7368, 7
      %v7370 = vsub.s32 %v7367, %v7369
      %v7371 = vrot.slane %v7343, %v7370
      %v7372 = vcombine.high %v7350, %v7350
      %v7373 = vcombine.high %v7357, %v7357
      %v7374 = vcombine.high %v7364, %v7364
      %v7375 = vcombine.high %v7371, %v7371
      %v7376 = vcombine.low %v6549, %v6551
      %v7377 = vcombine.high %v6549, %v6551
      %v7378 = vcombine.low %v6553, %v6555
      %v7379 = vcombine.high %v6553, %v6555
      %v7381 = vunpack.c.l.s4 1966171168
      %v7382 = vunpack.c.0.s8 %v7381
      %v7383 = vlaneseq
      %v7384 = vshrl.u32 %v7383, 7
      %v7385 = vsub.s32 %v7382, %v7384
      %v7386 = vrot.slane %v7376, %v7385
      %v7388 = vunpack.c.l.s4 1966171168
      %v7389 = vunpack.c.0.s8 %v7388
      %v7390 = vlaneseq
      %v7391 = vshrl.u32 %v7390, 7
      %v7392 = vsub.s32 %v7389, %v7391
      %v7393 = vrot.slane %v7377, %v7392
      %v7395 = vunpack.c.l.s4 1966171168
      %v7396 = vunpack.c.0.s8 %v7395
      %v7397 = vlaneseq
      %v7398 = vshrl.u32 %v7397, 7
      %v7399 = vsub.s32 %v7396, %v7398
      %v7400 = vrot.slane %v7378, %v7399
      %v7402 = vunpack.c.l.s4 1966171168
      %v7403 = vunpack.c.0.s8 %v7402
      %v7404 = vlaneseq
      %v7405 = vshrl.u32 %v7404, 7
      %v7406 = vsub.s32 %v7403, %v7405
      %v7407 = vrot.slane %v7379, %v7406
      %v7408 = vcombine.low %v7386, %v7400
      %v7409 = vcombine.high %v7386, %v7400
      %v7410 = vcombine.low %v7393, %v7407
      %v7411 = vcombine.high %v7393, %v7407
      %v7413 = vunpack.c.l.s4 1966171168
      %v7414 = vunpack.c.0.s8 %v7413
      %v7415 = vlaneseq
      %v7416 = vshrl.u32 %v7415, 7
      %v7417 = vsub.s32 %v7414, %v7416
      %v7418 = vrot.slane %v7408, %v7417
      %v7420 = vunpack.c.l.s4 1966171168
      %v7421 = vunpack.c.0.s8 %v7420
      %v7422 = vlaneseq
      %v7423 = vshrl.u32 %v7422, 7
      %v7424 = vsub.s32 %v7421, %v7423
      %v7425 = vrot.slane %v7410, %v7424
      %v7427 = vunpack.c.l.s4 1966171168
      %v7428 = vunpack.c.0.s8 %v7427
      %v7429 = vlaneseq
      %v7430 = vshrl.u32 %v7429, 7
      %v7431 = vsub.s32 %v7428, %v7430
      %v7432 = vrot.slane %v7409, %v7431
      %v7434 = vunpack.c.l.s4 1966171168
      %v7435 = vunpack.c.0.s8 %v7434
      %v7436 = vlaneseq
      %v7437 = vshrl.u32 %v7436, 7
      %v7438 = vsub.s32 %v7435, %v7437
      %v7439 = vrot.slane %v7411, %v7438
      %v7440 = vcombine.high %v7418, %v7418
      %v7441 = vcombine.high %v7425, %v7425
      %v7442 = vcombine.high %v7432, %v7432
      %v7443 = vcombine.high %v7439, %v7439
      %v7444 = vcombine.low %v6557, %v6559
      %v7445 = vcombine.high %v6557, %v6559
      %v7446 = vcombine.low %v6561, %v6563
      %v7447 = vcombine.high %v6561, %v6563
      %v7449 = vunpack.c.l.s4 1966171168
      %v7450 = vunpack.c.0.s8 %v7449
      %v7451 = vlaneseq
      %v7452 = vshrl.u32 %v7451, 7
      %v7453 = vsub.s32 %v7450, %v7452
      %v7454 = vrot.slane %v7444, %v7453
      %v7456 = vunpack.c.l.s4 1966171168
      %v7457 = vunpack.c.0.s8 %v7456
      %v7458 = vlaneseq
      %v7459 = vshrl.u32 %v7458, 7
      %v7460 = vsub.s32 %v7457, %v7459
      %v7461 = vrot.slane %v7445, %v7460
      %v7463 = vunpack.c.l.s4 1966171168
      %v7464 = vunpack.c.0.s8 %v7463
      %v7465 = vlaneseq
      %v7466 = vshrl.u32 %v7465, 7
      %v7467 = vsub.s32 %v7464, %v7466
      %v7468 = vrot.slane %v7446, %v7467
      %v7470 = vunpack.c.l.s4 1966171168
      %v7471 = vunpack.c.0.s8 %v7470
      %v7472 = vlaneseq
      %v7473 = vshrl.u32 %v7472, 7
      %v7474 = vsub.s32 %v7471, %v7473
      %v7475 = vrot.slane %v7447, %v7474
      %v7476 = vcombine.low %v7454, %v7468
      %v7477 = vcombine.high %v7454, %v7468
      %v7478 = vcombine.low %v7461, %v7475
      %v7479 = vcombine.high %v7461, %v7475
      %v7481 = vunpack.c.l.s4 1966171168
      %v7482 = vunpack.c.0.s8 %v7481
      %v7483 = vlaneseq
      %v7484 = vshrl.u32 %v7483, 7
      %v7485 = vsub.s32 %v7482, %v7484
      %v7486 = vrot.slane %v7476, %v7485
      %v7488 = vunpack.c.l.s4 1966171168
      %v7489 = vunpack.c.0.s8 %v7488
      %v7490 = vlaneseq
      %v7491 = vshrl.u32 %v7490, 7
      %v7492 = vsub.s32 %v7489, %v7491
      %v7493 = vrot.slane %v7478, %v7492
      %v7495 = vunpack.c.l.s4 1966171168
      %v7496 = vunpack.c.0.s8 %v7495
      %v7497 = vlaneseq
      %v7498 = vshrl.u32 %v7497, 7
      %v7499 = vsub.s32 %v7496, %v7498
      %v7500 = vrot.slane %v7477, %v7499
      %v7502 = vunpack.c.l.s4 1966171168
      %v7503 = vunpack.c.0.s8 %v7502
      %v7504 = vlaneseq
      %v7505 = vshrl.u32 %v7504, 7
      %v7506 = vsub.s32 %v7503, %v7505
      %v7507 = vrot.slane %v7479, %v7506
      %v7508 = vcombine.high %v7486, %v7486
      %v7509 = vcombine.high %v7493, %v7493
      %v7510 = vcombine.high %v7500, %v7500
      %v7511 = vcombine.high %v7507, %v7507
      %v7512 = vcombine.low %v6565, %v6567
      %v7513 = vcombine.high %v6565, %v6567
      %v7514 = vcombine.low %v6569, %v6571
      %v7515 = vcombine.high %v6569, %v6571
      %v7517 = vunpack.c.l.s4 1966171168
      %v7518 = vunpack.c.0.s8 %v7517
      %v7519 = vlaneseq
      %v7520 = vshrl.u32 %v7519, 7
      %v7521 = vsub.s32 %v7518, %v7520
      %v7522 = vrot.slane %v7512, %v7521
      %v7524 = vunpack.c.l.s4 1966171168
      %v7525 = vunpack.c.0.s8 %v7524
      %v7526 = vlaneseq
      %v7527 = vshrl.u32 %v7526, 7
      %v7528 = vsub.s32 %v7525, %v7527
      %v7529 = vrot.slane %v7513, %v7528
      %v7531 = vunpack.c.l.s4 1966171168
      %v7532 = vunpack.c.0.s8 %v7531
      %v7533 = vlaneseq
      %v7534 = vshrl.u32 %v7533, 7
      %v7535 = vsub.s32 %v7532, %v7534
      %v7536 = vrot.slane %v7514, %v7535
      %v7538 = vunpack.c.l.s4 1966171168
      %v7539 = vunpack.c.0.s8 %v7538
      %v7540 = vlaneseq
      %v7541 = vshrl.u32 %v7540, 7
      %v7542 = vsub.s32 %v7539, %v7541
      %v7543 = vrot.slane %v7515, %v7542
      %v7544 = vcombine.low %v7522, %v7536
      %v7545 = vcombine.high %v7522, %v7536
      %v7546 = vcombine.low %v7529, %v7543
      %v7547 = vcombine.high %v7529, %v7543
      %v7549 = vunpack.c.l.s4 1966171168
      %v7550 = vunpack.c.0.s8 %v7549
      %v7551 = vlaneseq
      %v7552 = vshrl.u32 %v7551, 7
      %v7553 = vsub.s32 %v7550, %v7552
      %v7554 = vrot.slane %v7544, %v7553
      %v7556 = vunpack.c.l.s4 1966171168
      %v7557 = vunpack.c.0.s8 %v7556
      %v7558 = vlaneseq
      %v7559 = vshrl.u32 %v7558, 7
      %v7560 = vsub.s32 %v7557, %v7559
      %v7561 = vrot.slane %v7546, %v7560
      %v7563 = vunpack.c.l.s4 1966171168
      %v7564 = vunpack.c.0.s8 %v7563
      %v7565 = vlaneseq
      %v7566 = vshrl.u32 %v7565, 7
      %v7567 = vsub.s32 %v7564, %v7566
      %v7568 = vrot.slane %v7545, %v7567
      %v7570 = vunpack.c.l.s4 1966171168
      %v7571 = vunpack.c.0.s8 %v7570
      %v7572 = vlaneseq
      %v7573 = vshrl.u32 %v7572, 7
      %v7574 = vsub.s32 %v7571, %v7573
      %v7575 = vrot.slane %v7547, %v7574
      %v7576 = vcombine.high %v7554, %v7554
      %v7577 = vcombine.high %v7561, %v7561
      %v7578 = vcombine.high %v7568, %v7568
      %v7579 = vcombine.high %v7575, %v7575
      %v7580 = vlaneseq
      %v7581 = vshrl.u32 %v7580, 7
      %v7582 = vsub.s32 0, %v7581
      %v7583 = vrot.slane %v6642, %v7582
      %v7584 = vlaneseq
      %v7585 = vshrl.u32 %v7584, 7
      %v7586 = vsub.s32 1, %v7585
      %v7587 = vrot.slane %v6642, %v7586
      %v7588 = vlaneseq
      %v7589 = vshrl.u32 %v7588, 7
      %v7590 = vsub.s32 2, %v7589
      %v7591 = vrot.slane %v6642, %v7590
      %v7592 = vlaneseq
      %v7593 = vshrl.u32 %v7592, 7
      %v7594 = vsub.s32 3, %v7593
      %v7595 = vrot.slane %v6642, %v7594
      %v7596 = vlaneseq
      %v7597 = vshrl.u32 %v7596, 7
      %v7598 = vsub.s32 0, %v7597
      %v7599 = vrot.slane %v6656, %v7598
      %v7600 = vlaneseq
      %v7601 = vshrl.u32 %v7600, 7
      %v7602 = vsub.s32 1, %v7601
      %v7603 = vrot.slane %v6656, %v7602
      %v7604 = vlaneseq
      %v7605 = vshrl.u32 %v7604, 7
      %v7606 = vsub.s32 2, %v7605
      %v7607 = vrot.slane %v6656, %v7606
      %v7608 = vlaneseq
      %v7609 = vshrl.u32 %v7608, 7
      %v7610 = vsub.s32 3, %v7609
      %v7611 = vrot.slane %v6656, %v7610
      %v7612 = vlaneseq
      %v7613 = vshrl.u32 %v7612, 7
      %v7614 = vsub.s32 0, %v7613
      %v7615 = vrot.slane %v6664, %v7614
      %v7616 = vlaneseq
      %v7617 = vshrl.u32 %v7616, 7
      %v7618 = vsub.s32 1, %v7617
      %v7619 = vrot.slane %v6664, %v7618
      %v7620 = vlaneseq
      %v7621 = vshrl.u32 %v7620, 7
      %v7622 = vsub.s32 2, %v7621
      %v7623 = vrot.slane %v6664, %v7622
      %v7624 = vlaneseq
      %v7625 = vshrl.u32 %v7624, 7
      %v7626 = vsub.s32 3, %v7625
      %v7627 = vrot.slane %v6664, %v7626
      %v7628 = vlaneseq
      %v7629 = vshrl.u32 %v7628, 7
      %v7630 = vsub.s32 0, %v7629
      %v7631 = vrot.slane %v6666, %v7630
      %v7632 = vlaneseq
      %v7633 = vshrl.u32 %v7632, 7
      %v7634 = vsub.s32 1, %v7633
      %v7635 = vrot.slane %v6666, %v7634
      %v7636 = vlaneseq
      %v7637 = vshrl.u32 %v7636, 7
      %v7638 = vsub.s32 2, %v7637
      %v7639 = vrot.slane %v6666, %v7638
      %v7640 = vlaneseq
      %v7641 = vshrl.u32 %v7640, 7
      %v7642 = vsub.s32 3, %v7641
      %v7643 = vrot.slane %v6666, %v7642
      %v7644 = vlaneseq
      %v7645 = vshrl.u32 %v7644, 7
      %v7646 = vsub.s32 0, %v7645
      %v7647 = vrot.slane %v6649, %v7646
      %v7648 = vlaneseq
      %v7649 = vshrl.u32 %v7648, 7
      %v7650 = vsub.s32 1, %v7649
      %v7651 = vrot.slane %v6649, %v7650
      %v7652 = vlaneseq
      %v7653 = vshrl.u32 %v7652, 7
      %v7654 = vsub.s32 2, %v7653
      %v7655 = vrot.slane %v6649, %v7654
      %v7656 = vlaneseq
      %v7657 = vshrl.u32 %v7656, 7
      %v7658 = vsub.s32 3, %v7657
      %v7659 = vrot.slane %v6649, %v7658
      %v7660 = vlaneseq
      %v7661 = vshrl.u32 %v7660, 7
      %v7662 = vsub.s32 0, %v7661
      %v7663 = vrot.slane %v6663, %v7662
      %v7664 = vlaneseq
      %v7665 = vshrl.u32 %v7664, 7
      %v7666 = vsub.s32 1, %v7665
      %v7667 = vrot.slane %v6663, %v7666
      %v7668 = vlaneseq
      %v7669 = vshrl.u32 %v7668, 7
      %v7670 = vsub.s32 2, %v7669
      %v7671 = vrot.slane %v6663, %v7670
      %v7672 = vlaneseq
      %v7673 = vshrl.u32 %v7672, 7
      %v7674 = vsub.s32 3, %v7673
      %v7675 = vrot.slane %v6663, %v7674
      %v7676 = vlaneseq
      %v7677 = vshrl.u32 %v7676, 7
      %v7678 = vsub.s32 0, %v7677
      %v7679 = vrot.slane %v6665, %v7678
      %v7680 = vlaneseq
      %v7681 = vshrl.u32 %v7680, 7
      %v7682 = vsub.s32 1, %v7681
      %v7683 = vrot.slane %v6665, %v7682
      %v7684 = vlaneseq
      %v7685 = vshrl.u32 %v7684, 7
      %v7686 = vsub.s32 2, %v7685
      %v7687 = vrot.slane %v6665, %v7686
      %v7688 = vlaneseq
      %v7689 = vshrl.u32 %v7688, 7
      %v7690 = vsub.s32 3, %v7689
      %v7691 = vrot.slane %v6665, %v7690
      %v7692 = vlaneseq
      %v7693 = vshrl.u32 %v7692, 7
      %v7694 = vsub.s32 0, %v7693
      %v7695 = vrot.slane %v6667, %v7694
      %v7696 = vlaneseq
      %v7697 = vshrl.u32 %v7696, 7
      %v7698 = vsub.s32 1, %v7697
      %v7699 = vrot.slane %v6667, %v7698
      %v7700 = vlaneseq
      %v7701 = vshrl.u32 %v7700, 7
      %v7702 = vsub.s32 2, %v7701
      %v7703 = vrot.slane %v6667, %v7702
      %v7704 = vlaneseq
      %v7705 = vshrl.u32 %v7704, 7
      %v7706 = vsub.s32 3, %v7705
      %v7707 = vrot.slane %v6667, %v7706
      %v7708 = vlaneseq
      %v7709 = vshrl.u32 %v7708, 7
      %v7710 = vsub.s32 0, %v7709
      %v7711 = vrot.slane %v6710, %v7710
      %v7712 = vlaneseq
      %v7713 = vshrl.u32 %v7712, 7
      %v7714 = vsub.s32 1, %v7713
      %v7715 = vrot.slane %v6710, %v7714
      %v7716 = vlaneseq
      %v7717 = vshrl.u32 %v7716, 7
      %v7718 = vsub.s32 2, %v7717
      %v7719 = vrot.slane %v6710, %v7718
      %v7720 = vlaneseq
      %v7721 = vshrl.u32 %v7720, 7
      %v7722 = vsub.s32 3, %v7721
      %v7723 = vrot.slane %v6710, %v7722
      %v7724 = vlaneseq
      %v7725 = vshrl.u32 %v7724, 7
      %v7726 = vsub.s32 0, %v7725
      %v7727 = vrot.slane %v6724, %v7726
      %v7728 = vlaneseq
      %v7729 = vshrl.u32 %v7728, 7
      %v7730 = vsub.s32 1, %v7729
      %v7731 = vrot.slane %v6724, %v7730
      %v7732 = vlaneseq
      %v7733 = vshrl.u32 %v7732, 7
      %v7734 = vsub.s32 2, %v7733
      %v7735 = vrot.slane %v6724, %v7734
      %v7736 = vlaneseq
      %v7737 = vshrl.u32 %v7736, 7
      %v7738 = vsub.s32 3, %v7737
      %v7739 = vrot.slane %v6724, %v7738
      %v7740 = vlaneseq
      %v7741 = vshrl.u32 %v7740, 7
      %v7742 = vsub.s32 0, %v7741
      %v7743 = vrot.slane %v6732, %v7742
      %v7744 = vlaneseq
      %v7745 = vshrl.u32 %v7744, 7
      %v7746 = vsub.s32 1, %v7745
      %v7747 = vrot.slane %v6732, %v7746
      %v7748 = vlaneseq
      %v7749 = vshrl.u32 %v7748, 7
      %v7750 = vsub.s32 2, %v7749
      %v7751 = vrot.slane %v6732, %v7750
      %v7752 = vlaneseq
      %v7753 = vshrl.u32 %v7752, 7
      %v7754 = vsub.s32 3, %v7753
      %v7755 = vrot.slane %v6732, %v7754
      %v7756 = vlaneseq
      %v7757 = vshrl.u32 %v7756, 7
      %v7758 = vsub.s32 0, %v7757
      %v7759 = vrot.slane %v6734, %v7758
      %v7760 = vlaneseq
      %v7761 = vshrl.u32 %v7760, 7
      %v7762 = vsub.s32 1, %v7761
      %v7763 = vrot.slane %v6734, %v7762
      %v7764 = vlaneseq
      %v7765 = vshrl.u32 %v7764, 7
      %v7766 = vsub.s32 2, %v7765
      %v7767 = vrot.slane %v6734, %v7766
      %v7768 = vlaneseq
      %v7769 = vshrl.u32 %v7768, 7
      %v7770 = vsub.s32 3, %v7769
      %v7771 = vrot.slane %v6734, %v7770
      %v7772 = vlaneseq
      %v7773 = vshrl.u32 %v7772, 7
      %v7774 = vsub.s32 0, %v7773
      %v7775 = vrot.slane %v6717, %v7774
      %v7776 = vlaneseq
      %v7777 = vshrl.u32 %v7776, 7
      %v7778 = vsub.s32 1, %v7777
      %v7779 = vrot.slane %v6717, %v7778
      %v7780 = vlaneseq
      %v7781 = vshrl.u32 %v7780, 7
      %v7782 = vsub.s32 2, %v7781
      %v7783 = vrot.slane %v6717, %v7782
      %v7784 = vlaneseq
      %v7785 = vshrl.u32 %v7784, 7
      %v7786 = vsub.s32 3, %v7785
      %v7787 = vrot.slane %v6717, %v7786
      %v7788 = vlaneseq
      %v7789 = vshrl.u32 %v7788, 7
      %v7790 = vsub.s32 0, %v7789
      %v7791 = vrot.slane %v6731, %v7790
      %v7792 = vlaneseq
      %v7793 = vshrl.u32 %v7792, 7
      %v7794 = vsub.s32 1, %v7793
      %v7795 = vrot.slane %v6731, %v7794
      %v7796 = vlaneseq
      %v7797 = vshrl.u32 %v7796, 7
      %v7798 = vsub.s32 2, %v7797
      %v7799 = vrot.slane %v6731, %v7798
      %v7800 = vlaneseq
      %v7801 = vshrl.u32 %v7800, 7
      %v7802 = vsub.s32 3, %v7801
      %v7803 = vrot.slane %v6731, %v7802
      %v7804 = vlaneseq
      %v7805 = vshrl.u32 %v7804, 7
      %v7806 = vsub.s32 0, %v7805
      %v7807 = vrot.slane %v6733, %v7806
      %v7808 = vlaneseq
      %v7809 = vshrl.u32 %v7808, 7
      %v7810 = vsub.s32 1, %v7809
      %v7811 = vrot.slane %v6733, %v7810
      %v7812 = vlaneseq
      %v7813 = vshrl.u32 %v7812, 7
      %v7814 = vsub.s32 2, %v7813
      %v7815 = vrot.slane %v6733, %v7814
      %v7816 = vlaneseq
      %v7817 = vshrl.u32 %v7816, 7
      %v7818 = vsub.s32 3, %v7817
      %v7819 = vrot.slane %v6733, %v7818
      %v7820 = vlaneseq
      %v7821 = vshrl.u32 %v7820, 7
      %v7822 = vsub.s32 0, %v7821
      %v7823 = vrot.slane %v6735, %v7822
      %v7824 = vlaneseq
      %v7825 = vshrl.u32 %v7824, 7
      %v7826 = vsub.s32 1, %v7825
      %v7827 = vrot.slane %v6735, %v7826
      %v7828 = vlaneseq
      %v7829 = vshrl.u32 %v7828, 7
      %v7830 = vsub.s32 2, %v7829
      %v7831 = vrot.slane %v6735, %v7830
      %v7832 = vlaneseq
      %v7833 = vshrl.u32 %v7832, 7
      %v7834 = vsub.s32 3, %v7833
      %v7835 = vrot.slane %v6735, %v7834
      %v7836 = vlaneseq
      %v7837 = vshrl.u32 %v7836, 7
      %v7838 = vsub.s32 0, %v7837
      %v7839 = vrot.slane %v6778, %v7838
      %v7840 = vlaneseq
      %v7841 = vshrl.u32 %v7840, 7
      %v7842 = vsub.s32 1, %v7841
      %v7843 = vrot.slane %v6778, %v7842
      %v7844 = vlaneseq
      %v7845 = vshrl.u32 %v7844, 7
      %v7846 = vsub.s32 2, %v7845
      %v7847 = vrot.slane %v6778, %v7846
      %v7848 = vlaneseq
      %v7849 = vshrl.u32 %v7848, 7
      %v7850 = vsub.s32 3, %v7849
      %v7851 = vrot.slane %v6778, %v7850
      %v7852 = vlaneseq
      %v7853 = vshrl.u32 %v7852, 7
      %v7854 = vsub.s32 0, %v7853
      %v7855 = vrot.slane %v6792, %v7854
      %v7856 = vlaneseq
      %v7857 = vshrl.u32 %v7856, 7
      %v7858 = vsub.s32 1, %v7857
      %v7859 = vrot.slane %v6792, %v7858
      %v7860 = vlaneseq
      %v7861 = vshrl.u32 %v7860, 7
      %v7862 = vsub.s32 2, %v7861
      %v7863 = vrot.slane %v6792, %v7862
      %v7864 = vlaneseq
      %v7865 = vshrl.u32 %v7864, 7
      %v7866 = vsub.s32 3, %v7865
      %v7867 = vrot.slane %v6792, %v7866
      %v7868 = vlaneseq
      %v7869 = vshrl.u32 %v7868, 7
      %v7870 = vsub.s32 0, %v7869
      %v7871 = vrot.slane %v6800, %v7870
      %v7872 = vlaneseq
      %v7873 = vshrl.u32 %v7872, 7
      %v7874 = vsub.s32 1, %v7873
      %v7875 = vrot.slane %v6800, %v7874
      %v7876 = vlaneseq
      %v7877 = vshrl.u32 %v7876, 7
      %v7878 = vsub.s32 2, %v7877
      %v7879 = vrot.slane %v6800, %v7878
      %v7880 = vlaneseq
      %v7881 = vshrl.u32 %v7880, 7
      %v7882 = vsub.s32 3, %v7881
      %v7883 = vrot.slane %v6800, %v7882
      %v7884 = vlaneseq
      %v7885 = vshrl.u32 %v7884, 7
      %v7886 = vsub.s32 0, %v7885
      %v7887 = vrot.slane %v6802, %v7886
      %v7888 = vlaneseq
      %v7889 = vshrl.u32 %v7888, 7
      %v7890 = vsub.s32 1, %v7889
      %v7891 = vrot.slane %v6802, %v7890
      %v7892 = vlaneseq
      %v7893 = vshrl.u32 %v7892, 7
      %v7894 = vsub.s32 2, %v7893
      %v7895 = vrot.slane %v6802, %v7894
      %v7896 = vlaneseq
      %v7897 = vshrl.u32 %v7896, 7
      %v7898 = vsub.s32 3, %v7897
      %v7899 = vrot.slane %v6802, %v7898
      %v7900 = vlaneseq
      %v7901 = vshrl.u32 %v7900, 7
      %v7902 = vsub.s32 0, %v7901
      %v7903 = vrot.slane %v6785, %v7902
      %v7904 = vlaneseq
      %v7905 = vshrl.u32 %v7904, 7
      %v7906 = vsub.s32 1, %v7905
      %v7907 = vrot.slane %v6785, %v7906
      %v7908 = vlaneseq
      %v7909 = vshrl.u32 %v7908, 7
      %v7910 = vsub.s32 2, %v7909
      %v7911 = vrot.slane %v6785, %v7910
      %v7912 = vlaneseq
      %v7913 = vshrl.u32 %v7912, 7
      %v7914 = vsub.s32 3, %v7913
      %v7915 = vrot.slane %v6785, %v7914
      %v7916 = vlaneseq
      %v7917 = vshrl.u32 %v7916, 7
      %v7918 = vsub.s32 0, %v7917
      %v7919 = vrot.slane %v6799, %v7918
      %v7920 = vlaneseq
      %v7921 = vshrl.u32 %v7920, 7
      %v7922 = vsub.s32 1, %v7921
      %v7923 = vrot.slane %v6799, %v7922
      %v7924 = vlaneseq
      %v7925 = vshrl.u32 %v7924, 7
      %v7926 = vsub.s32 2, %v7925
      %v7927 = vrot.slane %v6799, %v7926
      %v7928 = vlaneseq
      %v7929 = vshrl.u32 %v7928, 7
      %v7930 = vsub.s32 3, %v7929
      %v7931 = vrot.slane %v6799, %v7930
      %v7932 = vlaneseq
      %v7933 = vshrl.u32 %v7932, 7
      %v7934 = vsub.s32 0, %v7933
      %v7935 = vrot.slane %v6801, %v7934
      %v7936 = vlaneseq
      %v7937 = vshrl.u32 %v7936, 7
      %v7938 = vsub.s32 1, %v7937
      %v7939 = vrot.slane %v6801, %v7938
      %v7940 = vlaneseq
      %v7941 = vshrl.u32 %v7940, 7
      %v7942 = vsub.s32 2, %v7941
      %v7943 = vrot.slane %v6801, %v7942
      %v7944 = vlaneseq
      %v7945 = vshrl.u32 %v7944, 7
      %v7946 = vsub.s32 3, %v7945
      %v7947 = vrot.slane %v6801, %v7946
      %v7948 = vlaneseq
      %v7949 = vshrl.u32 %v7948, 7
      %v7950 = vsub.s32 0, %v7949
      %v7951 = vrot.slane %v6803, %v7950
      %v7952 = vlaneseq
      %v7953 = vshrl.u32 %v7952, 7
      %v7954 = vsub.s32 1, %v7953
      %v7955 = vrot.slane %v6803, %v7954
      %v7956 = vlaneseq
      %v7957 = vshrl.u32 %v7956, 7
      %v7958 = vsub.s32 2, %v7957
      %v7959 = vrot.slane %v6803, %v7958
      %v7960 = vlaneseq
      %v7961 = vshrl.u32 %v7960, 7
      %v7962 = vsub.s32 3, %v7961
      %v7963 = vrot.slane %v6803, %v7962
      %v7964 = vlaneseq
      %v7965 = vshrl.u32 %v7964, 7
      %v7966 = vsub.s32 0, %v7965
      %v7967 = vrot.slane %v6846, %v7966
      %v7968 = vlaneseq
      %v7969 = vshrl.u32 %v7968, 7
      %v7970 = vsub.s32 1, %v7969
      %v7971 = vrot.slane %v6846, %v7970
      %v7972 = vlaneseq
      %v7973 = vshrl.u32 %v7972, 7
      %v7974 = vsub.s32 2, %v7973
      %v7975 = vrot.slane %v6846, %v7974
      %v7976 = vlaneseq
      %v7977 = vshrl.u32 %v7976, 7
      %v7978 = vsub.s32 3, %v7977
      %v7979 = vrot.slane %v6846, %v7978
      %v7980 = vlaneseq
      %v7981 = vshrl.u32 %v7980, 7
      %v7982 = vsub.s32 0, %v7981
      %v7983 = vrot.slane %v6860, %v7982
      %v7984 = vlaneseq
      %v7985 = vshrl.u32 %v7984, 7
      %v7986 = vsub.s32 1, %v7985
      %v7987 = vrot.slane %v6860, %v7986
      %v7988 = vlaneseq
      %v7989 = vshrl.u32 %v7988, 7
      %v7990 = vsub.s32 2, %v7989
      %v7991 = vrot.slane %v6860, %v7990
      %v7992 = vlaneseq
      %v7993 = vshrl.u32 %v7992, 7
      %v7994 = vsub.s32 3, %v7993
      %v7995 = vrot.slane %v6860, %v7994
      %v7996 = vlaneseq
      %v7997 = vshrl.u32 %v7996, 7
      %v7998 = vsub.s32 0, %v7997
      %v7999 = vrot.slane %v6868, %v7998
      %v8000 = vlaneseq
      %v8001 = vshrl.u32 %v8000, 7
      %v8002 = vsub.s32 1, %v8001
      %v8003 = vrot.slane %v6868, %v8002
      %v8004 = vlaneseq
      %v8005 = vshrl.u32 %v8004, 7
      %v8006 = vsub.s32 2, %v8005
      %v8007 = vrot.slane %v6868, %v8006
      %v8008 = vlaneseq
      %v8009 = vshrl.u32 %v8008, 7
      %v8010 = vsub.s32 3, %v8009
      %v8011 = vrot.slane %v6868, %v8010
      %v8012 = vlaneseq
      %v8013 = vshrl.u32 %v8012, 7
      %v8014 = vsub.s32 0, %v8013
      %v8015 = vrot.slane %v6870, %v8014
      %v8016 = vlaneseq
      %v8017 = vshrl.u32 %v8016, 7
      %v8018 = vsub.s32 1, %v8017
      %v8019 = vrot.slane %v6870, %v8018
      %v8020 = vlaneseq
      %v8021 = vshrl.u32 %v8020, 7
      %v8022 = vsub.s32 2, %v8021
      %v8023 = vrot.slane %v6870, %v8022
      %v8024 = vlaneseq
      %v8025 = vshrl.u32 %v8024, 7
      %v8026 = vsub.s32 3, %v8025
      %v8027 = vrot.slane %v6870, %v8026
      %v8028 = vlaneseq
      %v8029 = vshrl.u32 %v8028, 7
      %v8030 = vsub.s32 0, %v8029
      %v8031 = vrot.slane %v6853, %v8030
      %v8032 = vlaneseq
      %v8033 = vshrl.u32 %v8032, 7
      %v8034 = vsub.s32 1, %v8033
      %v8035 = vrot.slane %v6853, %v8034
      %v8036 = vlaneseq
      %v8037 = vshrl.u32 %v8036, 7
      %v8038 = vsub.s32 2, %v8037
      %v8039 = vrot.slane %v6853, %v8038
      %v8040 = vlaneseq
      %v8041 = vshrl.u32 %v8040, 7
      %v8042 = vsub.s32 3, %v8041
      %v8043 = vrot.slane %v6853, %v8042
      %v8044 = vlaneseq
      %v8045 = vshrl.u32 %v8044, 7
      %v8046 = vsub.s32 0, %v8045
      %v8047 = vrot.slane %v6867, %v8046
      %v8048 = vlaneseq
      %v8049 = vshrl.u32 %v8048, 7
      %v8050 = vsub.s32 1, %v8049
      %v8051 = vrot.slane %v6867, %v8050
      %v8052 = vlaneseq
      %v8053 = vshrl.u32 %v8052, 7
      %v8054 = vsub.s32 2, %v8053
      %v8055 = vrot.slane %v6867, %v8054
      %v8056 = vlaneseq
      %v8057 = vshrl.u32 %v8056, 7
      %v8058 = vsub.s32 3, %v8057
      %v8059 = vrot.slane %v6867, %v8058
      %v8060 = vlaneseq
      %v8061 = vshrl.u32 %v8060, 7
      %v8062 = vsub.s32 0, %v8061
      %v8063 = vrot.slane %v6869, %v8062
      %v8064 = vlaneseq
      %v8065 = vshrl.u32 %v8064, 7
      %v8066 = vsub.s32 1, %v8065
      %v8067 = vrot.slane %v6869, %v8066
      %v8068 = vlaneseq
      %v8069 = vshrl.u32 %v8068, 7
      %v8070 = vsub.s32 2, %v8069
      %v8071 = vrot.slane %v6869, %v8070
      %v8072 = vlaneseq
      %v8073 = vshrl.u32 %v8072, 7
      %v8074 = vsub.s32 3, %v8073
      %v8075 = vrot.slane %v6869, %v8074
      %v8076 = vlaneseq
      %v8077 = vshrl.u32 %v8076, 7
      %v8078 = vsub.s32 0, %v8077
      %v8079 = vrot.slane %v6871, %v8078
      %v8080 = vlaneseq
      %v8081 = vshrl.u32 %v8080, 7
      %v8082 = vsub.s32 1, %v8081
      %v8083 = vrot.slane %v6871, %v8082
      %v8084 = vlaneseq
      %v8085 = vshrl.u32 %v8084, 7
      %v8086 = vsub.s32 2, %v8085
      %v8087 = vrot.slane %v6871, %v8086
      %v8088 = vlaneseq
      %v8089 = vshrl.u32 %v8088, 7
      %v8090 = vsub.s32 3, %v8089
      %v8091 = vrot.slane %v6871, %v8090
      %v8092 = vlaneseq
      %v8093 = vshrl.u32 %v8092, 7
      %v8094 = vsub.s32 0, %v8093
      %v8095 = vrot.slane %v6914, %v8094
      %v8096 = vlaneseq
      %v8097 = vshrl.u32 %v8096, 7
      %v8098 = vsub.s32 1, %v8097
      %v8099 = vrot.slane %v6914, %v8098
      %v8100 = vlaneseq
      %v8101 = vshrl.u32 %v8100, 7
      %v8102 = vsub.s32 2, %v8101
      %v8103 = vrot.slane %v6914, %v8102
      %v8104 = vlaneseq
      %v8105 = vshrl.u32 %v8104, 7
      %v8106 = vsub.s32 3, %v8105
      %v8107 = vrot.slane %v6914, %v8106
      %v8108 = vlaneseq
      %v8109 = vshrl.u32 %v8108, 7
      %v8110 = vsub.s32 0, %v8109
      %v8111 = vrot.slane %v6928, %v8110
      %v8112 = vlaneseq
      %v8113 = vshrl.u32 %v8112, 7
      %v8114 = vsub.s32 1, %v8113
      %v8115 = vrot.slane %v6928, %v8114
      %v8116 = vlaneseq
      %v8117 = vshrl.u32 %v8116, 7
      %v8118 = vsub.s32 2, %v8117
      %v8119 = vrot.slane %v6928, %v8118
      %v8120 = vlaneseq
      %v8121 = vshrl.u32 %v8120, 7
      %v8122 = vsub.s32 3, %v8121
      %v8123 = vrot.slane %v6928, %v8122
      %v8124 = vlaneseq
      %v8125 = vshrl.u32 %v8124, 7
      %v8126 = vsub.s32 0, %v8125
      %v8127 = vrot.slane %v6936, %v8126
      %v8128 = vlaneseq
      %v8129 = vshrl.u32 %v8128, 7
      %v8130 = vsub.s32 1, %v8129
      %v8131 = vrot.slane %v6936, %v8130
      %v8132 = vlaneseq
      %v8133 = vshrl.u32 %v8132, 7
      %v8134 = vsub.s32 2, %v8133
      %v8135 = vrot.slane %v6936, %v8134
      %v8136 = vlaneseq
      %v8137 = vshrl.u32 %v8136, 7
      %v8138 = vsub.s32 3, %v8137
      %v8139 = vrot.slane %v6936, %v8138
      %v8140 = vlaneseq
      %v8141 = vshrl.u32 %v8140, 7
      %v8142 = vsub.s32 0, %v8141
      %v8143 = vrot.slane %v6938, %v8142
      %v8144 = vlaneseq
      %v8145 = vshrl.u32 %v8144, 7
      %v8146 = vsub.s32 1, %v8145
      %v8147 = vrot.slane %v6938, %v8146
      %v8148 = vlaneseq
      %v8149 = vshrl.u32 %v8148, 7
      %v8150 = vsub.s32 2, %v8149
      %v8151 = vrot.slane %v6938, %v8150
      %v8152 = vlaneseq
      %v8153 = vshrl.u32 %v8152, 7
      %v8154 = vsub.s32 3, %v8153
      %v8155 = vrot.slane %v6938, %v8154
      %v8156 = vlaneseq
      %v8157 = vshrl.u32 %v8156, 7
      %v8158 = vsub.s32 0, %v8157
      %v8159 = vrot.slane %v6921, %v8158
      %v8160 = vlaneseq
      %v8161 = vshrl.u32 %v8160, 7
      %v8162 = vsub.s32 1, %v8161
      %v8163 = vrot.slane %v6921, %v8162
      %v8164 = vlaneseq
      %v8165 = vshrl.u32 %v8164, 7
      %v8166 = vsub.s32 2, %v8165
      %v8167 = vrot.slane %v6921, %v8166
      %v8168 = vlaneseq
      %v8169 = vshrl.u32 %v8168, 7
      %v8170 = vsub.s32 3, %v8169
      %v8171 = vrot.slane %v6921, %v8170
      %v8172 = vlaneseq
      %v8173 = vshrl.u32 %v8172, 7
      %v8174 = vsub.s32 0, %v8173
      %v8175 = vrot.slane %v6935, %v8174
      %v8176 = vlaneseq
      %v8177 = vshrl.u32 %v8176, 7
      %v8178 = vsub.s32 1, %v8177
      %v8179 = vrot.slane %v6935, %v8178
      %v8180 = vlaneseq
      %v8181 = vshrl.u32 %v8180, 7
      %v8182 = vsub.s32 2, %v8181
      %v8183 = vrot.slane %v6935, %v8182
      %v8184 = vlaneseq
      %v8185 = vshrl.u32 %v8184, 7
      %v8186 = vsub.s32 3, %v8185
      %v8187 = vrot.slane %v6935, %v8186
      %v8188 = vlaneseq
      %v8189 = vshrl.u32 %v8188, 7
      %v8190 = vsub.s32 0, %v8189
      %v8191 = vrot.slane %v6937, %v8190
      %v8192 = vlaneseq
      %v8193 = vshrl.u32 %v8192, 7
      %v8194 = vsub.s32 1, %v8193
      %v8195 = vrot.slane %v6937, %v8194
      %v8196 = vlaneseq
      %v8197 = vshrl.u32 %v8196, 7
      %v8198 = vsub.s32 2, %v8197
      %v8199 = vrot.slane %v6937, %v8198
      %v8200 = vlaneseq
      %v8201 = vshrl.u32 %v8200, 7
      %v8202 = vsub.s32 3, %v8201
      %v8203 = vrot.slane %v6937, %v8202
      %v8204 = vlaneseq
      %v8205 = vshrl.u32 %v8204, 7
      %v8206 = vsub.s32 0, %v8205
      %v8207 = vrot.slane %v6939, %v8206
      %v8208 = vlaneseq
      %v8209 = vshrl.u32 %v8208, 7
      %v8210 = vsub.s32 1, %v8209
      %v8211 = vrot.slane %v6939, %v8210
      %v8212 = vlaneseq
      %v8213 = vshrl.u32 %v8212, 7
      %v8214 = vsub.s32 2, %v8213
      %v8215 = vrot.slane %v6939, %v8214
      %v8216 = vlaneseq
      %v8217 = vshrl.u32 %v8216, 7
      %v8218 = vsub.s32 3, %v8217
      %v8219 = vrot.slane %v6939, %v8218
      %v8220 = vlaneseq
      %v8221 = vshrl.u32 %v8220, 7
      %v8222 = vsub.s32 0, %v8221
      %v8223 = vrot.slane %v6982, %v8222
      %v8224 = vlaneseq
      %v8225 = vshrl.u32 %v8224, 7
      %v8226 = vsub.s32 1, %v8225
      %v8227 = vrot.slane %v6982, %v8226
      %v8228 = vlaneseq
      %v8229 = vshrl.u32 %v8228, 7
      %v8230 = vsub.s32 2, %v8229
      %v8231 = vrot.slane %v6982, %v8230
      %v8232 = vlaneseq
      %v8233 = vshrl.u32 %v8232, 7
      %v8234 = vsub.s32 3, %v8233
      %v8235 = vrot.slane %v6982, %v8234
      %v8236 = vlaneseq
      %v8237 = vshrl.u32 %v8236, 7
      %v8238 = vsub.s32 0, %v8237
      %v8239 = vrot.slane %v6996, %v8238
      %v8240 = vlaneseq
      %v8241 = vshrl.u32 %v8240, 7
      %v8242 = vsub.s32 1, %v8241
      %v8243 = vrot.slane %v6996, %v8242
      %v8244 = vlaneseq
      %v8245 = vshrl.u32 %v8244, 7
      %v8246 = vsub.s32 2, %v8245
      %v8247 = vrot.slane %v6996, %v8246
      %v8248 = vlaneseq
      %v8249 = vshrl.u32 %v8248, 7
      %v8250 = vsub.s32 3, %v8249
      %v8251 = vrot.slane %v6996, %v8250
      %v8252 = vlaneseq
      %v8253 = vshrl.u32 %v8252, 7
      %v8254 = vsub.s32 0, %v8253
      %v8255 = vrot.slane %v7004, %v8254
      %v8256 = vlaneseq
      %v8257 = vshrl.u32 %v8256, 7
      %v8258 = vsub.s32 1, %v8257
      %v8259 = vrot.slane %v7004, %v8258
      %v8260 = vlaneseq
      %v8261 = vshrl.u32 %v8260, 7
      %v8262 = vsub.s32 2, %v8261
      %v8263 = vrot.slane %v7004, %v8262
      %v8264 = vlaneseq
      %v8265 = vshrl.u32 %v8264, 7
      %v8266 = vsub.s32 3, %v8265
      %v8267 = vrot.slane %v7004, %v8266
      %v8268 = vlaneseq
      %v8269 = vshrl.u32 %v8268, 7
      %v8270 = vsub.s32 0, %v8269
      %v8271 = vrot.slane %v7006, %v8270
      %v8272 = vlaneseq
      %v8273 = vshrl.u32 %v8272, 7
      %v8274 = vsub.s32 1, %v8273
      %v8275 = vrot.slane %v7006, %v8274
      %v8276 = vlaneseq
      %v8277 = vshrl.u32 %v8276, 7
      %v8278 = vsub.s32 2, %v8277
      %v8279 = vrot.slane %v7006, %v8278
      %v8280 = vlaneseq
      %v8281 = vshrl.u32 %v8280, 7
      %v8282 = vsub.s32 3, %v8281
      %v8283 = vrot.slane %v7006, %v8282
      %v8284 = vlaneseq
      %v8285 = vshrl.u32 %v8284, 7
      %v8286 = vsub.s32 0, %v8285
      %v8287 = vrot.slane %v6989, %v8286
      %v8288 = vlaneseq
      %v8289 = vshrl.u32 %v8288, 7
      %v8290 = vsub.s32 1, %v8289
      %v8291 = vrot.slane %v6989, %v8290
      %v8292 = vlaneseq
      %v8293 = vshrl.u32 %v8292, 7
      %v8294 = vsub.s32 2, %v8293
      %v8295 = vrot.slane %v6989, %v8294
      %v8296 = vlaneseq
      %v8297 = vshrl.u32 %v8296, 7
      %v8298 = vsub.s32 3, %v8297
      %v8299 = vrot.slane %v6989, %v8298
      %v8300 = vlaneseq
      %v8301 = vshrl.u32 %v8300, 7
      %v8302 = vsub.s32 0, %v8301
      %v8303 = vrot.slane %v7003, %v8302
      %v8304 = vlaneseq
      %v8305 = vshrl.u32 %v8304, 7
      %v8306 = vsub.s32 1, %v8305
      %v8307 = vrot.slane %v7003, %v8306
      %v8308 = vlaneseq
      %v8309 = vshrl.u32 %v8308, 7
      %v8310 = vsub.s32 2, %v8309
      %v8311 = vrot.slane %v7003, %v8310
      %v8312 = vlaneseq
      %v8313 = vshrl.u32 %v8312, 7
      %v8314 = vsub.s32 3, %v8313
      %v8315 = vrot.slane %v7003, %v8314
      %v8316 = vlaneseq
      %v8317 = vshrl.u32 %v8316, 7
      %v8318 = vsub.s32 0, %v8317
      %v8319 = vrot.slane %v7005, %v8318
      %v8320 = vlaneseq
      %v8321 = vshrl.u32 %v8320, 7
      %v8322 = vsub.s32 1, %v8321
      %v8323 = vrot.slane %v7005, %v8322
      %v8324 = vlaneseq
      %v8325 = vshrl.u32 %v8324, 7
      %v8326 = vsub.s32 2, %v8325
      %v8327 = vrot.slane %v7005, %v8326
      %v8328 = vlaneseq
      %v8329 = vshrl.u32 %v8328, 7
      %v8330 = vsub.s32 3, %v8329
      %v8331 = vrot.slane %v7005, %v8330
      %v8332 = vlaneseq
      %v8333 = vshrl.u32 %v8332, 7
      %v8334 = vsub.s32 0, %v8333
      %v8335 = vrot.slane %v7007, %v8334
      %v8336 = vlaneseq
      %v8337 = vshrl.u32 %v8336, 7
      %v8338 = vsub.s32 1, %v8337
      %v8339 = vrot.slane %v7007, %v8338
      %v8340 = vlaneseq
      %v8341 = vshrl.u32 %v8340, 7
      %v8342 = vsub.s32 2, %v8341
      %v8343 = vrot.slane %v7007, %v8342
      %v8344 = vlaneseq
      %v8345 = vshrl.u32 %v8344, 7
      %v8346 = vsub.s32 3, %v8345
      %v8347 = vrot.slane %v7007, %v8346
      %v8348 = vlaneseq
      %v8349 = vshrl.u32 %v8348, 7
      %v8350 = vsub.s32 0, %v8349
      %v8351 = vrot.slane %v7050, %v8350
      %v8352 = vlaneseq
      %v8353 = vshrl.u32 %v8352, 7
      %v8354 = vsub.s32 1, %v8353
      %v8355 = vrot.slane %v7050, %v8354
      %v8356 = vlaneseq
      %v8357 = vshrl.u32 %v8356, 7
      %v8358 = vsub.s32 2, %v8357
      %v8359 = vrot.slane %v7050, %v8358
      %v8360 = vlaneseq
      %v8361 = vshrl.u32 %v8360, 7
      %v8362 = vsub.s32 3, %v8361
      %v8363 = vrot.slane %v7050, %v8362
      %v8364 = vlaneseq
      %v8365 = vshrl.u32 %v8364, 7
      %v8366 = vsub.s32 0, %v8365
      %v8367 = vrot.slane %v7064, %v8366
      %v8368 = vlaneseq
      %v8369 = vshrl.u32 %v8368, 7
      %v8370 = vsub.s32 1, %v8369
      %v8371 = vrot.slane %v7064, %v8370
      %v8372 = vlaneseq
      %v8373 = vshrl.u32 %v8372, 7
      %v8374 = vsub.s32 2, %v8373
      %v8375 = vrot.slane %v7064, %v8374
      %v8376 = vlaneseq
      %v8377 = vshrl.u32 %v8376, 7
      %v8378 = vsub.s32 3, %v8377
      %v8379 = vrot.slane %v7064, %v8378
      %v8380 = vlaneseq
      %v8381 = vshrl.u32 %v8380, 7
      %v8382 = vsub.s32 0, %v8381
      %v8383 = vrot.slane %v7072, %v8382
      %v8384 = vlaneseq
      %v8385 = vshrl.u32 %v8384, 7
      %v8386 = vsub.s32 1, %v8385
      %v8387 = vrot.slane %v7072, %v8386
      %v8388 = vlaneseq
      %v8389 = vshrl.u32 %v8388, 7
      %v8390 = vsub.s32 2, %v8389
      %v8391 = vrot.slane %v7072, %v8390
      %v8392 = vlaneseq
      %v8393 = vshrl.u32 %v8392, 7
      %v8394 = vsub.s32 3, %v8393
      %v8395 = vrot.slane %v7072, %v8394
      %v8396 = vlaneseq
      %v8397 = vshrl.u32 %v8396, 7
      %v8398 = vsub.s32 0, %v8397
      %v8399 = vrot.slane %v7074, %v8398
      %v8400 = vlaneseq
      %v8401 = vshrl.u32 %v8400, 7
      %v8402 = vsub.s32 1, %v8401
      %v8403 = vrot.slane %v7074, %v8402
      %v8404 = vlaneseq
      %v8405 = vshrl.u32 %v8404, 7
      %v8406 = vsub.s32 2, %v8405
      %v8407 = vrot.slane %v7074, %v8406
      %v8408 = vlaneseq
      %v8409 = vshrl.u32 %v8408, 7
      %v8410 = vsub.s32 3, %v8409
      %v8411 = vrot.slane %v7074, %v8410
      %v8412 = vlaneseq
      %v8413 = vshrl.u32 %v8412, 7
      %v8414 = vsub.s32 0, %v8413
      %v8415 = vrot.slane %v7057, %v8414
      %v8416 = vlaneseq
      %v8417 = vshrl.u32 %v8416, 7
      %v8418 = vsub.s32 1, %v8417
      %v8419 = vrot.slane %v7057, %v8418
      %v8420 = vlaneseq
      %v8421 = vshrl.u32 %v8420, 7
      %v8422 = vsub.s32 2, %v8421
      %v8423 = vrot.slane %v7057, %v8422
      %v8424 = vlaneseq
      %v8425 = vshrl.u32 %v8424, 7
      %v8426 = vsub.s32 3, %v8425
      %v8427 = vrot.slane %v7057, %v8426
      %v8428 = vlaneseq
      %v8429 = vshrl.u32 %v8428, 7
      %v8430 = vsub.s32 0, %v8429
      %v8431 = vrot.slane %v7071, %v8430
      %v8432 = vlaneseq
      %v8433 = vshrl.u32 %v8432, 7
      %v8434 = vsub.s32 1, %v8433
      %v8435 = vrot.slane %v7071, %v8434
      %v8436 = vlaneseq
      %v8437 = vshrl.u32 %v8436, 7
      %v8438 = vsub.s32 2, %v8437
      %v8439 = vrot.slane %v7071, %v8438
      %v8440 = vlaneseq
      %v8441 = vshrl.u32 %v8440, 7
      %v8442 = vsub.s32 3, %v8441
      %v8443 = vrot.slane %v7071, %v8442
      %v8444 = vlaneseq
      %v8445 = vshrl.u32 %v8444, 7
      %v8446 = vsub.s32 0, %v8445
      %v8447 = vrot.slane %v7073, %v8446
      %v8448 = vlaneseq
      %v8449 = vshrl.u32 %v8448, 7
      %v8450 = vsub.s32 1, %v8449
      %v8451 = vrot.slane %v7073, %v8450
      %v8452 = vlaneseq
      %v8453 = vshrl.u32 %v8452, 7
      %v8454 = vsub.s32 2, %v8453
      %v8455 = vrot.slane %v7073, %v8454
      %v8456 = vlaneseq
      %v8457 = vshrl.u32 %v8456, 7
      %v8458 = vsub.s32 3, %v8457
      %v8459 = vrot.slane %v7073, %v8458
      %v8460 = vlaneseq
      %v8461 = vshrl.u32 %v8460, 7
      %v8462 = vsub.s32 0, %v8461
      %v8463 = vrot.slane %v7075, %v8462
      %v8464 = vlaneseq
      %v8465 = vshrl.u32 %v8464, 7
      %v8466 = vsub.s32 1, %v8465
      %v8467 = vrot.slane %v7075, %v8466
      %v8468 = vlaneseq
      %v8469 = vshrl.u32 %v8468, 7
      %v8470 = vsub.s32 2, %v8469
      %v8471 = vrot.slane %v7075, %v8470
      %v8472 = vlaneseq
      %v8473 = vshrl.u32 %v8472, 7
      %v8474 = vsub.s32 3, %v8473
      %v8475 = vrot.slane %v7075, %v8474
      %v8700 = vcombine.low %v7146, %v7160
      %v8701 = vcombine.low %v7168, %v7170
      %v8702 = vcombine.low %v7153, %v7167
      %v8704 = vunpack.c.l.s4 1966171168
      %v8705 = vunpack.c.0.s8 %v8704
      %v8706 = vlaneseq
      %v8707 = vshrl.u32 %v8706, 7
      %v8708 = vsub.s32 %v8705, %v8707
      %v8709 = vrot.slane %v8700, %v8708
      %v8711 = vunpack.c.l.s4 1966171168
      %v8712 = vunpack.c.0.s8 %v8711
      %v8713 = vlaneseq
      %v8714 = vshrl.u32 %v8713, 7
      %v8715 = vsub.s32 %v8712, %v8714
      %v8716 = vrot.slane %v8701, %v8715
      %v8718 = vunpack.c.l.s4 1966171168
      %v8719 = vunpack.c.0.s8 %v8718
      %v8720 = vlaneseq
      %v8721 = vshrl.u32 %v8720, 7
      %v8722 = vsub.s32 %v8719, %v8721
      %v8723 = vrot.slane %v8702, %v8722
      %v8725 = vunpack.c.l.s4 1966171168
      %v8726 = vunpack.c.0.s8 %v8725
      %v8727 = vlaneseq
      %v8728 = vshrl.u32 %v8727, 7
      %v8729 = vsub.s32 %v8726, %v8728
      %v8730 = vrot.slane %v7169, %v8729
      %v8731 = vcombine.low %v8709, %v8716
      %v8732 = vcombine.high %v8709, %v8716
      %v8733 = vcombine.low %v8723, %v8730
      %v8734 = vcombine.high %v8723, %v8730
      %v8736 = vunpack.c.l.s4 1966171168
      %v8737 = vunpack.c.0.s8 %v8736
      %v8738 = vlaneseq
      %v8739 = vshrl.u32 %v8738, 7
      %v8740 = vsub.s32 %v8737, %v8739
      %v8741 = vrot.slane %v8731, %v8740
      %v8743 = vunpack.c.l.s4 1966171168
      %v8744 = vunpack.c.0.s8 %v8743
      %v8745 = vlaneseq
      %v8746 = vshrl.u32 %v8745, 7
      %v8747 = vsub.s32 %v8744, %v8746
      %v8748 = vrot.slane %v8732, %v8747
      %v8750 = vunpack.c.l.s4 1966171168
      %v8751 = vunpack.c.0.s8 %v8750
      %v8752 = vlaneseq
      %v8753 = vshrl.u32 %v8752, 7
      %v8754 = vsub.s32 %v8751, %v8753
      %v8755 = vrot.slane %v8733, %v8754
      %v8757 = vunpack.c.l.s4 1966171168
      %v8758 = vunpack.c.0.s8 %v8757
      %v8759 = vlaneseq
      %v8760 = vshrl.u32 %v8759, 7
      %v8761 = vsub.s32 %v8758, %v8760
      %v8762 = vrot.slane %v8734, %v8761
      %v8763 = vcombine.low %v8741, %v8755
      %v8764 = vcombine.high %v8741, %v8755
      %v8765 = vcombine.low %v8748, %v8762
      %v8766 = vcombine.high %v8748, %v8762
      %v8767 = vcombine.low %v7171, %v7214
      %v8768 = vcombine.low %v7228, %v7236
      %v8769 = vcombine.low %v7238, %v7221
      %v8771 = vunpack.c.l.s4 1966171168
      %v8772 = vunpack.c.0.s8 %v8771
      %v8773 = vlaneseq
      %v8774 = vshrl.u32 %v8773, 7
      %v8775 = vsub.s32 %v8772, %v8774
      %v8776 = vrot.slane %v8767, %v8775
      %v8778 = vunpack.c.l.s4 1966171168
      %v8779 = vunpack.c.0.s8 %v8778
      %v8780 = vlaneseq
      %v8781 = vshrl.u32 %v8780, 7
      %v8782 = vsub.s32 %v8779, %v8781
      %v8783 = vrot.slane %v8768, %v8782
      %v8785 = vunpack.c.l.s4 1966171168
      %v8786 = vunpack.c.0.s8 %v8785
      %v8787 = vlaneseq
      %v8788 = vshrl.u32 %v8787, 7
      %v8789 = vsub.s32 %v8786, %v8788
      %v8790 = vrot.slane %v8769, %v8789
      %v8792 = vunpack.c.l.s4 1966171168
      %v8793 = vunpack.c.0.s8 %v8792
      %v8794 = vlaneseq
      %v8795 = vshrl.u32 %v8794, 7
      %v8796 = vsub.s32 %v8793, %v8795
      %v8797 = vrot.slane %v7235, %v8796
      %v8798 = vcombine.low %v8776, %v8783
      %v8799 = vcombine.high %v8776, %v8783
      %v8800 = vcombine.low %v8790, %v8797
      %v8801 = vcombine.high %v8790, %v8797
      %v8803 = vunpack.c.l.s4 1966171168
      %v8804 = vunpack.c.0.s8 %v8803
      %v8805 = vlaneseq
      %v8806 = vshrl.u32 %v8805, 7
      %v8807 = vsub.s32 %v8804, %v8806
      %v8808 = vrot.slane %v8798, %v8807
      %v8810 = vunpack.c.l.s4 1966171168
      %v8811 = vunpack.c.0.s8 %v8810
      %v8812 = vlaneseq
      %v8813 = vshrl.u32 %v8812, 7
      %v8814 = vsub.s32 %v8811, %v8813
      %v8815 = vrot.slane %v8799, %v8814
      %v8817 = vunpack.c.l.s4 1966171168
      %v8818 = vunpack.c.0.s8 %v8817
      %v8819 = vlaneseq
      %v8820 = vshrl.u32 %v8819, 7
      %v8821 = vsub.s32 %v8818, %v8820
      %v8822 = vrot.slane %v8800, %v8821
      %v8824 = vunpack.c.l.s4 1966171168
      %v8825 = vunpack.c.0.s8 %v8824
      %v8826 = vlaneseq
      %v8827 = vshrl.u32 %v8826, 7
      %v8828 = vsub.s32 %v8825, %v8827
      %v8829 = vrot.slane %v8801, %v8828
      %v8830 = vcombine.low %v8808, %v8822
      %v8831 = vcombine.high %v8808, %v8822
      %v8832 = vcombine.low %v8815, %v8829
      %v8833 = vcombine.high %v8815, %v8829
      %v8834 = vcombine.low %v7237, %v7239
      %v8835 = vcombine.low %v7282, %v7296
      %v8836 = vcombine.low %v7304, %v7306
      %v8838 = vunpack.c.l.s4 1966171168
      %v8839 = vunpack.c.0.s8 %v8838
      %v8840 = vlaneseq
      %v8841 = vshrl.u32 %v8840, 7
      %v8842 = vsub.s32 %v8839, %v8841
      %v8843 = vrot.slane %v8834, %v8842
      %v8845 = vunpack.c.l.s4 1966171168
      %v8846 = vunpack.c.0.s8 %v8845
      %v8847 = vlaneseq
      %v8848 = vshrl.u32 %v8847, 7
      %v8849 = vsub.s32 %v8846, %v8848
      %v8850 = vrot.slane %v8835, %v8849
      %v8852 = vunpack.c.l.s4 1966171168
      %v8853 = vunpack.c.0.s8 %v8852
      %v8854 = vlaneseq
      %v8855 = vshrl.u32 %v8854, 7
      %v8856 = vsub.s32 %v8853, %v8855
      %v8857 = vrot.slane %v8836, %v8856
      %v8859 = vunpack.c.l.s4 1966171168
      %v8860 = vunpack.c.0.s8 %v8859
      %v8861 = vlaneseq
      %v8862 = vshrl.u32 %v8861, 7
      %v8863 = vsub.s32 %v8860, %v8862
      %v8864 = vrot.slane %v7289, %v8863
      %v8865 = vcombine.low %v8843, %v8850
      %v8866 = vcombine.high %v8843, %v8850
      %v8867 = vcombine.low %v8857, %v8864
      %v8868 = vcombine.high %v8857, %v8864
      %v8870 = vunpack.c.l.s4 1966171168
      %v8871 = vunpack.c.0.s8 %v8870
      %v8872 = vlaneseq
      %v8873 = vshrl.u32 %v8872, 7
      %v8874 = vsub.s32 %v8871, %v8873
      %v8875 = vrot.slane %v8865, %v8874
      %v8877 = vunpack.c.l.s4 1966171168
      %v8878 = vunpack.c.0.s8 %v8877
      %v8879 = vlaneseq
      %v8880 = vshrl.u32 %v8879, 7
      %v8881 = vsub.s32 %v8878, %v8880
      %v8882 = vrot.slane %v8866, %v8881
      %v8884 = vunpack.c.l.s4 1966171168
      %v8885 = vunpack.c.0.s8 %v8884
      %v8886 = vlaneseq
      %v8887 = vshrl.u32 %v8886, 7
      %v8888 = vsub.s32 %v8885, %v8887
      %v8889 = vrot.slane %v8867, %v8888
      %v8891 = vunpack.c.l.s4 1966171168
      %v8892 = vunpack.c.0.s8 %v8891
      %v8893 = vlaneseq
      %v8894 = vshrl.u32 %v8893, 7
      %v8895 = vsub.s32 %v8892, %v8894
      %v8896 = vrot.slane %v8868, %v8895
      %v8897 = vcombine.low %v8875, %v8889
      %v8898 = vcombine.high %v8875, %v8889
      %v8899 = vcombine.low %v8882, %v8896
      %v8900 = vcombine.high %v8882, %v8896
      %v8901 = vcombine.low %v7303, %v7305
      %v8902 = vcombine.low %v7307, %v7350
      %v8903 = vcombine.low %v7364, %v7372
      %v8905 = vunpack.c.l.s4 1966171168
      %v8906 = vunpack.c.0.s8 %v8905
      %v8907 = vlaneseq
      %v8908 = vshrl.u32 %v8907, 7
      %v8909 = vsub.s32 %v8906, %v8908
      %v8910 = vrot.slane %v8901, %v8909
      %v8912 = vunpack.c.l.s4 1966171168
      %v8913 = vunpack.c.0.s8 %v8912
      %v8914 = vlaneseq
      %v8915 = vshrl.u32 %v8914, 7
      %v8916 = vsub.s32 %v8913, %v8915
      %v8917 = vrot.slane %v8902, %v8916
      %v8919 = vunpack.c.l.s4 1966171168
      %v8920 = vunpack.c.0.s8 %v8919
      %v8921 = vlaneseq
      %v8922 = vshrl.u32 %v8921, 7
      %v8923 = vsub.s32 %v8920, %v8922
      %v8924 = vrot.slane %v8903, %v8923
      %v8926 = vunpack.c.l.s4 1966171168
      %v8927 = vunpack.c.0.s8 %v8926
      %v8928 = vlaneseq
      %v8929 = vshrl.u32 %v8928, 7
      %v8930 = vsub.s32 %v8927, %v8929
      %v8931 = vrot.slane %v7374, %v8930
      %v8932 = vcombine.low %v8910, %v8917
      %v8933 = vcombine.high %v8910, %v8917
      %v8934 = vcombine.low %v8924, %v8931
      %v8935 = vcombine.high %v8924, %v8931
      %v8937 = vunpack.c.l.s4 1966171168
      %v8938 = vunpack.c.0.s8 %v8937
      %v8939 = vlaneseq
      %v8940 = vshrl.u32 %v8939, 7
      %v8941 = vsub.s32 %v8938, %v8940
      %v8942 = vrot.slane %v8932, %v8941
      %v8944 = vunpack.c.l.s4 1966171168
      %v8945 = vunpack.c.0.s8 %v8944
      %v8946 = vlaneseq
      %v8947 = vshrl.u32 %v8946, 7
      %v8948 = vsub.s32 %v8945, %v8947
      %v8949 = vrot.slane %v8933, %v8948
      %v8951 = vunpack.c.l.s4 1966171168
      %v8952 = vunpack.c.0.s8 %v8951
      %v8953 = vlaneseq
      %v8954 = vshrl.u32 %v8953, 7
      %v8955 = vsub.s32 %v8952, %v8954
      %v8956 = vrot.slane %v8934, %v8955
      %v8958 = vunpack.c.l.s4 1966171168
      %v8959 = vunpack.c.0.s8 %v8958
      %v8960 = vlaneseq
      %v8961 = vshrl.u32 %v8960, 7
      %v8962 = vsub.s32 %v8959, %v8961
      %v8963 = vrot.slane %v8935, %v8962
      %v8964 = vcombine.low %v8942, %v8956
      %v8965 = vcombine.high %v8942, %v8956
      %v8966 = vcombine.low %v8949, %v8963
      %v8967 = vcombine.high %v8949, %v8963
      %v8968 = vcombine.low %v7357, %v7371
      %v8969 = vcombine.low %v7373, %v7375
      %v8970 = vcombine.low %v7418, %v7432
      %v8972 = vunpack.c.l.s4 1966171168
      %v8973 = vunpack.c.0.s8 %v8972
      %v8974 = vlaneseq
      %v8975 = vshrl.u32 %v8974, 7
      %v8976 = vsub.s32 %v8973, %v8975
      %v8977 = vrot.slane %v8968, %v8976
      %v8979 = vunpack.c.l.s4 1966171168
      %v8980 = vunpack.c.0.s8 %v8979
      %v8981 = vlaneseq
      %v8982 = vshrl.u32 %v8981, 7
      %v8983 = vsub.s32 %v8980, %v8982
      %v8984 = vrot.slane %v8969, %v8983
      %v8986 = vunpack.c.l.s4 1966171168
      %v8987 = vunpack.c.0.s8 %v8986
      %v8988 = vlaneseq
      %v8989 = vshrl.u32 %v8988, 7
      %v8990 = vsub.s32 %v8987, %v8989
      %v8991 = vrot.slane %v8970, %v8990
      %v8993 = vunpack.c.l.s4 1966171168
      %v8994 = vunpack.c.0.s8 %v8993
      %v8995 = vlaneseq
      %v8996 = vshrl.u32 %v8995, 7
      %v8997 = vsub.s32 %v8994, %v8996
      %v8998 = vrot.slane %v7440, %v8997
      %v8999 = vcombine.low %v8977, %v8984
      %v9000 = vcombine.high %v8977, %v8984
      %v9001 = vcombine.low %v8991, %v8998
      %v9002 = vcombine.high %v8991, %v8998
      %v9004 = vunpack.c.l.s4 1966171168
      %v9005 = vunpack.c.0.s8 %v9004
      %v9006 = vlaneseq
      %v9007 = vshrl.u32 %v9006, 7
      %v9008 = vsub.s32 %v9005, %v9007
      %v9009 = vrot.slane %v8999, %v9008
      %v9011 = vunpack.c.l.s4 1966171168
      %v9012 = vunpack.c.0.s8 %v9011
      %v9013 = vlaneseq
      %v9014 = vshrl.u32 %v9013, 7
      %v9015 = vsub.s32 %v9012, %v9014
      %v9016 = vrot.slane %v9000, %v9015
      %v9018 = vunpack.c.l.s4 1966171168
      %v9019 = vunpack.c.0.s8 %v9018
      %v9020 = vlaneseq
      %v9021 = vshrl.u32 %v9020, 7
      %v9022 = vsub.s32 %v9019, %v9021
      %v9023 = vrot.slane %v9001, %v9022
      %v9025 = vunpack.c.l.s4 1966171168
      %v9026 = vunpack.c.0.s8 %v9025
      %v9027 = vlaneseq
      %v9028 = vshrl.u32 %v9027, 7
      %v9029 = vsub.s32 %v9026, %v9028
      %v9030 = vrot.slane %v9002, %v9029
      %v9031 = vcombine.low %v9009, %v9023
      %v9032 = vcombine.high %v9009, %v9023
      %v9033 = vcombine.low %v9016, %v9030
      %v9034 = vcombine.high %v9016, %v9030
      %v9035 = vcombine.low %v7442, %v7425
      %v9036 = vcombine.low %v7439, %v7441
      %v9037 = vcombine.low %v7443, %v7486
      %v9039 = vunpack.c.l.s4 1966171168
      %v9040 = vunpack.c.0.s8 %v9039
      %v9041 = vlaneseq
      %v9042 = vshrl.u32 %v9041, 7
      %v9043 = vsub.s32 %v9040, %v9042
      %v9044 = vrot.slane %v9035, %v9043
      %v9046 = vunpack.c.l.s4 1966171168
      %v9047 = vunpack.c.0.s8 %v9046
      %v9048 = vlaneseq
      %v9049 = vshrl.u32 %v9048, 7
      %v9050 = vsub.s32 %v9047, %v9049
      %v9051 = vrot.slane %v9036, %v9050
      %v9053 = vunpack.c.l.s4 1966171168
      %v9054 = vunpack.c.0.s8 %v9053
      %v9055 = vlaneseq
      %v9056 = vshrl.u32 %v9055, 7
      %v9057 = vsub.s32 %v9054, %v9056
      %v9058 = vrot.slane %v9037, %v9057
      %v9060 = vunpack.c.l.s4 1966171168
      %v9061 = vunpack.c.0.s8 %v9060
      %v9062 = vlaneseq
      %v9063 = vshrl.u32 %v9062, 7
      %v9064 = vsub.s32 %v9061, %v9063
      %v9065 = vrot.slane %v7500, %v9064
      %v9066 = vcombine.low %v9044, %v9051
      %v9067 = vcombine.high %v9044, %v9051
      %v9068 = vcombine.low %v9058, %v9065
      %v9069 = vcombine.high %v9058, %v9065
      %v9071 = vunpack.c.l.s4 1966171168
      %v9072 = vunpack.c.0.s8 %v9071
      %v9073 = vlaneseq
      %v9074 = vshrl.u32 %v9073, 7
      %v9075 = vsub.s32 %v9072, %v9074
      %v9076 = vrot.slane %v9066, %v9075
      %v9078 = vunpack.c.l.s4 1966171168
      %v9079 = vunpack.c.0.s8 %v9078
      %v9080 = vlaneseq
      %v9081 = vshrl.u32 %v9080, 7
      %v9082 = vsub.s32 %v9079, %v9081
      %v9083 = vrot.slane %v9067, %v9082
      %v9085 = vunpack.c.l.s4 1966171168
      %v9086 = vunpack.c.0.s8 %v9085
      %v9087 = vlaneseq
      %v9088 = vshrl.u32 %v9087, 7
      %v9089 = vsub.s32 %v9086, %v9088
      %v9090 = vrot.slane %v9068, %v9089
      %v9092 = vunpack.c.l.s4 1966171168
      %v9093 = vunpack.c.0.s8 %v9092
      %v9094 = vlaneseq
      %v9095 = vshrl.u32 %v9094, 7
      %v9096 = vsub.s32 %v9093, %v9095
      %v9097 = vrot.slane %v9069, %v9096
      %v9098 = vcombine.low %v9076, %v9090
      %v9099 = vcombine.high %v9076, %v9090
      %v9100 = vcombine.low %v9083, %v9097
      %v9101 = vcombine.high %v9083, %v9097
      %v9102 = vcombine.low %v7508, %v7510
      %v9103 = vcombine.low %v7493, %v7507
      %v9104 = vcombine.low %v7509, %v7511
      %v9106 = vunpack.c.l.s4 1966171168
      %v9107 = vunpack.c.0.s8 %v9106
      %v9108 = vlaneseq
      %v9109 = vshrl.u32 %v9108, 7
      %v9110 = vsub.s32 %v9107, %v9109
      %v9111 = vrot.slane %v9102, %v9110
      %v9113 = vunpack.c.l.s4 1966171168
      %v9114 = vunpack.c.0.s8 %v9113
      %v9115 = vlaneseq
      %v9116 = vshrl.u32 %v9115, 7
      %v9117 = vsub.s32 %v9114, %v9116
      %v9118 = vrot.slane %v9103, %v9117
      %v9120 = vunpack.c.l.s4 1966171168
      %v9121 = vunpack.c.0.s8 %v9120
      %v9122 = vlaneseq
      %v9123 = vshrl.u32 %v9122, 7
      %v9124 = vsub.s32 %v9121, %v9123
      %v9125 = vrot.slane %v9104, %v9124
      %v9127 = vunpack.c.l.s4 1966171168
      %v9128 = vunpack.c.0.s8 %v9127
      %v9129 = vlaneseq
      %v9130 = vshrl.u32 %v9129, 7
      %v9131 = vsub.s32 %v9128, %v9130
      %v9132 = vrot.slane %v7554, %v9131
      %v9133 = vcombine.low %v9111, %v9118
      %v9134 = vcombine.high %v9111, %v9118
      %v9135 = vcombine.low %v9125, %v9132
      %v9136 = vcombine.high %v9125, %v9132
      %v9138 = vunpack.c.l.s4 1966171168
      %v9139 = vunpack.c.0.s8 %v9138
      %v9140 = vlaneseq
      %v9141 = vshrl.u32 %v9140, 7
      %v9142 = vsub.s32 %v9139, %v9141
      %v9143 = vrot.slane %v9133, %v9142
      %v9145 = vunpack.c.l.s4 1966171168
      %v9146 = vunpack.c.0.s8 %v9145
      %v9147 = vlaneseq
      %v9148 = vshrl.u32 %v9147, 7
      %v9149 = vsub.s32 %v9146, %v9148
      %v9150 = vrot.slane %v9134, %v9149
      %v9152 = vunpack.c.l.s4 1966171168
      %v9153 = vunpack.c.0.s8 %v9152
      %v9154 = vlaneseq
      %v9155 = vshrl.u32 %v9154, 7
      %v9156 = vsub.s32 %v9153, %v9155
      %v9157 = vrot.slane %v9135, %v9156
      %v9159 = vunpack.c.l.s4 1966171168
      %v9160 = vunpack.c.0.s8 %v9159
      %v9161 = vlaneseq
      %v9162 = vshrl.u32 %v9161, 7
      %v9163 = vsub.s32 %v9160, %v9162
      %v9164 = vrot.slane %v9136, %v9163
      %v9165 = vcombine.low %v9143, %v9157
      %v9166 = vcombine.high %v9143, %v9157
      %v9167 = vcombine.low %v9150, %v9164
      %v9168 = vcombine.high %v9150, %v9164
      %v9169 = vcombine.low %v7568, %v7576
      %v9170 = vcombine.low %v7578, %v7561
      %v9171 = vcombine.low %v7575, %v7577
      %v9173 = vunpack.c.l.s4 1966171168
      %v9174 = vunpack.c.0.s8 %v9173
      %v9175 = vlaneseq
      %v9176 = vshrl.u32 %v9175, 7
      %v9177 = vsub.s32 %v9174, %v9176
      %v9178 = vrot.slane %v9169, %v9177
      %v9180 = vunpack.c.l.s4 1966171168
      %v9181 = vunpack.c.0.s8 %v9180
      %v9182 = vlaneseq
      %v9183 = vshrl.u32 %v9182, 7
      %v9184 = vsub.s32 %v9181, %v9183
      %v9185 = vrot.slane %v9170, %v9184
      %v9187 = vunpack.c.l.s4 1966171168
      %v9188 = vunpack.c.0.s8 %v9187
      %v9189 = vlaneseq
      %v9190 = vshrl.u32 %v9189, 7
      %v9191 = vsub.s32 %v9188, %v9190
      %v9192 = vrot.slane %v9171, %v9191
      %v9194 = vunpack.c.l.s4 1966171168
      %v9195 = vunpack.c.0.s8 %v9194
      %v9196 = vlaneseq
      %v9197 = vshrl.u32 %v9196, 7
      %v9198 = vsub.s32 %v9195, %v9197
      %v9199 = vrot.slane %v7579, %v9198
      %v9200 = vcombine.low %v9178, %v9185
      %v9201 = vcombine.high %v9178, %v9185
      %v9202 = vcombine.low %v9192, %v9199
      %v9203 = vcombine.high %v9192, %v9199
      %v9205 = vunpack.c.l.s4 1966171168
      %v9206 = vunpack.c.0.s8 %v9205
      %v9207 = vlaneseq
      %v9208 = vshrl.u32 %v9207, 7
      %v9209 = vsub.s32 %v9206, %v9208
      %v9210 = vrot.slane %v9200, %v9209
      %v9212 = vunpack.c.l.s4 1966171168
      %v9213 = vunpack.c.0.s8 %v9212
      %v9214 = vlaneseq
      %v9215 = vshrl.u32 %v9214, 7
      %v9216 = vsub.s32 %v9213, %v9215
      %v9217 = vrot.slane %v9201, %v9216
      %v9219 = vunpack.c.l.s4 1966171168
      %v9220 = vunpack.c.0.s8 %v9219
      %v9221 = vlaneseq
      %v9222 = vshrl.u32 %v9221, 7
      %v9223 = vsub.s32 %v9220, %v9222
      %v9224 = vrot.slane %v9202, %v9223
      %v9226 = vunpack.c.l.s4 1966171168
      %v9227 = vunpack.c.0.s8 %v9226
      %v9228 = vlaneseq
      %v9229 = vshrl.u32 %v9228, 7
      %v9230 = vsub.s32 %v9227, %v9229
      %v9231 = vrot.slane %v9203, %v9230
      %v9232 = vcombine.low %v9210, %v9224
      %v9233 = vcombine.high %v9210, %v9224
      %v9234 = vcombine.low %v9217, %v9231
      %v9235 = vcombine.high %v9217, %v9231
      %v9268 = vmul.f32 %v7583, %v8763
      %v9269 = vmul.f32 %v7587, %v8765
      %v9270 = vmul.f32 %v7591, %v8764
      %v9271 = vmul.f32 %v7595, %v8766
      %v9272 = vmul.f32 %v7599, %v8763
      %v9273 = vmul.f32 %v7603, %v8765
      %v9274 = vmul.f32 %v7607, %v8764
      %v9275 = vmul.f32 %v7611, %v8766
      %v9276 = vmul.f32 %v7615, %v8763
      %v9277 = vmul.f32 %v7619, %v8765
      %v9278 = vmul.f32 %v7623, %v8764
      %v9279 = vmul.f32 %v7627, %v8766
      %v9280 = vmul.f32 %v7631, %v8763
      %v9281 = vmul.f32 %v7635, %v8765
      %v9282 = vmul.f32 %v7639, %v8764
      %v9283 = vmul.f32 %v7643, %v8766
      %v9284 = vmul.f32 %v7647, %v8763
      %v9285 = vmul.f32 %v7651, %v8765
      %v9286 = vmul.f32 %v7655, %v8764
      %v9287 = vmul.f32 %v7659, %v8766
      %v9288 = vmul.f32 %v7663, %v8763
      %v9289 = vmul.f32 %v7667, %v8765
      %v9290 = vmul.f32 %v7671, %v8764
      %v9291 = vmul.f32 %v7675, %v8766
      %v9292 = vmul.f32 %v7679, %v8763
      %v9293 = vmul.f32 %v7683, %v8765
      %v9294 = vmul.f32 %v7687, %v8764
      %v9295 = vmul.f32 %v7691, %v8766
      %v9296 = vmul.f32 %v7695, %v8830
      %v9297 = vmul.f32 %v7699, %v8832
      %v9298 = vmul.f32 %v7703, %v8831
      %v9299 = vmul.f32 %v7707, %v8833
      %v9300 = vmul.f32 %v7711, %v8830
      %v9301 = vmul.f32 %v7715, %v8832
      %v9302 = vmul.f32 %v7719, %v8831
      %v9303 = vmul.f32 %v7723, %v8833
      %v9304 = vmul.f32 %v7727, %v8830
      %v9305 = vmul.f32 %v7731, %v8832
      %v9306 = vmul.f32 %v7735, %v8831
      %v9307 = vmul.f32 %v7739, %v8833
      %v9308 = vmul.f32 %v7743, %v8830
      %v9309 = vmul.f32 %v7747, %v8832
      %v9310 = vmul.f32 %v7751, %v8831
      %v9311 = vmul.f32 %v7755, %v8833
      %v9312 = vmul.f32 %v7759, %v8830
      %v9313 = vmul.f32 %v7763, %v8832
      %v9314 = vmul.f32 %v7767, %v8831
      %v9315 = vmul.f32 %v7771, %v8833
      %v9316 = vmul.f32 %v7775, %v8830
      %v9317 = vmul.f32 %v7779, %v8832
      %v9318 = vmul.f32 %v7783, %v8831
      %v9319 = vmul.f32 %v7787, %v8833
      %v9320 = vmul.f32 %v7791, %v8830
      %v9321 = vmul.f32 %v7795, %v8832
      %v9322 = vmul.f32 %v7799, %v8831
      %v9323 = vmul.f32 %v7803, %v8833
      %v9324 = vmul.f32 %v7807, %v8897
      %v9325 = vmul.f32 %v7811, %v8899
      %v9326 = vmul.f32 %v7815, %v8898
      %v9327 = vmul.f32 %v7819, %v8900
      %v9328 = vmul.f32 %v7823, %v8897
      %v9329 = vmul.f32 %v7827, %v8899
      %v9330 = vmul.f32 %v7831, %v8898
      %v9331 = vmul.f32 %v7835, %v8900
      %v9332 = vmul.f32 %v7839, %v8897
      %v9333 = vmul.f32 %v7843, %v8899
      %v9334 = vmul.f32 %v7847, %v8898
      %v9335 = vmul.f32 %v7851, %v8900
      %v9336 = vmul.f32 %v7855, %v8897
      %v9337 = vmul.f32 %v7859, %v8899
      %v9338 = vmul.f32 %v7863, %v8898
      %v9339 = vmul.f32 %v7867, %v8900
      %v9340 = vmul.f32 %v7871, %v8897
      %v9341 = vmul.f32 %v7875, %v8899
      %v9342 = vmul.f32 %v7879, %v8898
      %v9343 = vmul.f32 %v7883, %v8900
      %v9344 = vmul.f32 %v7887, %v8897
      %v9345 = vmul.f32 %v7891, %v8899
      %v9346 = vmul.f32 %v7895, %v8898
      %v9347 = vmul.f32 %v7899, %v8900
      %v9348 = vmul.f32 %v7903, %v8897
      %v9349 = vmul.f32 %v7907, %v8899
      %v9350 = vmul.f32 %v7911, %v8898
      %v9351 = vmul.f32 %v7915, %v8900
      %v9352 = vmul.f32 %v7919, %v8964
      %v9353 = vmul.f32 %v7923, %v8966
      %v9354 = vmul.f32 %v7927, %v8965
      %v9355 = vmul.f32 %v7931, %v8967
      %v9356 = vmul.f32 %v7935, %v8964
      %v9357 = vmul.f32 %v7939, %v8966
      %v9358 = vmul.f32 %v7943, %v8965
      %v9359 = vmul.f32 %v7947, %v8967
      %v9360 = vmul.f32 %v7951, %v8964
      %v9361 = vmul.f32 %v7955, %v8966
      %v9362 = vmul.f32 %v7959, %v8965
      %v9363 = vmul.f32 %v7963, %v8967
      %v9364 = vmul.f32 %v7967, %v8964
      %v9365 = vmul.f32 %v7971, %v8966
      %v9366 = vmul.f32 %v7975, %v8965
      %v9367 = vmul.f32 %v7979, %v8967
      %v9368 = vmul.f32 %v7983, %v8964
      %v9369 = vmul.f32 %v7987, %v8966
      %v9370 = vmul.f32 %v7991, %v8965
      %v9371 = vmul.f32 %v7995, %v8967
      %v9372 = vmul.f32 %v7999, %v8964
      %v9373 = vmul.f32 %v8003, %v8966
      %v9374 = vmul.f32 %v8007, %v8965
      %v9375 = vmul.f32 %v8011, %v8967
      %v9376 = vmul.f32 %v8015, %v8964
      %v9377 = vmul.f32 %v8019, %v8966
      %v9378 = vmul.f32 %v8023, %v8965
      %v9379 = vmul.f32 %v8027, %v8967
      %v9380 = vmul.f32 %v8031, %v9031
      %v9381 = vmul.f32 %v8035, %v9033
      %v9382 = vmul.f32 %v8039, %v9032
      %v9383 = vmul.f32 %v8043, %v9034
      %v9384 = vmul.f32 %v8047, %v9031
      %v9385 = vmul.f32 %v8051, %v9033
      %v9386 = vmul.f32 %v8055, %v9032
      %v9387 = vmul.f32 %v8059, %v9034
      %v9388 = vmul.f32 %v8063, %v9031
      %v9389 = vmul.f32 %v8067, %v9033
      %v9390 = vmul.f32 %v8071, %v9032
      %v9391 = vmul.f32 %v8075, %v9034
      %v9392 = vmul.f32 %v8079, %v9031
      %v9393 = vmul.f32 %v8083, %v9033
      %v9394 = vmul.f32 %v8087, %v9032
      %v9395 = vmul.f32 %v8091, %v9034
      %v9396 = vmul.f32 %v8095, %v9031
      %v9397 = vmul.f32 %v8099, %v9033
      %v9398 = vmul.f32 %v8103, %v9032
      %v9399 = vmul.f32 %v8107, %v9034
      %v9400 = vmul.f32 %v8111, %v9031
      %v9401 = vmul.f32 %v8115, %v9033
      %v9402 = vmul.f32 %v8119, %v9032
      %v9403 = vmul.f32 %v8123, %v9034
      %v9404 = vmul.f32 %v8127, %v9031
      %v9405 = vmul.f32 %v8131, %v9033
      %v9406 = vmul.f32 %v8135, %v9032
      %v9407 = vmul.f32 %v8139, %v9034
      %v9408 = vmul.f32 %v8143, %v9098
      %v9409 = vmul.f32 %v8147, %v9100
      %v9410 = vmul.f32 %v8151, %v9099
      %v9411 = vmul.f32 %v8155, %v9101
      %v9412 = vmul.f32 %v8159, %v9098
      %v9413 = vmul.f32 %v8163, %v9100
      %v9414 = vmul.f32 %v8167, %v9099
      %v9415 = vmul.f32 %v8171, %v9101
      %v9416 = vmul.f32 %v8175, %v9098
      %v9417 = vmul.f32 %v8179, %v9100
      %v9418 = vmul.f32 %v8183, %v9099
      %v9419 = vmul.f32 %v8187, %v9101
      %v9420 = vmul.f32 %v8191, %v9098
      %v9421 = vmul.f32 %v8195, %v9100
      %v9422 = vmul.f32 %v8199, %v9099
      %v9423 = vmul.f32 %v8203, %v9101
      %v9424 = vmul.f32 %v8207, %v9098
      %v9425 = vmul.f32 %v8211, %v9100
      %v9426 = vmul.f32 %v8215, %v9099
      %v9427 = vmul.f32 %v8219, %v9101
      %v9428 = vmul.f32 %v8223, %v9098
      %v9429 = vmul.f32 %v8227, %v9100
      %v9430 = vmul.f32 %v8231, %v9099
      %v9431 = vmul.f32 %v8235, %v9101
      %v9432 = vmul.f32 %v8239, %v9098
      %v9433 = vmul.f32 %v8243, %v9100
      %v9434 = vmul.f32 %v8247, %v9099
      %v9435 = vmul.f32 %v8251, %v9101
      %v9436 = vmul.f32 %v8255, %v9165
      %v9437 = vmul.f32 %v8259, %v9167
      %v9438 = vmul.f32 %v8263, %v9166
      %v9439 = vmul.f32 %v8267, %v9168
      %v9440 = vmul.f32 %v8271, %v9165
      %v9441 = vmul.f32 %v8275, %v9167
      %v9442 = vmul.f32 %v8279, %v9166
      %v9443 = vmul.f32 %v8283, %v9168
      %v9444 = vmul.f32 %v8287, %v9165
      %v9445 = vmul.f32 %v8291, %v9167
      %v9446 = vmul.f32 %v8295, %v9166
      %v9447 = vmul.f32 %v8299, %v9168
      %v9448 = vmul.f32 %v8303, %v9165
      %v9449 = vmul.f32 %v8307, %v9167
      %v9450 = vmul.f32 %v8311, %v9166
      %v9451 = vmul.f32 %v8315, %v9168
      %v9452 = vmul.f32 %v8319, %v9165
      %v9453 = vmul.f32 %v8323, %v9167
      %v9454 = vmul.f32 %v8327, %v9166
      %v9455 = vmul.f32 %v8331, %v9168
      %v9456 = vmul.f32 %v8335, %v9165
      %v9457 = vmul.f32 %v8339, %v9167
      %v9458 = vmul.f32 %v8343, %v9166
      %v9459 = vmul.f32 %v8347, %v9168
      %v9460 = vmul.f32 %v8351, %v9165
      %v9461 = vmul.f32 %v8355, %v9167
      %v9462 = vmul.f32 %v8359, %v9166
      %v9463 = vmul.f32 %v8363, %v9168
      %v9464 = vmul.f32 %v8367, %v9232
      %v9465 = vmul.f32 %v8371, %v9234
      %v9466 = vmul.f32 %v8375, %v9233
      %v9467 = vmul.f32 %v8379, %v9235
      %v9468 = vmul.f32 %v8383, %v9232
      %v9469 = vmul.f32 %v8387, %v9234
      %v9470 = vmul.f32 %v8391, %v9233
      %v9471 = vmul.f32 %v8395, %v9235
      %v9472 = vmul.f32 %v8399, %v9232
      %v9473 = vmul.f32 %v8403, %v9234
      %v9474 = vmul.f32 %v8407, %v9233
      %v9475 = vmul.f32 %v8411, %v9235
      %v9476 = vmul.f32 %v8415, %v9232
      %v9477 = vmul.f32 %v8419, %v9234
      %v9478 = vmul.f32 %v8423, %v9233
      %v9479 = vmul.f32 %v8427, %v9235
      %v9480 = vmul.f32 %v8431, %v9232
      %v9481 = vmul.f32 %v8435, %v9234
      %v9482 = vmul.f32 %v8439, %v9233
      %v9483 = vmul.f32 %v8443, %v9235
      %v9484 = vmul.f32 %v8447, %v9232
      %v9485 = vmul.f32 %v8451, %v9234
      %v9486 = vmul.f32 %v8455, %v9233
      %v9487 = vmul.f32 %v8459, %v9235
      %v9488 = vmul.f32 %v8463, %v9232
      %v9489 = vmul.f32 %v8467, %v9234
      %v9490 = vmul.f32 %v8471, %v9233
      %v9491 = vmul.f32 %v8475, %v9235
      %9492 = vst [vmem:[%s393] sm:$0x7f] %v9268
      %9493 = vst [vmem:[%s393 + $0x8] sm:$0x7f] %v9269
      %9494 = vst [vmem:[%s393 + $0x10] sm:$0x7f] %v9270
      %9495 = vst [vmem:[%s393 + $0x18] sm:$0x7f] %v9271
      %9496 = vst [vmem:[%s393 + $0x20] sm:$0x7f] %v9272
      %9497 = vst [vmem:[%s393 + $0x28] sm:$0x7f] %v9273
      %9498 = vst [vmem:[%s393 + $0x30] sm:$0x7f] %v9274
      %9499 = vst [vmem:[%s393 + $0x38] sm:$0x7f] %v9275
      %9500 = vst [vmem:[%s393 + $0x40] sm:$0x7f] %v9276
      %9501 = vst [vmem:[%s393 + $0x48] sm:$0x7f] %v9277
      %9502 = vst [vmem:[%s393 + $0x50] sm:$0x7f] %v9278
      %9503 = vst [vmem:[%s393 + $0x58] sm:$0x7f] %v9279
      %9504 = vst [vmem:[%s393 + $0x60] sm:$0x7f] %v9280
      %9505 = vst [vmem:[%s393 + $0x68] sm:$0x7f] %v9281
      %9506 = vst [vmem:[%s393 + $0x70] sm:$0x7f] %v9282
      %9507 = vst [vmem:[%s393 + $0x78] sm:$0x7f] %v9283
      %9508 = vst [vmem:[%s393 + $0x80] sm:$0x7f] %v9284
      %9509 = vst [vmem:[%s393 + $0x88] sm:$0x7f] %v9285
      %9510 = vst [vmem:[%s393 + $0x90] sm:$0x7f] %v9286
      %9511 = vst [vmem:[%s393 + $0x98] sm:$0x7f] %v9287
      %9512 = vst [vmem:[%s393 + $0xa0] sm:$0x7f] %v9288
      %9513 = vst [vmem:[%s393 + $0xa8] sm:$0x7f] %v9289
      %9514 = vst [vmem:[%s393 + $0xb0] sm:$0x7f] %v9290
      %9515 = vst [vmem:[%s393 + $0xb8] sm:$0x7f] %v9291
      %9516 = vst [vmem:[%s393 + $0xc0] sm:$0x7f] %v9292
      %9517 = vst [vmem:[%s393 + $0xc8] sm:$0x7f] %v9293
      %9518 = vst [vmem:[%s393 + $0xd0] sm:$0x7f] %v9294
      %9519 = vst [vmem:[%s393 + $0xd8] sm:$0x7f] %v9295
      %9520 = vst [vmem:[%s393 + $0xe0] sm:$0x7f] %v9296
      %9521 = vst [vmem:[%s393 + $0xe8] sm:$0x7f] %v9297
      %9522 = vst [vmem:[%s393 + $0xf0] sm:$0x7f] %v9298
      %9523 = vst [vmem:[%s393 + $0xf8] sm:$0x7f] %v9299
      %9524 = vst [vmem:[%s393 + $0x100] sm:$0x7f] %v9300
      %9525 = vst [vmem:[%s393 + $0x108] sm:$0x7f] %v9301
      %9526 = vst [vmem:[%s393 + $0x110] sm:$0x7f] %v9302
      %9527 = vst [vmem:[%s393 + $0x118] sm:$0x7f] %v9303
      %9528 = vst [vmem:[%s393 + $0x120] sm:$0x7f] %v9304
      %9529 = vst [vmem:[%s393 + $0x128] sm:$0x7f] %v9305
      %9530 = vst [vmem:[%s393 + $0x130] sm:$0x7f] %v9306
      %9531 = vst [vmem:[%s393 + $0x138] sm:$0x7f] %v9307
      %9532 = vst [vmem:[%s393 + $0x140] sm:$0x7f] %v9308
      %9533 = vst [vmem:[%s393 + $0x148] sm:$0x7f] %v9309
      %9534 = vst [vmem:[%s393 + $0x150] sm:$0x7f] %v9310
      %9535 = vst [vmem:[%s393 + $0x158] sm:$0x7f] %v9311
      %9536 = vst [vmem:[%s393 + $0x160] sm:$0x7f] %v9312
      %9537 = vst [vmem:[%s393 + $0x168] sm:$0x7f] %v9313
      %9538 = vst [vmem:[%s393 + $0x170] sm:$0x7f] %v9314
      %9539 = vst [vmem:[%s393 + $0x178] sm:$0x7f] %v9315
      %9540 = vst [vmem:[%s393 + $0x180] sm:$0x7f] %v9316
      %9541 = vst [vmem:[%s393 + $0x188] sm:$0x7f] %v9317
      %9542 = vst [vmem:[%s393 + $0x190] sm:$0x7f] %v9318
      %9543 = vst [vmem:[%s393 + $0x198] sm:$0x7f] %v9319
      %9544 = vst [vmem:[%s393 + $0x1a0] sm:$0x7f] %v9320
      %9545 = vst [vmem:[%s393 + $0x1a8] sm:$0x7f] %v9321
      %9546 = vst [vmem:[%s393 + $0x1b0] sm:$0x7f] %v9322
      %9547 = vst [vmem:[%s393 + $0x1b8] sm:$0x7f] %v9323
      %9548 = vst [vmem:[%s393 + $0x1c0] sm:$0x7f] %v9324
      %9549 = vst [vmem:[%s393 + $0x1c8] sm:$0x7f] %v9325
      %9550 = vst [vmem:[%s393 + $0x1d0] sm:$0x7f] %v9326
      %9551 = vst [vmem:[%s393 + $0x1d8] sm:$0x7f] %v9327
      %9552 = vst [vmem:[%s393 + $0x1e0] sm:$0x7f] %v9328
      %9553 = vst [vmem:[%s393 + $0x1e8] sm:$0x7f] %v9329
      %9554 = vst [vmem:[%s393 + $0x1f0] sm:$0x7f] %v9330
      %9555 = vst [vmem:[%s393 + $0x1f8] sm:$0x7f] %v9331
      %9556 = vst [vmem:[%s393 + $0x200] sm:$0x7f] %v9332
      %9557 = vst [vmem:[%s393 + $0x208] sm:$0x7f] %v9333
      %9558 = vst [vmem:[%s393 + $0x210] sm:$0x7f] %v9334
      %9559 = vst [vmem:[%s393 + $0x218] sm:$0x7f] %v9335
      %9560 = vst [vmem:[%s393 + $0x220] sm:$0x7f] %v9336
      %9561 = vst [vmem:[%s393 + $0x228] sm:$0x7f] %v9337
      %9562 = vst [vmem:[%s393 + $0x230] sm:$0x7f] %v9338
      %9563 = vst [vmem:[%s393 + $0x238] sm:$0x7f] %v9339
      %9564 = vst [vmem:[%s393 + $0x240] sm:$0x7f] %v9340
      %9565 = vst [vmem:[%s393 + $0x248] sm:$0x7f] %v9341
      %9566 = vst [vmem:[%s393 + $0x250] sm:$0x7f] %v9342
      %9567 = vst [vmem:[%s393 + $0x258] sm:$0x7f] %v9343
      %9568 = vst [vmem:[%s393 + $0x260] sm:$0x7f] %v9344
      %9569 = vst [vmem:[%s393 + $0x268] sm:$0x7f] %v9345
      %9570 = vst [vmem:[%s393 + $0x270] sm:$0x7f] %v9346
      %9571 = vst [vmem:[%s393 + $0x278] sm:$0x7f] %v9347
      %9572 = vst [vmem:[%s393 + $0x280] sm:$0x7f] %v9348
      %9573 = vst [vmem:[%s393 + $0x288] sm:$0x7f] %v9349
      %9574 = vst [vmem:[%s393 + $0x290] sm:$0x7f] %v9350
      %9575 = vst [vmem:[%s393 + $0x298] sm:$0x7f] %v9351
      %9576 = vst [vmem:[%s393 + $0x2a0] sm:$0x7f] %v9352
      %9577 = vst [vmem:[%s393 + $0x2a8] sm:$0x7f] %v9353
      %9578 = vst [vmem:[%s393 + $0x2b0] sm:$0x7f] %v9354
      %9579 = vst [vmem:[%s393 + $0x2b8] sm:$0x7f] %v9355
      %9580 = vst [vmem:[%s393 + $0x2c0] sm:$0x7f] %v9356
      %9581 = vst [vmem:[%s393 + $0x2c8] sm:$0x7f] %v9357
      %9582 = vst [vmem:[%s393 + $0x2d0] sm:$0x7f] %v9358
      %9583 = vst [vmem:[%s393 + $0x2d8] sm:$0x7f] %v9359
      %9584 = vst [vmem:[%s393 + $0x2e0] sm:$0x7f] %v9360
      %9585 = vst [vmem:[%s393 + $0x2e8] sm:$0x7f] %v9361
      %9586 = vst [vmem:[%s393 + $0x2f0] sm:$0x7f] %v9362
      %9587 = vst [vmem:[%s393 + $0x2f8] sm:$0x7f] %v9363
      %9588 = vst [vmem:[%s393 + $0x300] sm:$0x7f] %v9364
      %9589 = vst [vmem:[%s393 + $0x308] sm:$0x7f] %v9365
      %9590 = vst [vmem:[%s393 + $0x310] sm:$0x7f] %v9366
      %9591 = vst [vmem:[%s393 + $0x318] sm:$0x7f] %v9367
      %9592 = vst [vmem:[%s393 + $0x320] sm:$0x7f] %v9368
      %9593 = vst [vmem:[%s393 + $0x328] sm:$0x7f] %v9369
      %9594 = vst [vmem:[%s393 + $0x330] sm:$0x7f] %v9370
      %9595 = vst [vmem:[%s393 + $0x338] sm:$0x7f] %v9371
      %9596 = vst [vmem:[%s393 + $0x340] sm:$0x7f] %v9372
      %9597 = vst [vmem:[%s393 + $0x348] sm:$0x7f] %v9373
      %9598 = vst [vmem:[%s393 + $0x350] sm:$0x7f] %v9374
      %9599 = vst [vmem:[%s393 + $0x358] sm:$0x7f] %v9375
      %9600 = vst [vmem:[%s393 + $0x360] sm:$0x7f] %v9376
      %9601 = vst [vmem:[%s393 + $0x368] sm:$0x7f] %v9377
      %9602 = vst [vmem:[%s393 + $0x370] sm:$0x7f] %v9378
      %9603 = vst [vmem:[%s393 + $0x378] sm:$0x7f] %v9379
      %9604 = vst [vmem:[%s393 + $0x380] sm:$0x7f] %v9380
      %9605 = vst [vmem:[%s393 + $0x388] sm:$0x7f] %v9381
      %9606 = vst [vmem:[%s393 + $0x390] sm:$0x7f] %v9382
      %9607 = vst [vmem:[%s393 + $0x398] sm:$0x7f] %v9383
      %9608 = vst [vmem:[%s393 + $0x3a0] sm:$0x7f] %v9384
      %9609 = vst [vmem:[%s393 + $0x3a8] sm:$0x7f] %v9385
      %9610 = vst [vmem:[%s393 + $0x3b0] sm:$0x7f] %v9386
      %9611 = vst [vmem:[%s393 + $0x3b8] sm:$0x7f] %v9387
      %9612 = vst [vmem:[%s393 + $0x3c0] sm:$0x7f] %v9388
      %9613 = vst [vmem:[%s393 + $0x3c8] sm:$0x7f] %v9389
      %9614 = vst [vmem:[%s393 + $0x3d0] sm:$0x7f] %v9390
      %9615 = vst [vmem:[%s393 + $0x3d8] sm:$0x7f] %v9391
      %9616 = vst [vmem:[%s393 + $0x3e0] sm:$0x7f] %v9392
      %9617 = vst [vmem:[%s393 + $0x3e8] sm:$0x7f] %v9393
      %9618 = vst [vmem:[%s393 + $0x3f0] sm:$0x7f] %v9394
      %9619 = vst [vmem:[%s393 + $0x3f8] sm:$0x7f] %v9395
      %9620 = vst [vmem:[%s393 + $0x400] sm:$0x7f] %v9396
      %9621 = vst [vmem:[%s393 + $0x408] sm:$0x7f] %v9397
      %9622 = vst [vmem:[%s393 + $0x410] sm:$0x7f] %v9398
      %9623 = vst [vmem:[%s393 + $0x418] sm:$0x7f] %v9399
      %9624 = vst [vmem:[%s393 + $0x420] sm:$0x7f] %v9400
      %9625 = vst [vmem:[%s393 + $0x428] sm:$0x7f] %v9401
      %9626 = vst [vmem:[%s393 + $0x430] sm:$0x7f] %v9402
      %9627 = vst [vmem:[%s393 + $0x438] sm:$0x7f] %v9403
      %9628 = vst [vmem:[%s393 + $0x440] sm:$0x7f] %v9404
      %9629 = vst [vmem:[%s393 + $0x448] sm:$0x7f] %v9405
      %9630 = vst [vmem:[%s393 + $0x450] sm:$0x7f] %v9406
      %9631 = vst [vmem:[%s393 + $0x458] sm:$0x7f] %v9407
      %9632 = vst [vmem:[%s393 + $0x460] sm:$0x7f] %v9408
      %9633 = vst [vmem:[%s393 + $0x468] sm:$0x7f] %v9409
      %9634 = vst [vmem:[%s393 + $0x470] sm:$0x7f] %v9410
      %9635 = vst [vmem:[%s393 + $0x478] sm:$0x7f] %v9411
      %9636 = vst [vmem:[%s393 + $0x480] sm:$0x7f] %v9412
      %9637 = vst [vmem:[%s393 + $0x488] sm:$0x7f] %v9413
      %9638 = vst [vmem:[%s393 + $0x490] sm:$0x7f] %v9414
      %9639 = vst [vmem:[%s393 + $0x498] sm:$0x7f] %v9415
      %9640 = vst [vmem:[%s393 + $0x4a0] sm:$0x7f] %v9416
      %9641 = vst [vmem:[%s393 + $0x4a8] sm:$0x7f] %v9417
      %9642 = vst [vmem:[%s393 + $0x4b0] sm:$0x7f] %v9418
      %9643 = vst [vmem:[%s393 + $0x4b8] sm:$0x7f] %v9419
      %9644 = vst [vmem:[%s393 + $0x4c0] sm:$0x7f] %v9420
      %9645 = vst [vmem:[%s393 + $0x4c8] sm:$0x7f] %v9421
      %9646 = vst [vmem:[%s393 + $0x4d0] sm:$0x7f] %v9422
      %9647 = vst [vmem:[%s393 + $0x4d8] sm:$0x7f] %v9423
      %9648 = vst [vmem:[%s393 + $0x4e0] sm:$0x7f] %v9424
      %9649 = vst [vmem:[%s393 + $0x4e8] sm:$0x7f] %v9425
      %9650 = vst [vmem:[%s393 + $0x4f0] sm:$0x7f] %v9426
      %9651 = vst [vmem:[%s393 + $0x4f8] sm:$0x7f] %v9427
      %9652 = vst [vmem:[%s393 + $0x500] sm:$0x7f] %v9428
      %9653 = vst [vmem:[%s393 + $0x508] sm:$0x7f] %v9429
      %9654 = vst [vmem:[%s393 + $0x510] sm:$0x7f] %v9430
      %9655 = vst [vmem:[%s393 + $0x518] sm:$0x7f] %v9431
      %9656 = vst [vmem:[%s393 + $0x520] sm:$0x7f] %v9432
      %9657 = vst [vmem:[%s393 + $0x528] sm:$0x7f] %v9433
      %9658 = vst [vmem:[%s393 + $0x530] sm:$0x7f] %v9434
      %9659 = vst [vmem:[%s393 + $0x538] sm:$0x7f] %v9435
      %9660 = vst [vmem:[%s393 + $0x540] sm:$0x7f] %v9436
      %9661 = vst [vmem:[%s393 + $0x548] sm:$0x7f] %v9437
      %9662 = vst [vmem:[%s393 + $0x550] sm:$0x7f] %v9438
      %9663 = vst [vmem:[%s393 + $0x558] sm:$0x7f] %v9439
      %9664 = vst [vmem:[%s393 + $0x560] sm:$0x7f] %v9440
      %9665 = vst [vmem:[%s393 + $0x568] sm:$0x7f] %v9441
      %9666 = vst [vmem:[%s393 + $0x570] sm:$0x7f] %v9442
      %9667 = vst [vmem:[%s393 + $0x578] sm:$0x7f] %v9443
      %9668 = vst [vmem:[%s393 + $0x580] sm:$0x7f] %v9444
      %9669 = vst [vmem:[%s393 + $0x588] sm:$0x7f] %v9445
      %9670 = vst [vmem:[%s393 + $0x590] sm:$0x7f] %v9446
      %9671 = vst [vmem:[%s393 + $0x598] sm:$0x7f] %v9447
      %9672 = vst [vmem:[%s393 + $0x5a0] sm:$0x7f] %v9448
      %9673 = vst [vmem:[%s393 + $0x5a8] sm:$0x7f] %v9449
      %9674 = vst [vmem:[%s393 + $0x5b0] sm:$0x7f] %v9450
      %9675 = vst [vmem:[%s393 + $0x5b8] sm:$0x7f] %v9451
      %9676 = vst [vmem:[%s393 + $0x5c0] sm:$0x7f] %v9452
      %9677 = vst [vmem:[%s393 + $0x5c8] sm:$0x7f] %v9453
      %9678 = vst [vmem:[%s393 + $0x5d0] sm:$0x7f] %v9454
      %9679 = vst [vmem:[%s393 + $0x5d8] sm:$0x7f] %v9455
      %9680 = vst [vmem:[%s393 + $0x5e0] sm:$0x7f] %v9456
      %9681 = vst [vmem:[%s393 + $0x5e8] sm:$0x7f] %v9457
      %9682 = vst [vmem:[%s393 + $0x5f0] sm:$0x7f] %v9458
      %9683 = vst [vmem:[%s393 + $0x5f8] sm:$0x7f] %v9459
      %9684 = vst [vmem:[%s393 + $0x600] sm:$0x7f] %v9460
      %9685 = vst [vmem:[%s393 + $0x608] sm:$0x7f] %v9461
      %9686 = vst [vmem:[%s393 + $0x610] sm:$0x7f] %v9462
      %9687 = vst [vmem:[%s393 + $0x618] sm:$0x7f] %v9463
      %9688 = vst [vmem:[%s393 + $0x620] sm:$0x7f] %v9464
      %9689 = vst [vmem:[%s393 + $0x628] sm:$0x7f] %v9465
      %9690 = vst [vmem:[%s393 + $0x630] sm:$0x7f] %v9466
      %9691 = vst [vmem:[%s393 + $0x638] sm:$0x7f] %v9467
      %9692 = vst [vmem:[%s393 + $0x640] sm:$0x7f] %v9468
      %9693 = vst [vmem:[%s393 + $0x648] sm:$0x7f] %v9469
      %9694 = vst [vmem:[%s393 + $0x650] sm:$0x7f] %v9470
      %9695 = vst [vmem:[%s393 + $0x658] sm:$0x7f] %v9471
      %9696 = vst [vmem:[%s393 + $0x660] sm:$0x7f] %v9472
      %9697 = vst [vmem:[%s393 + $0x668] sm:$0x7f] %v9473
      %9698 = vst [vmem:[%s393 + $0x670] sm:$0x7f] %v9474
      %9699 = vst [vmem:[%s393 + $0x678] sm:$0x7f] %v9475
      %9700 = vst [vmem:[%s393 + $0x680] sm:$0x7f] %v9476
      %9701 = vst [vmem:[%s393 + $0x688] sm:$0x7f] %v9477
      %9702 = vst [vmem:[%s393 + $0x690] sm:$0x7f] %v9478
      %9703 = vst [vmem:[%s393 + $0x698] sm:$0x7f] %v9479
      %9704 = vst [vmem:[%s393 + $0x6a0] sm:$0x7f] %v9480
      %9705 = vst [vmem:[%s393 + $0x6a8] sm:$0x7f] %v9481
      %9706 = vst [vmem:[%s393 + $0x6b0] sm:$0x7f] %v9482
      %9707 = vst [vmem:[%s393 + $0x6b8] sm:$0x7f] %v9483
      %9708 = vst [vmem:[%s393 + $0x6c0] sm:$0x7f] %v9484
      %9709 = vst [vmem:[%s393 + $0x6c8] sm:$0x7f] %v9485
      %9710 = vst [vmem:[%s393 + $0x6d0] sm:$0x7f] %v9486
      %9711 = vst [vmem:[%s393 + $0x6d8] sm:$0x7f] %v9487
      %9712 = vst [vmem:[%s393 + $0x6e0] sm:$0x7f] %v9488
      %9713 = vst [vmem:[%s393 + $0x6e8] sm:$0x7f] %v9489
      %9714 = vst [vmem:[%s393 + $0x6f0] sm:$0x7f] %v9490
      %9715 = vst [vmem:[%s393 + $0x6f8] sm:$0x7f] %v9491
      %s9716 = smul.u32 8, %s22
      %p9717 = scmp.lt.s32.totalorder %s9716, 15
      %s9718 = scalar_select %p9717, %s9716, 15
      %s9719 = smul.addr %s9718, 28
      %s9720 = smul.addr %s9719, 8
      %s9721 = scalar_lea.vmem %s11, %s9720
      // Predicated region
      $region65: #{coord_att_head_nhwc.1} parent=63 // pred_check
        %p9722 = pneg %p276
      $region66: #{coord_att_head_nhwc.1} parent=63 // pred_check_branch
        %9724 = sbr.rel (%p9722) target = $region68
      $region67: #{coord_att_head_nhwc.1} parent=63 // pred_region
        %s9725 = smul.u32 8, %s22
      $region68: #{coord_att_head_nhwc.1} parent=63 // pred_fallthru
        _
    $region64: #{coord_att_head_nhwc.1} parent=5 // pred_fallthru
      _
    %p9726 = scmp.le.s32.totalorder 2, %s17
    // Predicated region
    $region69: #{coord_att_head_nhwc.1} parent=5 // pred_check
      %p9727 = pneg %p9726
    $region70: #{coord_att_head_nhwc.1} parent=5 // pred_check_branch
      %9729 = sbr.rel (%p9727) target = $region72
    $region71: #{coord_att_head_nhwc.1} parent=5 // pred_region
      %s9730 = ssub.s32 %s17, 2
      // Predicated region
      $region73: #{coord_att_head_nhwc.1} parent=71 // pred_check
        %p9731 = pneg %p282
      $region74: #{coord_att_head_nhwc.1} parent=71 // pred_check_branch
        %9733 = sbr.rel (%p9731) target = $region76
      $region75: #{coord_att_head_nhwc.1} parent=71 // pred_region
        %s9734 = smul.u32 8, %s23
        %p9735 = scmp.lt.s32.totalorder %s9734, 15
        %s9736 = scalar_select %p9735, %s9734, 15
        %s9737 = smul.addr %s9736, 28
        %s9738 = smul.addr %s9737, 8
        %s9739 = scalar_lea.vmem %s11, %s9738
      $region76: #{coord_att_head_nhwc.1} parent=71 // pred_fallthru
        _
    $region72: #{coord_att_head_nhwc.1} parent=5 // pred_fallthru
      _
  $region6: #{coord_att_head_nhwc.1} parent=0 // loop_footer
    %s21 = sadd.s32 1, %s17
  $region7: #{coord_att_head_nhwc.1} parent=0 // loop_footer_branch
    %16 = sbr.rel target = $region3
  $region8: #{coord_att_head_nhwc.1} parent=0 // loop_exit
    _

</llo_original>
